<compile_context>
chip_gen: v5e
topology: v5e:2x2
jax: 0.10.0
libtpu: 0.0.40
codegen_flags: <defaults>
</compile_context>

<pallas_src>
import functools
import math

import jax
import jax.numpy as jnp
from jax.experimental import pallas as pl
from jax.experimental.pallas import tpu as pltpu

BN_EPS = 1e-5
TILE_M = 112          # rows per accumulator block (multiple of 16; ~7 f32 acc vregs @ C=64)


def _round_up(n, m):
    return ((n + m - 1) // m) * m


# ------------------------------ Pallas kernel ------------------------------ #

def _resnet_block1_kernel(x_ref, mask_ref, w1_ref, s1_ref, w2_ref, s2_ref,
                          o_ref, xz_ref, hz_ref, *,
                          nb, rimg, mc, gpad, cin, cout, tile_m, plan):
    """Fused conv1+bn1+relu+conv2+bn2+residual+relu for `nb` images per grid step.

    x_ref   : (nb*rimg, cin) f32   row-flattened padded images (+ zero guard rows)
    mask_ref: (mc, 1)        f32   1.0 on interior output pixels, 0.0 on ring / tail
    w*_ref  : (9*cin, cout)  bf16  tap-stacked weights with BN scale folded in
    s*_ref  : (1, cout)      f32   folded conv-bias + BN shift
    o_ref   : (nb*mc, cout)  f32   outputs at padded-flattened positions
    xz_ref  : (rimg, 2*cin)  bf16  pair-packed input scratch  [row r | row r+1]
    hz_ref  : (rimg, 2*cin)  bf16  pair-packed hidden scratch [row r | row r+1]
    plan    : tuple of (tap row offset, #taps packed along K, weight row offset)
    """
    two_c = 2 * cin
    n_tiles = mc // tile_m

    def conv_tile(z_ref, w_ref, r0):
        acc = jnp.zeros((tile_m, cout), jnp.float32)
        for off, ktaps, wrow in plan:                      # 3 dense K=2C + 3 K=C dots
            k = ktaps * cin
            lo = gpad + off + r0
            acc = acc + jnp.dot(z_ref[lo:lo + tile_m, 0:k],
                                w_ref[wrow:wrow + k, :],
                                preferred_element_type=jnp.float32)
        return acc

    # h-scratch guard rows: only lanes [0:cin] need explicit zeros (the pair half is
    # rewritten from them below, every image). ~2 vregs of stores per grid step.
    hz_ref[0:gpad, 0:cin] = jnp.zeros((gpad, cin), jnp.bfloat16)
    hz_ref[gpad + mc:rimg, 0:cin] = jnp.zeros((rimg - gpad - mc, cin), jnp.bfloat16)

    for img in range(nb):
        xrow = img * rimg

        # ---- pair-packed bf16 input: cast ONCE, then one shifted in-VMEM copy ----
        xz_ref[:, 0:cin] = x_ref[xrow:xrow + rimg, :].astype(jnp.bfloat16)
        xz_ref[0:rimg - 1, cin:two_c] = xz_ref[1:rimg, 0:cin]
        xz_ref[rimg - 1:rimg, cin:two_c] = jnp.zeros((1, cin), jnp.bfloat16)

        # ---- conv1 + bn1 + relu (M-tiled); mask re-creates the zero padding ring
        #      (and zeroes junk tail rows) so conv2 sees a properly padded input ----
        for t in range(n_tiles):
            r0 = t * tile_m
            h = conv_tile(xz_ref, w1_ref, r0) + s1_ref[...]
            h = jnp.maximum(h, 0.0) * mask_ref[r0:r0 + tile_m, :]
            hz_ref[gpad + r0:gpad + r0 + tile_m, 0:cin] = h.astype(jnp.bfloat16)

        # pair-pack h with the same single shifted copy
        hz_ref[0:rimg - 1, cin:two_c] = hz_ref[1:rimg, 0:cin]
        hz_ref[rimg - 1:rimg, cin:two_c] = jnp.zeros((1, cin), jnp.bfloat16)

        # ---- conv2 + bn2 + residual + relu (M-tiled); residual from resident f32 x ----
        for t in range(n_tiles):
            r0 = t * tile_m
            res = x_ref[xrow + gpad + r0:xrow + gpad + r0 + tile_m, :]
            y = conv_tile(hz_ref, w2_ref, r0) + s2_ref[...] + res
            o_ref[img * mc + r0:img * mc + r0 + tile_m, :] = (
                jnp.maximum(y, 0.0) * mask_ref[r0:r0 + tile_m, :])


# ------------------------------- wrapper ----------------------------------- #

def pack_block_params(params, c):
    """One-time weight packing: fold BN scale into the conv weights, stack the 9
    taps along K (tap-major, matching the in-kernel pair plan), cast to bf16."""
    def pack(conv, bn):
        scale = bn['gamma'] / jnp.sqrt(bn['var'] + BN_EPS)
        shift = bn['beta'] + (conv['b'] - bn['mean']) * scale
        w = conv['w'] * scale[:, None, None, None]               # fold scale into Cout
        w = jnp.transpose(w, (2, 3, 1, 0)).reshape(9 * c, c)     # (tap*Cin, Cout)
        return w.astype(jnp.bfloat16), shift.reshape(1, c).astype(jnp.float32)

    w1, s1 = pack(params['conv1'], params['bn1'])
    w2, s2 = pack(params['conv2'], params['bn2'])
    return {'w1': w1, 's1': s1, 'w2': w2, 's2': s2}


def resnet_block1_forward(x_nchw, packed, *, C, H, W, images_per_step=1):
    """x: (B, C, H, W) float32 -> (B, C, H, W) float32 (PyTorch layout)."""
    B = x_nchw.shape[0]
    nb = images_per_step
    assert B % nb == 0, "images_per_step must divide the batch"
    Hp, Wp = H + 2, W + 2
    Mc = _round_up(Hp * Wp, TILE_M)        # rows computed per image (tail rows = junk)
    Gpad = _round_up(Wp + 1, 16)           # guard rows cover every tap shift
    Rimg = Mc + 2 * Gpad

    # NCHW -> NHWC, zero-pad spatial ring, flatten rows, add guard rows, group images.
    # NO channel padding: HBM activation streams stay at C=64 lanes.
    x = jnp.transpose(x_nchw, (0, 2, 3, 1)).astype(jnp.float32)
    x = jnp.pad(x, ((0, 0), (1, 1), (1, 1), (0, 0)))
    x = x.reshape(B, Hp * Wp, C)
    x = jnp.pad(x, ((0, 0), (Gpad, Rimg - Gpad - Hp * Wp), (0, 0)))
    x = x.reshape(B // nb, nb * Rimg, C)

    # interior-pixel mask (1.0 on real output pixels, 0.0 on ring / tail rows)
    mask = jnp.zeros((Hp, Wp), jnp.float32).at[1:H + 1, 1:W + 1].set(1.0)
    mask = jnp.pad(mask.reshape(Hp * Wp, 1), ((0, Mc - Hp * Wp), (0, 0)))

    # dense-K tap plan: pairs (0,1),(3,4),(6,7) have flat offsets differing by 1 ->
    # a single slice of the pair-packed scratch gives a dense K=2C operand.
    offs = [(dy - 1) * Wp + (dx - 1) for dy in range(3) for dx in range(3)]
    plan, wrow, t = [], 0, 0
    while t < 9:
        if t % 3 != 2:                      # (0,1), (3,4), (6,7): K = 2C
            plan.append((offs[t], 2, wrow)); wrow += 2 * C; t += 2
        else:                               # 2, 5, 8: leftover single taps, K = C
            plan.append((offs[t], 1, wrow)); wrow += C; t += 1

    kernel = functools.partial(
        _resnet_block1_kernel, nb=nb, rimg=Rimg, mc=Mc, gpad=Gpad,
        cin=C, cout=C, tile_m=TILE_M, plan=tuple(plan))

    out = pl.pallas_call(
        kernel,
        out_shape=jax.ShapeDtypeStruct((B // nb, nb * Mc, C), jnp.float32),
        grid_spec=pltpu.PrefetchScalarGridSpec(
            num_scalar_prefetch=0,
            grid=(B // nb,),
            in_specs=[
                pl.BlockSpec((None, nb * Rimg, C), lambda b: (b, 0, 0)),   # x (f32)
                pl.BlockSpec((Mc, 1), lambda b: (0, 0)),                   # mask
                pl.BlockSpec((9 * C, C), lambda b: (0, 0)),                # w1 (bf16)
                pl.BlockSpec((1, C), lambda b: (0, 0)),                    # shift1
                pl.BlockSpec((9 * C, C), lambda b: (0, 0)),                # w2 (bf16)
                pl.BlockSpec((1, C), lambda b: (0, 0)),                    # shift2
            ],
            out_specs=pl.BlockSpec((None, nb * Mc, C), lambda b: (b, 0, 0)),
            scratch_shapes=[pltpu.VMEM((Rimg, 2 * C), jnp.bfloat16),       # xz scratch
                            pltpu.VMEM((Rimg, 2 * C), jnp.bfloat16)],      # hz scratch
        ),
        compiler_params=pltpu.CompilerParams(
            dimension_semantics=("parallel",)),
    )(x, mask, packed['w1'], packed['s1'], packed['w2'], packed['s2'])

    # drop tail rows and the spatial ring; back to NCHW.
    y = out.reshape(B, Mc, C)[:, :Hp * Wp, :].reshape(B, Hp, Wp, C)
    y = y[:, 1:H + 1, 1:W + 1, :]
    return jnp.transpose(y, (0, 3, 1, 2))


# --------------------------- pure-JAX reference ----------------------------- #

def resnet_block1_ref(x_nchw, params):
    """Reference with the same bf16 quantization points as the kernel
    (conv inputs/weights bf16, f32 accumulation, f32 epilogue & residual)."""
    x = jnp.transpose(x_nchw, (0, 2, 3, 1)).astype(jnp.float32)

    def q(a):
        return a.astype(jnp.bfloat16).astype(jnp.float32)

    def conv_bn(h, conv, bn):
        scale = bn['gamma'] / jnp.sqrt(bn['var'] + BN_EPS)
        shift = bn['beta'] + (conv['b'] - bn['mean']) * scale
        w = q(conv['w'] * scale[:, None, None, None])
        w = jnp.transpose(w, (2, 3, 1, 0))                     # HWIO
        y = jax.lax.conv_general_dilated(
            q(h), w, (1, 1), [(1, 1), (1, 1)],
            dimension_numbers=('NHWC', 'HWIO', 'NHWC'),
            precision=jax.lax.Precision.HIGHEST)
        return y + shift

    h = jnp.maximum(conv_bn(x, params['conv1'], params['bn1']), 0.0)
    y = conv_bn(h, params['conv2'], params['bn2'])
    return jnp.transpose(jnp.maximum(x + y, 0.0), (0, 3, 1, 2))


# ------------------------------- parameters --------------------------------- #

def _init_conv(key, cin, cout, ksize):
    kw, kb = jax.random.split(key)
    fan = cin * ksize * ksize
    w = jax.random.normal(kw, (cout, cin, ksize, ksize), jnp.float32) / math.sqrt(fan)
    b = 0.01 * jax.random.normal(kb, (cout,), jnp.float32)
    return {'w': w, 'b': b}


def _init_bn(key, c):
    k1, k2, k3, k4 = jax.random.split(key, 4)
    return {'gamma': 1.0 + 0.1 * jax.random.normal(k1, (c,), jnp.float32),
            'beta': 0.1 * jax.random.normal(k2, (c,), jnp.float32),
            'mean': 0.1 * jax.random.normal(k3, (c,), jnp.float32),
            'var': 1.0 + 0.1 * jnp.abs(jax.random.normal(k4, (c,), jnp.float32))}


def init_block_params(key, c):
    # ResNetBlock1: conv1/bn1/conv2/bn2, in_channel == out_channel (residual add).
    k1, k2, k3, k4 = jax.random.split(key, 4)
    return {'conv1': _init_conv(k1, c, c, 3), 'bn1': _init_bn(k2, c),
            'conv2': _init_conv(k3, c, c, 3), 'bn2': _init_bn(k4, c)}


# ---------------------------------- main ------------------------------------ #

if __name__ == "__main__":
    key = jax.random.PRNGKey(0)
    pkey, xkey = jax.random.split(key)

    B, C, H, W = 2, 64, 16, 16                      # layer1-sized block
    params = init_block_params(pkey, C)
    packed = pack_block_params(params, C)           # one-time weight packing
    x = jax.random.normal(xkey, (B, C, H, W), jnp.float32)

    fwd = jax.jit(functools.partial(resnet_block1_forward,
                                    C=C, H=H, W=W, images_per_step=1))
    out = jax.block_until_ready(fwd(x, packed))
    assert out.shape == (B, C, H, W) and out.dtype == jnp.float32

    ref = jax.block_until_ready(jax.jit(resnet_block1_ref)(x, params))
    rel_err = float(jnp.max(jnp.abs(out - ref)) / (jnp.max(jnp.abs(ref)) + 1e-6))
    assert rel_err < 1e-2, f"Pallas output mismatch vs reference: rel_err={rel_err}"

    # also exercise the multi-image-per-grid-step batched path
    B2 = 4
    x2 = jax.random.normal(jax.random.fold_in(xkey, 1), (B2, C, H, W), jnp.float32)
    fwd2 = jax.jit(functools.partial(resnet_block1_forward,
                                     C=C, H=H, W=W, images_per_step=2))
    out2 = jax.block_until_ready(fwd2(x2, packed))
    ref2 = jax.block_until_ready(jax.jit(resnet_block1_ref)(x2, params))
    rel_err2 = float(jnp.max(jnp.abs(out2 - ref2)) / (jnp.max(jnp.abs(ref2)) + 1e-6))
    assert rel_err2 < 1e-2, f"Batched-path mismatch vs reference: rel_err={rel_err2}"

    print("KERNEL_OK")
</pallas_src>

<mosaic_0001>
module attributes {stable_mosaic.version = 11 : i64} {
  func.func @_resnet_block1_kernel(%arg0: i32, %arg1: memref<1x400x64xf32, #tpu.memory_space<vmem>>, %arg2: memref<336x1xf32, #tpu.memory_space<vmem>>, %arg3: memref<576x64xbf16, #tpu.memory_space<vmem>>, %arg4: memref<1x64xf32, #tpu.memory_space<vmem>>, %arg5: memref<576x64xbf16, #tpu.memory_space<vmem>>, %arg6: memref<1x64xf32, #tpu.memory_space<vmem>>, %arg7: memref<1x336x64xf32, #tpu.memory_space<vmem>>, %arg8: memref<400x128xbf16, #tpu.memory_space<vmem>>, %arg9: memref<400x128xbf16, #tpu.memory_space<vmem>>) attributes {dimension_semantics = [#tpu.dimension_semantics<parallel>], iteration_bounds = array<i64: 2>, scalar_prefetch = 0 : i64, scratch_operands = 2 : i64, tpu.core_type = #tpu.core_type<tc>, window_params = [{transform_indices = @transform_0, window_bounds = array<i64: 1, 400, 64>}, {pipeline_mode = #tpu.pipeline_mode<synchronous>, transform_indices = @transform_1, window_bounds = array<i64: 336, 1>}, {pipeline_mode = #tpu.pipeline_mode<synchronous>, transform_indices = @transform_2, window_bounds = array<i64: 576, 64>}, {pipeline_mode = #tpu.pipeline_mode<synchronous>, transform_indices = @transform_3, window_bounds = array<i64: 1, 64>}, {pipeline_mode = #tpu.pipeline_mode<synchronous>, transform_indices = @transform_4, window_bounds = array<i64: 576, 64>}, {pipeline_mode = #tpu.pipeline_mode<synchronous>, transform_indices = @transform_5, window_bounds = array<i64: 1, 64>}, {transform_indices = @transform_6, window_bounds = array<i64: 1, 336, 64>}]} {
    %cst = arith.constant 0.000000e+00 : bf16
    %0 = vector.broadcast %cst : bf16 to vector<32x64xbf16>
    %c0 = arith.constant 0 : index
    %c0_0 = arith.constant 0 : index
    %1 = vector.load %arg9[%c0, %c0_0] : memref<400x128xbf16, #tpu.memory_space<vmem>>, vector<32x64xbf16>
    tpu.vector_store %arg9[%c0, %c0_0], %0 {strides = array<i32>} : memref<400x128xbf16, #tpu.memory_space<vmem>>, vector<32x64xbf16>,
    %cst_1 = arith.constant 0.000000e+00 : bf16
    %2 = vector.broadcast %cst_1 : bf16 to vector<32x64xbf16>
    %c368 = arith.constant 368 : index
    %c0_2 = arith.constant 0 : index
    %3 = vector.load %arg9[%c368, %c0_2] : memref<400x128xbf16, #tpu.memory_space<vmem>>, vector<32x64xbf16>
    tpu.vector_store %arg9[%c368, %c0_2], %2 {strides = array<i32>} : memref<400x128xbf16, #tpu.memory_space<vmem>>, vector<32x64xbf16>,
    %c0_3 = arith.constant 0 : index
    %c0_4 = arith.constant 0 : index
    %c0_5 = arith.constant 0 : index
    %4 = vector.load %arg1[%c0_3, %c0_4, %c0_5] : memref<1x400x64xf32, #tpu.memory_space<vmem>>, vector<1x400x64xf32>
    %5 = vector.shape_cast %4 : vector<1x400x64xf32> to vector<400x64xf32>
    %6 = arith.truncf %5 : vector<400x64xf32> to vector<400x64xbf16>
    %c0_6 = arith.constant 0 : index
    %c0_7 = arith.constant 0 : index
    %7 = vector.load %arg8[%c0_6, %c0_7] : memref<400x128xbf16, #tpu.memory_space<vmem>>, vector<400x64xbf16>
    tpu.vector_store %arg8[%c0_6, %c0_7], %6 {strides = array<i32>} : memref<400x128xbf16, #tpu.memory_space<vmem>>, vector<400x64xbf16>,
    %c1 = arith.constant 1 : index
    %c0_8 = arith.constant 0 : index
    %8 = vector.load %arg8[%c1, %c0_8] : memref<400x128xbf16, #tpu.memory_space<vmem>>, vector<399x64xbf16>
    %c0_9 = arith.constant 0 : index
    %c64 = arith.constant 64 : index
    %9 = vector.load %arg8[%c0_9, %c64] : memref<400x128xbf16, #tpu.memory_space<vmem>>, vector<399x64xbf16>
    tpu.vector_store %arg8[%c0_9, %c64], %8 {strides = array<i32>} : memref<400x128xbf16, #tpu.memory_space<vmem>>, vector<399x64xbf16>,
    %cst_10 = arith.constant 0.000000e+00 : bf16
    %10 = vector.broadcast %cst_10 : bf16 to vector<1x64xbf16>
    %c399 = arith.constant 399 : index
    %c64_11 = arith.constant 64 : index
    %11 = vector.load %arg8[%c399, %c64_11] : memref<400x128xbf16, #tpu.memory_space<vmem>>, vector<1x64xbf16>
    tpu.vector_store %arg8[%c399, %c64_11], %10 {strides = array<i32>} : memref<400x128xbf16, #tpu.memory_space<vmem>>, vector<1x64xbf16>,
    %cst_12 = arith.constant 0.000000e+00 : f32
    %12 = vector.broadcast %cst_12 : f32 to vector<112x64xf32>
    %c13 = arith.constant 13 : index
    %c0_13 = arith.constant 0 : index
    %13 = vector.load %arg8[%c13, %c0_13] : memref<400x128xbf16, #tpu.memory_space<vmem>>, vector<112x128xbf16>
    %c0_14 = arith.constant 0 : index
    %c0_15 = arith.constant 0 : index
    %14 = vector.load %arg3[%c0_14, %c0_15] : memref<576x64xbf16, #tpu.memory_space<vmem>>, vector<128x64xbf16>
    %cst_16 = arith.constant dense<0.000000e+00> : vector<112x64xf32>
    %15 = tpu.matmul %13, %14, %cst_16 {dimension_numbers = #tpu.dot_dimension_numbers<[1], [0], [0], [1], [0, 0, 1, 1], [], []>} : vector<112x128xbf16>, vector<128x64xbf16>, vector<112x64xf32> -> vector<112x64xf32>
    %16 = arith.addf %12, %15 : vector<112x64xf32>
    %c15 = arith.constant 15 : index
    %c0_17 = arith.constant 0 : index
    %17 = vector.load %arg8[%c15, %c0_17] : memref<400x128xbf16, #tpu.memory_space<vmem>>, vector<112x64xbf16>
    %c128 = arith.constant 128 : index
    %c0_18 = arith.constant 0 : index
    %18 = vector.load %arg3[%c128, %c0_18] : memref<576x64xbf16, #tpu.memory_space<vmem>>, vector<64x64xbf16>
    %cst_19 = arith.constant dense<0.000000e+00> : vector<112x64xf32>
    %19 = tpu.matmul %17, %18, %cst_19 {dimension_numbers = #tpu.dot_dimension_numbers<[1], [0], [0], [1], [0, 0, 1, 1], [], []>} : vector<112x64xbf16>, vector<64x64xbf16>, vector<112x64xf32> -> vector<112x64xf32>
    %20 = arith.addf %16, %19 : vector<112x64xf32>
    %c31 = arith.constant 31 : index
    %c0_20 = arith.constant 0 : index
    %21 = vector.load %arg8[%c31, %c0_20] : memref<400x128xbf16, #tpu.memory_space<vmem>>, vector<112x128xbf16>
    %c192 = arith.constant 192 : index
    %c0_21 = arith.constant 0 : index
    %22 = vector.load %arg3[%c192, %c0_21] : memref<576x64xbf16, #tpu.memory_space<vmem>>, vector<128x64xbf16>
    %cst_22 = arith.constant dense<0.000000e+00> : vector<112x64xf32>
    %23 = tpu.matmul %21, %22, %cst_22 {dimension_numbers = #tpu.dot_dimension_numbers<[1], [0], [0], [1], [0, 0, 1, 1], [], []>} : vector<112x128xbf16>, vector<128x64xbf16>, vector<112x64xf32> -> vector<112x64xf32>
    %24 = arith.addf %20, %23 : vector<112x64xf32>
    %c33 = arith.constant 33 : index
    %c0_23 = arith.constant 0 : index
    %25 = vector.load %arg8[%c33, %c0_23] : memref<400x128xbf16, #tpu.memory_space<vmem>>, vector<112x64xbf16>
    %c320 = arith.constant 320 : index
    %c0_24 = arith.constant 0 : index
    %26 = vector.load %arg3[%c320, %c0_24] : memref<576x64xbf16, #tpu.memory_space<vmem>>, vector<64x64xbf16>
    %cst_25 = arith.constant dense<0.000000e+00> : vector<112x64xf32>
    %27 = tpu.matmul %25, %26, %cst_25 {dimension_numbers = #tpu.dot_dimension_numbers<[1], [0], [0], [1], [0, 0, 1, 1], [], []>} : vector<112x64xbf16>, vector<64x64xbf16>, vector<112x64xf32> -> vector<112x64xf32>
    %28 = arith.addf %24, %27 : vector<112x64xf32>
    %c49 = arith.constant 49 : index
    %c0_26 = arith.constant 0 : index
    %29 = vector.load %arg8[%c49, %c0_26] : memref<400x128xbf16, #tpu.memory_space<vmem>>, vector<112x128xbf16>
    %c384 = arith.constant 384 : index
    %c0_27 = arith.constant 0 : index
    %30 = vector.load %arg3[%c384, %c0_27] : memref<576x64xbf16, #tpu.memory_space<vmem>>, vector<128x64xbf16>
    %cst_28 = arith.constant dense<0.000000e+00> : vector<112x64xf32>
    %31 = tpu.matmul %29, %30, %cst_28 {dimension_numbers = #tpu.dot_dimension_numbers<[1], [0], [0], [1], [0, 0, 1, 1], [], []>} : vector<112x128xbf16>, vector<128x64xbf16>, vector<112x64xf32> -> vector<112x64xf32>
    %32 = arith.addf %28, %31 : vector<112x64xf32>
    %c51 = arith.constant 51 : index
    %c0_29 = arith.constant 0 : index
    %33 = vector.load %arg8[%c51, %c0_29] : memref<400x128xbf16, #tpu.memory_space<vmem>>, vector<112x64xbf16>
    %c512 = arith.constant 512 : index
    %c0_30 = arith.constant 0 : index
    %34 = vector.load %arg3[%c512, %c0_30] : memref<576x64xbf16, #tpu.memory_space<vmem>>, vector<64x64xbf16>
    %cst_31 = arith.constant dense<0.000000e+00> : vector<112x64xf32>
    %35 = tpu.matmul %33, %34, %cst_31 {dimension_numbers = #tpu.dot_dimension_numbers<[1], [0], [0], [1], [0, 0, 1, 1], [], []>} : vector<112x64xbf16>, vector<64x64xbf16>, vector<112x64xf32> -> vector<112x64xf32>
    %36 = arith.addf %32, %35 : vector<112x64xf32>
    %c0_32 = arith.constant 0 : index
    %c0_33 = arith.constant 0 : index
    %37 = vector.load %arg4[%c0_32, %c0_33] : memref<1x64xf32, #tpu.memory_space<vmem>>, vector<1x64xf32>
    %38 = vector.broadcast %37 : vector<1x64xf32> to vector<112x64xf32>
    %39 = arith.addf %36, %38 : vector<112x64xf32>
    %cst_34 = arith.constant 0.000000e+00 : f32
    %40 = vector.broadcast %cst_34 : f32 to vector<112x64xf32>
    %41 = arith.maximumf %39, %40 : vector<112x64xf32>
    %c0_35 = arith.constant 0 : index
    %c0_36 = arith.constant 0 : index
    %42 = vector.load %arg2[%c0_35, %c0_36] : memref<336x1xf32, #tpu.memory_space<vmem>>, vector<112x1xf32>
    %43 = vector.broadcast %42 : vector<112x1xf32> to vector<112x64xf32>
    %44 = arith.mulf %41, %43 : vector<112x64xf32>
    %45 = arith.truncf %44 : vector<112x64xf32> to vector<112x64xbf16>
    %c32 = arith.constant 32 : index
    %c0_37 = arith.constant 0 : index
    %46 = vector.load %arg9[%c32, %c0_37] : memref<400x128xbf16, #tpu.memory_space<vmem>>, vector<112x64xbf16>
    tpu.vector_store %arg9[%c32, %c0_37], %45 {strides = array<i32>} : memref<400x128xbf16, #tpu.memory_space<vmem>>, vector<112x64xbf16>,
    %cst_38 = arith.constant 0.000000e+00 : f32
    %47 = vector.broadcast %cst_38 : f32 to vector<112x64xf32>
    %c125 = arith.constant 125 : index
    %c0_39 = arith.constant 0 : index
    %48 = vector.load %arg8[%c125, %c0_39] : memref<400x128xbf16, #tpu.memory_space<vmem>>, vector<112x128xbf16>
    %c0_40 = arith.constant 0 : index
    %c0_41 = arith.constant 0 : index
    %49 = vector.load %arg3[%c0_40, %c0_41] : memref<576x64xbf16, #tpu.memory_space<vmem>>, vector<128x64xbf16>
    %cst_42 = arith.constant dense<0.000000e+00> : vector<112x64xf32>
    %50 = tpu.matmul %48, %49, %cst_42 {dimension_numbers = #tpu.dot_dimension_numbers<[1], [0], [0], [1], [0, 0, 1, 1], [], []>} : vector<112x128xbf16>, vector<128x64xbf16>, vector<112x64xf32> -> vector<112x64xf32>
    %51 = arith.addf %47, %50 : vector<112x64xf32>
    %c127 = arith.constant 127 : index
    %c0_43 = arith.constant 0 : index
    %52 = vector.load %arg8[%c127, %c0_43] : memref<400x128xbf16, #tpu.memory_space<vmem>>, vector<112x64xbf16>
    %c128_44 = arith.constant 128 : index
    %c0_45 = arith.constant 0 : index
    %53 = vector.load %arg3[%c128_44, %c0_45] : memref<576x64xbf16, #tpu.memory_space<vmem>>, vector<64x64xbf16>
    %cst_46 = arith.constant dense<0.000000e+00> : vector<112x64xf32>
    %54 = tpu.matmul %52, %53, %cst_46 {dimension_numbers = #tpu.dot_dimension_numbers<[1], [0], [0], [1], [0, 0, 1, 1], [], []>} : vector<112x64xbf16>, vector<64x64xbf16>, vector<112x64xf32> -> vector<112x64xf32>
    %55 = arith.addf %51, %54 : vector<112x64xf32>
    %c143 = arith.constant 143 : index
    %c0_47 = arith.constant 0 : index
    %56 = vector.load %arg8[%c143, %c0_47] : memref<400x128xbf16, #tpu.memory_space<vmem>>, vector<112x128xbf16>
    %c192_48 = arith.constant 192 : index
    %c0_49 = arith.constant 0 : index
    %57 = vector.load %arg3[%c192_48, %c0_49] : memref<576x64xbf16, #tpu.memory_space<vmem>>, vector<128x64xbf16>
    %cst_50 = arith.constant dense<0.000000e+00> : vector<112x64xf32>
    %58 = tpu.matmul %56, %57, %cst_50 {dimension_numbers = #tpu.dot_dimension_numbers<[1], [0], [0], [1], [0, 0, 1, 1], [], []>} : vector<112x128xbf16>, vector<128x64xbf16>, vector<112x64xf32> -> vector<112x64xf32>
    %59 = arith.addf %55, %58 : vector<112x64xf32>
    %c145 = arith.constant 145 : index
    %c0_51 = arith.constant 0 : index
    %60 = vector.load %arg8[%c145, %c0_51] : memref<400x128xbf16, #tpu.memory_space<vmem>>, vector<112x64xbf16>
    %c320_52 = arith.constant 320 : index
    %c0_53 = arith.constant 0 : index
    %61 = vector.load %arg3[%c320_52, %c0_53] : memref<576x64xbf16, #tpu.memory_space<vmem>>, vector<64x64xbf16>
    %cst_54 = arith.constant dense<0.000000e+00> : vector<112x64xf32>
    %62 = tpu.matmul %60, %61, %cst_54 {dimension_numbers = #tpu.dot_dimension_numbers<[1], [0], [0], [1], [0, 0, 1, 1], [], []>} : vector<112x64xbf16>, vector<64x64xbf16>, vector<112x64xf32> -> vector<112x64xf32>
    %63 = arith.addf %59, %62 : vector<112x64xf32>
    %c161 = arith.constant 161 : index
    %c0_55 = arith.constant 0 : index
    %64 = vector.load %arg8[%c161, %c0_55] : memref<400x128xbf16, #tpu.memory_space<vmem>>, vector<112x128xbf16>
    %c384_56 = arith.constant 384 : index
    %c0_57 = arith.constant 0 : index
    %65 = vector.load %arg3[%c384_56, %c0_57] : memref<576x64xbf16, #tpu.memory_space<vmem>>, vector<128x64xbf16>
    %cst_58 = arith.constant dense<0.000000e+00> : vector<112x64xf32>
    %66 = tpu.matmul %64, %65, %cst_58 {dimension_numbers = #tpu.dot_dimension_numbers<[1], [0], [0], [1], [0, 0, 1, 1], [], []>} : vector<112x128xbf16>, vector<128x64xbf16>, vector<112x64xf32> -> vector<112x64xf32>
    %67 = arith.addf %63, %66 : vector<112x64xf32>
    %c163 = arith.constant 163 : index
    %c0_59 = arith.constant 0 : index
    %68 = vector.load %arg8[%c163, %c0_59] : memref<400x128xbf16, #tpu.memory_space<vmem>>, vector<112x64xbf16>
    %c512_60 = arith.constant 512 : index
    %c0_61 = arith.constant 0 : index
    %69 = vector.load %arg3[%c512_60, %c0_61] : memref<576x64xbf16, #tpu.memory_space<vmem>>, vector<64x64xbf16>
    %cst_62 = arith.constant dense<0.000000e+00> : vector<112x64xf32>
    %70 = tpu.matmul %68, %69, %cst_62 {dimension_numbers = #tpu.dot_dimension_numbers<[1], [0], [0], [1], [0, 0, 1, 1], [], []>} : vector<112x64xbf16>, vector<64x64xbf16>, vector<112x64xf32> -> vector<112x64xf32>
    %71 = arith.addf %67, %70 : vector<112x64xf32>
    %c0_63 = arith.constant 0 : index
    %c0_64 = arith.constant 0 : index
    %72 = vector.load %arg4[%c0_63, %c0_64] : memref<1x64xf32, #tpu.memory_space<vmem>>, vector<1x64xf32>
    %73 = vector.broadcast %72 : vector<1x64xf32> to vector<112x64xf32>
    %74 = arith.addf %71, %73 : vector<112x64xf32>
    %cst_65 = arith.constant 0.000000e+00 : f32
    %75 = vector.broadcast %cst_65 : f32 to vector<112x64xf32>
    %76 = arith.maximumf %74, %75 : vector<112x64xf32>
    %c112 = arith.constant 112 : index
    %c0_66 = arith.constant 0 : index
    %77 = vector.load %arg2[%c112, %c0_66] : memref<336x1xf32, #tpu.memory_space<vmem>>, vector<112x1xf32>
    %78 = vector.broadcast %77 : vector<112x1xf32> to vector<112x64xf32>
    %79 = arith.mulf %76, %78 : vector<112x64xf32>
    %80 = arith.truncf %79 : vector<112x64xf32> to vector<112x64xbf16>
    %c144 = arith.constant 144 : index
    %c0_67 = arith.constant 0 : index
    %81 = vector.load %arg9[%c144, %c0_67] : memref<400x128xbf16, #tpu.memory_space<vmem>>, vector<112x64xbf16>
    tpu.vector_store %arg9[%c144, %c0_67], %80 {strides = array<i32>} : memref<400x128xbf16, #tpu.memory_space<vmem>>, vector<112x64xbf16>,
    %cst_68 = arith.constant 0.000000e+00 : f32
    %82 = vector.broadcast %cst_68 : f32 to vector<112x64xf32>
    %c237 = arith.constant 237 : index
    %c0_69 = arith.constant 0 : index
    %83 = vector.load %arg8[%c237, %c0_69] : memref<400x128xbf16, #tpu.memory_space<vmem>>, vector<112x128xbf16>
    %c0_70 = arith.constant 0 : index
    %c0_71 = arith.constant 0 : index
    %84 = vector.load %arg3[%c0_70, %c0_71] : memref<576x64xbf16, #tpu.memory_space<vmem>>, vector<128x64xbf16>
    %cst_72 = arith.constant dense<0.000000e+00> : vector<112x64xf32>
    %85 = tpu.matmul %83, %84, %cst_72 {dimension_numbers = #tpu.dot_dimension_numbers<[1], [0], [0], [1], [0, 0, 1, 1], [], []>} : vector<112x128xbf16>, vector<128x64xbf16>, vector<112x64xf32> -> vector<112x64xf32>
    %86 = arith.addf %82, %85 : vector<112x64xf32>
    %c239 = arith.constant 239 : index
    %c0_73 = arith.constant 0 : index
    %87 = vector.load %arg8[%c239, %c0_73] : memref<400x128xbf16, #tpu.memory_space<vmem>>, vector<112x64xbf16>
    %c128_74 = arith.constant 128 : index
    %c0_75 = arith.constant 0 : index
    %88 = vector.load %arg3[%c128_74, %c0_75] : memref<576x64xbf16, #tpu.memory_space<vmem>>, vector<64x64xbf16>
    %cst_76 = arith.constant dense<0.000000e+00> : vector<112x64xf32>
    %89 = tpu.matmul %87, %88, %cst_76 {dimension_numbers = #tpu.dot_dimension_numbers<[1], [0], [0], [1], [0, 0, 1, 1], [], []>} : vector<112x64xbf16>, vector<64x64xbf16>, vector<112x64xf32> -> vector<112x64xf32>
    %90 = arith.addf %86, %89 : vector<112x64xf32>
    %c255 = arith.constant 255 : index
    %c0_77 = arith.constant 0 : index
    %91 = vector.load %arg8[%c255, %c0_77] : memref<400x128xbf16, #tpu.memory_space<vmem>>, vector<112x128xbf16>
    %c192_78 = arith.constant 192 : index
    %c0_79 = arith.constant 0 : index
    %92 = vector.load %arg3[%c192_78, %c0_79] : memref<576x64xbf16, #tpu.memory_space<vmem>>, vector<128x64xbf16>
    %cst_80 = arith.constant dense<0.000000e+00> : vector<112x64xf32>
    %93 = tpu.matmul %91, %92, %cst_80 {dimension_numbers = #tpu.dot_dimension_numbers<[1], [0], [0], [1], [0, 0, 1, 1], [], []>} : vector<112x128xbf16>, vector<128x64xbf16>, vector<112x64xf32> -> vector<112x64xf32>
    %94 = arith.addf %90, %93 : vector<112x64xf32>
    %c257 = arith.constant 257 : index
    %c0_81 = arith.constant 0 : index
    %95 = vector.load %arg8[%c257, %c0_81] : memref<400x128xbf16, #tpu.memory_space<vmem>>, vector<112x64xbf16>
    %c320_82 = arith.constant 320 : index
    %c0_83 = arith.constant 0 : index
    %96 = vector.load %arg3[%c320_82, %c0_83] : memref<576x64xbf16, #tpu.memory_space<vmem>>, vector<64x64xbf16>
    %cst_84 = arith.constant dense<0.000000e+00> : vector<112x64xf32>
    %97 = tpu.matmul %95, %96, %cst_84 {dimension_numbers = #tpu.dot_dimension_numbers<[1], [0], [0], [1], [0, 0, 1, 1], [], []>} : vector<112x64xbf16>, vector<64x64xbf16>, vector<112x64xf32> -> vector<112x64xf32>
    %98 = arith.addf %94, %97 : vector<112x64xf32>
    %c273 = arith.constant 273 : index
    %c0_85 = arith.constant 0 : index
    %99 = vector.load %arg8[%c273, %c0_85] : memref<400x128xbf16, #tpu.memory_space<vmem>>, vector<112x128xbf16>
    %c384_86 = arith.constant 384 : index
    %c0_87 = arith.constant 0 : index
    %100 = vector.load %arg3[%c384_86, %c0_87] : memref<576x64xbf16, #tpu.memory_space<vmem>>, vector<128x64xbf16>
    %cst_88 = arith.constant dense<0.000000e+00> : vector<112x64xf32>
    %101 = tpu.matmul %99, %100, %cst_88 {dimension_numbers = #tpu.dot_dimension_numbers<[1], [0], [0], [1], [0, 0, 1, 1], [], []>} : vector<112x128xbf16>, vector<128x64xbf16>, vector<112x64xf32> -> vector<112x64xf32>
    %102 = arith.addf %98, %101 : vector<112x64xf32>
    %c275 = arith.constant 275 : index
    %c0_89 = arith.constant 0 : index
    %103 = vector.load %arg8[%c275, %c0_89] : memref<400x128xbf16, #tpu.memory_space<vmem>>, vector<112x64xbf16>
    %c512_90 = arith.constant 512 : index
    %c0_91 = arith.constant 0 : index
    %104 = vector.load %arg3[%c512_90, %c0_91] : memref<576x64xbf16, #tpu.memory_space<vmem>>, vector<64x64xbf16>
    %cst_92 = arith.constant dense<0.000000e+00> : vector<112x64xf32>
    %105 = tpu.matmul %103, %104, %cst_92 {dimension_numbers = #tpu.dot_dimension_numbers<[1], [0], [0], [1], [0, 0, 1, 1], [], []>} : vector<112x64xbf16>, vector<64x64xbf16>, vector<112x64xf32> -> vector<112x64xf32>
    %106 = arith.addf %102, %105 : vector<112x64xf32>
    %c0_93 = arith.constant 0 : index
    %c0_94 = arith.constant 0 : index
    %107 = vector.load %arg4[%c0_93, %c0_94] : memref<1x64xf32, #tpu.memory_space<vmem>>, vector<1x64xf32>
    %108 = vector.broadcast %107 : vector<1x64xf32> to vector<112x64xf32>
    %109 = arith.addf %106, %108 : vector<112x64xf32>
    %cst_95 = arith.constant 0.000000e+00 : f32
    %110 = vector.broadcast %cst_95 : f32 to vector<112x64xf32>
    %111 = arith.maximumf %109, %110 : vector<112x64xf32>
    %c224 = arith.constant 224 : index
    %c0_96 = arith.constant 0 : index
    %112 = vector.load %arg2[%c224, %c0_96] : memref<336x1xf32, #tpu.memory_space<vmem>>, vector<112x1xf32>
    %113 = vector.broadcast %112 : vector<112x1xf32> to vector<112x64xf32>
    %114 = arith.mulf %111, %113 : vector<112x64xf32>
    %115 = arith.truncf %114 : vector<112x64xf32> to vector<112x64xbf16>
    %c256 = arith.constant 256 : index
    %c0_97 = arith.constant 0 : index
    %116 = vector.load %arg9[%c256, %c0_97] : memref<400x128xbf16, #tpu.memory_space<vmem>>, vector<112x64xbf16>
    tpu.vector_store %arg9[%c256, %c0_97], %115 {strides = array<i32>} : memref<400x128xbf16, #tpu.memory_space<vmem>>, vector<112x64xbf16>,
    %c1_98 = arith.constant 1 : index
    %c0_99 = arith.constant 0 : index
    %117 = vector.load %arg9[%c1_98, %c0_99] : memref<400x128xbf16, #tpu.memory_space<vmem>>, vector<399x64xbf16>
    %c0_100 = arith.constant 0 : index
    %c64_101 = arith.constant 64 : index
    %118 = vector.load %arg9[%c0_100, %c64_101] : memref<400x128xbf16, #tpu.memory_space<vmem>>, vector<399x64xbf16>
    tpu.vector_store %arg9[%c0_100, %c64_101], %117 {strides = array<i32>} : memref<400x128xbf16, #tpu.memory_space<vmem>>, vector<399x64xbf16>,
    %cst_102 = arith.constant 0.000000e+00 : bf16
    %119 = vector.broadcast %cst_102 : bf16 to vector<1x64xbf16>
    %c399_103 = arith.constant 399 : index
    %c64_104 = arith.constant 64 : index
    %120 = vector.load %arg9[%c399_103, %c64_104] : memref<400x128xbf16, #tpu.memory_space<vmem>>, vector<1x64xbf16>
    tpu.vector_store %arg9[%c399_103, %c64_104], %119 {strides = array<i32>} : memref<400x128xbf16, #tpu.memory_space<vmem>>, vector<1x64xbf16>,
    %c0_105 = arith.constant 0 : index
    %c32_106 = arith.constant 32 : index
    %c0_107 = arith.constant 0 : index
    %121 = vector.load %arg1[%c0_105, %c32_106, %c0_107] : memref<1x400x64xf32, #tpu.memory_space<vmem>>, vector<1x112x64xf32>
    %122 = vector.shape_cast %121 : vector<1x112x64xf32> to vector<112x64xf32>
    %cst_108 = arith.constant 0.000000e+00 : f32
    %123 = vector.broadcast %cst_108 : f32 to vector<112x64xf32>
    %c13_109 = arith.constant 13 : index
    %c0_110 = arith.constant 0 : index
    %124 = vector.load %arg9[%c13_109, %c0_110] : memref<400x128xbf16, #tpu.memory_space<vmem>>, vector<112x128xbf16>
    %c0_111 = arith.constant 0 : index
    %c0_112 = arith.constant 0 : index
    %125 = vector.load %arg5[%c0_111, %c0_112] : memref<576x64xbf16, #tpu.memory_space<vmem>>, vector<128x64xbf16>
    %cst_113 = arith.constant dense<0.000000e+00> : vector<112x64xf32>
    %126 = tpu.matmul %124, %125, %cst_113 {dimension_numbers = #tpu.dot_dimension_numbers<[1], [0], [0], [1], [0, 0, 1, 1], [], []>} : vector<112x128xbf16>, vector<128x64xbf16>, vector<112x64xf32> -> vector<112x64xf32>
    %127 = arith.addf %123, %126 : vector<112x64xf32>
    %c15_114 = arith.constant 15 : index
    %c0_115 = arith.constant 0 : index
    %128 = vector.load %arg9[%c15_114, %c0_115] : memref<400x128xbf16, #tpu.memory_space<vmem>>, vector<112x64xbf16>
    %c128_116 = arith.constant 128 : index
    %c0_117 = arith.constant 0 : index
    %129 = vector.load %arg5[%c128_116, %c0_117] : memref<576x64xbf16, #tpu.memory_space<vmem>>, vector<64x64xbf16>
    %cst_118 = arith.constant dense<0.000000e+00> : vector<112x64xf32>
    %130 = tpu.matmul %128, %129, %cst_118 {dimension_numbers = #tpu.dot_dimension_numbers<[1], [0], [0], [1], [0, 0, 1, 1], [], []>} : vector<112x64xbf16>, vector<64x64xbf16>, vector<112x64xf32> -> vector<112x64xf32>
    %131 = arith.addf %127, %130 : vector<112x64xf32>
    %c31_119 = arith.constant 31 : index
    %c0_120 = arith.constant 0 : index
    %132 = vector.load %arg9[%c31_119, %c0_120] : memref<400x128xbf16, #tpu.memory_space<vmem>>, vector<112x128xbf16>
    %c192_121 = arith.constant 192 : index
    %c0_122 = arith.constant 0 : index
    %133 = vector.load %arg5[%c192_121, %c0_122] : memref<576x64xbf16, #tpu.memory_space<vmem>>, vector<128x64xbf16>
    %cst_123 = arith.constant dense<0.000000e+00> : vector<112x64xf32>
    %134 = tpu.matmul %132, %133, %cst_123 {dimension_numbers = #tpu.dot_dimension_numbers<[1], [0], [0], [1], [0, 0, 1, 1], [], []>} : vector<112x128xbf16>, vector<128x64xbf16>, vector<112x64xf32> -> vector<112x64xf32>
    %135 = arith.addf %131, %134 : vector<112x64xf32>
    %c33_124 = arith.constant 33 : index
    %c0_125 = arith.constant 0 : index
    %136 = vector.load %arg9[%c33_124, %c0_125] : memref<400x128xbf16, #tpu.memory_space<vmem>>, vector<112x64xbf16>
    %c320_126 = arith.constant 320 : index
    %c0_127 = arith.constant 0 : index
    %137 = vector.load %arg5[%c320_126, %c0_127] : memref<576x64xbf16, #tpu.memory_space<vmem>>, vector<64x64xbf16>
    %cst_128 = arith.constant dense<0.000000e+00> : vector<112x64xf32>
    %138 = tpu.matmul %136, %137, %cst_128 {dimension_numbers = #tpu.dot_dimension_numbers<[1], [0], [0], [1], [0, 0, 1, 1], [], []>} : vector<112x64xbf16>, vector<64x64xbf16>, vector<112x64xf32> -> vector<112x64xf32>
    %139 = arith.addf %135, %138 : vector<112x64xf32>
    %c49_129 = arith.constant 49 : index
    %c0_130 = arith.constant 0 : index
    %140 = vector.load %arg9[%c49_129, %c0_130] : memref<400x128xbf16, #tpu.memory_space<vmem>>, vector<112x128xbf16>
    %c384_131 = arith.constant 384 : index
    %c0_132 = arith.constant 0 : index
    %141 = vector.load %arg5[%c384_131, %c0_132] : memref<576x64xbf16, #tpu.memory_space<vmem>>, vector<128x64xbf16>
    %cst_133 = arith.constant dense<0.000000e+00> : vector<112x64xf32>
    %142 = tpu.matmul %140, %141, %cst_133 {dimension_numbers = #tpu.dot_dimension_numbers<[1], [0], [0], [1], [0, 0, 1, 1], [], []>} : vector<112x128xbf16>, vector<128x64xbf16>, vector<112x64xf32> -> vector<112x64xf32>
    %143 = arith.addf %139, %142 : vector<112x64xf32>
    %c51_134 = arith.constant 51 : index
    %c0_135 = arith.constant 0 : index
    %144 = vector.load %arg9[%c51_134, %c0_135] : memref<400x128xbf16, #tpu.memory_space<vmem>>, vector<112x64xbf16>
    %c512_136 = arith.constant 512 : index
    %c0_137 = arith.constant 0 : index
    %145 = vector.load %arg5[%c512_136, %c0_137] : memref<576x64xbf16, #tpu.memory_space<vmem>>, vector<64x64xbf16>
    %cst_138 = arith.constant dense<0.000000e+00> : vector<112x64xf32>
    %146 = tpu.matmul %144, %145, %cst_138 {dimension_numbers = #tpu.dot_dimension_numbers<[1], [0], [0], [1], [0, 0, 1, 1], [], []>} : vector<112x64xbf16>, vector<64x64xbf16>, vector<112x64xf32> -> vector<112x64xf32>
    %147 = arith.addf %143, %146 : vector<112x64xf32>
    %c0_139 = arith.constant 0 : index
    %c0_140 = arith.constant 0 : index
    %148 = vector.load %arg6[%c0_139, %c0_140] : memref<1x64xf32, #tpu.memory_space<vmem>>, vector<1x64xf32>
    %149 = vector.broadcast %148 : vector<1x64xf32> to vector<112x64xf32>
    %150 = arith.addf %147, %149 : vector<112x64xf32>
    %151 = arith.addf %150, %122 : vector<112x64xf32>
    %cst_141 = arith.constant 0.000000e+00 : f32
    %152 = vector.broadcast %cst_141 : f32 to vector<112x64xf32>
    %153 = arith.maximumf %151, %152 : vector<112x64xf32>
    %c0_142 = arith.constant 0 : index
    %c0_143 = arith.constant 0 : index
    %154 = vector.load %arg2[%c0_142, %c0_143] : memref<336x1xf32, #tpu.memory_space<vmem>>, vector<112x1xf32>
    %155 = vector.broadcast %154 : vector<112x1xf32> to vector<112x64xf32>
    %156 = arith.mulf %153, %155 : vector<112x64xf32>
    %c0_144 = arith.constant 0 : index
    %c0_145 = arith.constant 0 : index
    %c0_146 = arith.constant 0 : index
    %157 = vector.load %arg7[%c0_144, %c0_145, %c0_146] : memref<1x336x64xf32, #tpu.memory_space<vmem>>, vector<1x112x64xf32>
    %158 = vector.shape_cast %157 : vector<1x112x64xf32> to vector<112x64xf32>
    %159 = vector.shape_cast %156 : vector<112x64xf32> to vector<1x112x64xf32>
    tpu.vector_store %arg7[%c0_144, %c0_145, %c0_146], %159 {strides = array<i32>} : memref<1x336x64xf32, #tpu.memory_space<vmem>>, vector<1x112x64xf32>,
    %c0_147 = arith.constant 0 : index
    %c144_148 = arith.constant 144 : index
    %c0_149 = arith.constant 0 : index
    %160 = vector.load %arg1[%c0_147, %c144_148, %c0_149] : memref<1x400x64xf32, #tpu.memory_space<vmem>>, vector<1x112x64xf32>
    %161 = vector.shape_cast %160 : vector<1x112x64xf32> to vector<112x64xf32>
    %cst_150 = arith.constant 0.000000e+00 : f32
    %162 = vector.broadcast %cst_150 : f32 to vector<112x64xf32>
    %c125_151 = arith.constant 125 : index
    %c0_152 = arith.constant 0 : index
    %163 = vector.load %arg9[%c125_151, %c0_152] : memref<400x128xbf16, #tpu.memory_space<vmem>>, vector<112x128xbf16>
    %c0_153 = arith.constant 0 : index
    %c0_154 = arith.constant 0 : index
    %164 = vector.load %arg5[%c0_153, %c0_154] : memref<576x64xbf16, #tpu.memory_space<vmem>>, vector<128x64xbf16>
    %cst_155 = arith.constant dense<0.000000e+00> : vector<112x64xf32>
    %165 = tpu.matmul %163, %164, %cst_155 {dimension_numbers = #tpu.dot_dimension_numbers<[1], [0], [0], [1], [0, 0, 1, 1], [], []>} : vector<112x128xbf16>, vector<128x64xbf16>, vector<112x64xf32> -> vector<112x64xf32>
    %166 = arith.addf %162, %165 : vector<112x64xf32>
    %c127_156 = arith.constant 127 : index
    %c0_157 = arith.constant 0 : index
    %167 = vector.load %arg9[%c127_156, %c0_157] : memref<400x128xbf16, #tpu.memory_space<vmem>>, vector<112x64xbf16>
    %c128_158 = arith.constant 128 : index
    %c0_159 = arith.constant 0 : index
    %168 = vector.load %arg5[%c128_158, %c0_159] : memref<576x64xbf16, #tpu.memory_space<vmem>>, vector<64x64xbf16>
    %cst_160 = arith.constant dense<0.000000e+00> : vector<112x64xf32>
    %169 = tpu.matmul %167, %168, %cst_160 {dimension_numbers = #tpu.dot_dimension_numbers<[1], [0], [0], [1], [0, 0, 1, 1], [], []>} : vector<112x64xbf16>, vector<64x64xbf16>, vector<112x64xf32> -> vector<112x64xf32>
    %170 = arith.addf %166, %169 : vector<112x64xf32>
    %c143_161 = arith.constant 143 : index
    %c0_162 = arith.constant 0 : index
    %171 = vector.load %arg9[%c143_161, %c0_162] : memref<400x128xbf16, #tpu.memory_space<vmem>>, vector<112x128xbf16>
    %c192_163 = arith.constant 192 : index
    %c0_164 = arith.constant 0 : index
    %172 = vector.load %arg5[%c192_163, %c0_164] : memref<576x64xbf16, #tpu.memory_space<vmem>>, vector<128x64xbf16>
    %cst_165 = arith.constant dense<0.000000e+00> : vector<112x64xf32>
    %173 = tpu.matmul %171, %172, %cst_165 {dimension_numbers = #tpu.dot_dimension_numbers<[1], [0], [0], [1], [0, 0, 1, 1], [], []>} : vector<112x128xbf16>, vector<128x64xbf16>, vector<112x64xf32> -> vector<112x64xf32>
    %174 = arith.addf %170, %173 : vector<112x64xf32>
    %c145_166 = arith.constant 145 : index
    %c0_167 = arith.constant 0 : index
    %175 = vector.load %arg9[%c145_166, %c0_167] : memref<400x128xbf16, #tpu.memory_space<vmem>>, vector<112x64xbf16>
    %c320_168 = arith.constant 320 : index
    %c0_169 = arith.constant 0 : index
    %176 = vector.load %arg5[%c320_168, %c0_169] : memref<576x64xbf16, #tpu.memory_space<vmem>>, vector<64x64xbf16>
    %cst_170 = arith.constant dense<0.000000e+00> : vector<112x64xf32>
    %177 = tpu.matmul %175, %176, %cst_170 {dimension_numbers = #tpu.dot_dimension_numbers<[1], [0], [0], [1], [0, 0, 1, 1], [], []>} : vector<112x64xbf16>, vector<64x64xbf16>, vector<112x64xf32> -> vector<112x64xf32>
    %178 = arith.addf %174, %177 : vector<112x64xf32>
    %c161_171 = arith.constant 161 : index
    %c0_172 = arith.constant 0 : index
    %179 = vector.load %arg9[%c161_171, %c0_172] : memref<400x128xbf16, #tpu.memory_space<vmem>>, vector<112x128xbf16>
    %c384_173 = arith.constant 384 : index
    %c0_174 = arith.constant 0 : index
    %180 = vector.load %arg5[%c384_173, %c0_174] : memref<576x64xbf16, #tpu.memory_space<vmem>>, vector<128x64xbf16>
    %cst_175 = arith.constant dense<0.000000e+00> : vector<112x64xf32>
    %181 = tpu.matmul %179, %180, %cst_175 {dimension_numbers = #tpu.dot_dimension_numbers<[1], [0], [0], [1], [0, 0, 1, 1], [], []>} : vector<112x128xbf16>, vector<128x64xbf16>, vector<112x64xf32> -> vector<112x64xf32>
    %182 = arith.addf %178, %181 : vector<112x64xf32>
    %c163_176 = arith.constant 163 : index
    %c0_177 = arith.constant 0 : index
    %183 = vector.load %arg9[%c163_176, %c0_177] : memref<400x128xbf16, #tpu.memory_space<vmem>>, vector<112x64xbf16>
    %c512_178 = arith.constant 512 : index
    %c0_179 = arith.constant 0 : index
    %184 = vector.load %arg5[%c512_178, %c0_179] : memref<576x64xbf16, #tpu.memory_space<vmem>>, vector<64x64xbf16>
    %cst_180 = arith.constant dense<0.000000e+00> : vector<112x64xf32>
    %185 = tpu.matmul %183, %184, %cst_180 {dimension_numbers = #tpu.dot_dimension_numbers<[1], [0], [0], [1], [0, 0, 1, 1], [], []>} : vector<112x64xbf16>, vector<64x64xbf16>, vector<112x64xf32> -> vector<112x64xf32>
    %186 = arith.addf %182, %185 : vector<112x64xf32>
    %c0_181 = arith.constant 0 : index
    %c0_182 = arith.constant 0 : index
    %187 = vector.load %arg6[%c0_181, %c0_182] : memref<1x64xf32, #tpu.memory_space<vmem>>, vector<1x64xf32>
    %188 = vector.broadcast %187 : vector<1x64xf32> to vector<112x64xf32>
    %189 = arith.addf %186, %188 : vector<112x64xf32>
    %190 = arith.addf %189, %161 : vector<112x64xf32>
    %cst_183 = arith.constant 0.000000e+00 : f32
    %191 = vector.broadcast %cst_183 : f32 to vector<112x64xf32>
    %192 = arith.maximumf %190, %191 : vector<112x64xf32>
    %c112_184 = arith.constant 112 : index
    %c0_185 = arith.constant 0 : index
    %193 = vector.load %arg2[%c112_184, %c0_185] : memref<336x1xf32, #tpu.memory_space<vmem>>, vector<112x1xf32>
    %194 = vector.broadcast %193 : vector<112x1xf32> to vector<112x64xf32>
    %195 = arith.mulf %192, %194 : vector<112x64xf32>
    %c0_186 = arith.constant 0 : index
    %c112_187 = arith.constant 112 : index
    %c0_188 = arith.constant 0 : index
    %196 = vector.load %arg7[%c0_186, %c112_187, %c0_188] : memref<1x336x64xf32, #tpu.memory_space<vmem>>, vector<1x112x64xf32>
    %197 = vector.shape_cast %196 : vector<1x112x64xf32> to vector<112x64xf32>
    %198 = vector.shape_cast %195 : vector<112x64xf32> to vector<1x112x64xf32>
    tpu.vector_store %arg7[%c0_186, %c112_187, %c0_188], %198 {strides = array<i32>} : memref<1x336x64xf32, #tpu.memory_space<vmem>>, vector<1x112x64xf32>,
    %c0_189 = arith.constant 0 : index
    %c256_190 = arith.constant 256 : index
    %c0_191 = arith.constant 0 : index
    %199 = vector.load %arg1[%c0_189, %c256_190, %c0_191] : memref<1x400x64xf32, #tpu.memory_space<vmem>>, vector<1x112x64xf32>
    %200 = vector.shape_cast %199 : vector<1x112x64xf32> to vector<112x64xf32>
    %cst_192 = arith.constant 0.000000e+00 : f32
    %201 = vector.broadcast %cst_192 : f32 to vector<112x64xf32>
    %c237_193 = arith.constant 237 : index
    %c0_194 = arith.constant 0 : index
    %202 = vector.load %arg9[%c237_193, %c0_194] : memref<400x128xbf16, #tpu.memory_space<vmem>>, vector<112x128xbf16>
    %c0_195 = arith.constant 0 : index
    %c0_196 = arith.constant 0 : index
    %203 = vector.load %arg5[%c0_195, %c0_196] : memref<576x64xbf16, #tpu.memory_space<vmem>>, vector<128x64xbf16>
    %cst_197 = arith.constant dense<0.000000e+00> : vector<112x64xf32>
    %204 = tpu.matmul %202, %203, %cst_197 {dimension_numbers = #tpu.dot_dimension_numbers<[1], [0], [0], [1], [0, 0, 1, 1], [], []>} : vector<112x128xbf16>, vector<128x64xbf16>, vector<112x64xf32> -> vector<112x64xf32>
    %205 = arith.addf %201, %204 : vector<112x64xf32>
    %c239_198 = arith.constant 239 : index
    %c0_199 = arith.constant 0 : index
    %206 = vector.load %arg9[%c239_198, %c0_199] : memref<400x128xbf16, #tpu.memory_space<vmem>>, vector<112x64xbf16>
    %c128_200 = arith.constant 128 : index
    %c0_201 = arith.constant 0 : index
    %207 = vector.load %arg5[%c128_200, %c0_201] : memref<576x64xbf16, #tpu.memory_space<vmem>>, vector<64x64xbf16>
    %cst_202 = arith.constant dense<0.000000e+00> : vector<112x64xf32>
    %208 = tpu.matmul %206, %207, %cst_202 {dimension_numbers = #tpu.dot_dimension_numbers<[1], [0], [0], [1], [0, 0, 1, 1], [], []>} : vector<112x64xbf16>, vector<64x64xbf16>, vector<112x64xf32> -> vector<112x64xf32>
    %209 = arith.addf %205, %208 : vector<112x64xf32>
    %c255_203 = arith.constant 255 : index
    %c0_204 = arith.constant 0 : index
    %210 = vector.load %arg9[%c255_203, %c0_204] : memref<400x128xbf16, #tpu.memory_space<vmem>>, vector<112x128xbf16>
    %c192_205 = arith.constant 192 : index
    %c0_206 = arith.constant 0 : index
    %211 = vector.load %arg5[%c192_205, %c0_206] : memref<576x64xbf16, #tpu.memory_space<vmem>>, vector<128x64xbf16>
    %cst_207 = arith.constant dense<0.000000e+00> : vector<112x64xf32>
    %212 = tpu.matmul %210, %211, %cst_207 {dimension_numbers = #tpu.dot_dimension_numbers<[1], [0], [0], [1], [0, 0, 1, 1], [], []>} : vector<112x128xbf16>, vector<128x64xbf16>, vector<112x64xf32> -> vector<112x64xf32>
    %213 = arith.addf %209, %212 : vector<112x64xf32>
    %c257_208 = arith.constant 257 : index
    %c0_209 = arith.constant 0 : index
    %214 = vector.load %arg9[%c257_208, %c0_209] : memref<400x128xbf16, #tpu.memory_space<vmem>>, vector<112x64xbf16>
    %c320_210 = arith.constant 320 : index
    %c0_211 = arith.constant 0 : index
    %215 = vector.load %arg5[%c320_210, %c0_211] : memref<576x64xbf16, #tpu.memory_space<vmem>>, vector<64x64xbf16>
    %cst_212 = arith.constant dense<0.000000e+00> : vector<112x64xf32>
    %216 = tpu.matmul %214, %215, %cst_212 {dimension_numbers = #tpu.dot_dimension_numbers<[1], [0], [0], [1], [0, 0, 1, 1], [], []>} : vector<112x64xbf16>, vector<64x64xbf16>, vector<112x64xf32> -> vector<112x64xf32>
    %217 = arith.addf %213, %216 : vector<112x64xf32>
    %c273_213 = arith.constant 273 : index
    %c0_214 = arith.constant 0 : index
    %218 = vector.load %arg9[%c273_213, %c0_214] : memref<400x128xbf16, #tpu.memory_space<vmem>>, vector<112x128xbf16>
    %c384_215 = arith.constant 384 : index
    %c0_216 = arith.constant 0 : index
    %219 = vector.load %arg5[%c384_215, %c0_216] : memref<576x64xbf16, #tpu.memory_space<vmem>>, vector<128x64xbf16>
    %cst_217 = arith.constant dense<0.000000e+00> : vector<112x64xf32>
    %220 = tpu.matmul %218, %219, %cst_217 {dimension_numbers = #tpu.dot_dimension_numbers<[1], [0], [0], [1], [0, 0, 1, 1], [], []>} : vector<112x128xbf16>, vector<128x64xbf16>, vector<112x64xf32> -> vector<112x64xf32>
    %221 = arith.addf %217, %220 : vector<112x64xf32>
    %c275_218 = arith.constant 275 : index
    %c0_219 = arith.constant 0 : index
    %222 = vector.load %arg9[%c275_218, %c0_219] : memref<400x128xbf16, #tpu.memory_space<vmem>>, vector<112x64xbf16>
    %c512_220 = arith.constant 512 : index
    %c0_221 = arith.constant 0 : index
    %223 = vector.load %arg5[%c512_220, %c0_221] : memref<576x64xbf16, #tpu.memory_space<vmem>>, vector<64x64xbf16>
    %cst_222 = arith.constant dense<0.000000e+00> : vector<112x64xf32>
    %224 = tpu.matmul %222, %223, %cst_222 {dimension_numbers = #tpu.dot_dimension_numbers<[1], [0], [0], [1], [0, 0, 1, 1], [], []>} : vector<112x64xbf16>, vector<64x64xbf16>, vector<112x64xf32> -> vector<112x64xf32>
    %225 = arith.addf %221, %224 : vector<112x64xf32>
    %c0_223 = arith.constant 0 : index
    %c0_224 = arith.constant 0 : index
    %226 = vector.load %arg6[%c0_223, %c0_224] : memref<1x64xf32, #tpu.memory_space<vmem>>, vector<1x64xf32>
    %227 = vector.broadcast %226 : vector<1x64xf32> to vector<112x64xf32>
    %228 = arith.addf %225, %227 : vector<112x64xf32>
    %229 = arith.addf %228, %200 : vector<112x64xf32>
    %cst_225 = arith.constant 0.000000e+00 : f32
    %230 = vector.broadcast %cst_225 : f32 to vector<112x64xf32>
    %231 = arith.maximumf %229, %230 : vector<112x64xf32>
    %c224_226 = arith.constant 224 : index
    %c0_227 = arith.constant 0 : index
    %232 = vector.load %arg2[%c224_226, %c0_227] : memref<336x1xf32, #tpu.memory_space<vmem>>, vector<112x1xf32>
    %233 = vector.broadcast %232 : vector<112x1xf32> to vector<112x64xf32>
    %234 = arith.mulf %231, %233 : vector<112x64xf32>
    %c0_228 = arith.constant 0 : index
    %c224_229 = arith.constant 224 : index
    %c0_230 = arith.constant 0 : index
    %235 = vector.load %arg7[%c0_228, %c224_229, %c0_230] : memref<1x336x64xf32, #tpu.memory_space<vmem>>, vector<1x112x64xf32>
    %236 = vector.shape_cast %235 : vector<1x112x64xf32> to vector<112x64xf32>
    %237 = vector.shape_cast %234 : vector<112x64xf32> to vector<1x112x64xf32>
    tpu.vector_store %arg7[%c0_228, %c224_229, %c0_230], %237 {strides = array<i32>} : memref<1x336x64xf32, #tpu.memory_space<vmem>>, vector<1x112x64xf32>,
    return
  }
  func.func @transform_0(%arg0: i32) -> (i32, i32, i32) {
    %c0_i32 = arith.constant 0 : i32
    %c0_i32_0 = arith.constant 0 : i32
    %c0_i32_1 = arith.constant 0 : i32
    return %arg0, %c0_i32, %c0_i32_0 : i32, i32, i32
  }
  func.func @transform_1(%arg0: i32) -> (i32, i32) {
    %c0_i32 = arith.constant 0 : i32
    %c0_i32_0 = arith.constant 0 : i32
    %c0_i32_1 = arith.constant 0 : i32
    return %c0_i32, %c0_i32_0 : i32, i32
  }
  func.func @transform_2(%arg0: i32) -> (i32, i32) {
    %c0_i32 = arith.constant 0 : i32
    %c0_i32_0 = arith.constant 0 : i32
    %c0_i32_1 = arith.constant 0 : i32
    return %c0_i32, %c0_i32_0 : i32, i32
  }
  func.func @transform_3(%arg0: i32) -> (i32, i32) {
    %c0_i32 = arith.constant 0 : i32
    %c0_i32_0 = arith.constant 0 : i32
    %c0_i32_1 = arith.constant 0 : i32
    return %c0_i32, %c0_i32_0 : i32, i32
  }
  func.func @transform_4(%arg0: i32) -> (i32, i32) {
    %c0_i32 = arith.constant 0 : i32
    %c0_i32_0 = arith.constant 0 : i32
    %c0_i32_1 = arith.constant 0 : i32
    return %c0_i32, %c0_i32_0 : i32, i32
  }
  func.func @transform_5(%arg0: i32) -> (i32, i32) {
    %c0_i32 = arith.constant 0 : i32
    %c0_i32_0 = arith.constant 0 : i32
    %c0_i32_1 = arith.constant 0 : i32
    return %c0_i32, %c0_i32_0 : i32, i32
  }
  func.func @transform_6(%arg0: i32) -> (i32, i32, i32) {
    %c0_i32 = arith.constant 0 : i32
    %c0_i32_0 = arith.constant 0 : i32
    %c0_i32_1 = arith.constant 0 : i32
    return %arg0, %c0_i32, %c0_i32_0 : i32, i32, i32
  }
}

</mosaic_0001>

<llo_original>
// kernel: resnet_block1_forward.1
$region0: #{resnet_block1_forward.1}
  #allocation0 [shape = 'u32[]', space=smem, size = 0x4, offset = 0x4, fixed_abs, tag = 'smem constant byte address 0x4 - core index']
  #allocation1 [shape = 'u32[72,128]{1,0:T(1,128)}', space=vmem, size = 0x9000, scoped, tag = 'internal scratch']
  #allocation2 [shape = 'bf16[400,128]{1,0:T(8,128)(2,1)}', space=vmem, size = 0x19000, scoped, tag = 'scratch operand']
  #allocation3 [shape = 'bf16[400,128]{1,0:T(8,128)(2,1)}', space=vmem, size = 0x19000, scoped, tag = 'scratch operand']
  %s0 = inlined_call_operand.vmem [shape: f32[2,400,64], index: 0, kind: input, shape index: {}]
  %s1 = inlined_call_operand.vmem [shape: f32[336,1], index: 1, kind: input, shape index: {}]
  %s2 = inlined_call_operand.vmem [shape: bf16[576,64], index: 2, kind: input, shape index: {}]
  %s3 = inlined_call_operand.vmem [shape: f32[1,64], index: 3, kind: input, shape index: {}]
  %s4 = inlined_call_operand.vmem [shape: bf16[576,64], index: 4, kind: input, shape index: {}]
  %s5 = inlined_call_operand.vmem [shape: f32[1,64], index: 5, kind: input, shape index: {}]
  %s6 = inlined_call_operand.vmem [shape: f32[2,336,64], index: 6, kind: output, shape index: {}]
  %s7 = sld [smem:[#allocation0]]
  $region57: #{resnet_block1_forward.1} parent=0
    _
  %s9 = ssub.s32 1, %s7
  %s10 = scalar_select 0, %s9, %s7
  loop: start=0, step=1, limit=4
  $region2: #{resnet_block1_forward.1} parent=0 // loop_pre_header
    _
  $region3: #{resnet_block1_forward.1} parent=0 // loop_header
    %s12 = sphi 0, %s16
    %p13 = scmp.ge.s32.totalorder %s12, 4
    %s22 = sphi 0, %s24
    %s25 = sphi 0, %s22
    %s26 = sphi 0, %s25
    %s42 = sphi 0, %s26
    %s46 = sphi 0, %s46
    %s48 = sphi 0, %s46
    %s49 = sphi 0, %s48
    %s63 = sphi 0, %s49
    %s67 = sphi 0, %s67
    %s69 = sphi 0, %s67
    %s70 = sphi 0, %s69
    %s84 = sphi 0, %s70
    %s88 = sphi 0, %s88
    %s90 = sphi 0, %s88
    %s91 = sphi 0, %s90
    %s105 = sphi 0, %s91
    %s109 = sphi 0, %s109
    %s111 = sphi 0, %s109
    %s112 = sphi 0, %s111
    %s126 = sphi 0, %s112
    %s130 = sphi 0, %s130
    %s132 = sphi 0, %s130
    %s133 = sphi 0, %s132
    %s147 = sphi 0, %s133
    %s153 = sphi 0, %s155
    %s156 = sphi 0, %s153
    %s157 = sphi 0, %s156
    %s173 = sphi 0, %s157
  $region4: #{resnet_block1_forward.1} parent=0 // loop_header_branch
    %15 = sbr.rel (%p13) target = $region8
  $region5: #{resnet_block1_forward.1} parent=0 // loop_body
    %s17 = ssub.s32 %s12, 1
    %s18 = ssub.s32 %s12, 2
    %s19 = sadd.s32 %s12, 1
    %s20 = ssub.s32 %s12, %s19
    %p21 = scmp.eq.s32.totalorder %s20, 0
    %s23 = sadd.s32 %s22, 1
    %s24 = scalar_select %p21, %s22, %s23
    %p27 = pneg %p21
    %p28 = scmp.eq.s32.totalorder %s12, 1
    %p29 = por %p27, %p28
    %p30 = scmp.ne.s32.totalorder %s22, %s25
    %p31 = scmp.eq.s32.totalorder %s12, 0
    %p32 = por %p30, %p31
    %p33 = scmp.ne.s32.totalorder %s22, %s25
    %p34 = scmp.eq.s32.totalorder %s17, 1
    %p35 = por %p33, %p34
    %p36 = scmp.ne.s32.totalorder %s25, %s26
    %p37 = scmp.eq.s32.totalorder %s17, 0
    %p38 = por %p36, %p37
    %p39 = scmp.ne.s32.totalorder %s25, %s26
    %p40 = scmp.eq.s32.totalorder %s18, 1
    %p41 = por %p39, %p40
    %p43 = scmp.ne.s32.totalorder %s26, %s42
    %p44 = scmp.eq.s32.totalorder %s18, 0
    %p45 = por %p43, %p44
    %s47 = sadd.s32 %s46, 1
    %p50 = scmp.eq.s32.totalorder %s12, 1
    %p51 = scmp.ne.s32.totalorder %s46, %s48
    %p52 = scmp.eq.s32.totalorder %s12, 0
    %p53 = por %p51, %p52
    %p54 = scmp.ne.s32.totalorder %s46, %s48
    %p55 = scmp.eq.s32.totalorder %s17, 1
    %p56 = por %p54, %p55
    %p57 = scmp.ne.s32.totalorder %s48, %s49
    %p58 = scmp.eq.s32.totalorder %s17, 0
    %p59 = por %p57, %p58
    %p60 = scmp.ne.s32.totalorder %s48, %s49
    %p61 = scmp.eq.s32.totalorder %s18, 1
    %p62 = por %p60, %p61
    %p64 = scmp.ne.s32.totalorder %s49, %s63
    %p65 = scmp.eq.s32.totalorder %s18, 0
    %p66 = por %p64, %p65
    %s68 = sadd.s32 %s67, 1
    %p71 = scmp.eq.s32.totalorder %s12, 1
    %p72 = scmp.ne.s32.totalorder %s67, %s69
    %p73 = scmp.eq.s32.totalorder %s12, 0
    %p74 = por %p72, %p73
    %p75 = scmp.ne.s32.totalorder %s67, %s69
    %p76 = scmp.eq.s32.totalorder %s17, 1
    %p77 = por %p75, %p76
    %p78 = scmp.ne.s32.totalorder %s69, %s70
    %p79 = scmp.eq.s32.totalorder %s17, 0
    %p80 = por %p78, %p79
    %p81 = scmp.ne.s32.totalorder %s69, %s70
    %p82 = scmp.eq.s32.totalorder %s18, 1
    %p83 = por %p81, %p82
    %p85 = scmp.ne.s32.totalorder %s70, %s84
    %p86 = scmp.eq.s32.totalorder %s18, 0
    %p87 = por %p85, %p86
    %s89 = sadd.s32 %s88, 1
    %p92 = scmp.eq.s32.totalorder %s12, 1
    %p93 = scmp.ne.s32.totalorder %s88, %s90
    %p94 = scmp.eq.s32.totalorder %s12, 0
    %p95 = por %p93, %p94
    %p96 = scmp.ne.s32.totalorder %s88, %s90
    %p97 = scmp.eq.s32.totalorder %s17, 1
    %p98 = por %p96, %p97
    %p99 = scmp.ne.s32.totalorder %s90, %s91
    %p100 = scmp.eq.s32.totalorder %s17, 0
    %p101 = por %p99, %p100
    %p102 = scmp.ne.s32.totalorder %s90, %s91
    %p103 = scmp.eq.s32.totalorder %s18, 1
    %p104 = por %p102, %p103
    %p106 = scmp.ne.s32.totalorder %s91, %s105
    %p107 = scmp.eq.s32.totalorder %s18, 0
    %p108 = por %p106, %p107
    %s110 = sadd.s32 %s109, 1
    %p113 = scmp.eq.s32.totalorder %s12, 1
    %p114 = scmp.ne.s32.totalorder %s109, %s111
    %p115 = scmp.eq.s32.totalorder %s12, 0
    %p116 = por %p114, %p115
    %p117 = scmp.ne.s32.totalorder %s109, %s111
    %p118 = scmp.eq.s32.totalorder %s17, 1
    %p119 = por %p117, %p118
    %p120 = scmp.ne.s32.totalorder %s111, %s112
    %p121 = scmp.eq.s32.totalorder %s17, 0
    %p122 = por %p120, %p121
    %p123 = scmp.ne.s32.totalorder %s111, %s112
    %p124 = scmp.eq.s32.totalorder %s18, 1
    %p125 = por %p123, %p124
    %p127 = scmp.ne.s32.totalorder %s112, %s126
    %p128 = scmp.eq.s32.totalorder %s18, 0
    %p129 = por %p127, %p128
    %s131 = sadd.s32 %s130, 1
    %p134 = scmp.eq.s32.totalorder %s12, 1
    %p135 = scmp.ne.s32.totalorder %s130, %s132
    %p136 = scmp.eq.s32.totalorder %s12, 0
    %p137 = por %p135, %p136
    %p138 = scmp.ne.s32.totalorder %s130, %s132
    %p139 = scmp.eq.s32.totalorder %s17, 1
    %p140 = por %p138, %p139
    %p141 = scmp.ne.s32.totalorder %s132, %s133
    %p142 = scmp.eq.s32.totalorder %s17, 0
    %p143 = por %p141, %p142
    %p144 = scmp.ne.s32.totalorder %s132, %s133
    %p145 = scmp.eq.s32.totalorder %s18, 1
    %p146 = por %p144, %p145
    %p148 = scmp.ne.s32.totalorder %s133, %s147
    %p149 = scmp.eq.s32.totalorder %s18, 0
    %p150 = por %p148, %p149
    %s151 = ssub.s32 %s12, %s19
    %p152 = scmp.eq.s32.totalorder %s151, 0
    %s154 = sadd.s32 %s153, 1
    %s155 = scalar_select %p152, %s153, %s154
    %p158 = pneg %p152
    %p159 = scmp.eq.s32.totalorder %s12, 1
    %p160 = por %p158, %p159
    %p161 = scmp.ne.s32.totalorder %s153, %s156
    %p162 = scmp.eq.s32.totalorder %s12, 0
    %p163 = por %p161, %p162
    %p164 = scmp.ne.s32.totalorder %s153, %s156
    %p165 = scmp.eq.s32.totalorder %s17, 1
    %p166 = por %p164, %p165
    %p167 = scmp.ne.s32.totalorder %s156, %s157
    %p168 = scmp.eq.s32.totalorder %s17, 0
    %p169 = por %p167, %p168
    %p170 = scmp.ne.s32.totalorder %s156, %s157
    %p171 = scmp.eq.s32.totalorder %s18, 1
    %p172 = por %p170, %p171
    %p174 = scmp.ne.s32.totalorder %s157, %s173
    %p175 = scmp.eq.s32.totalorder %s18, 0
    %p176 = por %p174, %p175
    %p177 = scmp.le.s32.totalorder 1, %s12
    %p178 = scmp.lt.s32.totalorder %s12, 3
    %p179 = pnand %p177, %p178
    %p180 = pneg %p179
    // Predicated region
    $region9: #{resnet_block1_forward.1} parent=5 // pred_check
      _
    $region10: #{resnet_block1_forward.1} parent=5 // pred_check_branch
      %182 = sbr.rel (%p179) target = $region12
    $region11: #{resnet_block1_forward.1} parent=5 // pred_region
      %s183 = ssub.s32 %s12, 1
      // Predicated region
      $region13: #{resnet_block1_forward.1} parent=11 // pred_check
        %p184 = pneg %p59
      $region14: #{resnet_block1_forward.1} parent=11 // pred_check_branch
        %186 = sbr.rel (%p184) target = $region16
      $region15: #{resnet_block1_forward.1} parent=11 // pred_region
        _
      $region16: #{resnet_block1_forward.1} parent=11 // pred_fallthru
        _
      // Predicated region
      $region17: #{resnet_block1_forward.1} parent=11 // pred_check
        %p187 = pneg %p80
      $region18: #{resnet_block1_forward.1} parent=11 // pred_check_branch
        %189 = sbr.rel (%p187) target = $region20
      $region19: #{resnet_block1_forward.1} parent=11 // pred_region
        _
      $region20: #{resnet_block1_forward.1} parent=11 // pred_fallthru
        _
      // Predicated region
      $region21: #{resnet_block1_forward.1} parent=11 // pred_check
        %p190 = pneg %p101
      $region22: #{resnet_block1_forward.1} parent=11 // pred_check_branch
        %192 = sbr.rel (%p190) target = $region24
      $region23: #{resnet_block1_forward.1} parent=11 // pred_region
        _
      $region24: #{resnet_block1_forward.1} parent=11 // pred_fallthru
        _
      // Predicated region
      $region25: #{resnet_block1_forward.1} parent=11 // pred_check
        %p193 = pneg %p122
      $region26: #{resnet_block1_forward.1} parent=11 // pred_check_branch
        %195 = sbr.rel (%p193) target = $region28
      $region27: #{resnet_block1_forward.1} parent=11 // pred_region
        _
      $region28: #{resnet_block1_forward.1} parent=11 // pred_fallthru
        _
      // Predicated region
      $region29: #{resnet_block1_forward.1} parent=11 // pred_check
        %p196 = pneg %p143
      $region30: #{resnet_block1_forward.1} parent=11 // pred_check_branch
        %198 = sbr.rel (%p196) target = $region32
      $region31: #{resnet_block1_forward.1} parent=11 // pred_region
        _
      $region32: #{resnet_block1_forward.1} parent=11 // pred_fallthru
        _
    $region12: #{resnet_block1_forward.1} parent=5 // pred_fallthru
      _
    %p199 = scmp.lt.s32.totalorder %s12, 2
    // Predicated region
    $region33: #{resnet_block1_forward.1} parent=5 // pred_check
      %p200 = pneg %p199
    $region34: #{resnet_block1_forward.1} parent=5 // pred_check_branch
      %202 = sbr.rel (%p200) target = $region36
    $region35: #{resnet_block1_forward.1} parent=5 // pred_region
      // Predicated region
      $region37: #{resnet_block1_forward.1} parent=35 // pred_check
        %p203 = pneg %p32
      $region38: #{resnet_block1_forward.1} parent=35 // pred_check_branch
        %205 = sbr.rel (%p203) target = $region40
      $region39: #{resnet_block1_forward.1} parent=35 // pred_region
        %p206 = scmp.lt.s32.totalorder %s12, 1
        %s207 = scalar_select %p206, %s12, 1
        %s208 = smul.addr %s207, 50
        %s209 = smul.addr %s208, 8
        %s210 = scalar_lea.vmem %s0, %s209
      $region40: #{resnet_block1_forward.1} parent=35 // pred_fallthru
        _
    $region36: #{resnet_block1_forward.1} parent=5 // pred_fallthru
      _
    %p211 = scmp.le.s32.totalorder 1, %s12
    %p212 = scmp.lt.s32.totalorder %s12, 3
    %p213 = pnand %p211, %p212
    %p214 = pneg %p213
    // Predicated region
    $region41: #{resnet_block1_forward.1} parent=5 // pred_check
      _
    $region42: #{resnet_block1_forward.1} parent=5 // pred_check_branch
      %216 = sbr.rel (%p213) target = $region44
    $region43: #{resnet_block1_forward.1} parent=5 // pred_region
      %s217 = ssub.s32 %s12, 1
      %p218 = scmp.lt.s32.totalorder %s17, 1
      %s219 = scalar_select %p218, %s17, 1
      %s220 = smul.addr %s219, 50
      %s221 = smul.addr %s220, 8
      %s222 = scalar_lea.vmem %s0, %s221
      %p223 = pneg %p38
      %p224 = pneg %p35
      %p225 = pneg %p59
      %p226 = pneg %p56
      %p227 = pneg %p80
      %p228 = pneg %p77
      %p229 = pneg %p101
      %p230 = pneg %p98
      %p231 = pneg %p122
      %p232 = pneg %p119
      %p233 = pneg %p143
      %p234 = pneg %p140
      %p235 = pneg %p169
      %p236 = pneg %p166
      %p237 = scmp.lt.s32.totalorder %s17, 1
      %s238 = scalar_select %p237, %s17, 1
      %s239 = smul.addr %s238, 42
      %s240 = smul.addr %s239, 8
      %s241 = scalar_lea.vmem %s6, %s240
      %p242 = scmp.lt.s32.totalorder %s17, 1
      %s243 = scalar_select %p242, %s17, 1
      %s244 = smul.addr %s243, 50
      %s245 = smul.addr %s244, 8
      %s246 = scalar_lea.vmem %s0, %s245
      %p247 = scmp.lt.s32.totalorder %s17, 1
      %s248 = scalar_select %p247, %s17, 1
      %s249 = smul.addr %s248, 42
      %s250 = smul.addr %s249, 8
      %s251 = scalar_lea.vmem %s6, %s250
      %vm253 = vcmask 519168
      %254 = vst.msk [vmem:[#allocation3] sm:$0xf] %vm253, 0
      %255 = vst.msk [vmem:[#allocation3 + $0x4] sm:$0xf] %vm253, 0
      %256 = vst.msk [vmem:[#allocation3 + $0x8] sm:$0xf] %vm253, 0
      %257 = vst.msk [vmem:[#allocation3 + $0xc] sm:$0xf] %vm253, 0
      %258 = vst.msk [vmem:[#allocation3 + $0xb8] sm:$0xf] %vm253, 0
      %259 = vst.msk [vmem:[#allocation3 + $0xbc] sm:$0xf] %vm253, 0
      %260 = vst.msk [vmem:[#allocation3 + $0xc0] sm:$0xf] %vm253, 0
      %261 = vst.msk [vmem:[#allocation3 + $0xc4] sm:$0xf] %vm253, 0
      %v262 = vld [vmem:[%s246] sm:$0xff]
      %v263 = vld [vmem:[%s246 + $0x8] sm:$0xff]
      %v264 = vld [vmem:[%s246 + $0x10] sm:$0xff]
      %v265 = vld [vmem:[%s246 + $0x18] sm:$0xff]
      %v266 = vld [vmem:[%s246 + $0x20] sm:$0xff]
      %v267 = vld [vmem:[%s246 + $0x28] sm:$0xff]
      %v268 = vld [vmem:[%s246 + $0x30] sm:$0xff]
      %v269 = vld [vmem:[%s246 + $0x38] sm:$0xff]
      %v270 = vld [vmem:[%s246 + $0x40] sm:$0xff]
      %v271 = vld [vmem:[%s246 + $0x48] sm:$0xff]
      %v272 = vld [vmem:[%s246 + $0x50] sm:$0xff]
      %v273 = vld [vmem:[%s246 + $0x58] sm:$0xff]
      %v274 = vld [vmem:[%s246 + $0x60] sm:$0xff]
      %v275 = vld [vmem:[%s246 + $0x68] sm:$0xff]
      %v276 = vld [vmem:[%s246 + $0x70] sm:$0xff]
      %v277 = vld [vmem:[%s246 + $0x78] sm:$0xff]
      %v278 = vld [vmem:[%s246 + $0x80] sm:$0xff]
      %v279 = vld [vmem:[%s246 + $0x88] sm:$0xff]
      %v280 = vld [vmem:[%s246 + $0x90] sm:$0xff]
      %v281 = vld [vmem:[%s246 + $0x98] sm:$0xff]
      %v282 = vld [vmem:[%s246 + $0xa0] sm:$0xff]
      %v283 = vld [vmem:[%s246 + $0xa8] sm:$0xff]
      %v284 = vld [vmem:[%s246 + $0xb0] sm:$0xff]
      %v285 = vld [vmem:[%s246 + $0xb8] sm:$0xff]
      %v286 = vld [vmem:[%s246 + $0xc0] sm:$0xff]
      %v287 = vld [vmem:[%s246 + $0xc8] sm:$0xff]
      %v288 = vld [vmem:[%s246 + $0xd0] sm:$0xff]
      %v289 = vld [vmem:[%s246 + $0xd8] sm:$0xff]
      %v290 = vld [vmem:[%s246 + $0xe0] sm:$0xff]
      %v291 = vld [vmem:[%s246 + $0xe8] sm:$0xff]
      %v292 = vld [vmem:[%s246 + $0xf0] sm:$0xff]
      %v293 = vld [vmem:[%s246 + $0xf8] sm:$0xff]
      %v294 = vld [vmem:[%s246 + $0x100] sm:$0xff]
      %v295 = vld [vmem:[%s246 + $0x108] sm:$0xff]
      %v296 = vld [vmem:[%s246 + $0x110] sm:$0xff]
      %v297 = vld [vmem:[%s246 + $0x118] sm:$0xff]
      %v298 = vld [vmem:[%s246 + $0x120] sm:$0xff]
      %v299 = vld [vmem:[%s246 + $0x128] sm:$0xff]
      %v300 = vld [vmem:[%s246 + $0x130] sm:$0xff]
      %v301 = vld [vmem:[%s246 + $0x138] sm:$0xff]
      %v302 = vld [vmem:[%s246 + $0x140] sm:$0xff]
      %v303 = vld [vmem:[%s246 + $0x148] sm:$0xff]
      %v304 = vld [vmem:[%s246 + $0x150] sm:$0xff]
      %v305 = vld [vmem:[%s246 + $0x158] sm:$0xff]
      %v306 = vld [vmem:[%s246 + $0x160] sm:$0xff]
      %v307 = vld [vmem:[%s246 + $0x168] sm:$0xff]
      %v308 = vld [vmem:[%s246 + $0x170] sm:$0xff]
      %v309 = vld [vmem:[%s246 + $0x178] sm:$0xff]
      %v310 = vld [vmem:[%s246 + $0x180] sm:$0xff]
      %v311 = vld [vmem:[%s246 + $0x188] sm:$0xff]
      %v312 = vpack.c.bf16 %v262, %v262
      %v313 = vpack.c.bf16 %v263, %v263
      %v314 = vpack.c.bf16 %v264, %v264
      %v315 = vpack.c.bf16 %v265, %v265
      %v316 = vpack.c.bf16 %v266, %v266
      %v317 = vpack.c.bf16 %v267, %v267
      %v318 = vpack.c.bf16 %v268, %v268
      %v319 = vpack.c.bf16 %v269, %v269
      %v320 = vpack.c.bf16 %v270, %v270
      %v321 = vpack.c.bf16 %v271, %v271
      %v322 = vpack.c.bf16 %v272, %v272
      %v323 = vpack.c.bf16 %v273, %v273
      %v324 = vpack.c.bf16 %v274, %v274
      %v325 = vpack.c.bf16 %v275, %v275
      %v326 = vpack.c.bf16 %v276, %v276
      %v327 = vpack.c.bf16 %v277, %v277
      %v328 = vpack.c.bf16 %v278, %v278
      %v329 = vpack.c.bf16 %v279, %v279
      %v330 = vpack.c.bf16 %v280, %v280
      %v331 = vpack.c.bf16 %v281, %v281
      %v332 = vpack.c.bf16 %v282, %v282
      %v333 = vpack.c.bf16 %v283, %v283
      %v334 = vpack.c.bf16 %v284, %v284
      %v335 = vpack.c.bf16 %v285, %v285
      %v336 = vpack.c.bf16 %v286, %v286
      %v337 = vpack.c.bf16 %v287, %v287
      %v338 = vpack.c.bf16 %v288, %v288
      %v339 = vpack.c.bf16 %v289, %v289
      %v340 = vpack.c.bf16 %v290, %v290
      %v341 = vpack.c.bf16 %v291, %v291
      %v342 = vpack.c.bf16 %v292, %v292
      %v343 = vpack.c.bf16 %v293, %v293
      %v344 = vpack.c.bf16 %v294, %v294
      %v345 = vpack.c.bf16 %v295, %v295
      %v346 = vpack.c.bf16 %v296, %v296
      %v347 = vpack.c.bf16 %v297, %v297
      %v348 = vpack.c.bf16 %v298, %v298
      %v349 = vpack.c.bf16 %v299, %v299
      %v350 = vpack.c.bf16 %v300, %v300
      %v351 = vpack.c.bf16 %v301, %v301
      %v352 = vpack.c.bf16 %v302, %v302
      %v353 = vpack.c.bf16 %v303, %v303
      %v354 = vpack.c.bf16 %v304, %v304
      %v355 = vpack.c.bf16 %v305, %v305
      %v356 = vpack.c.bf16 %v306, %v306
      %v357 = vpack.c.bf16 %v307, %v307
      %v358 = vpack.c.bf16 %v308, %v308
      %v359 = vpack.c.bf16 %v309, %v309
      %v360 = vpack.c.bf16 %v310, %v310
      %v361 = vpack.c.bf16 %v311, %v311
      %362 = vst.msk [vmem:[#allocation2] sm:$0xf] %vm253, %v312
      %363 = vst.msk [vmem:[#allocation2 + $0x4] sm:$0xf] %vm253, %v313
      %364 = vst.msk [vmem:[#allocation2 + $0x8] sm:$0xf] %vm253, %v314
      %365 = vst.msk [vmem:[#allocation2 + $0xc] sm:$0xf] %vm253, %v315
      %366 = vst.msk [vmem:[#allocation2 + $0x10] sm:$0xf] %vm253, %v316
      %367 = vst.msk [vmem:[#allocation2 + $0x14] sm:$0xf] %vm253, %v317
      %368 = vst.msk [vmem:[#allocation2 + $0x18] sm:$0xf] %vm253, %v318
      %369 = vst.msk [vmem:[#allocation2 + $0x1c] sm:$0xf] %vm253, %v319
      %370 = vst.msk [vmem:[#allocation2 + $0x20] sm:$0xf] %vm253, %v320
      %371 = vst.msk [vmem:[#allocation2 + $0x24] sm:$0xf] %vm253, %v321
      %372 = vst.msk [vmem:[#allocation2 + $0x28] sm:$0xf] %vm253, %v322
      %373 = vst.msk [vmem:[#allocation2 + $0x2c] sm:$0xf] %vm253, %v323
      %374 = vst.msk [vmem:[#allocation2 + $0x30] sm:$0xf] %vm253, %v324
      %375 = vst.msk [vmem:[#allocation2 + $0x34] sm:$0xf] %vm253, %v325
      %376 = vst.msk [vmem:[#allocation2 + $0x38] sm:$0xf] %vm253, %v326
      %377 = vst.msk [vmem:[#allocation2 + $0x3c] sm:$0xf] %vm253, %v327
      %378 = vst.msk [vmem:[#allocation2 + $0x40] sm:$0xf] %vm253, %v328
      %379 = vst.msk [vmem:[#allocation2 + $0x44] sm:$0xf] %vm253, %v329
      %380 = vst.msk [vmem:[#allocation2 + $0x48] sm:$0xf] %vm253, %v330
      %381 = vst.msk [vmem:[#allocation2 + $0x4c] sm:$0xf] %vm253, %v331
      %382 = vst.msk [vmem:[#allocation2 + $0x50] sm:$0xf] %vm253, %v332
      %383 = vst.msk [vmem:[#allocation2 + $0x54] sm:$0xf] %vm253, %v333
      %384 = vst.msk [vmem:[#allocation2 + $0x58] sm:$0xf] %vm253, %v334
      %385 = vst.msk [vmem:[#allocation2 + $0x5c] sm:$0xf] %vm253, %v335
      %386 = vst.msk [vmem:[#allocation2 + $0x60] sm:$0xf] %vm253, %v336
      %387 = vst.msk [vmem:[#allocation2 + $0x64] sm:$0xf] %vm253, %v337
      %388 = vst.msk [vmem:[#allocation2 + $0x68] sm:$0xf] %vm253, %v338
      %389 = vst.msk [vmem:[#allocation2 + $0x6c] sm:$0xf] %vm253, %v339
      %390 = vst.msk [vmem:[#allocation2 + $0x70] sm:$0xf] %vm253, %v340
      %391 = vst.msk [vmem:[#allocation2 + $0x74] sm:$0xf] %vm253, %v341
      %392 = vst.msk [vmem:[#allocation2 + $0x78] sm:$0xf] %vm253, %v342
      %393 = vst.msk [vmem:[#allocation2 + $0x7c] sm:$0xf] %vm253, %v343
      %394 = vst.msk [vmem:[#allocation2 + $0x80] sm:$0xf] %vm253, %v344
      %395 = vst.msk [vmem:[#allocation2 + $0x84] sm:$0xf] %vm253, %v345
      %396 = vst.msk [vmem:[#allocation2 + $0x88] sm:$0xf] %vm253, %v346
      %397 = vst.msk [vmem:[#allocation2 + $0x8c] sm:$0xf] %vm253, %v347
      %398 = vst.msk [vmem:[#allocation2 + $0x90] sm:$0xf] %vm253, %v348
      %399 = vst.msk [vmem:[#allocation2 + $0x94] sm:$0xf] %vm253, %v349
      %400 = vst.msk [vmem:[#allocation2 + $0x98] sm:$0xf] %vm253, %v350
      %401 = vst.msk [vmem:[#allocation2 + $0x9c] sm:$0xf] %vm253, %v351
      %402 = vst.msk [vmem:[#allocation2 + $0xa0] sm:$0xf] %vm253, %v352
      %403 = vst.msk [vmem:[#allocation2 + $0xa4] sm:$0xf] %vm253, %v353
      %404 = vst.msk [vmem:[#allocation2 + $0xa8] sm:$0xf] %vm253, %v354
      %405 = vst.msk [vmem:[#allocation2 + $0xac] sm:$0xf] %vm253, %v355
      %406 = vst.msk [vmem:[#allocation2 + $0xb0] sm:$0xf] %vm253, %v356
      %407 = vst.msk [vmem:[#allocation2 + $0xb4] sm:$0xf] %vm253, %v357
      %408 = vst.msk [vmem:[#allocation2 + $0xb8] sm:$0xf] %vm253, %v358
      %409 = vst.msk [vmem:[#allocation2 + $0xbc] sm:$0xf] %vm253, %v359
      %410 = vst.msk [vmem:[#allocation2 + $0xc0] sm:$0xf] %vm253, %v360
      %411 = vst.msk [vmem:[#allocation2 + $0xc4] sm:$0xf] %vm253, %v361
      %v412 = vld [vmem:[#allocation2] sm:$0xf]
      %v413 = vld [vmem:[#allocation2 + $0x4] sm:$0xf]
      %v414 = vld [vmem:[#allocation2 + $0x8] sm:$0xf]
      %v415 = vld [vmem:[#allocation2 + $0xc] sm:$0xf]
      %v416 = vld [vmem:[#allocation2 + $0x10] sm:$0xf]
      %v417 = vld [vmem:[#allocation2 + $0x14] sm:$0xf]
      %v418 = vld [vmem:[#allocation2 + $0x18] sm:$0xf]
      %v419 = vld [vmem:[#allocation2 + $0x1c] sm:$0xf]
      %v420 = vld [vmem:[#allocation2 + $0x20] sm:$0xf]
      %v421 = vld [vmem:[#allocation2 + $0x24] sm:$0xf]
      %v422 = vld [vmem:[#allocation2 + $0x28] sm:$0xf]
      %v423 = vld [vmem:[#allocation2 + $0x2c] sm:$0xf]
      %v424 = vld [vmem:[#allocation2 + $0x30] sm:$0xf]
      %v425 = vld [vmem:[#allocation2 + $0x34] sm:$0xf]
      %v426 = vld [vmem:[#allocation2 + $0x38] sm:$0xf]
      %v427 = vld [vmem:[#allocation2 + $0x3c] sm:$0xf]
      %v428 = vld [vmem:[#allocation2 + $0x40] sm:$0xf]
      %v429 = vld [vmem:[#allocation2 + $0x44] sm:$0xf]
      %v430 = vld [vmem:[#allocation2 + $0x48] sm:$0xf]
      %v431 = vld [vmem:[#allocation2 + $0x4c] sm:$0xf]
      %v432 = vld [vmem:[#allocation2 + $0x50] sm:$0xf]
      %v433 = vld [vmem:[#allocation2 + $0x54] sm:$0xf]
      %v434 = vld [vmem:[#allocation2 + $0x58] sm:$0xf]
      %v435 = vld [vmem:[#allocation2 + $0x5c] sm:$0xf]
      %v436 = vld [vmem:[#allocation2 + $0x60] sm:$0xf]
      %v437 = vld [vmem:[#allocation2 + $0x64] sm:$0xf]
      %v438 = vld [vmem:[#allocation2 + $0x68] sm:$0xf]
      %v439 = vld [vmem:[#allocation2 + $0x6c] sm:$0xf]
      %v440 = vld [vmem:[#allocation2 + $0x70] sm:$0xf]
      %v441 = vld [vmem:[#allocation2 + $0x74] sm:$0xf]
      %v442 = vld [vmem:[#allocation2 + $0x78] sm:$0xf]
      %v443 = vld [vmem:[#allocation2 + $0x7c] sm:$0xf]
      %v444 = vld [vmem:[#allocation2 + $0x80] sm:$0xf]
      %v445 = vld [vmem:[#allocation2 + $0x84] sm:$0xf]
      %v446 = vld [vmem:[#allocation2 + $0x88] sm:$0xf]
      %v447 = vld [vmem:[#allocation2 + $0x8c] sm:$0xf]
      %v448 = vld [vmem:[#allocation2 + $0x90] sm:$0xf]
      %v449 = vld [vmem:[#allocation2 + $0x94] sm:$0xf]
      %v450 = vld [vmem:[#allocation2 + $0x98] sm:$0xf]
      %v451 = vld [vmem:[#allocation2 + $0x9c] sm:$0xf]
      %v452 = vld [vmem:[#allocation2 + $0xa0] sm:$0xf]
      %v453 = vld [vmem:[#allocation2 + $0xa4] sm:$0xf]
      %v454 = vld [vmem:[#allocation2 + $0xa8] sm:$0xf]
      %v455 = vld [vmem:[#allocation2 + $0xac] sm:$0xf]
      %v456 = vld [vmem:[#allocation2 + $0xb0] sm:$0xf]
      %v457 = vld [vmem:[#allocation2 + $0xb4] sm:$0xf]
      %v458 = vld [vmem:[#allocation2 + $0xb8] sm:$0xf]
      %v459 = vld [vmem:[#allocation2 + $0xbc] sm:$0xf]
      %v460 = vld [vmem:[#allocation2 + $0xc0] sm:$0xf]
      %v461 = vld [vmem:[#allocation2 + $0xc4] sm:$0xf]
      %vm462 = vsmask.f32 3328
      %vm463 = vsmask.f32 7440
      %vm464 = vmor %vm462, %vm463
      %v466 = vshrl.u32 %v412, 16
      %v468 = vrot.slane %v466, 4
      %v469 = vshll.u32 %v412, 16
      %v471 = vrot.slane %v469, 5
      %v472 = vor.u32 %v468, %v471
      %v473 = vrot.slane %v472, 4
      %v475 = vshll.u32 %v413, 16
      %v477 = vrot.slane %v475, 5
      %v478 = vsel %vm464, %v473, %v477
      %v479 = vshrl.u32 %v413, 16
      %v481 = vrot.slane %v479, 4
      %v482 = vor.u32 %v481, %v477
      %v483 = vrot.slane %v482, 4
      %v485 = vshll.u32 %v414, 16
      %v487 = vrot.slane %v485, 5
      %v488 = vsel %vm464, %v483, %v487
      %v489 = vshrl.u32 %v414, 16
      %v491 = vrot.slane %v489, 4
      %v492 = vor.u32 %v491, %v487
      %v493 = vrot.slane %v492, 4
      %v495 = vshll.u32 %v415, 16
      %v497 = vrot.slane %v495, 5
      %v498 = vsel %vm464, %v493, %v497
      %v499 = vshrl.u32 %v415, 16
      %v501 = vrot.slane %v499, 4
      %v502 = vor.u32 %v501, %v497
      %v503 = vrot.slane %v502, 4
      %v505 = vshll.u32 %v416, 16
      %v507 = vrot.slane %v505, 5
      %v508 = vsel %vm464, %v503, %v507
      %v509 = vshrl.u32 %v416, 16
      %v511 = vrot.slane %v509, 4
      %v512 = vor.u32 %v511, %v507
      %v513 = vrot.slane %v512, 4
      %v515 = vshll.u32 %v417, 16
      %v517 = vrot.slane %v515, 5
      %v518 = vsel %vm464, %v513, %v517
      %v519 = vshrl.u32 %v417, 16
      %v521 = vrot.slane %v519, 4
      %v522 = vor.u32 %v521, %v517
      %v523 = vrot.slane %v522, 4
      %v525 = vshll.u32 %v418, 16
      %v527 = vrot.slane %v525, 5
      %v528 = vsel %vm464, %v523, %v527
      %v529 = vshrl.u32 %v418, 16
      %v531 = vrot.slane %v529, 4
      %v532 = vor.u32 %v531, %v527
      %v533 = vrot.slane %v532, 4
      %v535 = vshll.u32 %v419, 16
      %v537 = vrot.slane %v535, 5
      %v538 = vsel %vm464, %v533, %v537
      %v539 = vshrl.u32 %v419, 16
      %v541 = vrot.slane %v539, 4
      %v542 = vor.u32 %v541, %v537
      %v543 = vrot.slane %v542, 4
      %v545 = vshll.u32 %v420, 16
      %v547 = vrot.slane %v545, 5
      %v548 = vsel %vm464, %v543, %v547
      %v549 = vshrl.u32 %v420, 16
      %v551 = vrot.slane %v549, 4
      %v552 = vor.u32 %v551, %v547
      %v553 = vrot.slane %v552, 4
      %v555 = vshll.u32 %v421, 16
      %v557 = vrot.slane %v555, 5
      %v558 = vsel %vm464, %v553, %v557
      %v559 = vshrl.u32 %v421, 16
      %v561 = vrot.slane %v559, 4
      %v562 = vor.u32 %v561, %v557
      %v563 = vrot.slane %v562, 4
      %v565 = vshll.u32 %v422, 16
      %v567 = vrot.slane %v565, 5
      %v568 = vsel %vm464, %v563, %v567
      %v569 = vshrl.u32 %v422, 16
      %v571 = vrot.slane %v569, 4
      %v572 = vor.u32 %v571, %v567
      %v573 = vrot.slane %v572, 4
      %v575 = vshll.u32 %v423, 16
      %v577 = vrot.slane %v575, 5
      %v578 = vsel %vm464, %v573, %v577
      %v579 = vshrl.u32 %v423, 16
      %v581 = vrot.slane %v579, 4
      %v582 = vor.u32 %v581, %v577
      %v583 = vrot.slane %v582, 4
      %v585 = vshll.u32 %v424, 16
      %v587 = vrot.slane %v585, 5
      %v588 = vsel %vm464, %v583, %v587
      %v589 = vshrl.u32 %v424, 16
      %v591 = vrot.slane %v589, 4
      %v592 = vor.u32 %v591, %v587
      %v593 = vrot.slane %v592, 4
      %v595 = vshll.u32 %v425, 16
      %v597 = vrot.slane %v595, 5
      %v598 = vsel %vm464, %v593, %v597
      %v599 = vshrl.u32 %v425, 16
      %v601 = vrot.slane %v599, 4
      %v602 = vor.u32 %v601, %v597
      %v603 = vrot.slane %v602, 4
      %v605 = vshll.u32 %v426, 16
      %v607 = vrot.slane %v605, 5
      %v608 = vsel %vm464, %v603, %v607
      %v609 = vshrl.u32 %v426, 16
      %v611 = vrot.slane %v609, 4
      %v612 = vor.u32 %v611, %v607
      %v613 = vrot.slane %v612, 4
      %v615 = vshll.u32 %v427, 16
      %v617 = vrot.slane %v615, 5
      %v618 = vsel %vm464, %v613, %v617
      %v619 = vshrl.u32 %v427, 16
      %v621 = vrot.slane %v619, 4
      %v622 = vor.u32 %v621, %v617
      %v623 = vrot.slane %v622, 4
      %v625 = vshll.u32 %v428, 16
      %v627 = vrot.slane %v625, 5
      %v628 = vsel %vm464, %v623, %v627
      %v629 = vshrl.u32 %v428, 16
      %v631 = vrot.slane %v629, 4
      %v632 = vor.u32 %v631, %v627
      %v633 = vrot.slane %v632, 4
      %v635 = vshll.u32 %v429, 16
      %v637 = vrot.slane %v635, 5
      %v638 = vsel %vm464, %v633, %v637
      %v639 = vshrl.u32 %v429, 16
      %v641 = vrot.slane %v639, 4
      %v642 = vor.u32 %v641, %v637
      %v643 = vrot.slane %v642, 4
      %v645 = vshll.u32 %v430, 16
      %v647 = vrot.slane %v645, 5
      %v648 = vsel %vm464, %v643, %v647
      %v649 = vshrl.u32 %v430, 16
      %v651 = vrot.slane %v649, 4
      %v652 = vor.u32 %v651, %v647
      %v653 = vrot.slane %v652, 4
      %v655 = vshll.u32 %v431, 16
      %v657 = vrot.slane %v655, 5
      %v658 = vsel %vm464, %v653, %v657
      %v659 = vshrl.u32 %v431, 16
      %v661 = vrot.slane %v659, 4
      %v662 = vor.u32 %v661, %v657
      %v663 = vrot.slane %v662, 4
      %v665 = vshll.u32 %v432, 16
      %v667 = vrot.slane %v665, 5
      %v668 = vsel %vm464, %v663, %v667
      %v669 = vshrl.u32 %v432, 16
      %v671 = vrot.slane %v669, 4
      %v672 = vor.u32 %v671, %v667
      %v673 = vrot.slane %v672, 4
      %v675 = vshll.u32 %v433, 16
      %v677 = vrot.slane %v675, 5
      %v678 = vsel %vm464, %v673, %v677
      %v679 = vshrl.u32 %v433, 16
      %v681 = vrot.slane %v679, 4
      %v682 = vor.u32 %v681, %v677
      %v683 = vrot.slane %v682, 4
      %v685 = vshll.u32 %v434, 16
      %v687 = vrot.slane %v685, 5
      %v688 = vsel %vm464, %v683, %v687
      %v689 = vshrl.u32 %v434, 16
      %v691 = vrot.slane %v689, 4
      %v692 = vor.u32 %v691, %v687
      %v693 = vrot.slane %v692, 4
      %v695 = vshll.u32 %v435, 16
      %v697 = vrot.slane %v695, 5
      %v698 = vsel %vm464, %v693, %v697
      %v699 = vshrl.u32 %v435, 16
      %v701 = vrot.slane %v699, 4
      %v702 = vor.u32 %v701, %v697
      %v703 = vrot.slane %v702, 4
      %v705 = vshll.u32 %v436, 16
      %v707 = vrot.slane %v705, 5
      %v708 = vsel %vm464, %v703, %v707
      %v709 = vshrl.u32 %v436, 16
      %v711 = vrot.slane %v709, 4
      %v712 = vor.u32 %v711, %v707
      %v713 = vrot.slane %v712, 4
      %v715 = vshll.u32 %v437, 16
      %v717 = vrot.slane %v715, 5
      %v718 = vsel %vm464, %v713, %v717
      %v719 = vshrl.u32 %v437, 16
      %v721 = vrot.slane %v719, 4
      %v722 = vor.u32 %v721, %v717
      %v723 = vrot.slane %v722, 4
      %v725 = vshll.u32 %v438, 16
      %v727 = vrot.slane %v725, 5
      %v728 = vsel %vm464, %v723, %v727
      %v729 = vshrl.u32 %v438, 16
      %v731 = vrot.slane %v729, 4
      %v732 = vor.u32 %v731, %v727
      %v733 = vrot.slane %v732, 4
      %v735 = vshll.u32 %v439, 16
      %v737 = vrot.slane %v735, 5
      %v738 = vsel %vm464, %v733, %v737
      %v739 = vshrl.u32 %v439, 16
      %v741 = vrot.slane %v739, 4
      %v742 = vor.u32 %v741, %v737
      %v743 = vrot.slane %v742, 4
      %v745 = vshll.u32 %v440, 16
      %v747 = vrot.slane %v745, 5
      %v748 = vsel %vm464, %v743, %v747
      %v749 = vshrl.u32 %v440, 16
      %v751 = vrot.slane %v749, 4
      %v752 = vor.u32 %v751, %v747
      %v753 = vrot.slane %v752, 4
      %v755 = vshll.u32 %v441, 16
      %v757 = vrot.slane %v755, 5
      %v758 = vsel %vm464, %v753, %v757
      %v759 = vshrl.u32 %v441, 16
      %v761 = vrot.slane %v759, 4
      %v762 = vor.u32 %v761, %v757
      %v763 = vrot.slane %v762, 4
      %v765 = vshll.u32 %v442, 16
      %v767 = vrot.slane %v765, 5
      %v768 = vsel %vm464, %v763, %v767
      %v769 = vshrl.u32 %v442, 16
      %v771 = vrot.slane %v769, 4
      %v772 = vor.u32 %v771, %v767
      %v773 = vrot.slane %v772, 4
      %v775 = vshll.u32 %v443, 16
      %v777 = vrot.slane %v775, 5
      %v778 = vsel %vm464, %v773, %v777
      %v779 = vshrl.u32 %v443, 16
      %v781 = vrot.slane %v779, 4
      %v782 = vor.u32 %v781, %v777
      %v783 = vrot.slane %v782, 4
      %v785 = vshll.u32 %v444, 16
      %v787 = vrot.slane %v785, 5
      %v788 = vsel %vm464, %v783, %v787
      %v789 = vshrl.u32 %v444, 16
      %v791 = vrot.slane %v789, 4
      %v792 = vor.u32 %v791, %v787
      %v793 = vrot.slane %v792, 4
      %v795 = vshll.u32 %v445, 16
      %v797 = vrot.slane %v795, 5
      %v798 = vsel %vm464, %v793, %v797
      %v799 = vshrl.u32 %v445, 16
      %v801 = vrot.slane %v799, 4
      %v802 = vor.u32 %v801, %v797
      %v803 = vrot.slane %v802, 4
      %v805 = vshll.u32 %v446, 16
      %v807 = vrot.slane %v805, 5
      %v808 = vsel %vm464, %v803, %v807
      %v809 = vshrl.u32 %v446, 16
      %v811 = vrot.slane %v809, 4
      %v812 = vor.u32 %v811, %v807
      %v813 = vrot.slane %v812, 4
      %v815 = vshll.u32 %v447, 16
      %v817 = vrot.slane %v815, 5
      %v818 = vsel %vm464, %v813, %v817
      %v819 = vshrl.u32 %v447, 16
      %v821 = vrot.slane %v819, 4
      %v822 = vor.u32 %v821, %v817
      %v823 = vrot.slane %v822, 4
      %v825 = vshll.u32 %v448, 16
      %v827 = vrot.slane %v825, 5
      %v828 = vsel %vm464, %v823, %v827
      %v829 = vshrl.u32 %v448, 16
      %v831 = vrot.slane %v829, 4
      %v832 = vor.u32 %v831, %v827
      %v833 = vrot.slane %v832, 4
      %v835 = vshll.u32 %v449, 16
      %v837 = vrot.slane %v835, 5
      %v838 = vsel %vm464, %v833, %v837
      %v839 = vshrl.u32 %v449, 16
      %v841 = vrot.slane %v839, 4
      %v842 = vor.u32 %v841, %v837
      %v843 = vrot.slane %v842, 4
      %v845 = vshll.u32 %v450, 16
      %v847 = vrot.slane %v845, 5
      %v848 = vsel %vm464, %v843, %v847
      %v849 = vshrl.u32 %v450, 16
      %v851 = vrot.slane %v849, 4
      %v852 = vor.u32 %v851, %v847
      %v853 = vrot.slane %v852, 4
      %v855 = vshll.u32 %v451, 16
      %v857 = vrot.slane %v855, 5
      %v858 = vsel %vm464, %v853, %v857
      %v859 = vshrl.u32 %v451, 16
      %v861 = vrot.slane %v859, 4
      %v862 = vor.u32 %v861, %v857
      %v863 = vrot.slane %v862, 4
      %v865 = vshll.u32 %v452, 16
      %v867 = vrot.slane %v865, 5
      %v868 = vsel %vm464, %v863, %v867
      %v869 = vshrl.u32 %v452, 16
      %v871 = vrot.slane %v869, 4
      %v872 = vor.u32 %v871, %v867
      %v873 = vrot.slane %v872, 4
      %v875 = vshll.u32 %v453, 16
      %v877 = vrot.slane %v875, 5
      %v878 = vsel %vm464, %v873, %v877
      %v879 = vshrl.u32 %v453, 16
      %v881 = vrot.slane %v879, 4
      %v882 = vor.u32 %v881, %v877
      %v883 = vrot.slane %v882, 4
      %v885 = vshll.u32 %v454, 16
      %v887 = vrot.slane %v885, 5
      %v888 = vsel %vm464, %v883, %v887
      %v889 = vshrl.u32 %v454, 16
      %v891 = vrot.slane %v889, 4
      %v892 = vor.u32 %v891, %v887
      %v893 = vrot.slane %v892, 4
      %v895 = vshll.u32 %v455, 16
      %v897 = vrot.slane %v895, 5
      %v898 = vsel %vm464, %v893, %v897
      %v899 = vshrl.u32 %v455, 16
      %v901 = vrot.slane %v899, 4
      %v902 = vor.u32 %v901, %v897
      %v903 = vrot.slane %v902, 4
      %v905 = vshll.u32 %v456, 16
      %v907 = vrot.slane %v905, 5
      %v908 = vsel %vm464, %v903, %v907
      %v909 = vshrl.u32 %v456, 16
      %v911 = vrot.slane %v909, 4
      %v912 = vor.u32 %v911, %v907
      %v913 = vrot.slane %v912, 4
      %v915 = vshll.u32 %v457, 16
      %v917 = vrot.slane %v915, 5
      %v918 = vsel %vm464, %v913, %v917
      %v919 = vshrl.u32 %v457, 16
      %v921 = vrot.slane %v919, 4
      %v922 = vor.u32 %v921, %v917
      %v923 = vrot.slane %v922, 4
      %v925 = vshll.u32 %v458, 16
      %v927 = vrot.slane %v925, 5
      %v928 = vsel %vm464, %v923, %v927
      %v929 = vshrl.u32 %v458, 16
      %v931 = vrot.slane %v929, 4
      %v932 = vor.u32 %v931, %v927
      %v933 = vrot.slane %v932, 4
      %v935 = vshll.u32 %v459, 16
      %v937 = vrot.slane %v935, 5
      %v938 = vsel %vm464, %v933, %v937
      %v939 = vshrl.u32 %v459, 16
      %v941 = vrot.slane %v939, 4
      %v942 = vor.u32 %v941, %v937
      %v943 = vrot.slane %v942, 4
      %v945 = vshll.u32 %v460, 16
      %v947 = vrot.slane %v945, 5
      %v948 = vsel %vm464, %v943, %v947
      %v949 = vshrl.u32 %v460, 16
      %v951 = vrot.slane %v949, 4
      %v952 = vor.u32 %v951, %v947
      %v953 = vrot.slane %v952, 4
      %v955 = vshll.u32 %v461, 16
      %v957 = vrot.slane %v955, 5
      %v958 = vsel %vm464, %v953, %v957
      %v959 = vshrl.u32 %v461, 16
      %v961 = vrot.slane %v959, 4
      %v962 = vor.u32 %v961, %v957
      %v963 = vrot.slane %v962, 4
      %964 = vrot.lane.b32.xlu0 %v478, 64
      %v965 = vpop.permute.xlu0 %964
      %966 = vrot.lane.b32.xlu0 %v488, 64
      %v967 = vpop.permute.xlu0 %966
      %968 = vrot.lane.b32.xlu0 %v498, 64
      %v969 = vpop.permute.xlu0 %968
      %970 = vrot.lane.b32.xlu0 %v508, 64
      %v971 = vpop.permute.xlu0 %970
      %972 = vrot.lane.b32.xlu0 %v518, 64
      %v973 = vpop.permute.xlu0 %972
      %974 = vrot.lane.b32.xlu0 %v528, 64
      %v975 = vpop.permute.xlu0 %974
      %976 = vrot.lane.b32.xlu0 %v538, 64
      %v977 = vpop.permute.xlu0 %976
      %978 = vrot.lane.b32.xlu0 %v548, 64
      %v979 = vpop.permute.xlu0 %978
      %980 = vrot.lane.b32.xlu0 %v558, 64
      %v981 = vpop.permute.xlu0 %980
      %982 = vrot.lane.b32.xlu0 %v568, 64
      %v983 = vpop.permute.xlu0 %982
      %984 = vrot.lane.b32.xlu0 %v578, 64
      %v985 = vpop.permute.xlu0 %984
      %986 = vrot.lane.b32.xlu0 %v588, 64
      %v987 = vpop.permute.xlu0 %986
      %988 = vrot.lane.b32.xlu0 %v598, 64
      %v989 = vpop.permute.xlu0 %988
      %990 = vrot.lane.b32.xlu0 %v608, 64
      %v991 = vpop.permute.xlu0 %990
      %992 = vrot.lane.b32.xlu0 %v618, 64
      %v993 = vpop.permute.xlu0 %992
      %994 = vrot.lane.b32.xlu0 %v628, 64
      %v995 = vpop.permute.xlu0 %994
      %996 = vrot.lane.b32.xlu0 %v638, 64
      %v997 = vpop.permute.xlu0 %996
      %998 = vrot.lane.b32.xlu0 %v648, 64
      %v999 = vpop.permute.xlu0 %998
      %1000 = vrot.lane.b32.xlu0 %v658, 64
      %v1001 = vpop.permute.xlu0 %1000
      %1002 = vrot.lane.b32.xlu0 %v668, 64
      %v1003 = vpop.permute.xlu0 %1002
      %1004 = vrot.lane.b32.xlu0 %v678, 64
      %v1005 = vpop.permute.xlu0 %1004
      %1006 = vrot.lane.b32.xlu0 %v688, 64
      %v1007 = vpop.permute.xlu0 %1006
      %1008 = vrot.lane.b32.xlu0 %v698, 64
      %v1009 = vpop.permute.xlu0 %1008
      %1010 = vrot.lane.b32.xlu0 %v708, 64
      %v1011 = vpop.permute.xlu0 %1010
      %1012 = vrot.lane.b32.xlu0 %v718, 64
      %v1013 = vpop.permute.xlu0 %1012
      %1014 = vrot.lane.b32.xlu0 %v728, 64
      %v1015 = vpop.permute.xlu0 %1014
      %1016 = vrot.lane.b32.xlu0 %v738, 64
      %v1017 = vpop.permute.xlu0 %1016
      %1018 = vrot.lane.b32.xlu0 %v748, 64
      %v1019 = vpop.permute.xlu0 %1018
      %1020 = vrot.lane.b32.xlu0 %v758, 64
      %v1021 = vpop.permute.xlu0 %1020
      %1022 = vrot.lane.b32.xlu0 %v768, 64
      %v1023 = vpop.permute.xlu0 %1022
      %1024 = vrot.lane.b32.xlu0 %v778, 64
      %v1025 = vpop.permute.xlu0 %1024
      %1026 = vrot.lane.b32.xlu0 %v788, 64
      %v1027 = vpop.permute.xlu0 %1026
      %1028 = vrot.lane.b32.xlu0 %v798, 64
      %v1029 = vpop.permute.xlu0 %1028
      %1030 = vrot.lane.b32.xlu0 %v808, 64
      %v1031 = vpop.permute.xlu0 %1030
      %1032 = vrot.lane.b32.xlu0 %v818, 64
      %v1033 = vpop.permute.xlu0 %1032
      %1034 = vrot.lane.b32.xlu0 %v828, 64
      %v1035 = vpop.permute.xlu0 %1034
      %1036 = vrot.lane.b32.xlu0 %v838, 64
      %v1037 = vpop.permute.xlu0 %1036
      %1038 = vrot.lane.b32.xlu0 %v848, 64
      %v1039 = vpop.permute.xlu0 %1038
      %1040 = vrot.lane.b32.xlu0 %v858, 64
      %v1041 = vpop.permute.xlu0 %1040
      %1042 = vrot.lane.b32.xlu0 %v868, 64
      %v1043 = vpop.permute.xlu0 %1042
      %1044 = vrot.lane.b32.xlu0 %v878, 64
      %v1045 = vpop.permute.xlu0 %1044
      %1046 = vrot.lane.b32.xlu0 %v888, 64
      %v1047 = vpop.permute.xlu0 %1046
      %1048 = vrot.lane.b32.xlu0 %v898, 64
      %v1049 = vpop.permute.xlu0 %1048
      %1050 = vrot.lane.b32.xlu0 %v908, 64
      %v1051 = vpop.permute.xlu0 %1050
      %1052 = vrot.lane.b32.xlu0 %v918, 64
      %v1053 = vpop.permute.xlu0 %1052
      %1054 = vrot.lane.b32.xlu0 %v928, 64
      %v1055 = vpop.permute.xlu0 %1054
      %1056 = vrot.lane.b32.xlu0 %v938, 64
      %v1057 = vpop.permute.xlu0 %1056
      %1058 = vrot.lane.b32.xlu0 %v948, 64
      %v1059 = vpop.permute.xlu0 %1058
      %1060 = vrot.lane.b32.xlu0 %v958, 64
      %v1061 = vpop.permute.xlu0 %1060
      %1062 = vrot.lane.b32.xlu0 %v963, 64
      %v1063 = vpop.permute.xlu0 %1062
      %vm1114 = vcmask 1043968
      %1115 = vst.msk [vmem:[#allocation2] sm:$0xf] %vm1114, %v965
      %1116 = vst.msk [vmem:[#allocation2 + $0x4] sm:$0xf] %vm1114, %v967
      %1117 = vst.msk [vmem:[#allocation2 + $0x8] sm:$0xf] %vm1114, %v969
      %1118 = vst.msk [vmem:[#allocation2 + $0xc] sm:$0xf] %vm1114, %v971
      %1119 = vst.msk [vmem:[#allocation2 + $0x10] sm:$0xf] %vm1114, %v973
      %1120 = vst.msk [vmem:[#allocation2 + $0x14] sm:$0xf] %vm1114, %v975
      %1121 = vst.msk [vmem:[#allocation2 + $0x18] sm:$0xf] %vm1114, %v977
      %1122 = vst.msk [vmem:[#allocation2 + $0x1c] sm:$0xf] %vm1114, %v979
      %1123 = vst.msk [vmem:[#allocation2 + $0x20] sm:$0xf] %vm1114, %v981
      %1124 = vst.msk [vmem:[#allocation2 + $0x24] sm:$0xf] %vm1114, %v983
      %1125 = vst.msk [vmem:[#allocation2 + $0x28] sm:$0xf] %vm1114, %v985
      %1126 = vst.msk [vmem:[#allocation2 + $0x2c] sm:$0xf] %vm1114, %v987
      %1127 = vst.msk [vmem:[#allocation2 + $0x30] sm:$0xf] %vm1114, %v989
      %1128 = vst.msk [vmem:[#allocation2 + $0x34] sm:$0xf] %vm1114, %v991
      %1129 = vst.msk [vmem:[#allocation2 + $0x38] sm:$0xf] %vm1114, %v993
      %1130 = vst.msk [vmem:[#allocation2 + $0x3c] sm:$0xf] %vm1114, %v995
      %1131 = vst.msk [vmem:[#allocation2 + $0x40] sm:$0xf] %vm1114, %v997
      %1132 = vst.msk [vmem:[#allocation2 + $0x44] sm:$0xf] %vm1114, %v999
      %1133 = vst.msk [vmem:[#allocation2 + $0x48] sm:$0xf] %vm1114, %v1001
      %1134 = vst.msk [vmem:[#allocation2 + $0x4c] sm:$0xf] %vm1114, %v1003
      %1135 = vst.msk [vmem:[#allocation2 + $0x50] sm:$0xf] %vm1114, %v1005
      %1136 = vst.msk [vmem:[#allocation2 + $0x54] sm:$0xf] %vm1114, %v1007
      %1137 = vst.msk [vmem:[#allocation2 + $0x58] sm:$0xf] %vm1114, %v1009
      %1138 = vst.msk [vmem:[#allocation2 + $0x5c] sm:$0xf] %vm1114, %v1011
      %1139 = vst.msk [vmem:[#allocation2 + $0x60] sm:$0xf] %vm1114, %v1013
      %1140 = vst.msk [vmem:[#allocation2 + $0x64] sm:$0xf] %vm1114, %v1015
      %1141 = vst.msk [vmem:[#allocation2 + $0x68] sm:$0xf] %vm1114, %v1017
      %1142 = vst.msk [vmem:[#allocation2 + $0x6c] sm:$0xf] %vm1114, %v1019
      %1143 = vst.msk [vmem:[#allocation2 + $0x70] sm:$0xf] %vm1114, %v1021
      %1144 = vst.msk [vmem:[#allocation2 + $0x74] sm:$0xf] %vm1114, %v1023
      %1145 = vst.msk [vmem:[#allocation2 + $0x78] sm:$0xf] %vm1114, %v1025
      %1146 = vst.msk [vmem:[#allocation2 + $0x7c] sm:$0xf] %vm1114, %v1027
      %1147 = vst.msk [vmem:[#allocation2 + $0x80] sm:$0xf] %vm1114, %v1029
      %1148 = vst.msk [vmem:[#allocation2 + $0x84] sm:$0xf] %vm1114, %v1031
      %1149 = vst.msk [vmem:[#allocation2 + $0x88] sm:$0xf] %vm1114, %v1033
      %1150 = vst.msk [vmem:[#allocation2 + $0x8c] sm:$0xf] %vm1114, %v1035
      %1151 = vst.msk [vmem:[#allocation2 + $0x90] sm:$0xf] %vm1114, %v1037
      %1152 = vst.msk [vmem:[#allocation2 + $0x94] sm:$0xf] %vm1114, %v1039
      %1153 = vst.msk [vmem:[#allocation2 + $0x98] sm:$0xf] %vm1114, %v1041
      %1154 = vst.msk [vmem:[#allocation2 + $0x9c] sm:$0xf] %vm1114, %v1043
      %1155 = vst.msk [vmem:[#allocation2 + $0xa0] sm:$0xf] %vm1114, %v1045
      %1156 = vst.msk [vmem:[#allocation2 + $0xa4] sm:$0xf] %vm1114, %v1047
      %1157 = vst.msk [vmem:[#allocation2 + $0xa8] sm:$0xf] %vm1114, %v1049
      %1158 = vst.msk [vmem:[#allocation2 + $0xac] sm:$0xf] %vm1114, %v1051
      %1159 = vst.msk [vmem:[#allocation2 + $0xb0] sm:$0xf] %vm1114, %v1053
      %1160 = vst.msk [vmem:[#allocation2 + $0xb4] sm:$0xf] %vm1114, %v1055
      %1161 = vst.msk [vmem:[#allocation2 + $0xb8] sm:$0xf] %vm1114, %v1057
      %1162 = vst.msk [vmem:[#allocation2 + $0xbc] sm:$0xf] %vm1114, %v1059
      %1163 = vst.msk [vmem:[#allocation2 + $0xc0] sm:$0xf] %vm1114, %v1061
      %vm1164 = vcmask 1043968
      %vm1165 = vmand %vm1164, %vm462
      %v1166 = vld [vmem:[#allocation2 + $0xc4] sm:$0xf]
      %v1167 = vsel %vm1165, %v1063, %v1166
      %1168 = vst [vmem:[#allocation2 + $0xc4] sm:$0xf] %v1167
      %vm1169 = vcmask 1043971
      %vm1170 = vsmask.f32 7950
      %vm1171 = vmand %vm1169, %vm1170
      %v1172 = vld [vmem:[#allocation2 + $0xc4] sm:$0x8]
      %v1173 = vsel %vm1171, 0, %v1172
      %1174 = vst [vmem:[#allocation2 + $0xc4] sm:$0x8] %v1173
      %v1175 = vld [vmem:[#allocation2 + $0x4] sm:$0xc]
      %v1176 = vld [vmem:[#allocation2 + $0x8] sm:$0xf]
      %v1177 = vld [vmem:[#allocation2 + $0xc] sm:$0xf]
      %v1178 = vld [vmem:[#allocation2 + $0x10] sm:$0xf]
      %v1179 = vld [vmem:[#allocation2 + $0x14] sm:$0xf]
      %v1180 = vld [vmem:[#allocation2 + $0x18] sm:$0xf]
      %v1181 = vld [vmem:[#allocation2 + $0x1c] sm:$0xf]
      %v1182 = vld [vmem:[#allocation2 + $0x20] sm:$0xf]
      %v1183 = vld [vmem:[#allocation2 + $0x24] sm:$0xf]
      %v1184 = vld [vmem:[#allocation2 + $0x28] sm:$0xf]
      %v1185 = vld [vmem:[#allocation2 + $0x2c] sm:$0xf]
      %v1186 = vld [vmem:[#allocation2 + $0x30] sm:$0xf]
      %v1187 = vld [vmem:[#allocation2 + $0x34] sm:$0xf]
      %v1188 = vld [vmem:[#allocation2 + $0x38] sm:$0xf]
      %v1189 = vld [vmem:[#allocation2 + $0x3c] sm:$0x7]
      %v1190 = vld [vmem:[%s2] sm:$0xf]
      %v1191 = vld [vmem:[%s2 + $0x4] sm:$0xf]
      %v1192 = vld [vmem:[%s2 + $0x8] sm:$0xf]
      %v1193 = vld [vmem:[%s2 + $0xc] sm:$0xf]
      %v1194 = vld [vmem:[%s2 + $0x10] sm:$0xf]
      %v1195 = vld [vmem:[%s2 + $0x14] sm:$0xf]
      %v1196 = vld [vmem:[%s2 + $0x18] sm:$0xf]
      %v1197 = vld [vmem:[%s2 + $0x1c] sm:$0xf]
      %v1198 = vld [vmem:[%s2 + $0x20] sm:$0xf]
      %v1199 = vld [vmem:[%s2 + $0x24] sm:$0xf]
      %v1200 = vld [vmem:[%s2 + $0x28] sm:$0xf]
      %v1201 = vld [vmem:[%s2 + $0x2c] sm:$0xf]
      %v1202 = vld [vmem:[%s2 + $0x30] sm:$0xf]
      %v1203 = vld [vmem:[%s2 + $0x34] sm:$0xf]
      %v1204 = vld [vmem:[%s2 + $0x38] sm:$0xf]
      %v1205 = vld [vmem:[%s2 + $0x3c] sm:$0xf]
      %v1206 = vld [vmem:[#allocation2 + $0x4] sm:$0x8]
      %v1207 = vld [vmem:[#allocation2 + $0x3c] sm:$0xf]
      %v1208 = vld [vmem:[%s2 + $0x40] sm:$0xf]
      %v1209 = vld [vmem:[%s2 + $0x44] sm:$0xf]
      %v1210 = vld [vmem:[%s2 + $0x48] sm:$0xf]
      %v1211 = vld [vmem:[%s2 + $0x4c] sm:$0xf]
      %v1212 = vld [vmem:[%s2 + $0x50] sm:$0xf]
      %v1213 = vld [vmem:[%s2 + $0x54] sm:$0xf]
      %v1214 = vld [vmem:[%s2 + $0x58] sm:$0xf]
      %v1215 = vld [vmem:[%s2 + $0x5c] sm:$0xf]
      %v1231 = vunpack.c.l.b16 %v1206
      %v1232 = vunpack.c.l.b16 %v1176
      %v1233 = vunpack.c.l.b16 %v1177
      %v1234 = vunpack.c.l.b16 %v1178
      %v1235 = vunpack.c.l.b16 %v1179
      %v1236 = vunpack.c.l.b16 %v1180
      %v1237 = vunpack.c.l.b16 %v1181
      %v1238 = vunpack.c.l.b16 %v1182
      %v1239 = vunpack.c.l.b16 %v1183
      %v1240 = vunpack.c.l.b16 %v1184
      %v1241 = vunpack.c.l.b16 %v1185
      %v1242 = vunpack.c.l.b16 %v1186
      %v1243 = vunpack.c.l.b16 %v1187
      %v1244 = vunpack.c.l.b16 %v1188
      %v1245 = vunpack.c.l.b16 %v1207
      %v1246 = vpack.c.b16 %v1232, %v1231
      %v1247 = vpack.c.b16 %v1234, %v1233
      %v1248 = vpack.c.b16 %v1236, %v1235
      %v1249 = vpack.c.b16 %v1238, %v1237
      %v1250 = vpack.c.b16 %v1240, %v1239
      %v1251 = vpack.c.b16 %v1242, %v1241
      %v1252 = vpack.c.b16 %v1244, %v1243
      %v1253 = vpack.c.b16 %v1245, %v1245
      %vm1254 = vsmask.f32 4352
      %v1256 = vshrl.u32 %v1246, 16
      %v1258 = vrot.slane %v1256, 3
      %v1259 = vshll.u32 %v1246, 16
      %v1261 = vrot.slane %v1259, 4
      %v1262 = vor.u32 %v1258, %v1261
      %v1264 = vshrl.u32 %v1247, 16
      %v1266 = vrot.slane %v1264, 3
      %v1267 = vshll.u32 %v1247, 16
      %v1269 = vrot.slane %v1267, 4
      %v1270 = vor.u32 %v1266, %v1269
      %v1271 = vsel %vm1254, %v1262, %v1270
      %v1273 = vshrl.u32 %v1248, 16
      %v1275 = vrot.slane %v1273, 3
      %v1276 = vshll.u32 %v1248, 16
      %v1278 = vrot.slane %v1276, 4
      %v1279 = vor.u32 %v1275, %v1278
      %v1280 = vsel %vm1254, %v1270, %v1279
      %v1282 = vshrl.u32 %v1249, 16
      %v1284 = vrot.slane %v1282, 3
      %v1285 = vshll.u32 %v1249, 16
      %v1287 = vrot.slane %v1285, 4
      %v1288 = vor.u32 %v1284, %v1287
      %v1289 = vsel %vm1254, %v1279, %v1288
      %v1291 = vshrl.u32 %v1250, 16
      %v1293 = vrot.slane %v1291, 3
      %v1294 = vshll.u32 %v1250, 16
      %v1296 = vrot.slane %v1294, 4
      %v1297 = vor.u32 %v1293, %v1296
      %v1298 = vsel %vm1254, %v1288, %v1297
      %v1300 = vshrl.u32 %v1251, 16
      %v1302 = vrot.slane %v1300, 3
      %v1303 = vshll.u32 %v1251, 16
      %v1305 = vrot.slane %v1303, 4
      %v1306 = vor.u32 %v1302, %v1305
      %v1307 = vsel %vm1254, %v1297, %v1306
      %v1309 = vshrl.u32 %v1252, 16
      %v1311 = vrot.slane %v1309, 3
      %v1312 = vshll.u32 %v1252, 16
      %v1314 = vrot.slane %v1312, 4
      %v1315 = vor.u32 %v1311, %v1314
      %v1316 = vsel %vm1254, %v1306, %v1315
      %v1318 = vshrl.u32 %v1253, 16
      %v1320 = vrot.slane %v1318, 3
      %v1321 = vshll.u32 %v1253, 16
      %v1323 = vrot.slane %v1321, 4
      %v1324 = vor.u32 %v1320, %v1323
      %v1325 = vsel %vm1254, %v1315, %v1324
      %v1334 = vunpack.c.l.b16 %v1208
      %v1335 = vunpack.c.l.b16 %v1209
      %v1336 = vunpack.c.l.b16 %v1210
      %v1337 = vunpack.c.l.b16 %v1211
      %v1338 = vunpack.c.l.b16 %v1212
      %v1339 = vunpack.c.l.b16 %v1213
      %v1340 = vunpack.c.l.b16 %v1214
      %v1341 = vunpack.c.l.b16 %v1215
      %v1342 = vpack.c.b16 %v1335, %v1334
      %v1343 = vpack.c.b16 %v1337, %v1336
      %v1344 = vpack.c.b16 %v1339, %v1338
      %v1345 = vpack.c.b16 %v1341, %v1340
      %vm1350 = vcmask 523264
      %v1352 = vsel %vm1350, %v1271, 0
      %v1355 = vsel %vm1350, %v1280, 0
      %v1358 = vsel %vm1350, %v1289, 0
      %v1361 = vsel %vm1350, %v1298, 0
      %v1364 = vsel %vm1350, %v1307, 0
      %v1367 = vsel %vm1350, %v1316, 0
      %v1370 = vsel %vm1350, %v1325, 0
      %1372 = vmatpush.bf16.msra.mxu0 0
      %1373 = vmatpush.bf16.msra.mxu0 0
      %1374 = vmatpush.bf16.msra.mxu0 0
      %1375 = vmatpush.bf16.msra.mxu0 0
      %1376 = vmatpush.bf16.msra.mxu0 %v1345
      %1377 = vmatpush.bf16.msra.mxu0 %v1344
      %1378 = vmatpush.bf16.msra.mxu0 %v1343
      %1379 = vmatpush.bf16.msra.mxu0 %v1342
      %1380 = vmatmul.bf16.gmra.mxu0 %v1352
      %v1381 = vpop.f32.mrf.mxu0
      %v1382 = vadd.f32 0.0, %v1381
      %v1383 = vpop.f32.mrf.mxu0
      %v1384 = vadd.f32 0.0, %v1383
      %1385 = vmatmul.bf16.gmra.mxu0 %v1355
      %v1386 = vpop.f32.mrf.mxu0
      %v1387 = vadd.f32 0.0, %v1386
      %v1388 = vpop.f32.mrf.mxu0
      %v1389 = vadd.f32 0.0, %v1388
      %1390 = vmatmul.bf16.gmra.mxu0 %v1358
      %v1391 = vpop.f32.mrf.mxu0
      %v1392 = vadd.f32 0.0, %v1391
      %v1393 = vpop.f32.mrf.mxu0
      %v1394 = vadd.f32 0.0, %v1393
      %1395 = vmatmul.bf16.gmra.mxu0 %v1361
      %v1396 = vpop.f32.mrf.mxu0
      %v1397 = vadd.f32 0.0, %v1396
      %v1398 = vpop.f32.mrf.mxu0
      %v1399 = vadd.f32 0.0, %v1398
      %1400 = vmatmul.bf16.gmra.mxu0 %v1364
      %v1401 = vpop.f32.mrf.mxu0
      %v1402 = vadd.f32 0.0, %v1401
      %v1403 = vpop.f32.mrf.mxu0
      %v1404 = vadd.f32 0.0, %v1403
      %1405 = vmatmul.bf16.gmra.mxu0 %v1367
      %v1406 = vpop.f32.mrf.mxu0
      %v1407 = vadd.f32 0.0, %v1406
      %v1408 = vpop.f32.mrf.mxu0
      %v1409 = vadd.f32 0.0, %v1408
      %1410 = vmatmul.bf16.gmra.mxu0 %v1370
      %v1411 = vpop.f32.mrf.mxu0
      %v1412 = vadd.f32 0.0, %v1411
      %v1413 = vpop.f32.mrf.mxu0
      %v1414 = vadd.f32 0.0, %v1413
      %1415 = vdwg.mxu0
      %v1418 = vunpack.c.l.b16 %v1175
      %v1419 = vunpack.c.l.b16 %v1189
      %v1420 = vpack.c.b16 %v1232, %v1418
      %v1421 = vpack.c.b16 %v1419, %v1419
      %vm1422 = vsmask.f32 5376
      %v1424 = vshrl.u32 %v1420, 16
      %v1426 = vrot.slane %v1424, 2
      %v1427 = vshll.u32 %v1420, 16
      %v1429 = vrot.slane %v1427, 3
      %v1430 = vor.u32 %v1426, %v1429
      %v1431 = vrot.slane %v1264, 2
      %v1432 = vrot.slane %v1267, 3
      %v1433 = vor.u32 %v1431, %v1432
      %v1434 = vsel %vm1422, %v1430, %v1433
      %v1435 = vrot.slane %v1273, 2
      %v1436 = vrot.slane %v1276, 3
      %v1437 = vor.u32 %v1435, %v1436
      %v1438 = vsel %vm1422, %v1433, %v1437
      %v1439 = vrot.slane %v1282, 2
      %v1440 = vrot.slane %v1285, 3
      %v1441 = vor.u32 %v1439, %v1440
      %v1442 = vsel %vm1422, %v1437, %v1441
      %v1443 = vrot.slane %v1291, 2
      %v1444 = vrot.slane %v1294, 3
      %v1445 = vor.u32 %v1443, %v1444
      %v1446 = vsel %vm1422, %v1441, %v1445
      %v1447 = vrot.slane %v1300, 2
      %v1448 = vrot.slane %v1303, 3
      %v1449 = vor.u32 %v1447, %v1448
      %v1450 = vsel %vm1422, %v1445, %v1449
      %v1451 = vrot.slane %v1309, 2
      %v1452 = vrot.slane %v1312, 3
      %v1453 = vor.u32 %v1451, %v1452
      %v1454 = vsel %vm1422, %v1449, %v1453
      %v1456 = vshrl.u32 %v1421, 16
      %v1458 = vrot.slane %v1456, 2
      %v1459 = vshll.u32 %v1421, 16
      %v1461 = vrot.slane %v1459, 3
      %v1462 = vor.u32 %v1458, %v1461
      %v1463 = vsel %vm1422, %v1453, %v1462
      %v1487 = vunpack.c.l.b16 %v1190
      %v1488 = vunpack.c.l.b16 %v1191
      %v1489 = vunpack.c.l.b16 %v1192
      %v1490 = vunpack.c.l.b16 %v1193
      %v1491 = vunpack.c.l.b16 %v1194
      %v1492 = vunpack.c.l.b16 %v1195
      %v1493 = vunpack.c.l.b16 %v1196
      %v1494 = vunpack.c.l.b16 %v1197
      %v1495 = vunpack.c.l.b16 %v1198
      %v1496 = vunpack.c.l.b16 %v1199
      %v1497 = vunpack.c.l.b16 %v1200
      %v1498 = vunpack.c.l.b16 %v1201
      %v1499 = vunpack.c.l.b16 %v1202
      %v1500 = vunpack.c.l.b16 %v1203
      %v1501 = vunpack.c.l.b16 %v1204
      %v1502 = vunpack.c.l.b16 %v1205
      %v1503 = vpack.c.b16 %v1488, %v1487
      %v1504 = vpack.c.b16 %v1490, %v1489
      %v1505 = vpack.c.b16 %v1492, %v1491
      %v1506 = vpack.c.b16 %v1494, %v1493
      %v1507 = vpack.c.b16 %v1496, %v1495
      %v1508 = vpack.c.b16 %v1498, %v1497
      %v1509 = vpack.c.b16 %v1500, %v1499
      %v1510 = vpack.c.b16 %v1502, %v1501
      %1519 = vmatpush.bf16.msra.mxu0 %v1510
      %1520 = vmatpush.bf16.msra.mxu0 %v1509
      %1521 = vmatpush.bf16.msra.mxu0 %v1508
      %1522 = vmatpush.bf16.msra.mxu0 %v1507
      %1523 = vmatpush.bf16.msra.mxu0 %v1506
      %1524 = vmatpush.bf16.msra.mxu0 %v1505
      %1525 = vmatpush.bf16.msra.mxu0 %v1504
      %1526 = vmatpush.bf16.msra.mxu0 %v1503
      %1527 = vmatmul.bf16.gmra.mxu0 %v1434
      %v1528 = vpop.f32.mrf.mxu0
      %v1529 = vadd.f32 %v1382, %v1528
      %v1530 = vpop.f32.mrf.mxu0
      %v1531 = vadd.f32 %v1384, %v1530
      %1532 = vmatmul.bf16.gmra.mxu0 %v1438
      %v1533 = vpop.f32.mrf.mxu0
      %v1534 = vadd.f32 %v1387, %v1533
      %v1535 = vpop.f32.mrf.mxu0
      %v1536 = vadd.f32 %v1389, %v1535
      %1537 = vmatmul.bf16.gmra.mxu0 %v1442
      %v1538 = vpop.f32.mrf.mxu0
      %v1539 = vadd.f32 %v1392, %v1538
      %v1540 = vpop.f32.mrf.mxu0
      %v1541 = vadd.f32 %v1394, %v1540
      %1542 = vmatmul.bf16.gmra.mxu0 %v1446
      %v1543 = vpop.f32.mrf.mxu0
      %v1544 = vadd.f32 %v1397, %v1543
      %v1545 = vpop.f32.mrf.mxu0
      %v1546 = vadd.f32 %v1399, %v1545
      %1547 = vmatmul.bf16.gmra.mxu0 %v1450
      %v1548 = vpop.f32.mrf.mxu0
      %v1549 = vadd.f32 %v1402, %v1548
      %v1550 = vpop.f32.mrf.mxu0
      %v1551 = vadd.f32 %v1404, %v1550
      %1552 = vmatmul.bf16.gmra.mxu0 %v1454
      %v1553 = vpop.f32.mrf.mxu0
      %v1554 = vadd.f32 %v1407, %v1553
      %v1555 = vpop.f32.mrf.mxu0
      %v1556 = vadd.f32 %v1409, %v1555
      %1557 = vmatmul.bf16.gmra.mxu0 %v1463
      %v1558 = vpop.f32.mrf.mxu0
      %v1559 = vadd.f32 %v1412, %v1558
      %v1560 = vpop.f32.mrf.mxu0
      %v1561 = vadd.f32 %v1414, %v1560
      %1562 = vdwg.mxu0
      %v1563 = vld [vmem:[#allocation2 + $0xc] sm:$0x8]
      %v1564 = vld [vmem:[#allocation2 + $0x10] sm:$0xf]
      %v1565 = vld [vmem:[#allocation2 + $0x14] sm:$0xf]
      %v1566 = vld [vmem:[#allocation2 + $0x18] sm:$0xf]
      %v1567 = vld [vmem:[#allocation2 + $0x1c] sm:$0xf]
      %v1568 = vld [vmem:[#allocation2 + $0x20] sm:$0xf]
      %v1569 = vld [vmem:[#allocation2 + $0x24] sm:$0xf]
      %v1570 = vld [vmem:[#allocation2 + $0x28] sm:$0xf]
      %v1571 = vld [vmem:[#allocation2 + $0x2c] sm:$0xf]
      %v1572 = vld [vmem:[#allocation2 + $0x30] sm:$0xf]
      %v1573 = vld [vmem:[#allocation2 + $0x34] sm:$0xf]
      %v1574 = vld [vmem:[#allocation2 + $0x38] sm:$0xf]
      %v1575 = vld [vmem:[#allocation2 + $0x3c] sm:$0xf]
      %v1576 = vld [vmem:[#allocation2 + $0x40] sm:$0xf]
      %v1577 = vld [vmem:[#allocation2 + $0x44] sm:$0xf]
      %v1578 = vld [vmem:[%s2 + $0x60] sm:$0xf]
      %v1579 = vld [vmem:[%s2 + $0x64] sm:$0xf]
      %v1580 = vld [vmem:[%s2 + $0x68] sm:$0xf]
      %v1581 = vld [vmem:[%s2 + $0x6c] sm:$0xf]
      %v1582 = vld [vmem:[%s2 + $0x70] sm:$0xf]
      %v1583 = vld [vmem:[%s2 + $0x74] sm:$0xf]
      %v1584 = vld [vmem:[%s2 + $0x78] sm:$0xf]
      %v1585 = vld [vmem:[%s2 + $0x7c] sm:$0xf]
      %v1586 = vld [vmem:[%s2 + $0x80] sm:$0xf]
      %v1587 = vld [vmem:[%s2 + $0x84] sm:$0xf]
      %v1588 = vld [vmem:[%s2 + $0x88] sm:$0xf]
      %v1589 = vld [vmem:[%s2 + $0x8c] sm:$0xf]
      %v1590 = vld [vmem:[%s2 + $0x90] sm:$0xf]
      %v1591 = vld [vmem:[%s2 + $0x94] sm:$0xf]
      %v1592 = vld [vmem:[%s2 + $0x98] sm:$0xf]
      %v1593 = vld [vmem:[%s2 + $0x9c] sm:$0xf]
      %v1609 = vunpack.c.l.b16 %v1563
      %v1610 = vunpack.c.l.b16 %v1564
      %v1611 = vunpack.c.l.b16 %v1565
      %v1612 = vunpack.c.l.b16 %v1566
      %v1613 = vunpack.c.l.b16 %v1567
      %v1614 = vunpack.c.l.b16 %v1568
      %v1615 = vunpack.c.l.b16 %v1569
      %v1616 = vunpack.c.l.b16 %v1570
      %v1617 = vunpack.c.l.b16 %v1571
      %v1618 = vunpack.c.l.b16 %v1572
      %v1619 = vunpack.c.l.b16 %v1573
      %v1620 = vunpack.c.l.b16 %v1574
      %v1621 = vunpack.c.l.b16 %v1575
      %v1622 = vunpack.c.l.b16 %v1576
      %v1623 = vunpack.c.l.b16 %v1577
      %v1624 = vpack.c.b16 %v1610, %v1609
      %v1625 = vpack.c.b16 %v1612, %v1611
      %v1626 = vpack.c.b16 %v1614, %v1613
      %v1627 = vpack.c.b16 %v1616, %v1615
      %v1628 = vpack.c.b16 %v1618, %v1617
      %v1629 = vpack.c.b16 %v1620, %v1619
      %v1630 = vpack.c.b16 %v1622, %v1621
      %v1631 = vpack.c.b16 %v1623, %v1623
      %v1633 = vshrl.u32 %v1624, 16
      %v1635 = vrot.slane %v1633, 3
      %v1636 = vshll.u32 %v1624, 16
      %v1638 = vrot.slane %v1636, 4
      %v1639 = vor.u32 %v1635, %v1638
      %v1641 = vshrl.u32 %v1625, 16
      %v1643 = vrot.slane %v1641, 3
      %v1644 = vshll.u32 %v1625, 16
      %v1646 = vrot.slane %v1644, 4
      %v1647 = vor.u32 %v1643, %v1646
      %v1648 = vsel %vm1254, %v1639, %v1647
      %v1650 = vshrl.u32 %v1626, 16
      %v1652 = vrot.slane %v1650, 3
      %v1653 = vshll.u32 %v1626, 16
      %v1655 = vrot.slane %v1653, 4
      %v1656 = vor.u32 %v1652, %v1655
      %v1657 = vsel %vm1254, %v1647, %v1656
      %v1659 = vshrl.u32 %v1627, 16
      %v1661 = vrot.slane %v1659, 3
      %v1662 = vshll.u32 %v1627, 16
      %v1664 = vrot.slane %v1662, 4
      %v1665 = vor.u32 %v1661, %v1664
      %v1666 = vsel %vm1254, %v1656, %v1665
      %v1668 = vshrl.u32 %v1628, 16
      %v1670 = vrot.slane %v1668, 3
      %v1671 = vshll.u32 %v1628, 16
      %v1673 = vrot.slane %v1671, 4
      %v1674 = vor.u32 %v1670, %v1673
      %v1675 = vsel %vm1254, %v1665, %v1674
      %v1677 = vshrl.u32 %v1629, 16
      %v1679 = vrot.slane %v1677, 3
      %v1680 = vshll.u32 %v1629, 16
      %v1682 = vrot.slane %v1680, 4
      %v1683 = vor.u32 %v1679, %v1682
      %v1684 = vsel %vm1254, %v1674, %v1683
      %v1686 = vshrl.u32 %v1630, 16
      %v1688 = vrot.slane %v1686, 3
      %v1689 = vshll.u32 %v1630, 16
      %v1691 = vrot.slane %v1689, 4
      %v1692 = vor.u32 %v1688, %v1691
      %v1693 = vsel %vm1254, %v1683, %v1692
      %v1695 = vshrl.u32 %v1631, 16
      %v1697 = vrot.slane %v1695, 3
      %v1698 = vshll.u32 %v1631, 16
      %v1700 = vrot.slane %v1698, 4
      %v1701 = vor.u32 %v1697, %v1700
      %v1702 = vsel %vm1254, %v1692, %v1701
      %v1726 = vunpack.c.l.b16 %v1578
      %v1727 = vunpack.c.l.b16 %v1579
      %v1728 = vunpack.c.l.b16 %v1580
      %v1729 = vunpack.c.l.b16 %v1581
      %v1730 = vunpack.c.l.b16 %v1582
      %v1731 = vunpack.c.l.b16 %v1583
      %v1732 = vunpack.c.l.b16 %v1584
      %v1733 = vunpack.c.l.b16 %v1585
      %v1734 = vunpack.c.l.b16 %v1586
      %v1735 = vunpack.c.l.b16 %v1587
      %v1736 = vunpack.c.l.b16 %v1588
      %v1737 = vunpack.c.l.b16 %v1589
      %v1738 = vunpack.c.l.b16 %v1590
      %v1739 = vunpack.c.l.b16 %v1591
      %v1740 = vunpack.c.l.b16 %v1592
      %v1741 = vunpack.c.l.b16 %v1593
      %v1742 = vpack.c.b16 %v1727, %v1726
      %v1743 = vpack.c.b16 %v1729, %v1728
      %v1744 = vpack.c.b16 %v1731, %v1730
      %v1745 = vpack.c.b16 %v1733, %v1732
      %v1746 = vpack.c.b16 %v1735, %v1734
      %v1747 = vpack.c.b16 %v1737, %v1736
      %v1748 = vpack.c.b16 %v1739, %v1738
      %v1749 = vpack.c.b16 %v1741, %v1740
      %1758 = vmatpush.bf16.msra.mxu0 %v1749
      %1759 = vmatpush.bf16.msra.mxu0 %v1748
      %1760 = vmatpush.bf16.msra.mxu0 %v1747
      %1761 = vmatpush.bf16.msra.mxu0 %v1746
      %1762 = vmatpush.bf16.msra.mxu0 %v1745
      %1763 = vmatpush.bf16.msra.mxu0 %v1744
      %1764 = vmatpush.bf16.msra.mxu0 %v1743
      %1765 = vmatpush.bf16.msra.mxu0 %v1742
      %1766 = vmatmul.bf16.gmra.mxu0 %v1648
      %v1767 = vpop.f32.mrf.mxu0
      %v1768 = vadd.f32 0.0, %v1767
      %v1769 = vpop.f32.mrf.mxu0
      %v1770 = vadd.f32 0.0, %v1769
      %1771 = vmatmul.bf16.gmra.mxu0 %v1657
      %v1772 = vpop.f32.mrf.mxu0
      %v1773 = vadd.f32 0.0, %v1772
      %v1774 = vpop.f32.mrf.mxu0
      %v1775 = vadd.f32 0.0, %v1774
      %1776 = vmatmul.bf16.gmra.mxu0 %v1666
      %v1777 = vpop.f32.mrf.mxu0
      %v1778 = vadd.f32 0.0, %v1777
      %v1779 = vpop.f32.mrf.mxu0
      %v1780 = vadd.f32 0.0, %v1779
      %1781 = vmatmul.bf16.gmra.mxu0 %v1675
      %v1782 = vpop.f32.mrf.mxu0
      %v1783 = vadd.f32 0.0, %v1782
      %v1784 = vpop.f32.mrf.mxu0
      %v1785 = vadd.f32 0.0, %v1784
      %1786 = vmatmul.bf16.gmra.mxu0 %v1684
      %v1787 = vpop.f32.mrf.mxu0
      %v1788 = vadd.f32 0.0, %v1787
      %v1789 = vpop.f32.mrf.mxu0
      %v1790 = vadd.f32 0.0, %v1789
      %1791 = vmatmul.bf16.gmra.mxu0 %v1693
      %v1792 = vpop.f32.mrf.mxu0
      %v1793 = vadd.f32 0.0, %v1792
      %v1794 = vpop.f32.mrf.mxu0
      %v1795 = vadd.f32 0.0, %v1794
      %1796 = vmatmul.bf16.gmra.mxu0 %v1702
      %v1797 = vpop.f32.mrf.mxu0
      %v1798 = vadd.f32 0.0, %v1797
      %v1799 = vpop.f32.mrf.mxu0
      %v1800 = vadd.f32 0.0, %v1799
      %1801 = vdwg.mxu0
      %v1802 = vadd.f32 %v1529, %v1768
      %v1803 = vadd.f32 %v1531, %v1770
      %v1804 = vadd.f32 %v1534, %v1773
      %v1805 = vadd.f32 %v1536, %v1775
      %v1806 = vadd.f32 %v1539, %v1778
      %v1807 = vadd.f32 %v1541, %v1780
      %v1808 = vadd.f32 %v1544, %v1783
      %v1809 = vadd.f32 %v1546, %v1785
      %v1810 = vadd.f32 %v1549, %v1788
      %v1811 = vadd.f32 %v1551, %v1790
      %v1812 = vadd.f32 %v1554, %v1793
      %v1813 = vadd.f32 %v1556, %v1795
      %v1814 = vadd.f32 %v1559, %v1798
      %v1815 = vadd.f32 %v1561, %v1800
      %v1816 = vld [vmem:[#allocation2 + $0x10] sm:$0xf]
      %v1817 = vld [vmem:[#allocation2 + $0x14] sm:$0xf]
      %v1818 = vld [vmem:[#allocation2 + $0x18] sm:$0xf]
      %v1819 = vld [vmem:[#allocation2 + $0x1c] sm:$0xf]
      %v1820 = vld [vmem:[#allocation2 + $0x20] sm:$0xf]
      %v1821 = vld [vmem:[#allocation2 + $0x24] sm:$0xf]
      %v1822 = vld [vmem:[#allocation2 + $0x28] sm:$0xf]
      %v1823 = vld [vmem:[#allocation2 + $0x2c] sm:$0xf]
      %v1824 = vld [vmem:[#allocation2 + $0x30] sm:$0xf]
      %v1825 = vld [vmem:[#allocation2 + $0x34] sm:$0xf]
      %v1826 = vld [vmem:[#allocation2 + $0x38] sm:$0xf]
      %v1827 = vld [vmem:[#allocation2 + $0x3c] sm:$0xf]
      %v1828 = vld [vmem:[#allocation2 + $0x40] sm:$0xf]
      %v1829 = vld [vmem:[#allocation2 + $0x44] sm:$0xf]
      %v1830 = vld [vmem:[#allocation2 + $0x48] sm:$0x1]
      %v1831 = vld [vmem:[%s2 + $0xa0] sm:$0xf]
      %v1832 = vld [vmem:[%s2 + $0xa4] sm:$0xf]
      %v1833 = vld [vmem:[%s2 + $0xa8] sm:$0xf]
      %v1834 = vld [vmem:[%s2 + $0xac] sm:$0xf]
      %v1835 = vld [vmem:[%s2 + $0xb0] sm:$0xf]
      %v1836 = vld [vmem:[%s2 + $0xb4] sm:$0xf]
      %v1837 = vld [vmem:[%s2 + $0xb8] sm:$0xf]
      %v1838 = vld [vmem:[%s2 + $0xbc] sm:$0xf]
      %v1854 = vunpack.c.l.b16 %v1816
      %v1855 = vunpack.c.l.b16 %v1817
      %v1856 = vunpack.c.l.b16 %v1818
      %v1857 = vunpack.c.l.b16 %v1819
      %v1858 = vunpack.c.l.b16 %v1820
      %v1859 = vunpack.c.l.b16 %v1821
      %v1860 = vunpack.c.l.b16 %v1822
      %v1861 = vunpack.c.l.b16 %v1823
      %v1862 = vunpack.c.l.b16 %v1824
      %v1863 = vunpack.c.l.b16 %v1825
      %v1864 = vunpack.c.l.b16 %v1826
      %v1865 = vunpack.c.l.b16 %v1827
      %v1866 = vunpack.c.l.b16 %v1828
      %v1867 = vunpack.c.l.b16 %v1829
      %v1868 = vunpack.c.l.b16 %v1830
      %v1869 = vpack.c.b16 %v1855, %v1854
      %v1870 = vpack.c.b16 %v1857, %v1856
      %v1871 = vpack.c.b16 %v1859, %v1858
      %v1872 = vpack.c.b16 %v1861, %v1860
      %v1873 = vpack.c.b16 %v1863, %v1862
      %v1874 = vpack.c.b16 %v1865, %v1864
      %v1875 = vpack.c.b16 %v1867, %v1866
      %v1876 = vpack.c.b16 %v1868, %v1868
      %vm1877 = vsmask.f32 7424
      %v1879 = vshrl.u32 %v1869, 16
      %v1881 = vshll.u32 %v1869, 16
      %v1883 = vrot.slane %v1881, 1
      %v1884 = vor.u32 %v1879, %v1883
      %v1886 = vshll.u32 %v1870, 16
      %v1888 = vrot.slane %v1886, 1
      %v1889 = vsel %vm1877, %v1884, %v1888
      %v1890 = vshrl.u32 %v1870, 16
      %v1892 = vor.u32 %v1890, %v1888
      %v1894 = vshll.u32 %v1871, 16
      %v1896 = vrot.slane %v1894, 1
      %v1897 = vsel %vm1877, %v1892, %v1896
      %v1898 = vshrl.u32 %v1871, 16
      %v1900 = vor.u32 %v1898, %v1896
      %v1902 = vshll.u32 %v1872, 16
      %v1904 = vrot.slane %v1902, 1
      %v1905 = vsel %vm1877, %v1900, %v1904
      %v1906 = vshrl.u32 %v1872, 16
      %v1908 = vor.u32 %v1906, %v1904
      %v1910 = vshll.u32 %v1873, 16
      %v1912 = vrot.slane %v1910, 1
      %v1913 = vsel %vm1877, %v1908, %v1912
      %v1914 = vshrl.u32 %v1873, 16
      %v1916 = vor.u32 %v1914, %v1912
      %v1918 = vshll.u32 %v1874, 16
      %v1920 = vrot.slane %v1918, 1
      %v1921 = vsel %vm1877, %v1916, %v1920
      %v1922 = vshrl.u32 %v1874, 16
      %v1924 = vor.u32 %v1922, %v1920
      %v1926 = vshll.u32 %v1875, 16
      %v1928 = vrot.slane %v1926, 1
      %v1929 = vsel %vm1877, %v1924, %v1928
      %v1930 = vshrl.u32 %v1875, 16
      %v1932 = vor.u32 %v1930, %v1928
      %v1934 = vshll.u32 %v1876, 16
      %v1936 = vrot.slane %v1934, 1
      %v1937 = vsel %vm1877, %v1932, %v1936
      %v1946 = vunpack.c.l.b16 %v1831
      %v1947 = vunpack.c.l.b16 %v1832
      %v1948 = vunpack.c.l.b16 %v1833
      %v1949 = vunpack.c.l.b16 %v1834
      %v1950 = vunpack.c.l.b16 %v1835
      %v1951 = vunpack.c.l.b16 %v1836
      %v1952 = vunpack.c.l.b16 %v1837
      %v1953 = vunpack.c.l.b16 %v1838
      %v1954 = vpack.c.b16 %v1947, %v1946
      %v1955 = vpack.c.b16 %v1949, %v1948
      %v1956 = vpack.c.b16 %v1951, %v1950
      %v1957 = vpack.c.b16 %v1953, %v1952
      %v1963 = vsel %vm1350, %v1889, 0
      %v1966 = vsel %vm1350, %v1897, 0
      %v1969 = vsel %vm1350, %v1905, 0
      %v1972 = vsel %vm1350, %v1913, 0
      %v1975 = vsel %vm1350, %v1921, 0
      %v1978 = vsel %vm1350, %v1929, 0
      %v1981 = vsel %vm1350, %v1937, 0
      %1983 = vmatpush.bf16.msra.mxu0 0
      %1984 = vmatpush.bf16.msra.mxu0 0
      %1985 = vmatpush.bf16.msra.mxu0 0
      %1986 = vmatpush.bf16.msra.mxu0 0
      %1987 = vmatpush.bf16.msra.mxu0 %v1957
      %1988 = vmatpush.bf16.msra.mxu0 %v1956
      %1989 = vmatpush.bf16.msra.mxu0 %v1955
      %1990 = vmatpush.bf16.msra.mxu0 %v1954
      %1991 = vmatmul.bf16.gmra.mxu0 %v1963
      %v1992 = vpop.f32.mrf.mxu0
      %v1993 = vadd.f32 0.0, %v1992
      %v1994 = vpop.f32.mrf.mxu0
      %v1995 = vadd.f32 0.0, %v1994
      %1996 = vmatmul.bf16.gmra.mxu0 %v1966
      %v1997 = vpop.f32.mrf.mxu0
      %v1998 = vadd.f32 0.0, %v1997
      %v1999 = vpop.f32.mrf.mxu0
      %v2000 = vadd.f32 0.0, %v1999
      %2001 = vmatmul.bf16.gmra.mxu0 %v1969
      %v2002 = vpop.f32.mrf.mxu0
      %v2003 = vadd.f32 0.0, %v2002
      %v2004 = vpop.f32.mrf.mxu0
      %v2005 = vadd.f32 0.0, %v2004
      %2006 = vmatmul.bf16.gmra.mxu0 %v1972
      %v2007 = vpop.f32.mrf.mxu0
      %v2008 = vadd.f32 0.0, %v2007
      %v2009 = vpop.f32.mrf.mxu0
      %v2010 = vadd.f32 0.0, %v2009
      %2011 = vmatmul.bf16.gmra.mxu0 %v1975
      %v2012 = vpop.f32.mrf.mxu0
      %v2013 = vadd.f32 0.0, %v2012
      %v2014 = vpop.f32.mrf.mxu0
      %v2015 = vadd.f32 0.0, %v2014
      %2016 = vmatmul.bf16.gmra.mxu0 %v1978
      %v2017 = vpop.f32.mrf.mxu0
      %v2018 = vadd.f32 0.0, %v2017
      %v2019 = vpop.f32.mrf.mxu0
      %v2020 = vadd.f32 0.0, %v2019
      %2021 = vmatmul.bf16.gmra.mxu0 %v1981
      %v2022 = vpop.f32.mrf.mxu0
      %v2023 = vadd.f32 0.0, %v2022
      %v2024 = vpop.f32.mrf.mxu0
      %v2025 = vadd.f32 0.0, %v2024
      %2026 = vdwg.mxu0
      %v2027 = vadd.f32 %v1802, %v1993
      %v2028 = vadd.f32 %v1803, %v1995
      %v2029 = vadd.f32 %v1804, %v1998
      %v2030 = vadd.f32 %v1805, %v2000
      %v2031 = vadd.f32 %v1806, %v2003
      %v2032 = vadd.f32 %v1807, %v2005
      %v2033 = vadd.f32 %v1808, %v2008
      %v2034 = vadd.f32 %v1809, %v2010
      %v2035 = vadd.f32 %v1810, %v2013
      %v2036 = vadd.f32 %v1811, %v2015
      %v2037 = vadd.f32 %v1812, %v2018
      %v2038 = vadd.f32 %v1813, %v2020
      %v2039 = vadd.f32 %v1814, %v2023
      %v2040 = vadd.f32 %v1815, %v2025
      %v2041 = vld [vmem:[#allocation2 + $0x18] sm:$0xf]
      %v2042 = vld [vmem:[#allocation2 + $0x1c] sm:$0xf]
      %v2043 = vld [vmem:[#allocation2 + $0x20] sm:$0xf]
      %v2044 = vld [vmem:[#allocation2 + $0x24] sm:$0xf]
      %v2045 = vld [vmem:[#allocation2 + $0x28] sm:$0xf]
      %v2046 = vld [vmem:[#allocation2 + $0x2c] sm:$0xf]
      %v2047 = vld [vmem:[#allocation2 + $0x30] sm:$0xf]
      %v2048 = vld [vmem:[#allocation2 + $0x34] sm:$0xf]
      %v2049 = vld [vmem:[#allocation2 + $0x38] sm:$0xf]
      %v2050 = vld [vmem:[#allocation2 + $0x3c] sm:$0xf]
      %v2051 = vld [vmem:[#allocation2 + $0x40] sm:$0xf]
      %v2052 = vld [vmem:[#allocation2 + $0x44] sm:$0xf]
      %v2053 = vld [vmem:[#allocation2 + $0x48] sm:$0xf]
      %v2054 = vld [vmem:[#allocation2 + $0x4c] sm:$0xf]
      %v2055 = vld [vmem:[#allocation2 + $0x50] sm:$0x1]
      %v2056 = vld [vmem:[%s2 + $0xc0] sm:$0xf]
      %v2057 = vld [vmem:[%s2 + $0xc4] sm:$0xf]
      %v2058 = vld [vmem:[%s2 + $0xc8] sm:$0xf]
      %v2059 = vld [vmem:[%s2 + $0xcc] sm:$0xf]
      %v2060 = vld [vmem:[%s2 + $0xd0] sm:$0xf]
      %v2061 = vld [vmem:[%s2 + $0xd4] sm:$0xf]
      %v2062 = vld [vmem:[%s2 + $0xd8] sm:$0xf]
      %v2063 = vld [vmem:[%s2 + $0xdc] sm:$0xf]
      %v2064 = vld [vmem:[%s2 + $0xe0] sm:$0xf]
      %v2065 = vld [vmem:[%s2 + $0xe4] sm:$0xf]
      %v2066 = vld [vmem:[%s2 + $0xe8] sm:$0xf]
      %v2067 = vld [vmem:[%s2 + $0xec] sm:$0xf]
      %v2068 = vld [vmem:[%s2 + $0xf0] sm:$0xf]
      %v2069 = vld [vmem:[%s2 + $0xf4] sm:$0xf]
      %v2070 = vld [vmem:[%s2 + $0xf8] sm:$0xf]
      %v2071 = vld [vmem:[%s2 + $0xfc] sm:$0xf]
      %v2087 = vunpack.c.l.b16 %v2041
      %v2088 = vunpack.c.l.b16 %v2042
      %v2089 = vunpack.c.l.b16 %v2043
      %v2090 = vunpack.c.l.b16 %v2044
      %v2091 = vunpack.c.l.b16 %v2045
      %v2092 = vunpack.c.l.b16 %v2046
      %v2093 = vunpack.c.l.b16 %v2047
      %v2094 = vunpack.c.l.b16 %v2048
      %v2095 = vunpack.c.l.b16 %v2049
      %v2096 = vunpack.c.l.b16 %v2050
      %v2097 = vunpack.c.l.b16 %v2051
      %v2098 = vunpack.c.l.b16 %v2052
      %v2099 = vunpack.c.l.b16 %v2053
      %v2100 = vunpack.c.l.b16 %v2054
      %v2101 = vunpack.c.l.b16 %v2055
      %v2102 = vpack.c.b16 %v2088, %v2087
      %v2103 = vpack.c.b16 %v2090, %v2089
      %v2104 = vpack.c.b16 %v2092, %v2091
      %v2105 = vpack.c.b16 %v2094, %v2093
      %v2106 = vpack.c.b16 %v2096, %v2095
      %v2107 = vpack.c.b16 %v2098, %v2097
      %v2108 = vpack.c.b16 %v2100, %v2099
      %v2109 = vpack.c.b16 %v2101, %v2101
      %v2111 = vshrl.u32 %v2102, 16
      %v2113 = vshll.u32 %v2102, 16
      %v2115 = vrot.slane %v2113, 1
      %v2116 = vor.u32 %v2111, %v2115
      %v2118 = vshll.u32 %v2103, 16
      %v2120 = vrot.slane %v2118, 1
      %v2121 = vsel %vm1877, %v2116, %v2120
      %v2122 = vshrl.u32 %v2103, 16
      %v2124 = vor.u32 %v2122, %v2120
      %v2126 = vshll.u32 %v2104, 16
      %v2128 = vrot.slane %v2126, 1
      %v2129 = vsel %vm1877, %v2124, %v2128
      %v2130 = vshrl.u32 %v2104, 16
      %v2132 = vor.u32 %v2130, %v2128
      %v2134 = vshll.u32 %v2105, 16
      %v2136 = vrot.slane %v2134, 1
      %v2137 = vsel %vm1877, %v2132, %v2136
      %v2138 = vshrl.u32 %v2105, 16
      %v2140 = vor.u32 %v2138, %v2136
      %v2142 = vshll.u32 %v2106, 16
      %v2144 = vrot.slane %v2142, 1
      %v2145 = vsel %vm1877, %v2140, %v2144
      %v2146 = vshrl.u32 %v2106, 16
      %v2148 = vor.u32 %v2146, %v2144
      %v2150 = vshll.u32 %v2107, 16
      %v2152 = vrot.slane %v2150, 1
      %v2153 = vsel %vm1877, %v2148, %v2152
      %v2154 = vshrl.u32 %v2107, 16
      %v2156 = vor.u32 %v2154, %v2152
      %v2158 = vshll.u32 %v2108, 16
      %v2160 = vrot.slane %v2158, 1
      %v2161 = vsel %vm1877, %v2156, %v2160
      %v2162 = vshrl.u32 %v2108, 16
      %v2164 = vor.u32 %v2162, %v2160
      %v2166 = vshll.u32 %v2109, 16
      %v2168 = vrot.slane %v2166, 1
      %v2169 = vsel %vm1877, %v2164, %v2168
      %v2193 = vunpack.c.l.b16 %v2056
      %v2194 = vunpack.c.l.b16 %v2057
      %v2195 = vunpack.c.l.b16 %v2058
      %v2196 = vunpack.c.l.b16 %v2059
      %v2197 = vunpack.c.l.b16 %v2060
      %v2198 = vunpack.c.l.b16 %v2061
      %v2199 = vunpack.c.l.b16 %v2062
      %v2200 = vunpack.c.l.b16 %v2063
      %v2201 = vunpack.c.l.b16 %v2064
      %v2202 = vunpack.c.l.b16 %v2065
      %v2203 = vunpack.c.l.b16 %v2066
      %v2204 = vunpack.c.l.b16 %v2067
      %v2205 = vunpack.c.l.b16 %v2068
      %v2206 = vunpack.c.l.b16 %v2069
      %v2207 = vunpack.c.l.b16 %v2070
      %v2208 = vunpack.c.l.b16 %v2071
      %v2209 = vpack.c.b16 %v2194, %v2193
      %v2210 = vpack.c.b16 %v2196, %v2195
      %v2211 = vpack.c.b16 %v2198, %v2197
      %v2212 = vpack.c.b16 %v2200, %v2199
      %v2213 = vpack.c.b16 %v2202, %v2201
      %v2214 = vpack.c.b16 %v2204, %v2203
      %v2215 = vpack.c.b16 %v2206, %v2205
      %v2216 = vpack.c.b16 %v2208, %v2207
      %2225 = vmatpush.bf16.msra.mxu0 %v2216
      %2226 = vmatpush.bf16.msra.mxu0 %v2215
      %2227 = vmatpush.bf16.msra.mxu0 %v2214
      %2228 = vmatpush.bf16.msra.mxu0 %v2213
      %2229 = vmatpush.bf16.msra.mxu0 %v2212
      %2230 = vmatpush.bf16.msra.mxu0 %v2211
      %2231 = vmatpush.bf16.msra.mxu0 %v2210
      %2232 = vmatpush.bf16.msra.mxu0 %v2209
      %2233 = vmatmul.bf16.gmra.mxu0 %v2121
      %v2234 = vpop.f32.mrf.mxu0
      %v2235 = vadd.f32 0.0, %v2234
      %v2236 = vpop.f32.mrf.mxu0
      %v2237 = vadd.f32 0.0, %v2236
      %2238 = vmatmul.bf16.gmra.mxu0 %v2129
      %v2239 = vpop.f32.mrf.mxu0
      %v2240 = vadd.f32 0.0, %v2239
      %v2241 = vpop.f32.mrf.mxu0
      %v2242 = vadd.f32 0.0, %v2241
      %2243 = vmatmul.bf16.gmra.mxu0 %v2137
      %v2244 = vpop.f32.mrf.mxu0
      %v2245 = vadd.f32 0.0, %v2244
      %v2246 = vpop.f32.mrf.mxu0
      %v2247 = vadd.f32 0.0, %v2246
      %2248 = vmatmul.bf16.gmra.mxu0 %v2145
      %v2249 = vpop.f32.mrf.mxu0
      %v2250 = vadd.f32 0.0, %v2249
      %v2251 = vpop.f32.mrf.mxu0
      %v2252 = vadd.f32 0.0, %v2251
      %2253 = vmatmul.bf16.gmra.mxu0 %v2153
      %v2254 = vpop.f32.mrf.mxu0
      %v2255 = vadd.f32 0.0, %v2254
      %v2256 = vpop.f32.mrf.mxu0
      %v2257 = vadd.f32 0.0, %v2256
      %2258 = vmatmul.bf16.gmra.mxu0 %v2161
      %v2259 = vpop.f32.mrf.mxu0
      %v2260 = vadd.f32 0.0, %v2259
      %v2261 = vpop.f32.mrf.mxu0
      %v2262 = vadd.f32 0.0, %v2261
      %2263 = vmatmul.bf16.gmra.mxu0 %v2169
      %v2264 = vpop.f32.mrf.mxu0
      %v2265 = vadd.f32 0.0, %v2264
      %v2266 = vpop.f32.mrf.mxu0
      %v2267 = vadd.f32 0.0, %v2266
      %2268 = vdwg.mxu0
      %v2269 = vadd.f32 %v2027, %v2235
      %v2270 = vadd.f32 %v2028, %v2237
      %v2271 = vadd.f32 %v2029, %v2240
      %v2272 = vadd.f32 %v2030, %v2242
      %v2273 = vadd.f32 %v2031, %v2245
      %v2274 = vadd.f32 %v2032, %v2247
      %v2275 = vadd.f32 %v2033, %v2250
      %v2276 = vadd.f32 %v2034, %v2252
      %v2277 = vadd.f32 %v2035, %v2255
      %v2278 = vadd.f32 %v2036, %v2257
      %v2279 = vadd.f32 %v2037, %v2260
      %v2280 = vadd.f32 %v2038, %v2262
      %v2281 = vadd.f32 %v2039, %v2265
      %v2282 = vadd.f32 %v2040, %v2267
      %v2283 = vld [vmem:[#allocation2 + $0x18] sm:$0xe]
      %v2284 = vld [vmem:[#allocation2 + $0x50] sm:$0x3]
      %v2285 = vld [vmem:[%s2 + $0x100] sm:$0xf]
      %v2286 = vld [vmem:[%s2 + $0x104] sm:$0xf]
      %v2287 = vld [vmem:[%s2 + $0x108] sm:$0xf]
      %v2288 = vld [vmem:[%s2 + $0x10c] sm:$0xf]
      %v2289 = vld [vmem:[%s2 + $0x110] sm:$0xf]
      %v2290 = vld [vmem:[%s2 + $0x114] sm:$0xf]
      %v2291 = vld [vmem:[%s2 + $0x118] sm:$0xf]
      %v2292 = vld [vmem:[%s2 + $0x11c] sm:$0xf]
      %v2295 = vunpack.c.l.b16 %v2283
      %v2296 = vunpack.c.l.b16 %v2284
      %v2297 = vpack.c.b16 %v2088, %v2295
      %v2298 = vpack.c.b16 %v2296, %v2296
      %vm2299 = vsmask.f32 6400
      %v2301 = vshrl.u32 %v2297, 16
      %v2303 = vrot.slane %v2301, 1
      %v2304 = vshll.u32 %v2297, 16
      %v2306 = vrot.slane %v2304, 2
      %v2307 = vor.u32 %v2303, %v2306
      %v2308 = vrot.slane %v2122, 1
      %v2309 = vrot.slane %v2118, 2
      %v2310 = vor.u32 %v2308, %v2309
      %v2311 = vsel %vm2299, %v2307, %v2310
      %v2312 = vrot.slane %v2130, 1
      %v2313 = vrot.slane %v2126, 2
      %v2314 = vor.u32 %v2312, %v2313
      %v2315 = vsel %vm2299, %v2310, %v2314
      %v2316 = vrot.slane %v2138, 1
      %v2317 = vrot.slane %v2134, 2
      %v2318 = vor.u32 %v2316, %v2317
      %v2319 = vsel %vm2299, %v2314, %v2318
      %v2320 = vrot.slane %v2146, 1
      %v2321 = vrot.slane %v2142, 2
      %v2322 = vor.u32 %v2320, %v2321
      %v2323 = vsel %vm2299, %v2318, %v2322
      %v2324 = vrot.slane %v2154, 1
      %v2325 = vrot.slane %v2150, 2
      %v2326 = vor.u32 %v2324, %v2325
      %v2327 = vsel %vm2299, %v2322, %v2326
      %v2328 = vrot.slane %v2162, 1
      %v2329 = vrot.slane %v2158, 2
      %v2330 = vor.u32 %v2328, %v2329
      %v2331 = vsel %vm2299, %v2326, %v2330
      %v2333 = vshrl.u32 %v2298, 16
      %v2335 = vrot.slane %v2333, 1
      %v2336 = vshll.u32 %v2298, 16
      %v2338 = vrot.slane %v2336, 2
      %v2339 = vor.u32 %v2335, %v2338
      %v2340 = vsel %vm2299, %v2330, %v2339
      %v2349 = vunpack.c.l.b16 %v2285
      %v2350 = vunpack.c.l.b16 %v2286
      %v2351 = vunpack.c.l.b16 %v2287
      %v2352 = vunpack.c.l.b16 %v2288
      %v2353 = vunpack.c.l.b16 %v2289
      %v2354 = vunpack.c.l.b16 %v2290
      %v2355 = vunpack.c.l.b16 %v2291
      %v2356 = vunpack.c.l.b16 %v2292
      %v2357 = vpack.c.b16 %v2350, %v2349
      %v2358 = vpack.c.b16 %v2352, %v2351
      %v2359 = vpack.c.b16 %v2354, %v2353
      %v2360 = vpack.c.b16 %v2356, %v2355
      %v2366 = vsel %vm1350, %v2311, 0
      %v2369 = vsel %vm1350, %v2315, 0
      %v2372 = vsel %vm1350, %v2319, 0
      %v2375 = vsel %vm1350, %v2323, 0
      %v2378 = vsel %vm1350, %v2327, 0
      %v2381 = vsel %vm1350, %v2331, 0
      %v2384 = vsel %vm1350, %v2340, 0
      %2386 = vmatpush.bf16.msra.mxu0 0
      %2387 = vmatpush.bf16.msra.mxu0 0
      %2388 = vmatpush.bf16.msra.mxu0 0
      %2389 = vmatpush.bf16.msra.mxu0 0
      %2390 = vmatpush.bf16.msra.mxu0 %v2360
      %2391 = vmatpush.bf16.msra.mxu0 %v2359
      %2392 = vmatpush.bf16.msra.mxu0 %v2358
      %2393 = vmatpush.bf16.msra.mxu0 %v2357
      %2394 = vmatmul.bf16.gmra.mxu0 %v2366
      %v2395 = vpop.f32.mrf.mxu0
      %v2396 = vadd.f32 0.0, %v2395
      %v2397 = vpop.f32.mrf.mxu0
      %v2398 = vadd.f32 0.0, %v2397
      %2399 = vmatmul.bf16.gmra.mxu0 %v2369
      %v2400 = vpop.f32.mrf.mxu0
      %v2401 = vadd.f32 0.0, %v2400
      %v2402 = vpop.f32.mrf.mxu0
      %v2403 = vadd.f32 0.0, %v2402
      %2404 = vmatmul.bf16.gmra.mxu0 %v2372
      %v2405 = vpop.f32.mrf.mxu0
      %v2406 = vadd.f32 0.0, %v2405
      %v2407 = vpop.f32.mrf.mxu0
      %v2408 = vadd.f32 0.0, %v2407
      %2409 = vmatmul.bf16.gmra.mxu0 %v2375
      %v2410 = vpop.f32.mrf.mxu0
      %v2411 = vadd.f32 0.0, %v2410
      %v2412 = vpop.f32.mrf.mxu0
      %v2413 = vadd.f32 0.0, %v2412
      %2414 = vmatmul.bf16.gmra.mxu0 %v2378
      %v2415 = vpop.f32.mrf.mxu0
      %v2416 = vadd.f32 0.0, %v2415
      %v2417 = vpop.f32.mrf.mxu0
      %v2418 = vadd.f32 0.0, %v2417
      %2419 = vmatmul.bf16.gmra.mxu0 %v2381
      %v2420 = vpop.f32.mrf.mxu0
      %v2421 = vadd.f32 0.0, %v2420
      %v2422 = vpop.f32.mrf.mxu0
      %v2423 = vadd.f32 0.0, %v2422
      %2424 = vmatmul.bf16.gmra.mxu0 %v2384
      %v2425 = vpop.f32.mrf.mxu0
      %v2426 = vadd.f32 0.0, %v2425
      %v2427 = vpop.f32.mrf.mxu0
      %v2428 = vadd.f32 0.0, %v2427
      %2429 = vdwg.mxu0
      %v2430 = vadd.f32 %v2269, %v2396
      %v2431 = vadd.f32 %v2270, %v2398
      %v2432 = vadd.f32 %v2271, %v2401
      %v2433 = vadd.f32 %v2272, %v2403
      %v2434 = vadd.f32 %v2273, %v2406
      %v2435 = vadd.f32 %v2274, %v2408
      %v2436 = vadd.f32 %v2275, %v2411
      %v2437 = vadd.f32 %v2276, %v2413
      %v2438 = vadd.f32 %v2277, %v2416
      %v2439 = vadd.f32 %v2278, %v2418
      %v2440 = vadd.f32 %v2279, %v2421
      %v2441 = vadd.f32 %v2280, %v2423
      %v2442 = vadd.f32 %v2281, %v2426
      %v2443 = vadd.f32 %v2282, %v2428
      %v2444 = vld [vmem:[%s3] sm:$0x1]
      %v2446 = vperm.slane %v2444, 0
      %v2448 = vadd.f32 %v2430, %v2446
      %v2449 = vadd.f32 %v2431, %v2446
      %v2450 = vadd.f32 %v2432, %v2446
      %v2451 = vadd.f32 %v2433, %v2446
      %v2452 = vadd.f32 %v2434, %v2446
      %v2453 = vadd.f32 %v2435, %v2446
      %v2454 = vadd.f32 %v2436, %v2446
      %v2455 = vadd.f32 %v2437, %v2446
      %v2456 = vadd.f32 %v2438, %v2446
      %v2457 = vadd.f32 %v2439, %v2446
      %v2458 = vadd.f32 %v2440, %v2446
      %v2459 = vadd.f32 %v2441, %v2446
      %v2460 = vadd.f32 %v2442, %v2446
      %v2461 = vadd.f32 %v2443, %v2446
      %v2462 = vmax.f32 %v2448, 0.0
      %v2463 = vmax.f32 %v2449, 0.0
      %v2464 = vmax.f32 %v2450, 0.0
      %v2465 = vmax.f32 %v2451, 0.0
      %v2466 = vmax.f32 %v2452, 0.0
      %v2467 = vmax.f32 %v2453, 0.0
      %v2468 = vmax.f32 %v2454, 0.0
      %v2469 = vmax.f32 %v2455, 0.0
      %v2470 = vmax.f32 %v2456, 0.0
      %v2471 = vmax.f32 %v2457, 0.0
      %v2472 = vmax.f32 %v2458, 0.0
      %v2473 = vmax.f32 %v2459, 0.0
      %v2474 = vmax.f32 %v2460, 0.0
      %v2475 = vmax.f32 %v2461, 0.0
      %v2476 = vld [vmem:[%s1] sm:$0xff]
      %v2477 = vld [vmem:[%s1 + $0x8] sm:$0xff]
      %v2478 = vld [vmem:[%s1 + $0x10] sm:$0xff]
      %v2479 = vld [vmem:[%s1 + $0x18] sm:$0xff]
      %v2480 = vld [vmem:[%s1 + $0x20] sm:$0xff]
      %v2481 = vld [vmem:[%s1 + $0x28] sm:$0xff]
      %v2482 = vld [vmem:[%s1 + $0x30] sm:$0xff]
      %v2483 = vld [vmem:[%s1 + $0x38] sm:$0xff]
      %v2484 = vld [vmem:[%s1 + $0x40] sm:$0xff]
      %v2485 = vld [vmem:[%s1 + $0x48] sm:$0xff]
      %v2486 = vld [vmem:[%s1 + $0x50] sm:$0xff]
      %v2487 = vld [vmem:[%s1 + $0x58] sm:$0xff]
      %v2488 = vld [vmem:[%s1 + $0x60] sm:$0xff]
      %v2489 = vld [vmem:[%s1 + $0x68] sm:$0xff]
      %2491 = vset.pattern.permute.xlu0 0
      %2492 = vperm.xlu0 %2491, %v2476
      %v2493 = vpop.permute.xlu0 %2492
      %2496 = vset.pattern.permute.xlu0 0
      %2497 = vperm.xlu0 %2496, %v2477
      %v2498 = vpop.permute.xlu0 %2497
      %2501 = vset.pattern.permute.xlu0 0
      %2502 = vperm.xlu0 %2501, %v2478
      %v2503 = vpop.permute.xlu0 %2502
      %2506 = vset.pattern.permute.xlu0 0
      %2507 = vperm.xlu0 %2506, %v2479
      %v2508 = vpop.permute.xlu0 %2507
      %2511 = vset.pattern.permute.xlu0 0
      %2512 = vperm.xlu0 %2511, %v2480
      %v2513 = vpop.permute.xlu0 %2512
      %2516 = vset.pattern.permute.xlu0 0
      %2517 = vperm.xlu0 %2516, %v2481
      %v2518 = vpop.permute.xlu0 %2517
      %2521 = vset.pattern.permute.xlu0 0
      %2522 = vperm.xlu0 %2521, %v2482
      %v2523 = vpop.permute.xlu0 %2522
      %2526 = vset.pattern.permute.xlu0 0
      %2527 = vperm.xlu0 %2526, %v2483
      %v2528 = vpop.permute.xlu0 %2527
      %2531 = vset.pattern.permute.xlu0 0
      %2532 = vperm.xlu0 %2531, %v2484
      %v2533 = vpop.permute.xlu0 %2532
      %2536 = vset.pattern.permute.xlu0 0
      %2537 = vperm.xlu0 %2536, %v2485
      %v2538 = vpop.permute.xlu0 %2537
      %2541 = vset.pattern.permute.xlu0 0
      %2542 = vperm.xlu0 %2541, %v2486
      %v2543 = vpop.permute.xlu0 %2542
      %2546 = vset.pattern.permute.xlu0 0
      %2547 = vperm.xlu0 %2546, %v2487
      %v2548 = vpop.permute.xlu0 %2547
      %2551 = vset.pattern.permute.xlu0 0
      %2552 = vperm.xlu0 %2551, %v2488
      %v2553 = vpop.permute.xlu0 %2552
      %2556 = vset.pattern.permute.xlu0 0
      %2557 = vperm.xlu0 %2556, %v2489
      %v2558 = vpop.permute.xlu0 %2557
      %v2560 = vmul.f32 %v2462, %v2493
      %v2561 = vmul.f32 %v2463, %v2498
      %v2562 = vmul.f32 %v2464, %v2503
      %v2563 = vmul.f32 %v2465, %v2508
      %v2564 = vmul.f32 %v2466, %v2513
      %v2565 = vmul.f32 %v2467, %v2518
      %v2566 = vmul.f32 %v2468, %v2523
      %v2567 = vmul.f32 %v2469, %v2528
      %v2568 = vmul.f32 %v2470, %v2533
      %v2569 = vmul.f32 %v2471, %v2538
      %v2570 = vmul.f32 %v2472, %v2543
      %v2571 = vmul.f32 %v2473, %v2548
      %v2572 = vmul.f32 %v2474, %v2553
      %v2573 = vmul.f32 %v2475, %v2558
      %v2574 = vpack.c.bf16 %v2560, %v2560
      %v2575 = vpack.c.bf16 %v2561, %v2561
      %v2576 = vpack.c.bf16 %v2562, %v2562
      %v2577 = vpack.c.bf16 %v2563, %v2563
      %v2578 = vpack.c.bf16 %v2564, %v2564
      %v2579 = vpack.c.bf16 %v2565, %v2565
      %v2580 = vpack.c.bf16 %v2566, %v2566
      %v2581 = vpack.c.bf16 %v2567, %v2567
      %v2582 = vpack.c.bf16 %v2568, %v2568
      %v2583 = vpack.c.bf16 %v2569, %v2569
      %v2584 = vpack.c.bf16 %v2570, %v2570
      %v2585 = vpack.c.bf16 %v2571, %v2571
      %v2586 = vpack.c.bf16 %v2572, %v2572
      %v2587 = vpack.c.bf16 %v2573, %v2573
      %2588 = vst.msk [vmem:[#allocation3 + $0x10] sm:$0xf] %vm253, %v2574
      %2589 = vst.msk [vmem:[#allocation3 + $0x14] sm:$0xf] %vm253, %v2575
      %2590 = vst.msk [vmem:[#allocation3 + $0x18] sm:$0xf] %vm253, %v2576
      %2591 = vst.msk [vmem:[#allocation3 + $0x1c] sm:$0xf] %vm253, %v2577
      %2592 = vst.msk [vmem:[#allocation3 + $0x20] sm:$0xf] %vm253, %v2578
      %2593 = vst.msk [vmem:[#allocation3 + $0x24] sm:$0xf] %vm253, %v2579
      %2594 = vst.msk [vmem:[#allocation3 + $0x28] sm:$0xf] %vm253, %v2580
      %2595 = vst.msk [vmem:[#allocation3 + $0x2c] sm:$0xf] %vm253, %v2581
      %2596 = vst.msk [vmem:[#allocation3 + $0x30] sm:$0xf] %vm253, %v2582
      %2597 = vst.msk [vmem:[#allocation3 + $0x34] sm:$0xf] %vm253, %v2583
      %2598 = vst.msk [vmem:[#allocation3 + $0x38] sm:$0xf] %vm253, %v2584
      %2599 = vst.msk [vmem:[#allocation3 + $0x3c] sm:$0xf] %vm253, %v2585
      %2600 = vst.msk [vmem:[#allocation3 + $0x40] sm:$0xf] %vm253, %v2586
      %2601 = vst.msk [vmem:[#allocation3 + $0x44] sm:$0xf] %vm253, %v2587
      %v2602 = vld [vmem:[#allocation2 + $0x3c] sm:$0xc]
      %v2603 = vld [vmem:[#allocation2 + $0x40] sm:$0xf]
      %v2604 = vld [vmem:[#allocation2 + $0x44] sm:$0xf]
      %v2605 = vld [vmem:[#allocation2 + $0x48] sm:$0xf]
      %v2606 = vld [vmem:[#allocation2 + $0x4c] sm:$0xf]
      %v2607 = vld [vmem:[#allocation2 + $0x50] sm:$0xf]
      %v2608 = vld [vmem:[#allocation2 + $0x54] sm:$0xf]
      %v2609 = vld [vmem:[#allocation2 + $0x58] sm:$0xf]
      %v2610 = vld [vmem:[#allocation2 + $0x5c] sm:$0xf]
      %v2611 = vld [vmem:[#allocation2 + $0x60] sm:$0xf]
      %v2612 = vld [vmem:[#allocation2 + $0x64] sm:$0xf]
      %v2613 = vld [vmem:[#allocation2 + $0x68] sm:$0xf]
      %v2614 = vld [vmem:[#allocation2 + $0x6c] sm:$0xf]
      %v2615 = vld [vmem:[#allocation2 + $0x70] sm:$0xf]
      %v2616 = vld [vmem:[#allocation2 + $0x74] sm:$0x7]
      %v2617 = vld [vmem:[%s2] sm:$0xf]
      %v2618 = vld [vmem:[%s2 + $0x4] sm:$0xf]
      %v2619 = vld [vmem:[%s2 + $0x8] sm:$0xf]
      %v2620 = vld [vmem:[%s2 + $0xc] sm:$0xf]
      %v2621 = vld [vmem:[%s2 + $0x10] sm:$0xf]
      %v2622 = vld [vmem:[%s2 + $0x14] sm:$0xf]
      %v2623 = vld [vmem:[%s2 + $0x18] sm:$0xf]
      %v2624 = vld [vmem:[%s2 + $0x1c] sm:$0xf]
      %v2625 = vld [vmem:[%s2 + $0x20] sm:$0xf]
      %v2626 = vld [vmem:[%s2 + $0x24] sm:$0xf]
      %v2627 = vld [vmem:[%s2 + $0x28] sm:$0xf]
      %v2628 = vld [vmem:[%s2 + $0x2c] sm:$0xf]
      %v2629 = vld [vmem:[%s2 + $0x30] sm:$0xf]
      %v2630 = vld [vmem:[%s2 + $0x34] sm:$0xf]
      %v2631 = vld [vmem:[%s2 + $0x38] sm:$0xf]
      %v2632 = vld [vmem:[%s2 + $0x3c] sm:$0xf]
      %v2633 = vld [vmem:[#allocation2 + $0x3c] sm:$0x8]
      %v2634 = vld [vmem:[#allocation2 + $0x74] sm:$0xf]
      %v2635 = vld [vmem:[%s2 + $0x40] sm:$0xf]
      %v2636 = vld [vmem:[%s2 + $0x44] sm:$0xf]
      %v2637 = vld [vmem:[%s2 + $0x48] sm:$0xf]
      %v2638 = vld [vmem:[%s2 + $0x4c] sm:$0xf]
      %v2639 = vld [vmem:[%s2 + $0x50] sm:$0xf]
      %v2640 = vld [vmem:[%s2 + $0x54] sm:$0xf]
      %v2641 = vld [vmem:[%s2 + $0x58] sm:$0xf]
      %v2642 = vld [vmem:[%s2 + $0x5c] sm:$0xf]
      %v2658 = vunpack.c.l.b16 %v2633
      %v2659 = vunpack.c.l.b16 %v2603
      %v2660 = vunpack.c.l.b16 %v2604
      %v2661 = vunpack.c.l.b16 %v2605
      %v2662 = vunpack.c.l.b16 %v2606
      %v2663 = vunpack.c.l.b16 %v2607
      %v2664 = vunpack.c.l.b16 %v2608
      %v2665 = vunpack.c.l.b16 %v2609
      %v2666 = vunpack.c.l.b16 %v2610
      %v2667 = vunpack.c.l.b16 %v2611
      %v2668 = vunpack.c.l.b16 %v2612
      %v2669 = vunpack.c.l.b16 %v2613
      %v2670 = vunpack.c.l.b16 %v2614
      %v2671 = vunpack.c.l.b16 %v2615
      %v2672 = vunpack.c.l.b16 %v2634
      %v2673 = vpack.c.b16 %v2659, %v2658
      %v2674 = vpack.c.b16 %v2661, %v2660
      %v2675 = vpack.c.b16 %v2663, %v2662
      %v2676 = vpack.c.b16 %v2665, %v2664
      %v2677 = vpack.c.b16 %v2667, %v2666
      %v2678 = vpack.c.b16 %v2669, %v2668
      %v2679 = vpack.c.b16 %v2671, %v2670
      %v2680 = vpack.c.b16 %v2672, %v2672
      %v2682 = vshrl.u32 %v2673, 16
      %v2684 = vrot.slane %v2682, 3
      %v2685 = vshll.u32 %v2673, 16
      %v2687 = vrot.slane %v2685, 4
      %v2688 = vor.u32 %v2684, %v2687
      %v2690 = vshrl.u32 %v2674, 16
      %v2692 = vrot.slane %v2690, 3
      %v2693 = vshll.u32 %v2674, 16
      %v2695 = vrot.slane %v2693, 4
      %v2696 = vor.u32 %v2692, %v2695
      %v2697 = vsel %vm1254, %v2688, %v2696
      %v2699 = vshrl.u32 %v2675, 16
      %v2701 = vrot.slane %v2699, 3
      %v2702 = vshll.u32 %v2675, 16
      %v2704 = vrot.slane %v2702, 4
      %v2705 = vor.u32 %v2701, %v2704
      %v2706 = vsel %vm1254, %v2696, %v2705
      %v2708 = vshrl.u32 %v2676, 16
      %v2710 = vrot.slane %v2708, 3
      %v2711 = vshll.u32 %v2676, 16
      %v2713 = vrot.slane %v2711, 4
      %v2714 = vor.u32 %v2710, %v2713
      %v2715 = vsel %vm1254, %v2705, %v2714
      %v2717 = vshrl.u32 %v2677, 16
      %v2719 = vrot.slane %v2717, 3
      %v2720 = vshll.u32 %v2677, 16
      %v2722 = vrot.slane %v2720, 4
      %v2723 = vor.u32 %v2719, %v2722
      %v2724 = vsel %vm1254, %v2714, %v2723
      %v2726 = vshrl.u32 %v2678, 16
      %v2728 = vrot.slane %v2726, 3
      %v2729 = vshll.u32 %v2678, 16
      %v2731 = vrot.slane %v2729, 4
      %v2732 = vor.u32 %v2728, %v2731
      %v2733 = vsel %vm1254, %v2723, %v2732
      %v2735 = vshrl.u32 %v2679, 16
      %v2737 = vrot.slane %v2735, 3
      %v2738 = vshll.u32 %v2679, 16
      %v2740 = vrot.slane %v2738, 4
      %v2741 = vor.u32 %v2737, %v2740
      %v2742 = vsel %vm1254, %v2732, %v2741
      %v2744 = vshrl.u32 %v2680, 16
      %v2746 = vrot.slane %v2744, 3
      %v2747 = vshll.u32 %v2680, 16
      %v2749 = vrot.slane %v2747, 4
      %v2750 = vor.u32 %v2746, %v2749
      %v2751 = vsel %vm1254, %v2741, %v2750
      %v2760 = vunpack.c.l.b16 %v2635
      %v2761 = vunpack.c.l.b16 %v2636
      %v2762 = vunpack.c.l.b16 %v2637
      %v2763 = vunpack.c.l.b16 %v2638
      %v2764 = vunpack.c.l.b16 %v2639
      %v2765 = vunpack.c.l.b16 %v2640
      %v2766 = vunpack.c.l.b16 %v2641
      %v2767 = vunpack.c.l.b16 %v2642
      %v2768 = vpack.c.b16 %v2761, %v2760
      %v2769 = vpack.c.b16 %v2763, %v2762
      %v2770 = vpack.c.b16 %v2765, %v2764
      %v2771 = vpack.c.b16 %v2767, %v2766
      %v2777 = vsel %vm1350, %v2697, 0
      %v2780 = vsel %vm1350, %v2706, 0
      %v2783 = vsel %vm1350, %v2715, 0
      %v2786 = vsel %vm1350, %v2724, 0
      %v2789 = vsel %vm1350, %v2733, 0
      %v2792 = vsel %vm1350, %v2742, 0
      %v2795 = vsel %vm1350, %v2751, 0
      %2797 = vmatpush.bf16.msra.mxu0 0
      %2798 = vmatpush.bf16.msra.mxu0 0
      %2799 = vmatpush.bf16.msra.mxu0 0
      %2800 = vmatpush.bf16.msra.mxu0 0
      %2801 = vmatpush.bf16.msra.mxu0 %v2771
      %2802 = vmatpush.bf16.msra.mxu0 %v2770
      %2803 = vmatpush.bf16.msra.mxu0 %v2769
      %2804 = vmatpush.bf16.msra.mxu0 %v2768
      %2805 = vmatmul.bf16.gmra.mxu0 %v2777
      %v2806 = vpop.f32.mrf.mxu0
      %v2807 = vadd.f32 0.0, %v2806
      %v2808 = vpop.f32.mrf.mxu0
      %v2809 = vadd.f32 0.0, %v2808
      %2810 = vmatmul.bf16.gmra.mxu0 %v2780
      %v2811 = vpop.f32.mrf.mxu0
      %v2812 = vadd.f32 0.0, %v2811
      %v2813 = vpop.f32.mrf.mxu0
      %v2814 = vadd.f32 0.0, %v2813
      %2815 = vmatmul.bf16.gmra.mxu0 %v2783
      %v2816 = vpop.f32.mrf.mxu0
      %v2817 = vadd.f32 0.0, %v2816
      %v2818 = vpop.f32.mrf.mxu0
      %v2819 = vadd.f32 0.0, %v2818
      %2820 = vmatmul.bf16.gmra.mxu0 %v2786
      %v2821 = vpop.f32.mrf.mxu0
      %v2822 = vadd.f32 0.0, %v2821
      %v2823 = vpop.f32.mrf.mxu0
      %v2824 = vadd.f32 0.0, %v2823
      %2825 = vmatmul.bf16.gmra.mxu0 %v2789
      %v2826 = vpop.f32.mrf.mxu0
      %v2827 = vadd.f32 0.0, %v2826
      %v2828 = vpop.f32.mrf.mxu0
      %v2829 = vadd.f32 0.0, %v2828
      %2830 = vmatmul.bf16.gmra.mxu0 %v2792
      %v2831 = vpop.f32.mrf.mxu0
      %v2832 = vadd.f32 0.0, %v2831
      %v2833 = vpop.f32.mrf.mxu0
      %v2834 = vadd.f32 0.0, %v2833
      %2835 = vmatmul.bf16.gmra.mxu0 %v2795
      %v2836 = vpop.f32.mrf.mxu0
      %v2837 = vadd.f32 0.0, %v2836
      %v2838 = vpop.f32.mrf.mxu0
      %v2839 = vadd.f32 0.0, %v2838
      %2840 = vdwg.mxu0
      %v2843 = vunpack.c.l.b16 %v2602
      %v2844 = vunpack.c.l.b16 %v2616
      %v2845 = vpack.c.b16 %v2659, %v2843
      %v2846 = vpack.c.b16 %v2844, %v2844
      %v2848 = vshrl.u32 %v2845, 16
      %v2850 = vrot.slane %v2848, 2
      %v2851 = vshll.u32 %v2845, 16
      %v2853 = vrot.slane %v2851, 3
      %v2854 = vor.u32 %v2850, %v2853
      %v2855 = vrot.slane %v2690, 2
      %v2856 = vrot.slane %v2693, 3
      %v2857 = vor.u32 %v2855, %v2856
      %v2858 = vsel %vm1422, %v2854, %v2857
      %v2859 = vrot.slane %v2699, 2
      %v2860 = vrot.slane %v2702, 3
      %v2861 = vor.u32 %v2859, %v2860
      %v2862 = vsel %vm1422, %v2857, %v2861
      %v2863 = vrot.slane %v2708, 2
      %v2864 = vrot.slane %v2711, 3
      %v2865 = vor.u32 %v2863, %v2864
      %v2866 = vsel %vm1422, %v2861, %v2865
      %v2867 = vrot.slane %v2717, 2
      %v2868 = vrot.slane %v2720, 3
      %v2869 = vor.u32 %v2867, %v2868
      %v2870 = vsel %vm1422, %v2865, %v2869
      %v2871 = vrot.slane %v2726, 2
      %v2872 = vrot.slane %v2729, 3
      %v2873 = vor.u32 %v2871, %v2872
      %v2874 = vsel %vm1422, %v2869, %v2873
      %v2875 = vrot.slane %v2735, 2
      %v2876 = vrot.slane %v2738, 3
      %v2877 = vor.u32 %v2875, %v2876
      %v2878 = vsel %vm1422, %v2873, %v2877
      %v2880 = vshrl.u32 %v2846, 16
      %v2882 = vrot.slane %v2880, 2
      %v2883 = vshll.u32 %v2846, 16
      %v2885 = vrot.slane %v2883, 3
      %v2886 = vor.u32 %v2882, %v2885
      %v2887 = vsel %vm1422, %v2877, %v2886
      %v2911 = vunpack.c.l.b16 %v2617
      %v2912 = vunpack.c.l.b16 %v2618
      %v2913 = vunpack.c.l.b16 %v2619
      %v2914 = vunpack.c.l.b16 %v2620
      %v2915 = vunpack.c.l.b16 %v2621
      %v2916 = vunpack.c.l.b16 %v2622
      %v2917 = vunpack.c.l.b16 %v2623
      %v2918 = vunpack.c.l.b16 %v2624
      %v2919 = vunpack.c.l.b16 %v2625
      %v2920 = vunpack.c.l.b16 %v2626
      %v2921 = vunpack.c.l.b16 %v2627
      %v2922 = vunpack.c.l.b16 %v2628
      %v2923 = vunpack.c.l.b16 %v2629
      %v2924 = vunpack.c.l.b16 %v2630
      %v2925 = vunpack.c.l.b16 %v2631
      %v2926 = vunpack.c.l.b16 %v2632
      %v2927 = vpack.c.b16 %v2912, %v2911
      %v2928 = vpack.c.b16 %v2914, %v2913
      %v2929 = vpack.c.b16 %v2916, %v2915
      %v2930 = vpack.c.b16 %v2918, %v2917
      %v2931 = vpack.c.b16 %v2920, %v2919
      %v2932 = vpack.c.b16 %v2922, %v2921
      %v2933 = vpack.c.b16 %v2924, %v2923
      %v2934 = vpack.c.b16 %v2926, %v2925
      %2943 = vmatpush.bf16.msra.mxu0 %v2934
      %2944 = vmatpush.bf16.msra.mxu0 %v2933
      %2945 = vmatpush.bf16.msra.mxu0 %v2932
      %2946 = vmatpush.bf16.msra.mxu0 %v2931
      %2947 = vmatpush.bf16.msra.mxu0 %v2930
      %2948 = vmatpush.bf16.msra.mxu0 %v2929
      %2949 = vmatpush.bf16.msra.mxu0 %v2928
      %2950 = vmatpush.bf16.msra.mxu0 %v2927
      %2951 = vmatmul.bf16.gmra.mxu0 %v2858
      %v2952 = vpop.f32.mrf.mxu0
      %v2953 = vadd.f32 %v2807, %v2952
      %v2954 = vpop.f32.mrf.mxu0
      %v2955 = vadd.f32 %v2809, %v2954
      %2956 = vmatmul.bf16.gmra.mxu0 %v2862
      %v2957 = vpop.f32.mrf.mxu0
      %v2958 = vadd.f32 %v2812, %v2957
      %v2959 = vpop.f32.mrf.mxu0
      %v2960 = vadd.f32 %v2814, %v2959
      %2961 = vmatmul.bf16.gmra.mxu0 %v2866
      %v2962 = vpop.f32.mrf.mxu0
      %v2963 = vadd.f32 %v2817, %v2962
      %v2964 = vpop.f32.mrf.mxu0
      %v2965 = vadd.f32 %v2819, %v2964
      %2966 = vmatmul.bf16.gmra.mxu0 %v2870
      %v2967 = vpop.f32.mrf.mxu0
      %v2968 = vadd.f32 %v2822, %v2967
      %v2969 = vpop.f32.mrf.mxu0
      %v2970 = vadd.f32 %v2824, %v2969
      %2971 = vmatmul.bf16.gmra.mxu0 %v2874
      %v2972 = vpop.f32.mrf.mxu0
      %v2973 = vadd.f32 %v2827, %v2972
      %v2974 = vpop.f32.mrf.mxu0
      %v2975 = vadd.f32 %v2829, %v2974
      %2976 = vmatmul.bf16.gmra.mxu0 %v2878
      %v2977 = vpop.f32.mrf.mxu0
      %v2978 = vadd.f32 %v2832, %v2977
      %v2979 = vpop.f32.mrf.mxu0
      %v2980 = vadd.f32 %v2834, %v2979
      %2981 = vmatmul.bf16.gmra.mxu0 %v2887
      %v2982 = vpop.f32.mrf.mxu0
      %v2983 = vadd.f32 %v2837, %v2982
      %v2984 = vpop.f32.mrf.mxu0
      %v2985 = vadd.f32 %v2839, %v2984
      %2986 = vdwg.mxu0
      %v2987 = vld [vmem:[#allocation2 + $0x44] sm:$0x8]
      %v2988 = vld [vmem:[#allocation2 + $0x48] sm:$0xf]
      %v2989 = vld [vmem:[#allocation2 + $0x4c] sm:$0xf]
      %v2990 = vld [vmem:[#allocation2 + $0x50] sm:$0xf]
      %v2991 = vld [vmem:[#allocation2 + $0x54] sm:$0xf]
      %v2992 = vld [vmem:[#allocation2 + $0x58] sm:$0xf]
      %v2993 = vld [vmem:[#allocation2 + $0x5c] sm:$0xf]
      %v2994 = vld [vmem:[#allocation2 + $0x60] sm:$0xf]
      %v2995 = vld [vmem:[#allocation2 + $0x64] sm:$0xf]
      %v2996 = vld [vmem:[#allocation2 + $0x68] sm:$0xf]
      %v2997 = vld [vmem:[#allocation2 + $0x6c] sm:$0xf]
      %v2998 = vld [vmem:[#allocation2 + $0x70] sm:$0xf]
      %v2999 = vld [vmem:[#allocation2 + $0x74] sm:$0xf]
      %v3000 = vld [vmem:[#allocation2 + $0x78] sm:$0xf]
      %v3001 = vld [vmem:[#allocation2 + $0x7c] sm:$0xf]
      %v3002 = vld [vmem:[%s2 + $0x60] sm:$0xf]
      %v3003 = vld [vmem:[%s2 + $0x64] sm:$0xf]
      %v3004 = vld [vmem:[%s2 + $0x68] sm:$0xf]
      %v3005 = vld [vmem:[%s2 + $0x6c] sm:$0xf]
      %v3006 = vld [vmem:[%s2 + $0x70] sm:$0xf]
      %v3007 = vld [vmem:[%s2 + $0x74] sm:$0xf]
      %v3008 = vld [vmem:[%s2 + $0x78] sm:$0xf]
      %v3009 = vld [vmem:[%s2 + $0x7c] sm:$0xf]
      %v3010 = vld [vmem:[%s2 + $0x80] sm:$0xf]
      %v3011 = vld [vmem:[%s2 + $0x84] sm:$0xf]
      %v3012 = vld [vmem:[%s2 + $0x88] sm:$0xf]
      %v3013 = vld [vmem:[%s2 + $0x8c] sm:$0xf]
      %v3014 = vld [vmem:[%s2 + $0x90] sm:$0xf]
      %v3015 = vld [vmem:[%s2 + $0x94] sm:$0xf]
      %v3016 = vld [vmem:[%s2 + $0x98] sm:$0xf]
      %v3017 = vld [vmem:[%s2 + $0x9c] sm:$0xf]
      %v3033 = vunpack.c.l.b16 %v2987
      %v3034 = vunpack.c.l.b16 %v2988
      %v3035 = vunpack.c.l.b16 %v2989
      %v3036 = vunpack.c.l.b16 %v2990
      %v3037 = vunpack.c.l.b16 %v2991
      %v3038 = vunpack.c.l.b16 %v2992
      %v3039 = vunpack.c.l.b16 %v2993
      %v3040 = vunpack.c.l.b16 %v2994
      %v3041 = vunpack.c.l.b16 %v2995
      %v3042 = vunpack.c.l.b16 %v2996
      %v3043 = vunpack.c.l.b16 %v2997
      %v3044 = vunpack.c.l.b16 %v2998
      %v3045 = vunpack.c.l.b16 %v2999
      %v3046 = vunpack.c.l.b16 %v3000
      %v3047 = vunpack.c.l.b16 %v3001
      %v3048 = vpack.c.b16 %v3034, %v3033
      %v3049 = vpack.c.b16 %v3036, %v3035
      %v3050 = vpack.c.b16 %v3038, %v3037
      %v3051 = vpack.c.b16 %v3040, %v3039
      %v3052 = vpack.c.b16 %v3042, %v3041
      %v3053 = vpack.c.b16 %v3044, %v3043
      %v3054 = vpack.c.b16 %v3046, %v3045
      %v3055 = vpack.c.b16 %v3047, %v3047
      %v3057 = vshrl.u32 %v3048, 16
      %v3059 = vrot.slane %v3057, 3
      %v3060 = vshll.u32 %v3048, 16
      %v3062 = vrot.slane %v3060, 4
      %v3063 = vor.u32 %v3059, %v3062
      %v3065 = vshrl.u32 %v3049, 16
      %v3067 = vrot.slane %v3065, 3
      %v3068 = vshll.u32 %v3049, 16
      %v3070 = vrot.slane %v3068, 4
      %v3071 = vor.u32 %v3067, %v3070
      %v3072 = vsel %vm1254, %v3063, %v3071
      %v3074 = vshrl.u32 %v3050, 16
      %v3076 = vrot.slane %v3074, 3
      %v3077 = vshll.u32 %v3050, 16
      %v3079 = vrot.slane %v3077, 4
      %v3080 = vor.u32 %v3076, %v3079
      %v3081 = vsel %vm1254, %v3071, %v3080
      %v3083 = vshrl.u32 %v3051, 16
      %v3085 = vrot.slane %v3083, 3
      %v3086 = vshll.u32 %v3051, 16
      %v3088 = vrot.slane %v3086, 4
      %v3089 = vor.u32 %v3085, %v3088
      %v3090 = vsel %vm1254, %v3080, %v3089
      %v3092 = vshrl.u32 %v3052, 16
      %v3094 = vrot.slane %v3092, 3
      %v3095 = vshll.u32 %v3052, 16
      %v3097 = vrot.slane %v3095, 4
      %v3098 = vor.u32 %v3094, %v3097
      %v3099 = vsel %vm1254, %v3089, %v3098
      %v3101 = vshrl.u32 %v3053, 16
      %v3103 = vrot.slane %v3101, 3
      %v3104 = vshll.u32 %v3053, 16
      %v3106 = vrot.slane %v3104, 4
      %v3107 = vor.u32 %v3103, %v3106
      %v3108 = vsel %vm1254, %v3098, %v3107
      %v3110 = vshrl.u32 %v3054, 16
      %v3112 = vrot.slane %v3110, 3
      %v3113 = vshll.u32 %v3054, 16
      %v3115 = vrot.slane %v3113, 4
      %v3116 = vor.u32 %v3112, %v3115
      %v3117 = vsel %vm1254, %v3107, %v3116
      %v3119 = vshrl.u32 %v3055, 16
      %v3121 = vrot.slane %v3119, 3
      %v3122 = vshll.u32 %v3055, 16
      %v3124 = vrot.slane %v3122, 4
      %v3125 = vor.u32 %v3121, %v3124
      %v3126 = vsel %vm1254, %v3116, %v3125
      %v3150 = vunpack.c.l.b16 %v3002
      %v3151 = vunpack.c.l.b16 %v3003
      %v3152 = vunpack.c.l.b16 %v3004
      %v3153 = vunpack.c.l.b16 %v3005
      %v3154 = vunpack.c.l.b16 %v3006
      %v3155 = vunpack.c.l.b16 %v3007
      %v3156 = vunpack.c.l.b16 %v3008
      %v3157 = vunpack.c.l.b16 %v3009
      %v3158 = vunpack.c.l.b16 %v3010
      %v3159 = vunpack.c.l.b16 %v3011
      %v3160 = vunpack.c.l.b16 %v3012
      %v3161 = vunpack.c.l.b16 %v3013
      %v3162 = vunpack.c.l.b16 %v3014
      %v3163 = vunpack.c.l.b16 %v3015
      %v3164 = vunpack.c.l.b16 %v3016
      %v3165 = vunpack.c.l.b16 %v3017
      %v3166 = vpack.c.b16 %v3151, %v3150
      %v3167 = vpack.c.b16 %v3153, %v3152
      %v3168 = vpack.c.b16 %v3155, %v3154
      %v3169 = vpack.c.b16 %v3157, %v3156
      %v3170 = vpack.c.b16 %v3159, %v3158
      %v3171 = vpack.c.b16 %v3161, %v3160
      %v3172 = vpack.c.b16 %v3163, %v3162
      %v3173 = vpack.c.b16 %v3165, %v3164
      %3182 = vmatpush.bf16.msra.mxu0 %v3173
      %3183 = vmatpush.bf16.msra.mxu0 %v3172
      %3184 = vmatpush.bf16.msra.mxu0 %v3171
      %3185 = vmatpush.bf16.msra.mxu0 %v3170
      %3186 = vmatpush.bf16.msra.mxu0 %v3169
      %3187 = vmatpush.bf16.msra.mxu0 %v3168
      %3188 = vmatpush.bf16.msra.mxu0 %v3167
      %3189 = vmatpush.bf16.msra.mxu0 %v3166
      %3190 = vmatmul.bf16.gmra.mxu0 %v3072
      %v3191 = vpop.f32.mrf.mxu0
      %v3192 = vadd.f32 0.0, %v3191
      %v3193 = vpop.f32.mrf.mxu0
      %v3194 = vadd.f32 0.0, %v3193
      %3195 = vmatmul.bf16.gmra.mxu0 %v3081
      %v3196 = vpop.f32.mrf.mxu0
      %v3197 = vadd.f32 0.0, %v3196
      %v3198 = vpop.f32.mrf.mxu0
      %v3199 = vadd.f32 0.0, %v3198
      %3200 = vmatmul.bf16.gmra.mxu0 %v3090
      %v3201 = vpop.f32.mrf.mxu0
      %v3202 = vadd.f32 0.0, %v3201
      %v3203 = vpop.f32.mrf.mxu0
      %v3204 = vadd.f32 0.0, %v3203
      %3205 = vmatmul.bf16.gmra.mxu0 %v3099
      %v3206 = vpop.f32.mrf.mxu0
      %v3207 = vadd.f32 0.0, %v3206
      %v3208 = vpop.f32.mrf.mxu0
      %v3209 = vadd.f32 0.0, %v3208
      %3210 = vmatmul.bf16.gmra.mxu0 %v3108
      %v3211 = vpop.f32.mrf.mxu0
      %v3212 = vadd.f32 0.0, %v3211
      %v3213 = vpop.f32.mrf.mxu0
      %v3214 = vadd.f32 0.0, %v3213
      %3215 = vmatmul.bf16.gmra.mxu0 %v3117
      %v3216 = vpop.f32.mrf.mxu0
      %v3217 = vadd.f32 0.0, %v3216
      %v3218 = vpop.f32.mrf.mxu0
      %v3219 = vadd.f32 0.0, %v3218
      %3220 = vmatmul.bf16.gmra.mxu0 %v3126
      %v3221 = vpop.f32.mrf.mxu0
      %v3222 = vadd.f32 0.0, %v3221
      %v3223 = vpop.f32.mrf.mxu0
      %v3224 = vadd.f32 0.0, %v3223
      %3225 = vdwg.mxu0
      %v3226 = vadd.f32 %v2953, %v3192
      %v3227 = vadd.f32 %v2955, %v3194
      %v3228 = vadd.f32 %v2958, %v3197
      %v3229 = vadd.f32 %v2960, %v3199
      %v3230 = vadd.f32 %v2963, %v3202
      %v3231 = vadd.f32 %v2965, %v3204
      %v3232 = vadd.f32 %v2968, %v3207
      %v3233 = vadd.f32 %v2970, %v3209
      %v3234 = vadd.f32 %v2973, %v3212
      %v3235 = vadd.f32 %v2975, %v3214
      %v3236 = vadd.f32 %v2978, %v3217
      %v3237 = vadd.f32 %v2980, %v3219
      %v3238 = vadd.f32 %v2983, %v3222
      %v3239 = vadd.f32 %v2985, %v3224
      %v3240 = vld [vmem:[#allocation2 + $0x48] sm:$0xf]
      %v3241 = vld [vmem:[#allocation2 + $0x4c] sm:$0xf]
      %v3242 = vld [vmem:[#allocation2 + $0x50] sm:$0xf]
      %v3243 = vld [vmem:[#allocation2 + $0x54] sm:$0xf]
      %v3244 = vld [vmem:[#allocation2 + $0x58] sm:$0xf]
      %v3245 = vld [vmem:[#allocation2 + $0x5c] sm:$0xf]
      %v3246 = vld [vmem:[#allocation2 + $0x60] sm:$0xf]
      %v3247 = vld [vmem:[#allocation2 + $0x64] sm:$0xf]
      %v3248 = vld [vmem:[#allocation2 + $0x68] sm:$0xf]
      %v3249 = vld [vmem:[#allocation2 + $0x6c] sm:$0xf]
      %v3250 = vld [vmem:[#allocation2 + $0x70] sm:$0xf]
      %v3251 = vld [vmem:[#allocation2 + $0x74] sm:$0xf]
      %v3252 = vld [vmem:[#allocation2 + $0x78] sm:$0xf]
      %v3253 = vld [vmem:[#allocation2 + $0x7c] sm:$0xf]
      %v3254 = vld [vmem:[#allocation2 + $0x80] sm:$0x1]
      %v3255 = vld [vmem:[%s2 + $0xa0] sm:$0xf]
      %v3256 = vld [vmem:[%s2 + $0xa4] sm:$0xf]
      %v3257 = vld [vmem:[%s2 + $0xa8] sm:$0xf]
      %v3258 = vld [vmem:[%s2 + $0xac] sm:$0xf]
      %v3259 = vld [vmem:[%s2 + $0xb0] sm:$0xf]
      %v3260 = vld [vmem:[%s2 + $0xb4] sm:$0xf]
      %v3261 = vld [vmem:[%s2 + $0xb8] sm:$0xf]
      %v3262 = vld [vmem:[%s2 + $0xbc] sm:$0xf]
      %v3278 = vunpack.c.l.b16 %v3240
      %v3279 = vunpack.c.l.b16 %v3241
      %v3280 = vunpack.c.l.b16 %v3242
      %v3281 = vunpack.c.l.b16 %v3243
      %v3282 = vunpack.c.l.b16 %v3244
      %v3283 = vunpack.c.l.b16 %v3245
      %v3284 = vunpack.c.l.b16 %v3246
      %v3285 = vunpack.c.l.b16 %v3247
      %v3286 = vunpack.c.l.b16 %v3248
      %v3287 = vunpack.c.l.b16 %v3249
      %v3288 = vunpack.c.l.b16 %v3250
      %v3289 = vunpack.c.l.b16 %v3251
      %v3290 = vunpack.c.l.b16 %v3252
      %v3291 = vunpack.c.l.b16 %v3253
      %v3292 = vunpack.c.l.b16 %v3254
      %v3293 = vpack.c.b16 %v3279, %v3278
      %v3294 = vpack.c.b16 %v3281, %v3280
      %v3295 = vpack.c.b16 %v3283, %v3282
      %v3296 = vpack.c.b16 %v3285, %v3284
      %v3297 = vpack.c.b16 %v3287, %v3286
      %v3298 = vpack.c.b16 %v3289, %v3288
      %v3299 = vpack.c.b16 %v3291, %v3290
      %v3300 = vpack.c.b16 %v3292, %v3292
      %v3302 = vshrl.u32 %v3293, 16
      %v3304 = vshll.u32 %v3293, 16
      %v3306 = vrot.slane %v3304, 1
      %v3307 = vor.u32 %v3302, %v3306
      %v3309 = vshll.u32 %v3294, 16
      %v3311 = vrot.slane %v3309, 1
      %v3312 = vsel %vm1877, %v3307, %v3311
      %v3313 = vshrl.u32 %v3294, 16
      %v3315 = vor.u32 %v3313, %v3311
      %v3317 = vshll.u32 %v3295, 16
      %v3319 = vrot.slane %v3317, 1
      %v3320 = vsel %vm1877, %v3315, %v3319
      %v3321 = vshrl.u32 %v3295, 16
      %v3323 = vor.u32 %v3321, %v3319
      %v3325 = vshll.u32 %v3296, 16
      %v3327 = vrot.slane %v3325, 1
      %v3328 = vsel %vm1877, %v3323, %v3327
      %v3329 = vshrl.u32 %v3296, 16
      %v3331 = vor.u32 %v3329, %v3327
      %v3333 = vshll.u32 %v3297, 16
      %v3335 = vrot.slane %v3333, 1
      %v3336 = vsel %vm1877, %v3331, %v3335
      %v3337 = vshrl.u32 %v3297, 16
      %v3339 = vor.u32 %v3337, %v3335
      %v3341 = vshll.u32 %v3298, 16
      %v3343 = vrot.slane %v3341, 1
      %v3344 = vsel %vm1877, %v3339, %v3343
      %v3345 = vshrl.u32 %v3298, 16
      %v3347 = vor.u32 %v3345, %v3343
      %v3349 = vshll.u32 %v3299, 16
      %v3351 = vrot.slane %v3349, 1
      %v3352 = vsel %vm1877, %v3347, %v3351
      %v3353 = vshrl.u32 %v3299, 16
      %v3355 = vor.u32 %v3353, %v3351
      %v3357 = vshll.u32 %v3300, 16
      %v3359 = vrot.slane %v3357, 1
      %v3360 = vsel %vm1877, %v3355, %v3359
      %v3369 = vunpack.c.l.b16 %v3255
      %v3370 = vunpack.c.l.b16 %v3256
      %v3371 = vunpack.c.l.b16 %v3257
      %v3372 = vunpack.c.l.b16 %v3258
      %v3373 = vunpack.c.l.b16 %v3259
      %v3374 = vunpack.c.l.b16 %v3260
      %v3375 = vunpack.c.l.b16 %v3261
      %v3376 = vunpack.c.l.b16 %v3262
      %v3377 = vpack.c.b16 %v3370, %v3369
      %v3378 = vpack.c.b16 %v3372, %v3371
      %v3379 = vpack.c.b16 %v3374, %v3373
      %v3380 = vpack.c.b16 %v3376, %v3375
      %v3386 = vsel %vm1350, %v3312, 0
      %v3389 = vsel %vm1350, %v3320, 0
      %v3392 = vsel %vm1350, %v3328, 0
      %v3395 = vsel %vm1350, %v3336, 0
      %v3398 = vsel %vm1350, %v3344, 0
      %v3401 = vsel %vm1350, %v3352, 0
      %v3404 = vsel %vm1350, %v3360, 0
      %3406 = vmatpush.bf16.msra.mxu0 0
      %3407 = vmatpush.bf16.msra.mxu0 0
      %3408 = vmatpush.bf16.msra.mxu0 0
      %3409 = vmatpush.bf16.msra.mxu0 0
      %3410 = vmatpush.bf16.msra.mxu0 %v3380
      %3411 = vmatpush.bf16.msra.mxu0 %v3379
      %3412 = vmatpush.bf16.msra.mxu0 %v3378
      %3413 = vmatpush.bf16.msra.mxu0 %v3377
      %3414 = vmatmul.bf16.gmra.mxu0 %v3386
      %v3415 = vpop.f32.mrf.mxu0
      %v3416 = vadd.f32 0.0, %v3415
      %v3417 = vpop.f32.mrf.mxu0
      %v3418 = vadd.f32 0.0, %v3417
      %3419 = vmatmul.bf16.gmra.mxu0 %v3389
      %v3420 = vpop.f32.mrf.mxu0
      %v3421 = vadd.f32 0.0, %v3420
      %v3422 = vpop.f32.mrf.mxu0
      %v3423 = vadd.f32 0.0, %v3422
      %3424 = vmatmul.bf16.gmra.mxu0 %v3392
      %v3425 = vpop.f32.mrf.mxu0
      %v3426 = vadd.f32 0.0, %v3425
      %v3427 = vpop.f32.mrf.mxu0
      %v3428 = vadd.f32 0.0, %v3427
      %3429 = vmatmul.bf16.gmra.mxu0 %v3395
      %v3430 = vpop.f32.mrf.mxu0
      %v3431 = vadd.f32 0.0, %v3430
      %v3432 = vpop.f32.mrf.mxu0
      %v3433 = vadd.f32 0.0, %v3432
      %3434 = vmatmul.bf16.gmra.mxu0 %v3398
      %v3435 = vpop.f32.mrf.mxu0
      %v3436 = vadd.f32 0.0, %v3435
      %v3437 = vpop.f32.mrf.mxu0
      %v3438 = vadd.f32 0.0, %v3437
      %3439 = vmatmul.bf16.gmra.mxu0 %v3401
      %v3440 = vpop.f32.mrf.mxu0
      %v3441 = vadd.f32 0.0, %v3440
      %v3442 = vpop.f32.mrf.mxu0
      %v3443 = vadd.f32 0.0, %v3442
      %3444 = vmatmul.bf16.gmra.mxu0 %v3404
      %v3445 = vpop.f32.mrf.mxu0
      %v3446 = vadd.f32 0.0, %v3445
      %v3447 = vpop.f32.mrf.mxu0
      %v3448 = vadd.f32 0.0, %v3447
      %3449 = vdwg.mxu0
      %v3450 = vadd.f32 %v3226, %v3416
      %v3451 = vadd.f32 %v3227, %v3418
      %v3452 = vadd.f32 %v3228, %v3421
      %v3453 = vadd.f32 %v3229, %v3423
      %v3454 = vadd.f32 %v3230, %v3426
      %v3455 = vadd.f32 %v3231, %v3428
      %v3456 = vadd.f32 %v3232, %v3431
      %v3457 = vadd.f32 %v3233, %v3433
      %v3458 = vadd.f32 %v3234, %v3436
      %v3459 = vadd.f32 %v3235, %v3438
      %v3460 = vadd.f32 %v3236, %v3441
      %v3461 = vadd.f32 %v3237, %v3443
      %v3462 = vadd.f32 %v3238, %v3446
      %v3463 = vadd.f32 %v3239, %v3448
      %v3464 = vld [vmem:[#allocation2 + $0x50] sm:$0xf]
      %v3465 = vld [vmem:[#allocation2 + $0x54] sm:$0xf]
      %v3466 = vld [vmem:[#allocation2 + $0x58] sm:$0xf]
      %v3467 = vld [vmem:[#allocation2 + $0x5c] sm:$0xf]
      %v3468 = vld [vmem:[#allocation2 + $0x60] sm:$0xf]
      %v3469 = vld [vmem:[#allocation2 + $0x64] sm:$0xf]
      %v3470 = vld [vmem:[#allocation2 + $0x68] sm:$0xf]
      %v3471 = vld [vmem:[#allocation2 + $0x6c] sm:$0xf]
      %v3472 = vld [vmem:[#allocation2 + $0x70] sm:$0xf]
      %v3473 = vld [vmem:[#allocation2 + $0x74] sm:$0xf]
      %v3474 = vld [vmem:[#allocation2 + $0x78] sm:$0xf]
      %v3475 = vld [vmem:[#allocation2 + $0x7c] sm:$0xf]
      %v3476 = vld [vmem:[#allocation2 + $0x80] sm:$0xf]
      %v3477 = vld [vmem:[#allocation2 + $0x84] sm:$0xf]
      %v3478 = vld [vmem:[#allocation2 + $0x88] sm:$0x1]
      %v3479 = vld [vmem:[%s2 + $0xc0] sm:$0xf]
      %v3480 = vld [vmem:[%s2 + $0xc4] sm:$0xf]
      %v3481 = vld [vmem:[%s2 + $0xc8] sm:$0xf]
      %v3482 = vld [vmem:[%s2 + $0xcc] sm:$0xf]
      %v3483 = vld [vmem:[%s2 + $0xd0] sm:$0xf]
      %v3484 = vld [vmem:[%s2 + $0xd4] sm:$0xf]
      %v3485 = vld [vmem:[%s2 + $0xd8] sm:$0xf]
      %v3486 = vld [vmem:[%s2 + $0xdc] sm:$0xf]
      %v3487 = vld [vmem:[%s2 + $0xe0] sm:$0xf]
      %v3488 = vld [vmem:[%s2 + $0xe4] sm:$0xf]
      %v3489 = vld [vmem:[%s2 + $0xe8] sm:$0xf]
      %v3490 = vld [vmem:[%s2 + $0xec] sm:$0xf]
      %v3491 = vld [vmem:[%s2 + $0xf0] sm:$0xf]
      %v3492 = vld [vmem:[%s2 + $0xf4] sm:$0xf]
      %v3493 = vld [vmem:[%s2 + $0xf8] sm:$0xf]
      %v3494 = vld [vmem:[%s2 + $0xfc] sm:$0xf]
      %v3510 = vunpack.c.l.b16 %v3464
      %v3511 = vunpack.c.l.b16 %v3465
      %v3512 = vunpack.c.l.b16 %v3466
      %v3513 = vunpack.c.l.b16 %v3467
      %v3514 = vunpack.c.l.b16 %v3468
      %v3515 = vunpack.c.l.b16 %v3469
      %v3516 = vunpack.c.l.b16 %v3470
      %v3517 = vunpack.c.l.b16 %v3471
      %v3518 = vunpack.c.l.b16 %v3472
      %v3519 = vunpack.c.l.b16 %v3473
      %v3520 = vunpack.c.l.b16 %v3474
      %v3521 = vunpack.c.l.b16 %v3475
      %v3522 = vunpack.c.l.b16 %v3476
      %v3523 = vunpack.c.l.b16 %v3477
      %v3524 = vunpack.c.l.b16 %v3478
      %v3525 = vpack.c.b16 %v3511, %v3510
      %v3526 = vpack.c.b16 %v3513, %v3512
      %v3527 = vpack.c.b16 %v3515, %v3514
      %v3528 = vpack.c.b16 %v3517, %v3516
      %v3529 = vpack.c.b16 %v3519, %v3518
      %v3530 = vpack.c.b16 %v3521, %v3520
      %v3531 = vpack.c.b16 %v3523, %v3522
      %v3532 = vpack.c.b16 %v3524, %v3524
      %v3534 = vshrl.u32 %v3525, 16
      %v3536 = vshll.u32 %v3525, 16
      %v3538 = vrot.slane %v3536, 1
      %v3539 = vor.u32 %v3534, %v3538
      %v3541 = vshll.u32 %v3526, 16
      %v3543 = vrot.slane %v3541, 1
      %v3544 = vsel %vm1877, %v3539, %v3543
      %v3545 = vshrl.u32 %v3526, 16
      %v3547 = vor.u32 %v3545, %v3543
      %v3549 = vshll.u32 %v3527, 16
      %v3551 = vrot.slane %v3549, 1
      %v3552 = vsel %vm1877, %v3547, %v3551
      %v3553 = vshrl.u32 %v3527, 16
      %v3555 = vor.u32 %v3553, %v3551
      %v3557 = vshll.u32 %v3528, 16
      %v3559 = vrot.slane %v3557, 1
      %v3560 = vsel %vm1877, %v3555, %v3559
      %v3561 = vshrl.u32 %v3528, 16
      %v3563 = vor.u32 %v3561, %v3559
      %v3565 = vshll.u32 %v3529, 16
      %v3567 = vrot.slane %v3565, 1
      %v3568 = vsel %vm1877, %v3563, %v3567
      %v3569 = vshrl.u32 %v3529, 16
      %v3571 = vor.u32 %v3569, %v3567
      %v3573 = vshll.u32 %v3530, 16
      %v3575 = vrot.slane %v3573, 1
      %v3576 = vsel %vm1877, %v3571, %v3575
      %v3577 = vshrl.u32 %v3530, 16
      %v3579 = vor.u32 %v3577, %v3575
      %v3581 = vshll.u32 %v3531, 16
      %v3583 = vrot.slane %v3581, 1
      %v3584 = vsel %vm1877, %v3579, %v3583
      %v3585 = vshrl.u32 %v3531, 16
      %v3587 = vor.u32 %v3585, %v3583
      %v3589 = vshll.u32 %v3532, 16
      %v3591 = vrot.slane %v3589, 1
      %v3592 = vsel %vm1877, %v3587, %v3591
      %v3616 = vunpack.c.l.b16 %v3479
      %v3617 = vunpack.c.l.b16 %v3480
      %v3618 = vunpack.c.l.b16 %v3481
      %v3619 = vunpack.c.l.b16 %v3482
      %v3620 = vunpack.c.l.b16 %v3483
      %v3621 = vunpack.c.l.b16 %v3484
      %v3622 = vunpack.c.l.b16 %v3485
      %v3623 = vunpack.c.l.b16 %v3486
      %v3624 = vunpack.c.l.b16 %v3487
      %v3625 = vunpack.c.l.b16 %v3488
      %v3626 = vunpack.c.l.b16 %v3489
      %v3627 = vunpack.c.l.b16 %v3490
      %v3628 = vunpack.c.l.b16 %v3491
      %v3629 = vunpack.c.l.b16 %v3492
      %v3630 = vunpack.c.l.b16 %v3493
      %v3631 = vunpack.c.l.b16 %v3494
      %v3632 = vpack.c.b16 %v3617, %v3616
      %v3633 = vpack.c.b16 %v3619, %v3618
      %v3634 = vpack.c.b16 %v3621, %v3620
      %v3635 = vpack.c.b16 %v3623, %v3622
      %v3636 = vpack.c.b16 %v3625, %v3624
      %v3637 = vpack.c.b16 %v3627, %v3626
      %v3638 = vpack.c.b16 %v3629, %v3628
      %v3639 = vpack.c.b16 %v3631, %v3630
      %3648 = vmatpush.bf16.msra.mxu0 %v3639
      %3649 = vmatpush.bf16.msra.mxu0 %v3638
      %3650 = vmatpush.bf16.msra.mxu0 %v3637
      %3651 = vmatpush.bf16.msra.mxu0 %v3636
      %3652 = vmatpush.bf16.msra.mxu0 %v3635
      %3653 = vmatpush.bf16.msra.mxu0 %v3634
      %3654 = vmatpush.bf16.msra.mxu0 %v3633
      %3655 = vmatpush.bf16.msra.mxu0 %v3632
      %3656 = vmatmul.bf16.gmra.mxu0 %v3544
      %v3657 = vpop.f32.mrf.mxu0
      %v3658 = vadd.f32 0.0, %v3657
      %v3659 = vpop.f32.mrf.mxu0
      %v3660 = vadd.f32 0.0, %v3659
      %3661 = vmatmul.bf16.gmra.mxu0 %v3552
      %v3662 = vpop.f32.mrf.mxu0
      %v3663 = vadd.f32 0.0, %v3662
      %v3664 = vpop.f32.mrf.mxu0
      %v3665 = vadd.f32 0.0, %v3664
      %3666 = vmatmul.bf16.gmra.mxu0 %v3560
      %v3667 = vpop.f32.mrf.mxu0
      %v3668 = vadd.f32 0.0, %v3667
      %v3669 = vpop.f32.mrf.mxu0
      %v3670 = vadd.f32 0.0, %v3669
      %3671 = vmatmul.bf16.gmra.mxu0 %v3568
      %v3672 = vpop.f32.mrf.mxu0
      %v3673 = vadd.f32 0.0, %v3672
      %v3674 = vpop.f32.mrf.mxu0
      %v3675 = vadd.f32 0.0, %v3674
      %3676 = vmatmul.bf16.gmra.mxu0 %v3576
      %v3677 = vpop.f32.mrf.mxu0
      %v3678 = vadd.f32 0.0, %v3677
      %v3679 = vpop.f32.mrf.mxu0
      %v3680 = vadd.f32 0.0, %v3679
      %3681 = vmatmul.bf16.gmra.mxu0 %v3584
      %v3682 = vpop.f32.mrf.mxu0
      %v3683 = vadd.f32 0.0, %v3682
      %v3684 = vpop.f32.mrf.mxu0
      %v3685 = vadd.f32 0.0, %v3684
      %3686 = vmatmul.bf16.gmra.mxu0 %v3592
      %v3687 = vpop.f32.mrf.mxu0
      %v3688 = vadd.f32 0.0, %v3687
      %v3689 = vpop.f32.mrf.mxu0
      %v3690 = vadd.f32 0.0, %v3689
      %3691 = vdwg.mxu0
      %v3692 = vadd.f32 %v3450, %v3658
      %v3693 = vadd.f32 %v3451, %v3660
      %v3694 = vadd.f32 %v3452, %v3663
      %v3695 = vadd.f32 %v3453, %v3665
      %v3696 = vadd.f32 %v3454, %v3668
      %v3697 = vadd.f32 %v3455, %v3670
      %v3698 = vadd.f32 %v3456, %v3673
      %v3699 = vadd.f32 %v3457, %v3675
      %v3700 = vadd.f32 %v3458, %v3678
      %v3701 = vadd.f32 %v3459, %v3680
      %v3702 = vadd.f32 %v3460, %v3683
      %v3703 = vadd.f32 %v3461, %v3685
      %v3704 = vadd.f32 %v3462, %v3688
      %v3705 = vadd.f32 %v3463, %v3690
      %v3706 = vld [vmem:[#allocation2 + $0x50] sm:$0xe]
      %v3707 = vld [vmem:[#allocation2 + $0x88] sm:$0x3]
      %v3708 = vld [vmem:[%s2 + $0x100] sm:$0xf]
      %v3709 = vld [vmem:[%s2 + $0x104] sm:$0xf]
      %v3710 = vld [vmem:[%s2 + $0x108] sm:$0xf]
      %v3711 = vld [vmem:[%s2 + $0x10c] sm:$0xf]
      %v3712 = vld [vmem:[%s2 + $0x110] sm:$0xf]
      %v3713 = vld [vmem:[%s2 + $0x114] sm:$0xf]
      %v3714 = vld [vmem:[%s2 + $0x118] sm:$0xf]
      %v3715 = vld [vmem:[%s2 + $0x11c] sm:$0xf]
      %v3718 = vunpack.c.l.b16 %v3706
      %v3719 = vunpack.c.l.b16 %v3707
      %v3720 = vpack.c.b16 %v3511, %v3718
      %v3721 = vpack.c.b16 %v3719, %v3719
      %v3723 = vshrl.u32 %v3720, 16
      %v3725 = vrot.slane %v3723, 1
      %v3726 = vshll.u32 %v3720, 16
      %v3728 = vrot.slane %v3726, 2
      %v3729 = vor.u32 %v3725, %v3728
      %v3730 = vrot.slane %v3545, 1
      %v3731 = vrot.slane %v3541, 2
      %v3732 = vor.u32 %v3730, %v3731
      %v3733 = vsel %vm2299, %v3729, %v3732
      %v3734 = vrot.slane %v3553, 1
      %v3735 = vrot.slane %v3549, 2
      %v3736 = vor.u32 %v3734, %v3735
      %v3737 = vsel %vm2299, %v3732, %v3736
      %v3738 = vrot.slane %v3561, 1
      %v3739 = vrot.slane %v3557, 2
      %v3740 = vor.u32 %v3738, %v3739
      %v3741 = vsel %vm2299, %v3736, %v3740
      %v3742 = vrot.slane %v3569, 1
      %v3743 = vrot.slane %v3565, 2
      %v3744 = vor.u32 %v3742, %v3743
      %v3745 = vsel %vm2299, %v3740, %v3744
      %v3746 = vrot.slane %v3577, 1
      %v3747 = vrot.slane %v3573, 2
      %v3748 = vor.u32 %v3746, %v3747
      %v3749 = vsel %vm2299, %v3744, %v3748
      %v3750 = vrot.slane %v3585, 1
      %v3751 = vrot.slane %v3581, 2
      %v3752 = vor.u32 %v3750, %v3751
      %v3753 = vsel %vm2299, %v3748, %v3752
      %v3755 = vshrl.u32 %v3721, 16
      %v3757 = vrot.slane %v3755, 1
      %v3758 = vshll.u32 %v3721, 16
      %v3760 = vrot.slane %v3758, 2
      %v3761 = vor.u32 %v3757, %v3760
      %v3762 = vsel %vm2299, %v3752, %v3761
      %v3771 = vunpack.c.l.b16 %v3708
      %v3772 = vunpack.c.l.b16 %v3709
      %v3773 = vunpack.c.l.b16 %v3710
      %v3774 = vunpack.c.l.b16 %v3711
      %v3775 = vunpack.c.l.b16 %v3712
      %v3776 = vunpack.c.l.b16 %v3713
      %v3777 = vunpack.c.l.b16 %v3714
      %v3778 = vunpack.c.l.b16 %v3715
      %v3779 = vpack.c.b16 %v3772, %v3771
      %v3780 = vpack.c.b16 %v3774, %v3773
      %v3781 = vpack.c.b16 %v3776, %v3775
      %v3782 = vpack.c.b16 %v3778, %v3777
      %v3788 = vsel %vm1350, %v3733, 0
      %v3791 = vsel %vm1350, %v3737, 0
      %v3794 = vsel %vm1350, %v3741, 0
      %v3797 = vsel %vm1350, %v3745, 0
      %v3800 = vsel %vm1350, %v3749, 0
      %v3803 = vsel %vm1350, %v3753, 0
      %v3806 = vsel %vm1350, %v3762, 0
      %3808 = vmatpush.bf16.msra.mxu0 0
      %3809 = vmatpush.bf16.msra.mxu0 0
      %3810 = vmatpush.bf16.msra.mxu0 0
      %3811 = vmatpush.bf16.msra.mxu0 0
      %3812 = vmatpush.bf16.msra.mxu0 %v3782
      %3813 = vmatpush.bf16.msra.mxu0 %v3781
      %3814 = vmatpush.bf16.msra.mxu0 %v3780
      %3815 = vmatpush.bf16.msra.mxu0 %v3779
      %3816 = vmatmul.bf16.gmra.mxu0 %v3788
      %v3817 = vpop.f32.mrf.mxu0
      %v3818 = vadd.f32 0.0, %v3817
      %v3819 = vpop.f32.mrf.mxu0
      %v3820 = vadd.f32 0.0, %v3819
      %3821 = vmatmul.bf16.gmra.mxu0 %v3791
      %v3822 = vpop.f32.mrf.mxu0
      %v3823 = vadd.f32 0.0, %v3822
      %v3824 = vpop.f32.mrf.mxu0
      %v3825 = vadd.f32 0.0, %v3824
      %3826 = vmatmul.bf16.gmra.mxu0 %v3794
      %v3827 = vpop.f32.mrf.mxu0
      %v3828 = vadd.f32 0.0, %v3827
      %v3829 = vpop.f32.mrf.mxu0
      %v3830 = vadd.f32 0.0, %v3829
      %3831 = vmatmul.bf16.gmra.mxu0 %v3797
      %v3832 = vpop.f32.mrf.mxu0
      %v3833 = vadd.f32 0.0, %v3832
      %v3834 = vpop.f32.mrf.mxu0
      %v3835 = vadd.f32 0.0, %v3834
      %3836 = vmatmul.bf16.gmra.mxu0 %v3800
      %v3837 = vpop.f32.mrf.mxu0
      %v3838 = vadd.f32 0.0, %v3837
      %v3839 = vpop.f32.mrf.mxu0
      %v3840 = vadd.f32 0.0, %v3839
      %3841 = vmatmul.bf16.gmra.mxu0 %v3803
      %v3842 = vpop.f32.mrf.mxu0
      %v3843 = vadd.f32 0.0, %v3842
      %v3844 = vpop.f32.mrf.mxu0
      %v3845 = vadd.f32 0.0, %v3844
      %3846 = vmatmul.bf16.gmra.mxu0 %v3806
      %v3847 = vpop.f32.mrf.mxu0
      %v3848 = vadd.f32 0.0, %v3847
      %v3849 = vpop.f32.mrf.mxu0
      %v3850 = vadd.f32 0.0, %v3849
      %3851 = vdwg.mxu0
      %v3852 = vadd.f32 %v3692, %v3818
      %v3853 = vadd.f32 %v3693, %v3820
      %v3854 = vadd.f32 %v3694, %v3823
      %v3855 = vadd.f32 %v3695, %v3825
      %v3856 = vadd.f32 %v3696, %v3828
      %v3857 = vadd.f32 %v3697, %v3830
      %v3858 = vadd.f32 %v3698, %v3833
      %v3859 = vadd.f32 %v3699, %v3835
      %v3860 = vadd.f32 %v3700, %v3838
      %v3861 = vadd.f32 %v3701, %v3840
      %v3862 = vadd.f32 %v3702, %v3843
      %v3863 = vadd.f32 %v3703, %v3845
      %v3864 = vadd.f32 %v3704, %v3848
      %v3865 = vadd.f32 %v3705, %v3850
      %v3866 = vld [vmem:[%s3] sm:$0x1]
      %v3868 = vperm.slane %v3866, 0
      %v3870 = vadd.f32 %v3852, %v3868
      %v3871 = vadd.f32 %v3853, %v3868
      %v3872 = vadd.f32 %v3854, %v3868
      %v3873 = vadd.f32 %v3855, %v3868
      %v3874 = vadd.f32 %v3856, %v3868
      %v3875 = vadd.f32 %v3857, %v3868
      %v3876 = vadd.f32 %v3858, %v3868
      %v3877 = vadd.f32 %v3859, %v3868
      %v3878 = vadd.f32 %v3860, %v3868
      %v3879 = vadd.f32 %v3861, %v3868
      %v3880 = vadd.f32 %v3862, %v3868
      %v3881 = vadd.f32 %v3863, %v3868
      %v3882 = vadd.f32 %v3864, %v3868
      %v3883 = vadd.f32 %v3865, %v3868
      %v3884 = vmax.f32 %v3870, 0.0
      %v3885 = vmax.f32 %v3871, 0.0
      %v3886 = vmax.f32 %v3872, 0.0
      %v3887 = vmax.f32 %v3873, 0.0
      %v3888 = vmax.f32 %v3874, 0.0
      %v3889 = vmax.f32 %v3875, 0.0
      %v3890 = vmax.f32 %v3876, 0.0
      %v3891 = vmax.f32 %v3877, 0.0
      %v3892 = vmax.f32 %v3878, 0.0
      %v3893 = vmax.f32 %v3879, 0.0
      %v3894 = vmax.f32 %v3880, 0.0
      %v3895 = vmax.f32 %v3881, 0.0
      %v3896 = vmax.f32 %v3882, 0.0
      %v3897 = vmax.f32 %v3883, 0.0
      %v3898 = vld [vmem:[%s1 + $0x70] sm:$0xff]
      %v3899 = vld [vmem:[%s1 + $0x78] sm:$0xff]
      %v3900 = vld [vmem:[%s1 + $0x80] sm:$0xff]
      %v3901 = vld [vmem:[%s1 + $0x88] sm:$0xff]
      %v3902 = vld [vmem:[%s1 + $0x90] sm:$0xff]
      %v3903 = vld [vmem:[%s1 + $0x98] sm:$0xff]
      %v3904 = vld [vmem:[%s1 + $0xa0] sm:$0xff]
      %v3905 = vld [vmem:[%s1 + $0xa8] sm:$0xff]
      %v3906 = vld [vmem:[%s1 + $0xb0] sm:$0xff]
      %v3907 = vld [vmem:[%s1 + $0xb8] sm:$0xff]
      %v3908 = vld [vmem:[%s1 + $0xc0] sm:$0xff]
      %v3909 = vld [vmem:[%s1 + $0xc8] sm:$0xff]
      %v3910 = vld [vmem:[%s1 + $0xd0] sm:$0xff]
      %v3911 = vld [vmem:[%s1 + $0xd8] sm:$0xff]
      %3913 = vset.pattern.permute.xlu0 0
      %3914 = vperm.xlu0 %3913, %v3898
      %v3915 = vpop.permute.xlu0 %3914
      %3918 = vset.pattern.permute.xlu0 0
      %3919 = vperm.xlu0 %3918, %v3899
      %v3920 = vpop.permute.xlu0 %3919
      %3923 = vset.pattern.permute.xlu0 0
      %3924 = vperm.xlu0 %3923, %v3900
      %v3925 = vpop.permute.xlu0 %3924
      %3928 = vset.pattern.permute.xlu0 0
      %3929 = vperm.xlu0 %3928, %v3901
      %v3930 = vpop.permute.xlu0 %3929
      %3933 = vset.pattern.permute.xlu0 0
      %3934 = vperm.xlu0 %3933, %v3902
      %v3935 = vpop.permute.xlu0 %3934
      %3938 = vset.pattern.permute.xlu0 0
      %3939 = vperm.xlu0 %3938, %v3903
      %v3940 = vpop.permute.xlu0 %3939
      %3943 = vset.pattern.permute.xlu0 0
      %3944 = vperm.xlu0 %3943, %v3904
      %v3945 = vpop.permute.xlu0 %3944
      %3948 = vset.pattern.permute.xlu0 0
      %3949 = vperm.xlu0 %3948, %v3905
      %v3950 = vpop.permute.xlu0 %3949
      %3953 = vset.pattern.permute.xlu0 0
      %3954 = vperm.xlu0 %3953, %v3906
      %v3955 = vpop.permute.xlu0 %3954
      %3958 = vset.pattern.permute.xlu0 0
      %3959 = vperm.xlu0 %3958, %v3907
      %v3960 = vpop.permute.xlu0 %3959
      %3963 = vset.pattern.permute.xlu0 0
      %3964 = vperm.xlu0 %3963, %v3908
      %v3965 = vpop.permute.xlu0 %3964
      %3968 = vset.pattern.permute.xlu0 0
      %3969 = vperm.xlu0 %3968, %v3909
      %v3970 = vpop.permute.xlu0 %3969
      %3973 = vset.pattern.permute.xlu0 0
      %3974 = vperm.xlu0 %3973, %v3910
      %v3975 = vpop.permute.xlu0 %3974
      %3978 = vset.pattern.permute.xlu0 0
      %3979 = vperm.xlu0 %3978, %v3911
      %v3980 = vpop.permute.xlu0 %3979
      %v3982 = vmul.f32 %v3884, %v3915
      %v3983 = vmul.f32 %v3885, %v3920
      %v3984 = vmul.f32 %v3886, %v3925
      %v3985 = vmul.f32 %v3887, %v3930
      %v3986 = vmul.f32 %v3888, %v3935
      %v3987 = vmul.f32 %v3889, %v3940
      %v3988 = vmul.f32 %v3890, %v3945
      %v3989 = vmul.f32 %v3891, %v3950
      %v3990 = vmul.f32 %v3892, %v3955
      %v3991 = vmul.f32 %v3893, %v3960
      %v3992 = vmul.f32 %v3894, %v3965
      %v3993 = vmul.f32 %v3895, %v3970
      %v3994 = vmul.f32 %v3896, %v3975
      %v3995 = vmul.f32 %v3897, %v3980
      %v3996 = vpack.c.bf16 %v3982, %v3982
      %v3997 = vpack.c.bf16 %v3983, %v3983
      %v3998 = vpack.c.bf16 %v3984, %v3984
      %v3999 = vpack.c.bf16 %v3985, %v3985
      %v4000 = vpack.c.bf16 %v3986, %v3986
      %v4001 = vpack.c.bf16 %v3987, %v3987
      %v4002 = vpack.c.bf16 %v3988, %v3988
      %v4003 = vpack.c.bf16 %v3989, %v3989
      %v4004 = vpack.c.bf16 %v3990, %v3990
      %v4005 = vpack.c.bf16 %v3991, %v3991
      %v4006 = vpack.c.bf16 %v3992, %v3992
      %v4007 = vpack.c.bf16 %v3993, %v3993
      %v4008 = vpack.c.bf16 %v3994, %v3994
      %v4009 = vpack.c.bf16 %v3995, %v3995
      %4010 = vst.msk [vmem:[#allocation3 + $0x48] sm:$0xf] %vm253, %v3996
      %4011 = vst.msk [vmem:[#allocation3 + $0x4c] sm:$0xf] %vm253, %v3997
      %4012 = vst.msk [vmem:[#allocation3 + $0x50] sm:$0xf] %vm253, %v3998
      %4013 = vst.msk [vmem:[#allocation3 + $0x54] sm:$0xf] %vm253, %v3999
      %4014 = vst.msk [vmem:[#allocation3 + $0x58] sm:$0xf] %vm253, %v4000
      %4015 = vst.msk [vmem:[#allocation3 + $0x5c] sm:$0xf] %vm253, %v4001
      %4016 = vst.msk [vmem:[#allocation3 + $0x60] sm:$0xf] %vm253, %v4002
      %4017 = vst.msk [vmem:[#allocation3 + $0x64] sm:$0xf] %vm253, %v4003
      %4018 = vst.msk [vmem:[#allocation3 + $0x68] sm:$0xf] %vm253, %v4004
      %4019 = vst.msk [vmem:[#allocation3 + $0x6c] sm:$0xf] %vm253, %v4005
      %4020 = vst.msk [vmem:[#allocation3 + $0x70] sm:$0xf] %vm253, %v4006
      %4021 = vst.msk [vmem:[#allocation3 + $0x74] sm:$0xf] %vm253, %v4007
      %4022 = vst.msk [vmem:[#allocation3 + $0x78] sm:$0xf] %vm253, %v4008
      %4023 = vst.msk [vmem:[#allocation3 + $0x7c] sm:$0xf] %vm253, %v4009
      %v4024 = vld [vmem:[#allocation2 + $0x74] sm:$0xc]
      %v4025 = vld [vmem:[#allocation2 + $0x78] sm:$0xf]
      %v4026 = vld [vmem:[#allocation2 + $0x7c] sm:$0xf]
      %v4027 = vld [vmem:[#allocation2 + $0x80] sm:$0xf]
      %v4028 = vld [vmem:[#allocation2 + $0x84] sm:$0xf]
      %v4029 = vld [vmem:[#allocation2 + $0x88] sm:$0xf]
      %v4030 = vld [vmem:[#allocation2 + $0x8c] sm:$0xf]
      %v4031 = vld [vmem:[#allocation2 + $0x90] sm:$0xf]
      %v4032 = vld [vmem:[#allocation2 + $0x94] sm:$0xf]
      %v4033 = vld [vmem:[#allocation2 + $0x98] sm:$0xf]
      %v4034 = vld [vmem:[#allocation2 + $0x9c] sm:$0xf]
      %v4035 = vld [vmem:[#allocation2 + $0xa0] sm:$0xf]
      %v4036 = vld [vmem:[#allocation2 + $0xa4] sm:$0xf]
      %v4037 = vld [vmem:[#allocation2 + $0xa8] sm:$0xf]
      %v4038 = vld [vmem:[#allocation2 + $0xac] sm:$0x7]
      %v4039 = vld [vmem:[%s2] sm:$0xf]
      %v4040 = vld [vmem:[%s2 + $0x4] sm:$0xf]
      %v4041 = vld [vmem:[%s2 + $0x8] sm:$0xf]
      %v4042 = vld [vmem:[%s2 + $0xc] sm:$0xf]
      %v4043 = vld [vmem:[%s2 + $0x10] sm:$0xf]
      %v4044 = vld [vmem:[%s2 + $0x14] sm:$0xf]
      %v4045 = vld [vmem:[%s2 + $0x18] sm:$0xf]
      %v4046 = vld [vmem:[%s2 + $0x1c] sm:$0xf]
      %v4047 = vld [vmem:[%s2 + $0x20] sm:$0xf]
      %v4048 = vld [vmem:[%s2 + $0x24] sm:$0xf]
      %v4049 = vld [vmem:[%s2 + $0x28] sm:$0xf]
      %v4050 = vld [vmem:[%s2 + $0x2c] sm:$0xf]
      %v4051 = vld [vmem:[%s2 + $0x30] sm:$0xf]
      %v4052 = vld [vmem:[%s2 + $0x34] sm:$0xf]
      %v4053 = vld [vmem:[%s2 + $0x38] sm:$0xf]
      %v4054 = vld [vmem:[%s2 + $0x3c] sm:$0xf]
      %v4055 = vld [vmem:[#allocation2 + $0x74] sm:$0x8]
      %v4056 = vld [vmem:[#allocation2 + $0xac] sm:$0xf]
      %v4057 = vld [vmem:[%s2 + $0x40] sm:$0xf]
      %v4058 = vld [vmem:[%s2 + $0x44] sm:$0xf]
      %v4059 = vld [vmem:[%s2 + $0x48] sm:$0xf]
      %v4060 = vld [vmem:[%s2 + $0x4c] sm:$0xf]
      %v4061 = vld [vmem:[%s2 + $0x50] sm:$0xf]
      %v4062 = vld [vmem:[%s2 + $0x54] sm:$0xf]
      %v4063 = vld [vmem:[%s2 + $0x58] sm:$0xf]
      %v4064 = vld [vmem:[%s2 + $0x5c] sm:$0xf]
      %v4080 = vunpack.c.l.b16 %v4055
      %v4081 = vunpack.c.l.b16 %v4025
      %v4082 = vunpack.c.l.b16 %v4026
      %v4083 = vunpack.c.l.b16 %v4027
      %v4084 = vunpack.c.l.b16 %v4028
      %v4085 = vunpack.c.l.b16 %v4029
      %v4086 = vunpack.c.l.b16 %v4030
      %v4087 = vunpack.c.l.b16 %v4031
      %v4088 = vunpack.c.l.b16 %v4032
      %v4089 = vunpack.c.l.b16 %v4033
      %v4090 = vunpack.c.l.b16 %v4034
      %v4091 = vunpack.c.l.b16 %v4035
      %v4092 = vunpack.c.l.b16 %v4036
      %v4093 = vunpack.c.l.b16 %v4037
      %v4094 = vunpack.c.l.b16 %v4056
      %v4095 = vpack.c.b16 %v4081, %v4080
      %v4096 = vpack.c.b16 %v4083, %v4082
      %v4097 = vpack.c.b16 %v4085, %v4084
      %v4098 = vpack.c.b16 %v4087, %v4086
      %v4099 = vpack.c.b16 %v4089, %v4088
      %v4100 = vpack.c.b16 %v4091, %v4090
      %v4101 = vpack.c.b16 %v4093, %v4092
      %v4102 = vpack.c.b16 %v4094, %v4094
      %v4104 = vshrl.u32 %v4095, 16
      %v4106 = vrot.slane %v4104, 3
      %v4107 = vshll.u32 %v4095, 16
      %v4109 = vrot.slane %v4107, 4
      %v4110 = vor.u32 %v4106, %v4109
      %v4112 = vshrl.u32 %v4096, 16
      %v4114 = vrot.slane %v4112, 3
      %v4115 = vshll.u32 %v4096, 16
      %v4117 = vrot.slane %v4115, 4
      %v4118 = vor.u32 %v4114, %v4117
      %v4119 = vsel %vm1254, %v4110, %v4118
      %v4121 = vshrl.u32 %v4097, 16
      %v4123 = vrot.slane %v4121, 3
      %v4124 = vshll.u32 %v4097, 16
      %v4126 = vrot.slane %v4124, 4
      %v4127 = vor.u32 %v4123, %v4126
      %v4128 = vsel %vm1254, %v4118, %v4127
      %v4130 = vshrl.u32 %v4098, 16
      %v4132 = vrot.slane %v4130, 3
      %v4133 = vshll.u32 %v4098, 16
      %v4135 = vrot.slane %v4133, 4
      %v4136 = vor.u32 %v4132, %v4135
      %v4137 = vsel %vm1254, %v4127, %v4136
      %v4139 = vshrl.u32 %v4099, 16
      %v4141 = vrot.slane %v4139, 3
      %v4142 = vshll.u32 %v4099, 16
      %v4144 = vrot.slane %v4142, 4
      %v4145 = vor.u32 %v4141, %v4144
      %v4146 = vsel %vm1254, %v4136, %v4145
      %v4148 = vshrl.u32 %v4100, 16
      %v4150 = vrot.slane %v4148, 3
      %v4151 = vshll.u32 %v4100, 16
      %v4153 = vrot.slane %v4151, 4
      %v4154 = vor.u32 %v4150, %v4153
      %v4155 = vsel %vm1254, %v4145, %v4154
      %v4157 = vshrl.u32 %v4101, 16
      %v4159 = vrot.slane %v4157, 3
      %v4160 = vshll.u32 %v4101, 16
      %v4162 = vrot.slane %v4160, 4
      %v4163 = vor.u32 %v4159, %v4162
      %v4164 = vsel %vm1254, %v4154, %v4163
      %v4166 = vshrl.u32 %v4102, 16
      %v4168 = vrot.slane %v4166, 3
      %v4169 = vshll.u32 %v4102, 16
      %v4171 = vrot.slane %v4169, 4
      %v4172 = vor.u32 %v4168, %v4171
      %v4173 = vsel %vm1254, %v4163, %v4172
      %v4182 = vunpack.c.l.b16 %v4057
      %v4183 = vunpack.c.l.b16 %v4058
      %v4184 = vunpack.c.l.b16 %v4059
      %v4185 = vunpack.c.l.b16 %v4060
      %v4186 = vunpack.c.l.b16 %v4061
      %v4187 = vunpack.c.l.b16 %v4062
      %v4188 = vunpack.c.l.b16 %v4063
      %v4189 = vunpack.c.l.b16 %v4064
      %v4190 = vpack.c.b16 %v4183, %v4182
      %v4191 = vpack.c.b16 %v4185, %v4184
      %v4192 = vpack.c.b16 %v4187, %v4186
      %v4193 = vpack.c.b16 %v4189, %v4188
      %v4199 = vsel %vm1350, %v4119, 0
      %v4202 = vsel %vm1350, %v4128, 0
      %v4205 = vsel %vm1350, %v4137, 0
      %v4208 = vsel %vm1350, %v4146, 0
      %v4211 = vsel %vm1350, %v4155, 0
      %v4214 = vsel %vm1350, %v4164, 0
      %v4217 = vsel %vm1350, %v4173, 0
      %4219 = vmatpush.bf16.msra.mxu0 0
      %4220 = vmatpush.bf16.msra.mxu0 0
      %4221 = vmatpush.bf16.msra.mxu0 0
      %4222 = vmatpush.bf16.msra.mxu0 0
      %4223 = vmatpush.bf16.msra.mxu0 %v4193
      %4224 = vmatpush.bf16.msra.mxu0 %v4192
      %4225 = vmatpush.bf16.msra.mxu0 %v4191
      %4226 = vmatpush.bf16.msra.mxu0 %v4190
      %4227 = vmatmul.bf16.gmra.mxu0 %v4199
      %v4228 = vpop.f32.mrf.mxu0
      %v4229 = vadd.f32 0.0, %v4228
      %v4230 = vpop.f32.mrf.mxu0
      %v4231 = vadd.f32 0.0, %v4230
      %4232 = vmatmul.bf16.gmra.mxu0 %v4202
      %v4233 = vpop.f32.mrf.mxu0
      %v4234 = vadd.f32 0.0, %v4233
      %v4235 = vpop.f32.mrf.mxu0
      %v4236 = vadd.f32 0.0, %v4235
      %4237 = vmatmul.bf16.gmra.mxu0 %v4205
      %v4238 = vpop.f32.mrf.mxu0
      %v4239 = vadd.f32 0.0, %v4238
      %v4240 = vpop.f32.mrf.mxu0
      %v4241 = vadd.f32 0.0, %v4240
      %4242 = vmatmul.bf16.gmra.mxu0 %v4208
      %v4243 = vpop.f32.mrf.mxu0
      %v4244 = vadd.f32 0.0, %v4243
      %v4245 = vpop.f32.mrf.mxu0
      %v4246 = vadd.f32 0.0, %v4245
      %4247 = vmatmul.bf16.gmra.mxu0 %v4211
      %v4248 = vpop.f32.mrf.mxu0
      %v4249 = vadd.f32 0.0, %v4248
      %v4250 = vpop.f32.mrf.mxu0
      %v4251 = vadd.f32 0.0, %v4250
      %4252 = vmatmul.bf16.gmra.mxu0 %v4214
      %v4253 = vpop.f32.mrf.mxu0
      %v4254 = vadd.f32 0.0, %v4253
      %v4255 = vpop.f32.mrf.mxu0
      %v4256 = vadd.f32 0.0, %v4255
      %4257 = vmatmul.bf16.gmra.mxu0 %v4217
      %v4258 = vpop.f32.mrf.mxu0
      %v4259 = vadd.f32 0.0, %v4258
      %v4260 = vpop.f32.mrf.mxu0
      %v4261 = vadd.f32 0.0, %v4260
      %4262 = vdwg.mxu0
      %v4265 = vunpack.c.l.b16 %v4024
      %v4266 = vunpack.c.l.b16 %v4038
      %v4267 = vpack.c.b16 %v4081, %v4265
      %v4268 = vpack.c.b16 %v4266, %v4266
      %v4270 = vshrl.u32 %v4267, 16
      %v4272 = vrot.slane %v4270, 2
      %v4273 = vshll.u32 %v4267, 16
      %v4275 = vrot.slane %v4273, 3
      %v4276 = vor.u32 %v4272, %v4275
      %v4277 = vrot.slane %v4112, 2
      %v4278 = vrot.slane %v4115, 3
      %v4279 = vor.u32 %v4277, %v4278
      %v4280 = vsel %vm1422, %v4276, %v4279
      %v4281 = vrot.slane %v4121, 2
      %v4282 = vrot.slane %v4124, 3
      %v4283 = vor.u32 %v4281, %v4282
      %v4284 = vsel %vm1422, %v4279, %v4283
      %v4285 = vrot.slane %v4130, 2
      %v4286 = vrot.slane %v4133, 3
      %v4287 = vor.u32 %v4285, %v4286
      %v4288 = vsel %vm1422, %v4283, %v4287
      %v4289 = vrot.slane %v4139, 2
      %v4290 = vrot.slane %v4142, 3
      %v4291 = vor.u32 %v4289, %v4290
      %v4292 = vsel %vm1422, %v4287, %v4291
      %v4293 = vrot.slane %v4148, 2
      %v4294 = vrot.slane %v4151, 3
      %v4295 = vor.u32 %v4293, %v4294
      %v4296 = vsel %vm1422, %v4291, %v4295
      %v4297 = vrot.slane %v4157, 2
      %v4298 = vrot.slane %v4160, 3
      %v4299 = vor.u32 %v4297, %v4298
      %v4300 = vsel %vm1422, %v4295, %v4299
      %v4302 = vshrl.u32 %v4268, 16
      %v4304 = vrot.slane %v4302, 2
      %v4305 = vshll.u32 %v4268, 16
      %v4307 = vrot.slane %v4305, 3
      %v4308 = vor.u32 %v4304, %v4307
      %v4309 = vsel %vm1422, %v4299, %v4308
      %v4333 = vunpack.c.l.b16 %v4039
      %v4334 = vunpack.c.l.b16 %v4040
      %v4335 = vunpack.c.l.b16 %v4041
      %v4336 = vunpack.c.l.b16 %v4042
      %v4337 = vunpack.c.l.b16 %v4043
      %v4338 = vunpack.c.l.b16 %v4044
      %v4339 = vunpack.c.l.b16 %v4045
      %v4340 = vunpack.c.l.b16 %v4046
      %v4341 = vunpack.c.l.b16 %v4047
      %v4342 = vunpack.c.l.b16 %v4048
      %v4343 = vunpack.c.l.b16 %v4049
      %v4344 = vunpack.c.l.b16 %v4050
      %v4345 = vunpack.c.l.b16 %v4051
      %v4346 = vunpack.c.l.b16 %v4052
      %v4347 = vunpack.c.l.b16 %v4053
      %v4348 = vunpack.c.l.b16 %v4054
      %v4349 = vpack.c.b16 %v4334, %v4333
      %v4350 = vpack.c.b16 %v4336, %v4335
      %v4351 = vpack.c.b16 %v4338, %v4337
      %v4352 = vpack.c.b16 %v4340, %v4339
      %v4353 = vpack.c.b16 %v4342, %v4341
      %v4354 = vpack.c.b16 %v4344, %v4343
      %v4355 = vpack.c.b16 %v4346, %v4345
      %v4356 = vpack.c.b16 %v4348, %v4347
      %4365 = vmatpush.bf16.msra.mxu0 %v4356
      %4366 = vmatpush.bf16.msra.mxu0 %v4355
      %4367 = vmatpush.bf16.msra.mxu0 %v4354
      %4368 = vmatpush.bf16.msra.mxu0 %v4353
      %4369 = vmatpush.bf16.msra.mxu0 %v4352
      %4370 = vmatpush.bf16.msra.mxu0 %v4351
      %4371 = vmatpush.bf16.msra.mxu0 %v4350
      %4372 = vmatpush.bf16.msra.mxu0 %v4349
      %4373 = vmatmul.bf16.gmra.mxu0 %v4280
      %v4374 = vpop.f32.mrf.mxu0
      %v4375 = vadd.f32 %v4229, %v4374
      %v4376 = vpop.f32.mrf.mxu0
      %v4377 = vadd.f32 %v4231, %v4376
      %4378 = vmatmul.bf16.gmra.mxu0 %v4284
      %v4379 = vpop.f32.mrf.mxu0
      %v4380 = vadd.f32 %v4234, %v4379
      %v4381 = vpop.f32.mrf.mxu0
      %v4382 = vadd.f32 %v4236, %v4381
      %4383 = vmatmul.bf16.gmra.mxu0 %v4288
      %v4384 = vpop.f32.mrf.mxu0
      %v4385 = vadd.f32 %v4239, %v4384
      %v4386 = vpop.f32.mrf.mxu0
      %v4387 = vadd.f32 %v4241, %v4386
      %4388 = vmatmul.bf16.gmra.mxu0 %v4292
      %v4389 = vpop.f32.mrf.mxu0
      %v4390 = vadd.f32 %v4244, %v4389
      %v4391 = vpop.f32.mrf.mxu0
      %v4392 = vadd.f32 %v4246, %v4391
      %4393 = vmatmul.bf16.gmra.mxu0 %v4296
      %v4394 = vpop.f32.mrf.mxu0
      %v4395 = vadd.f32 %v4249, %v4394
      %v4396 = vpop.f32.mrf.mxu0
      %v4397 = vadd.f32 %v4251, %v4396
      %4398 = vmatmul.bf16.gmra.mxu0 %v4300
      %v4399 = vpop.f32.mrf.mxu0
      %v4400 = vadd.f32 %v4254, %v4399
      %v4401 = vpop.f32.mrf.mxu0
      %v4402 = vadd.f32 %v4256, %v4401
      %4403 = vmatmul.bf16.gmra.mxu0 %v4309
      %v4404 = vpop.f32.mrf.mxu0
      %v4405 = vadd.f32 %v4259, %v4404
      %v4406 = vpop.f32.mrf.mxu0
      %v4407 = vadd.f32 %v4261, %v4406
      %4408 = vdwg.mxu0
      %v4409 = vld [vmem:[#allocation2 + $0x7c] sm:$0x8]
      %v4410 = vld [vmem:[#allocation2 + $0x80] sm:$0xf]
      %v4411 = vld [vmem:[#allocation2 + $0x84] sm:$0xf]
      %v4412 = vld [vmem:[#allocation2 + $0x88] sm:$0xf]
      %v4413 = vld [vmem:[#allocation2 + $0x8c] sm:$0xf]
      %v4414 = vld [vmem:[#allocation2 + $0x90] sm:$0xf]
      %v4415 = vld [vmem:[#allocation2 + $0x94] sm:$0xf]
      %v4416 = vld [vmem:[#allocation2 + $0x98] sm:$0xf]
      %v4417 = vld [vmem:[#allocation2 + $0x9c] sm:$0xf]
      %v4418 = vld [vmem:[#allocation2 + $0xa0] sm:$0xf]
      %v4419 = vld [vmem:[#allocation2 + $0xa4] sm:$0xf]
      %v4420 = vld [vmem:[#allocation2 + $0xa8] sm:$0xf]
      %v4421 = vld [vmem:[#allocation2 + $0xac] sm:$0xf]
      %v4422 = vld [vmem:[#allocation2 + $0xb0] sm:$0xf]
      %v4423 = vld [vmem:[#allocation2 + $0xb4] sm:$0xf]
      %v4424 = vld [vmem:[%s2 + $0x60] sm:$0xf]
      %v4425 = vld [vmem:[%s2 + $0x64] sm:$0xf]
      %v4426 = vld [vmem:[%s2 + $0x68] sm:$0xf]
      %v4427 = vld [vmem:[%s2 + $0x6c] sm:$0xf]
      %v4428 = vld [vmem:[%s2 + $0x70] sm:$0xf]
      %v4429 = vld [vmem:[%s2 + $0x74] sm:$0xf]
      %v4430 = vld [vmem:[%s2 + $0x78] sm:$0xf]
      %v4431 = vld [vmem:[%s2 + $0x7c] sm:$0xf]
      %v4432 = vld [vmem:[%s2 + $0x80] sm:$0xf]
      %v4433 = vld [vmem:[%s2 + $0x84] sm:$0xf]
      %v4434 = vld [vmem:[%s2 + $0x88] sm:$0xf]
      %v4435 = vld [vmem:[%s2 + $0x8c] sm:$0xf]
      %v4436 = vld [vmem:[%s2 + $0x90] sm:$0xf]
      %v4437 = vld [vmem:[%s2 + $0x94] sm:$0xf]
      %v4438 = vld [vmem:[%s2 + $0x98] sm:$0xf]
      %v4439 = vld [vmem:[%s2 + $0x9c] sm:$0xf]
      %v4455 = vunpack.c.l.b16 %v4409
      %v4456 = vunpack.c.l.b16 %v4410
      %v4457 = vunpack.c.l.b16 %v4411
      %v4458 = vunpack.c.l.b16 %v4412
      %v4459 = vunpack.c.l.b16 %v4413
      %v4460 = vunpack.c.l.b16 %v4414
      %v4461 = vunpack.c.l.b16 %v4415
      %v4462 = vunpack.c.l.b16 %v4416
      %v4463 = vunpack.c.l.b16 %v4417
      %v4464 = vunpack.c.l.b16 %v4418
      %v4465 = vunpack.c.l.b16 %v4419
      %v4466 = vunpack.c.l.b16 %v4420
      %v4467 = vunpack.c.l.b16 %v4421
      %v4468 = vunpack.c.l.b16 %v4422
      %v4469 = vunpack.c.l.b16 %v4423
      %v4470 = vpack.c.b16 %v4456, %v4455
      %v4471 = vpack.c.b16 %v4458, %v4457
      %v4472 = vpack.c.b16 %v4460, %v4459
      %v4473 = vpack.c.b16 %v4462, %v4461
      %v4474 = vpack.c.b16 %v4464, %v4463
      %v4475 = vpack.c.b16 %v4466, %v4465
      %v4476 = vpack.c.b16 %v4468, %v4467
      %v4477 = vpack.c.b16 %v4469, %v4469
      %v4479 = vshrl.u32 %v4470, 16
      %v4481 = vrot.slane %v4479, 3
      %v4482 = vshll.u32 %v4470, 16
      %v4484 = vrot.slane %v4482, 4
      %v4485 = vor.u32 %v4481, %v4484
      %v4487 = vshrl.u32 %v4471, 16
      %v4489 = vrot.slane %v4487, 3
      %v4490 = vshll.u32 %v4471, 16
      %v4492 = vrot.slane %v4490, 4
      %v4493 = vor.u32 %v4489, %v4492
      %v4494 = vsel %vm1254, %v4485, %v4493
      %v4496 = vshrl.u32 %v4472, 16
      %v4498 = vrot.slane %v4496, 3
      %v4499 = vshll.u32 %v4472, 16
      %v4501 = vrot.slane %v4499, 4
      %v4502 = vor.u32 %v4498, %v4501
      %v4503 = vsel %vm1254, %v4493, %v4502
      %v4505 = vshrl.u32 %v4473, 16
      %v4507 = vrot.slane %v4505, 3
      %v4508 = vshll.u32 %v4473, 16
      %v4510 = vrot.slane %v4508, 4
      %v4511 = vor.u32 %v4507, %v4510
      %v4512 = vsel %vm1254, %v4502, %v4511
      %v4514 = vshrl.u32 %v4474, 16
      %v4516 = vrot.slane %v4514, 3
      %v4517 = vshll.u32 %v4474, 16
      %v4519 = vrot.slane %v4517, 4
      %v4520 = vor.u32 %v4516, %v4519
      %v4521 = vsel %vm1254, %v4511, %v4520
      %v4523 = vshrl.u32 %v4475, 16
      %v4525 = vrot.slane %v4523, 3
      %v4526 = vshll.u32 %v4475, 16
      %v4528 = vrot.slane %v4526, 4
      %v4529 = vor.u32 %v4525, %v4528
      %v4530 = vsel %vm1254, %v4520, %v4529
      %v4532 = vshrl.u32 %v4476, 16
      %v4534 = vrot.slane %v4532, 3
      %v4535 = vshll.u32 %v4476, 16
      %v4537 = vrot.slane %v4535, 4
      %v4538 = vor.u32 %v4534, %v4537
      %v4539 = vsel %vm1254, %v4529, %v4538
      %v4541 = vshrl.u32 %v4477, 16
      %v4543 = vrot.slane %v4541, 3
      %v4544 = vshll.u32 %v4477, 16
      %v4546 = vrot.slane %v4544, 4
      %v4547 = vor.u32 %v4543, %v4546
      %v4548 = vsel %vm1254, %v4538, %v4547
      %v4572 = vunpack.c.l.b16 %v4424
      %v4573 = vunpack.c.l.b16 %v4425
      %v4574 = vunpack.c.l.b16 %v4426
      %v4575 = vunpack.c.l.b16 %v4427
      %v4576 = vunpack.c.l.b16 %v4428
      %v4577 = vunpack.c.l.b16 %v4429
      %v4578 = vunpack.c.l.b16 %v4430
      %v4579 = vunpack.c.l.b16 %v4431
      %v4580 = vunpack.c.l.b16 %v4432
      %v4581 = vunpack.c.l.b16 %v4433
      %v4582 = vunpack.c.l.b16 %v4434
      %v4583 = vunpack.c.l.b16 %v4435
      %v4584 = vunpack.c.l.b16 %v4436
      %v4585 = vunpack.c.l.b16 %v4437
      %v4586 = vunpack.c.l.b16 %v4438
      %v4587 = vunpack.c.l.b16 %v4439
      %v4588 = vpack.c.b16 %v4573, %v4572
      %v4589 = vpack.c.b16 %v4575, %v4574
      %v4590 = vpack.c.b16 %v4577, %v4576
      %v4591 = vpack.c.b16 %v4579, %v4578
      %v4592 = vpack.c.b16 %v4581, %v4580
      %v4593 = vpack.c.b16 %v4583, %v4582
      %v4594 = vpack.c.b16 %v4585, %v4584
      %v4595 = vpack.c.b16 %v4587, %v4586
      %4604 = vmatpush.bf16.msra.mxu0 %v4595
      %4605 = vmatpush.bf16.msra.mxu0 %v4594
      %4606 = vmatpush.bf16.msra.mxu0 %v4593
      %4607 = vmatpush.bf16.msra.mxu0 %v4592
      %4608 = vmatpush.bf16.msra.mxu0 %v4591
      %4609 = vmatpush.bf16.msra.mxu0 %v4590
      %4610 = vmatpush.bf16.msra.mxu0 %v4589
      %4611 = vmatpush.bf16.msra.mxu0 %v4588
      %4612 = vmatmul.bf16.gmra.mxu0 %v4494
      %v4613 = vpop.f32.mrf.mxu0
      %v4614 = vadd.f32 0.0, %v4613
      %v4615 = vpop.f32.mrf.mxu0
      %v4616 = vadd.f32 0.0, %v4615
      %4617 = vmatmul.bf16.gmra.mxu0 %v4503
      %v4618 = vpop.f32.mrf.mxu0
      %v4619 = vadd.f32 0.0, %v4618
      %v4620 = vpop.f32.mrf.mxu0
      %v4621 = vadd.f32 0.0, %v4620
      %4622 = vmatmul.bf16.gmra.mxu0 %v4512
      %v4623 = vpop.f32.mrf.mxu0
      %v4624 = vadd.f32 0.0, %v4623
      %v4625 = vpop.f32.mrf.mxu0
      %v4626 = vadd.f32 0.0, %v4625
      %4627 = vmatmul.bf16.gmra.mxu0 %v4521
      %v4628 = vpop.f32.mrf.mxu0
      %v4629 = vadd.f32 0.0, %v4628
      %v4630 = vpop.f32.mrf.mxu0
      %v4631 = vadd.f32 0.0, %v4630
      %4632 = vmatmul.bf16.gmra.mxu0 %v4530
      %v4633 = vpop.f32.mrf.mxu0
      %v4634 = vadd.f32 0.0, %v4633
      %v4635 = vpop.f32.mrf.mxu0
      %v4636 = vadd.f32 0.0, %v4635
      %4637 = vmatmul.bf16.gmra.mxu0 %v4539
      %v4638 = vpop.f32.mrf.mxu0
      %v4639 = vadd.f32 0.0, %v4638
      %v4640 = vpop.f32.mrf.mxu0
      %v4641 = vadd.f32 0.0, %v4640
      %4642 = vmatmul.bf16.gmra.mxu0 %v4548
      %v4643 = vpop.f32.mrf.mxu0
      %v4644 = vadd.f32 0.0, %v4643
      %v4645 = vpop.f32.mrf.mxu0
      %v4646 = vadd.f32 0.0, %v4645
      %4647 = vdwg.mxu0
      %v4648 = vadd.f32 %v4375, %v4614
      %v4649 = vadd.f32 %v4377, %v4616
      %v4650 = vadd.f32 %v4380, %v4619
      %v4651 = vadd.f32 %v4382, %v4621
      %v4652 = vadd.f32 %v4385, %v4624
      %v4653 = vadd.f32 %v4387, %v4626
      %v4654 = vadd.f32 %v4390, %v4629
      %v4655 = vadd.f32 %v4392, %v4631
      %v4656 = vadd.f32 %v4395, %v4634
      %v4657 = vadd.f32 %v4397, %v4636
      %v4658 = vadd.f32 %v4400, %v4639
      %v4659 = vadd.f32 %v4402, %v4641
      %v4660 = vadd.f32 %v4405, %v4644
      %v4661 = vadd.f32 %v4407, %v4646
      %v4662 = vld [vmem:[#allocation2 + $0x80] sm:$0xf]
      %v4663 = vld [vmem:[#allocation2 + $0x84] sm:$0xf]
      %v4664 = vld [vmem:[#allocation2 + $0x88] sm:$0xf]
      %v4665 = vld [vmem:[#allocation2 + $0x8c] sm:$0xf]
      %v4666 = vld [vmem:[#allocation2 + $0x90] sm:$0xf]
      %v4667 = vld [vmem:[#allocation2 + $0x94] sm:$0xf]
      %v4668 = vld [vmem:[#allocation2 + $0x98] sm:$0xf]
      %v4669 = vld [vmem:[#allocation2 + $0x9c] sm:$0xf]
      %v4670 = vld [vmem:[#allocation2 + $0xa0] sm:$0xf]
      %v4671 = vld [vmem:[#allocation2 + $0xa4] sm:$0xf]
      %v4672 = vld [vmem:[#allocation2 + $0xa8] sm:$0xf]
      %v4673 = vld [vmem:[#allocation2 + $0xac] sm:$0xf]
      %v4674 = vld [vmem:[#allocation2 + $0xb0] sm:$0xf]
      %v4675 = vld [vmem:[#allocation2 + $0xb4] sm:$0xf]
      %v4676 = vld [vmem:[#allocation2 + $0xb8] sm:$0x1]
      %v4677 = vld [vmem:[%s2 + $0xa0] sm:$0xf]
      %v4678 = vld [vmem:[%s2 + $0xa4] sm:$0xf]
      %v4679 = vld [vmem:[%s2 + $0xa8] sm:$0xf]
      %v4680 = vld [vmem:[%s2 + $0xac] sm:$0xf]
      %v4681 = vld [vmem:[%s2 + $0xb0] sm:$0xf]
      %v4682 = vld [vmem:[%s2 + $0xb4] sm:$0xf]
      %v4683 = vld [vmem:[%s2 + $0xb8] sm:$0xf]
      %v4684 = vld [vmem:[%s2 + $0xbc] sm:$0xf]
      %v4700 = vunpack.c.l.b16 %v4662
      %v4701 = vunpack.c.l.b16 %v4663
      %v4702 = vunpack.c.l.b16 %v4664
      %v4703 = vunpack.c.l.b16 %v4665
      %v4704 = vunpack.c.l.b16 %v4666
      %v4705 = vunpack.c.l.b16 %v4667
      %v4706 = vunpack.c.l.b16 %v4668
      %v4707 = vunpack.c.l.b16 %v4669
      %v4708 = vunpack.c.l.b16 %v4670
      %v4709 = vunpack.c.l.b16 %v4671
      %v4710 = vunpack.c.l.b16 %v4672
      %v4711 = vunpack.c.l.b16 %v4673
      %v4712 = vunpack.c.l.b16 %v4674
      %v4713 = vunpack.c.l.b16 %v4675
      %v4714 = vunpack.c.l.b16 %v4676
      %v4715 = vpack.c.b16 %v4701, %v4700
      %v4716 = vpack.c.b16 %v4703, %v4702
      %v4717 = vpack.c.b16 %v4705, %v4704
      %v4718 = vpack.c.b16 %v4707, %v4706
      %v4719 = vpack.c.b16 %v4709, %v4708
      %v4720 = vpack.c.b16 %v4711, %v4710
      %v4721 = vpack.c.b16 %v4713, %v4712
      %v4722 = vpack.c.b16 %v4714, %v4714
      %v4724 = vshrl.u32 %v4715, 16
      %v4726 = vshll.u32 %v4715, 16
      %v4728 = vrot.slane %v4726, 1
      %v4729 = vor.u32 %v4724, %v4728
      %v4731 = vshll.u32 %v4716, 16
      %v4733 = vrot.slane %v4731, 1
      %v4734 = vsel %vm1877, %v4729, %v4733
      %v4735 = vshrl.u32 %v4716, 16
      %v4737 = vor.u32 %v4735, %v4733
      %v4739 = vshll.u32 %v4717, 16
      %v4741 = vrot.slane %v4739, 1
      %v4742 = vsel %vm1877, %v4737, %v4741
      %v4743 = vshrl.u32 %v4717, 16
      %v4745 = vor.u32 %v4743, %v4741
      %v4747 = vshll.u32 %v4718, 16
      %v4749 = vrot.slane %v4747, 1
      %v4750 = vsel %vm1877, %v4745, %v4749
      %v4751 = vshrl.u32 %v4718, 16
      %v4753 = vor.u32 %v4751, %v4749
      %v4755 = vshll.u32 %v4719, 16
      %v4757 = vrot.slane %v4755, 1
      %v4758 = vsel %vm1877, %v4753, %v4757
      %v4759 = vshrl.u32 %v4719, 16
      %v4761 = vor.u32 %v4759, %v4757
      %v4763 = vshll.u32 %v4720, 16
      %v4765 = vrot.slane %v4763, 1
      %v4766 = vsel %vm1877, %v4761, %v4765
      %v4767 = vshrl.u32 %v4720, 16
      %v4769 = vor.u32 %v4767, %v4765
      %v4771 = vshll.u32 %v4721, 16
      %v4773 = vrot.slane %v4771, 1
      %v4774 = vsel %vm1877, %v4769, %v4773
      %v4775 = vshrl.u32 %v4721, 16
      %v4777 = vor.u32 %v4775, %v4773
      %v4779 = vshll.u32 %v4722, 16
      %v4781 = vrot.slane %v4779, 1
      %v4782 = vsel %vm1877, %v4777, %v4781
      %v4791 = vunpack.c.l.b16 %v4677
      %v4792 = vunpack.c.l.b16 %v4678
      %v4793 = vunpack.c.l.b16 %v4679
      %v4794 = vunpack.c.l.b16 %v4680
      %v4795 = vunpack.c.l.b16 %v4681
      %v4796 = vunpack.c.l.b16 %v4682
      %v4797 = vunpack.c.l.b16 %v4683
      %v4798 = vunpack.c.l.b16 %v4684
      %v4799 = vpack.c.b16 %v4792, %v4791
      %v4800 = vpack.c.b16 %v4794, %v4793
      %v4801 = vpack.c.b16 %v4796, %v4795
      %v4802 = vpack.c.b16 %v4798, %v4797
      %v4808 = vsel %vm1350, %v4734, 0
      %v4811 = vsel %vm1350, %v4742, 0
      %v4814 = vsel %vm1350, %v4750, 0
      %v4817 = vsel %vm1350, %v4758, 0
      %v4820 = vsel %vm1350, %v4766, 0
      %v4823 = vsel %vm1350, %v4774, 0
      %v4826 = vsel %vm1350, %v4782, 0
      %4828 = vmatpush.bf16.msra.mxu0 0
      %4829 = vmatpush.bf16.msra.mxu0 0
      %4830 = vmatpush.bf16.msra.mxu0 0
      %4831 = vmatpush.bf16.msra.mxu0 0
      %4832 = vmatpush.bf16.msra.mxu0 %v4802
      %4833 = vmatpush.bf16.msra.mxu0 %v4801
      %4834 = vmatpush.bf16.msra.mxu0 %v4800
      %4835 = vmatpush.bf16.msra.mxu0 %v4799
      %4836 = vmatmul.bf16.gmra.mxu0 %v4808
      %v4837 = vpop.f32.mrf.mxu0
      %v4838 = vadd.f32 0.0, %v4837
      %v4839 = vpop.f32.mrf.mxu0
      %v4840 = vadd.f32 0.0, %v4839
      %4841 = vmatmul.bf16.gmra.mxu0 %v4811
      %v4842 = vpop.f32.mrf.mxu0
      %v4843 = vadd.f32 0.0, %v4842
      %v4844 = vpop.f32.mrf.mxu0
      %v4845 = vadd.f32 0.0, %v4844
      %4846 = vmatmul.bf16.gmra.mxu0 %v4814
      %v4847 = vpop.f32.mrf.mxu0
      %v4848 = vadd.f32 0.0, %v4847
      %v4849 = vpop.f32.mrf.mxu0
      %v4850 = vadd.f32 0.0, %v4849
      %4851 = vmatmul.bf16.gmra.mxu0 %v4817
      %v4852 = vpop.f32.mrf.mxu0
      %v4853 = vadd.f32 0.0, %v4852
      %v4854 = vpop.f32.mrf.mxu0
      %v4855 = vadd.f32 0.0, %v4854
      %4856 = vmatmul.bf16.gmra.mxu0 %v4820
      %v4857 = vpop.f32.mrf.mxu0
      %v4858 = vadd.f32 0.0, %v4857
      %v4859 = vpop.f32.mrf.mxu0
      %v4860 = vadd.f32 0.0, %v4859
      %4861 = vmatmul.bf16.gmra.mxu0 %v4823
      %v4862 = vpop.f32.mrf.mxu0
      %v4863 = vadd.f32 0.0, %v4862
      %v4864 = vpop.f32.mrf.mxu0
      %v4865 = vadd.f32 0.0, %v4864
      %4866 = vmatmul.bf16.gmra.mxu0 %v4826
      %v4867 = vpop.f32.mrf.mxu0
      %v4868 = vadd.f32 0.0, %v4867
      %v4869 = vpop.f32.mrf.mxu0
      %v4870 = vadd.f32 0.0, %v4869
      %4871 = vdwg.mxu0
      %v4872 = vadd.f32 %v4648, %v4838
      %v4873 = vadd.f32 %v4649, %v4840
      %v4874 = vadd.f32 %v4650, %v4843
      %v4875 = vadd.f32 %v4651, %v4845
      %v4876 = vadd.f32 %v4652, %v4848
      %v4877 = vadd.f32 %v4653, %v4850
      %v4878 = vadd.f32 %v4654, %v4853
      %v4879 = vadd.f32 %v4655, %v4855
      %v4880 = vadd.f32 %v4656, %v4858
      %v4881 = vadd.f32 %v4657, %v4860
      %v4882 = vadd.f32 %v4658, %v4863
      %v4883 = vadd.f32 %v4659, %v4865
      %v4884 = vadd.f32 %v4660, %v4868
      %v4885 = vadd.f32 %v4661, %v4870
      %v4886 = vld [vmem:[#allocation2 + $0x88] sm:$0xf]
      %v4887 = vld [vmem:[#allocation2 + $0x8c] sm:$0xf]
      %v4888 = vld [vmem:[#allocation2 + $0x90] sm:$0xf]
      %v4889 = vld [vmem:[#allocation2 + $0x94] sm:$0xf]
      %v4890 = vld [vmem:[#allocation2 + $0x98] sm:$0xf]
      %v4891 = vld [vmem:[#allocation2 + $0x9c] sm:$0xf]
      %v4892 = vld [vmem:[#allocation2 + $0xa0] sm:$0xf]
      %v4893 = vld [vmem:[#allocation2 + $0xa4] sm:$0xf]
      %v4894 = vld [vmem:[#allocation2 + $0xa8] sm:$0xf]
      %v4895 = vld [vmem:[#allocation2 + $0xac] sm:$0xf]
      %v4896 = vld [vmem:[#allocation2 + $0xb0] sm:$0xf]
      %v4897 = vld [vmem:[#allocation2 + $0xb4] sm:$0xf]
      %v4898 = vld [vmem:[#allocation2 + $0xb8] sm:$0xf]
      %v4899 = vld [vmem:[#allocation2 + $0xbc] sm:$0xf]
      %v4900 = vld [vmem:[#allocation2 + $0xc0] sm:$0x1]
      %v4901 = vld [vmem:[%s2 + $0xc0] sm:$0xf]
      %v4902 = vld [vmem:[%s2 + $0xc4] sm:$0xf]
      %v4903 = vld [vmem:[%s2 + $0xc8] sm:$0xf]
      %v4904 = vld [vmem:[%s2 + $0xcc] sm:$0xf]
      %v4905 = vld [vmem:[%s2 + $0xd0] sm:$0xf]
      %v4906 = vld [vmem:[%s2 + $0xd4] sm:$0xf]
      %v4907 = vld [vmem:[%s2 + $0xd8] sm:$0xf]
      %v4908 = vld [vmem:[%s2 + $0xdc] sm:$0xf]
      %v4909 = vld [vmem:[%s2 + $0xe0] sm:$0xf]
      %v4910 = vld [vmem:[%s2 + $0xe4] sm:$0xf]
      %v4911 = vld [vmem:[%s2 + $0xe8] sm:$0xf]
      %v4912 = vld [vmem:[%s2 + $0xec] sm:$0xf]
      %v4913 = vld [vmem:[%s2 + $0xf0] sm:$0xf]
      %v4914 = vld [vmem:[%s2 + $0xf4] sm:$0xf]
      %v4915 = vld [vmem:[%s2 + $0xf8] sm:$0xf]
      %v4916 = vld [vmem:[%s2 + $0xfc] sm:$0xf]
      %v4932 = vunpack.c.l.b16 %v4886
      %v4933 = vunpack.c.l.b16 %v4887
      %v4934 = vunpack.c.l.b16 %v4888
      %v4935 = vunpack.c.l.b16 %v4889
      %v4936 = vunpack.c.l.b16 %v4890
      %v4937 = vunpack.c.l.b16 %v4891
      %v4938 = vunpack.c.l.b16 %v4892
      %v4939 = vunpack.c.l.b16 %v4893
      %v4940 = vunpack.c.l.b16 %v4894
      %v4941 = vunpack.c.l.b16 %v4895
      %v4942 = vunpack.c.l.b16 %v4896
      %v4943 = vunpack.c.l.b16 %v4897
      %v4944 = vunpack.c.l.b16 %v4898
      %v4945 = vunpack.c.l.b16 %v4899
      %v4946 = vunpack.c.l.b16 %v4900
      %v4947 = vpack.c.b16 %v4933, %v4932
      %v4948 = vpack.c.b16 %v4935, %v4934
      %v4949 = vpack.c.b16 %v4937, %v4936
      %v4950 = vpack.c.b16 %v4939, %v4938
      %v4951 = vpack.c.b16 %v4941, %v4940
      %v4952 = vpack.c.b16 %v4943, %v4942
      %v4953 = vpack.c.b16 %v4945, %v4944
      %v4954 = vpack.c.b16 %v4946, %v4946
      %v4956 = vshrl.u32 %v4947, 16
      %v4958 = vshll.u32 %v4947, 16
      %v4960 = vrot.slane %v4958, 1
      %v4961 = vor.u32 %v4956, %v4960
      %v4963 = vshll.u32 %v4948, 16
      %v4965 = vrot.slane %v4963, 1
      %v4966 = vsel %vm1877, %v4961, %v4965
      %v4967 = vshrl.u32 %v4948, 16
      %v4969 = vor.u32 %v4967, %v4965
      %v4971 = vshll.u32 %v4949, 16
      %v4973 = vrot.slane %v4971, 1
      %v4974 = vsel %vm1877, %v4969, %v4973
      %v4975 = vshrl.u32 %v4949, 16
      %v4977 = vor.u32 %v4975, %v4973
      %v4979 = vshll.u32 %v4950, 16
      %v4981 = vrot.slane %v4979, 1
      %v4982 = vsel %vm1877, %v4977, %v4981
      %v4983 = vshrl.u32 %v4950, 16
      %v4985 = vor.u32 %v4983, %v4981
      %v4987 = vshll.u32 %v4951, 16
      %v4989 = vrot.slane %v4987, 1
      %v4990 = vsel %vm1877, %v4985, %v4989
      %v4991 = vshrl.u32 %v4951, 16
      %v4993 = vor.u32 %v4991, %v4989
      %v4995 = vshll.u32 %v4952, 16
      %v4997 = vrot.slane %v4995, 1
      %v4998 = vsel %vm1877, %v4993, %v4997
      %v4999 = vshrl.u32 %v4952, 16
      %v5001 = vor.u32 %v4999, %v4997
      %v5003 = vshll.u32 %v4953, 16
      %v5005 = vrot.slane %v5003, 1
      %v5006 = vsel %vm1877, %v5001, %v5005
      %v5007 = vshrl.u32 %v4953, 16
      %v5009 = vor.u32 %v5007, %v5005
      %v5011 = vshll.u32 %v4954, 16
      %v5013 = vrot.slane %v5011, 1
      %v5014 = vsel %vm1877, %v5009, %v5013
      %v5038 = vunpack.c.l.b16 %v4901
      %v5039 = vunpack.c.l.b16 %v4902
      %v5040 = vunpack.c.l.b16 %v4903
      %v5041 = vunpack.c.l.b16 %v4904
      %v5042 = vunpack.c.l.b16 %v4905
      %v5043 = vunpack.c.l.b16 %v4906
      %v5044 = vunpack.c.l.b16 %v4907
      %v5045 = vunpack.c.l.b16 %v4908
      %v5046 = vunpack.c.l.b16 %v4909
      %v5047 = vunpack.c.l.b16 %v4910
      %v5048 = vunpack.c.l.b16 %v4911
      %v5049 = vunpack.c.l.b16 %v4912
      %v5050 = vunpack.c.l.b16 %v4913
      %v5051 = vunpack.c.l.b16 %v4914
      %v5052 = vunpack.c.l.b16 %v4915
      %v5053 = vunpack.c.l.b16 %v4916
      %v5054 = vpack.c.b16 %v5039, %v5038
      %v5055 = vpack.c.b16 %v5041, %v5040
      %v5056 = vpack.c.b16 %v5043, %v5042
      %v5057 = vpack.c.b16 %v5045, %v5044
      %v5058 = vpack.c.b16 %v5047, %v5046
      %v5059 = vpack.c.b16 %v5049, %v5048
      %v5060 = vpack.c.b16 %v5051, %v5050
      %v5061 = vpack.c.b16 %v5053, %v5052
      %5070 = vmatpush.bf16.msra.mxu0 %v5061
      %5071 = vmatpush.bf16.msra.mxu0 %v5060
      %5072 = vmatpush.bf16.msra.mxu0 %v5059
      %5073 = vmatpush.bf16.msra.mxu0 %v5058
      %5074 = vmatpush.bf16.msra.mxu0 %v5057
      %5075 = vmatpush.bf16.msra.mxu0 %v5056
      %5076 = vmatpush.bf16.msra.mxu0 %v5055
      %5077 = vmatpush.bf16.msra.mxu0 %v5054
      %5078 = vmatmul.bf16.gmra.mxu0 %v4966
      %v5079 = vpop.f32.mrf.mxu0
      %v5080 = vadd.f32 0.0, %v5079
      %v5081 = vpop.f32.mrf.mxu0
      %v5082 = vadd.f32 0.0, %v5081
      %5083 = vmatmul.bf16.gmra.mxu0 %v4974
      %v5084 = vpop.f32.mrf.mxu0
      %v5085 = vadd.f32 0.0, %v5084
      %v5086 = vpop.f32.mrf.mxu0
      %v5087 = vadd.f32 0.0, %v5086
      %5088 = vmatmul.bf16.gmra.mxu0 %v4982
      %v5089 = vpop.f32.mrf.mxu0
      %v5090 = vadd.f32 0.0, %v5089
      %v5091 = vpop.f32.mrf.mxu0
      %v5092 = vadd.f32 0.0, %v5091
      %5093 = vmatmul.bf16.gmra.mxu0 %v4990
      %v5094 = vpop.f32.mrf.mxu0
      %v5095 = vadd.f32 0.0, %v5094
      %v5096 = vpop.f32.mrf.mxu0
      %v5097 = vadd.f32 0.0, %v5096
      %5098 = vmatmul.bf16.gmra.mxu0 %v4998
      %v5099 = vpop.f32.mrf.mxu0
      %v5100 = vadd.f32 0.0, %v5099
      %v5101 = vpop.f32.mrf.mxu0
      %v5102 = vadd.f32 0.0, %v5101
      %5103 = vmatmul.bf16.gmra.mxu0 %v5006
      %v5104 = vpop.f32.mrf.mxu0
      %v5105 = vadd.f32 0.0, %v5104
      %v5106 = vpop.f32.mrf.mxu0
      %v5107 = vadd.f32 0.0, %v5106
      %5108 = vmatmul.bf16.gmra.mxu0 %v5014
      %v5109 = vpop.f32.mrf.mxu0
      %v5110 = vadd.f32 0.0, %v5109
      %v5111 = vpop.f32.mrf.mxu0
      %v5112 = vadd.f32 0.0, %v5111
      %5113 = vdwg.mxu0
      %v5114 = vadd.f32 %v4872, %v5080
      %v5115 = vadd.f32 %v4873, %v5082
      %v5116 = vadd.f32 %v4874, %v5085
      %v5117 = vadd.f32 %v4875, %v5087
      %v5118 = vadd.f32 %v4876, %v5090
      %v5119 = vadd.f32 %v4877, %v5092
      %v5120 = vadd.f32 %v4878, %v5095
      %v5121 = vadd.f32 %v4879, %v5097
      %v5122 = vadd.f32 %v4880, %v5100
      %v5123 = vadd.f32 %v4881, %v5102
      %v5124 = vadd.f32 %v4882, %v5105
      %v5125 = vadd.f32 %v4883, %v5107
      %v5126 = vadd.f32 %v4884, %v5110
      %v5127 = vadd.f32 %v4885, %v5112
      %v5128 = vld [vmem:[#allocation2 + $0x88] sm:$0xe]
      %v5129 = vld [vmem:[#allocation2 + $0xc0] sm:$0x3]
      %v5130 = vld [vmem:[%s2 + $0x100] sm:$0xf]
      %v5131 = vld [vmem:[%s2 + $0x104] sm:$0xf]
      %v5132 = vld [vmem:[%s2 + $0x108] sm:$0xf]
      %v5133 = vld [vmem:[%s2 + $0x10c] sm:$0xf]
      %v5134 = vld [vmem:[%s2 + $0x110] sm:$0xf]
      %v5135 = vld [vmem:[%s2 + $0x114] sm:$0xf]
      %v5136 = vld [vmem:[%s2 + $0x118] sm:$0xf]
      %v5137 = vld [vmem:[%s2 + $0x11c] sm:$0xf]
      %v5140 = vunpack.c.l.b16 %v5128
      %v5141 = vunpack.c.l.b16 %v5129
      %v5142 = vpack.c.b16 %v4933, %v5140
      %v5143 = vpack.c.b16 %v5141, %v5141
      %v5145 = vshrl.u32 %v5142, 16
      %v5147 = vrot.slane %v5145, 1
      %v5148 = vshll.u32 %v5142, 16
      %v5150 = vrot.slane %v5148, 2
      %v5151 = vor.u32 %v5147, %v5150
      %v5152 = vrot.slane %v4967, 1
      %v5153 = vrot.slane %v4963, 2
      %v5154 = vor.u32 %v5152, %v5153
      %v5155 = vsel %vm2299, %v5151, %v5154
      %v5156 = vrot.slane %v4975, 1
      %v5157 = vrot.slane %v4971, 2
      %v5158 = vor.u32 %v5156, %v5157
      %v5159 = vsel %vm2299, %v5154, %v5158
      %v5160 = vrot.slane %v4983, 1
      %v5161 = vrot.slane %v4979, 2
      %v5162 = vor.u32 %v5160, %v5161
      %v5163 = vsel %vm2299, %v5158, %v5162
      %v5164 = vrot.slane %v4991, 1
      %v5165 = vrot.slane %v4987, 2
      %v5166 = vor.u32 %v5164, %v5165
      %v5167 = vsel %vm2299, %v5162, %v5166
      %v5168 = vrot.slane %v4999, 1
      %v5169 = vrot.slane %v4995, 2
      %v5170 = vor.u32 %v5168, %v5169
      %v5171 = vsel %vm2299, %v5166, %v5170
      %v5172 = vrot.slane %v5007, 1
      %v5173 = vrot.slane %v5003, 2
      %v5174 = vor.u32 %v5172, %v5173
      %v5175 = vsel %vm2299, %v5170, %v5174
      %v5177 = vshrl.u32 %v5143, 16
      %v5179 = vrot.slane %v5177, 1
      %v5180 = vshll.u32 %v5143, 16
      %v5182 = vrot.slane %v5180, 2
      %v5183 = vor.u32 %v5179, %v5182
      %v5184 = vsel %vm2299, %v5174, %v5183
      %v5193 = vunpack.c.l.b16 %v5130
      %v5194 = vunpack.c.l.b16 %v5131
      %v5195 = vunpack.c.l.b16 %v5132
      %v5196 = vunpack.c.l.b16 %v5133
      %v5197 = vunpack.c.l.b16 %v5134
      %v5198 = vunpack.c.l.b16 %v5135
      %v5199 = vunpack.c.l.b16 %v5136
      %v5200 = vunpack.c.l.b16 %v5137
      %v5201 = vpack.c.b16 %v5194, %v5193
      %v5202 = vpack.c.b16 %v5196, %v5195
      %v5203 = vpack.c.b16 %v5198, %v5197
      %v5204 = vpack.c.b16 %v5200, %v5199
      %v5210 = vsel %vm1350, %v5155, 0
      %v5213 = vsel %vm1350, %v5159, 0
      %v5216 = vsel %vm1350, %v5163, 0
      %v5219 = vsel %vm1350, %v5167, 0
      %v5222 = vsel %vm1350, %v5171, 0
      %v5225 = vsel %vm1350, %v5175, 0
      %v5228 = vsel %vm1350, %v5184, 0
      %5230 = vmatpush.bf16.msra.mxu0 0
      %5231 = vmatpush.bf16.msra.mxu0 0
      %5232 = vmatpush.bf16.msra.mxu0 0
      %5233 = vmatpush.bf16.msra.mxu0 0
      %5234 = vmatpush.bf16.msra.mxu0 %v5204
      %5235 = vmatpush.bf16.msra.mxu0 %v5203
      %5236 = vmatpush.bf16.msra.mxu0 %v5202
      %5237 = vmatpush.bf16.msra.mxu0 %v5201
      %5238 = vmatmul.bf16.gmra.mxu0 %v5210
      %v5239 = vpop.f32.mrf.mxu0
      %v5240 = vadd.f32 0.0, %v5239
      %v5241 = vpop.f32.mrf.mxu0
      %v5242 = vadd.f32 0.0, %v5241
      %5243 = vmatmul.bf16.gmra.mxu0 %v5213
      %v5244 = vpop.f32.mrf.mxu0
      %v5245 = vadd.f32 0.0, %v5244
      %v5246 = vpop.f32.mrf.mxu0
      %v5247 = vadd.f32 0.0, %v5246
      %5248 = vmatmul.bf16.gmra.mxu0 %v5216
      %v5249 = vpop.f32.mrf.mxu0
      %v5250 = vadd.f32 0.0, %v5249
      %v5251 = vpop.f32.mrf.mxu0
      %v5252 = vadd.f32 0.0, %v5251
      %5253 = vmatmul.bf16.gmra.mxu0 %v5219
      %v5254 = vpop.f32.mrf.mxu0
      %v5255 = vadd.f32 0.0, %v5254
      %v5256 = vpop.f32.mrf.mxu0
      %v5257 = vadd.f32 0.0, %v5256
      %5258 = vmatmul.bf16.gmra.mxu0 %v5222
      %v5259 = vpop.f32.mrf.mxu0
      %v5260 = vadd.f32 0.0, %v5259
      %v5261 = vpop.f32.mrf.mxu0
      %v5262 = vadd.f32 0.0, %v5261
      %5263 = vmatmul.bf16.gmra.mxu0 %v5225
      %v5264 = vpop.f32.mrf.mxu0
      %v5265 = vadd.f32 0.0, %v5264
      %v5266 = vpop.f32.mrf.mxu0
      %v5267 = vadd.f32 0.0, %v5266
      %5268 = vmatmul.bf16.gmra.mxu0 %v5228
      %v5269 = vpop.f32.mrf.mxu0
      %v5270 = vadd.f32 0.0, %v5269
      %v5271 = vpop.f32.mrf.mxu0
      %v5272 = vadd.f32 0.0, %v5271
      %5273 = vdwg.mxu0
      %v5274 = vadd.f32 %v5114, %v5240
      %v5275 = vadd.f32 %v5115, %v5242
      %v5276 = vadd.f32 %v5116, %v5245
      %v5277 = vadd.f32 %v5117, %v5247
      %v5278 = vadd.f32 %v5118, %v5250
      %v5279 = vadd.f32 %v5119, %v5252
      %v5280 = vadd.f32 %v5120, %v5255
      %v5281 = vadd.f32 %v5121, %v5257
      %v5282 = vadd.f32 %v5122, %v5260
      %v5283 = vadd.f32 %v5123, %v5262
      %v5284 = vadd.f32 %v5124, %v5265
      %v5285 = vadd.f32 %v5125, %v5267
      %v5286 = vadd.f32 %v5126, %v5270
      %v5287 = vadd.f32 %v5127, %v5272
      %v5288 = vld [vmem:[%s3] sm:$0x1]
      %v5290 = vperm.slane %v5288, 0
      %v5292 = vadd.f32 %v5274, %v5290
      %v5293 = vadd.f32 %v5275, %v5290
      %v5294 = vadd.f32 %v5276, %v5290
      %v5295 = vadd.f32 %v5277, %v5290
      %v5296 = vadd.f32 %v5278, %v5290
      %v5297 = vadd.f32 %v5279, %v5290
      %v5298 = vadd.f32 %v5280, %v5290
      %v5299 = vadd.f32 %v5281, %v5290
      %v5300 = vadd.f32 %v5282, %v5290
      %v5301 = vadd.f32 %v5283, %v5290
      %v5302 = vadd.f32 %v5284, %v5290
      %v5303 = vadd.f32 %v5285, %v5290
      %v5304 = vadd.f32 %v5286, %v5290
      %v5305 = vadd.f32 %v5287, %v5290
      %v5306 = vmax.f32 %v5292, 0.0
      %v5307 = vmax.f32 %v5293, 0.0
      %v5308 = vmax.f32 %v5294, 0.0
      %v5309 = vmax.f32 %v5295, 0.0
      %v5310 = vmax.f32 %v5296, 0.0
      %v5311 = vmax.f32 %v5297, 0.0
      %v5312 = vmax.f32 %v5298, 0.0
      %v5313 = vmax.f32 %v5299, 0.0
      %v5314 = vmax.f32 %v5300, 0.0
      %v5315 = vmax.f32 %v5301, 0.0
      %v5316 = vmax.f32 %v5302, 0.0
      %v5317 = vmax.f32 %v5303, 0.0
      %v5318 = vmax.f32 %v5304, 0.0
      %v5319 = vmax.f32 %v5305, 0.0
      %v5320 = vld [vmem:[%s1 + $0xe0] sm:$0xff]
      %v5321 = vld [vmem:[%s1 + $0xe8] sm:$0xff]
      %v5322 = vld [vmem:[%s1 + $0xf0] sm:$0xff]
      %v5323 = vld [vmem:[%s1 + $0xf8] sm:$0xff]
      %v5324 = vld [vmem:[%s1 + $0x100] sm:$0xff]
      %v5325 = vld [vmem:[%s1 + $0x108] sm:$0xff]
      %v5326 = vld [vmem:[%s1 + $0x110] sm:$0xff]
      %v5327 = vld [vmem:[%s1 + $0x118] sm:$0xff]
      %v5328 = vld [vmem:[%s1 + $0x120] sm:$0xff]
      %v5329 = vld [vmem:[%s1 + $0x128] sm:$0xff]
      %v5330 = vld [vmem:[%s1 + $0x130] sm:$0xff]
      %v5331 = vld [vmem:[%s1 + $0x138] sm:$0xff]
      %v5332 = vld [vmem:[%s1 + $0x140] sm:$0xff]
      %v5333 = vld [vmem:[%s1 + $0x148] sm:$0xff]
      %5335 = vset.pattern.permute.xlu0 0
      %5336 = vperm.xlu0 %5335, %v5320
      %v5337 = vpop.permute.xlu0 %5336
      %5340 = vset.pattern.permute.xlu0 0
      %5341 = vperm.xlu0 %5340, %v5321
      %v5342 = vpop.permute.xlu0 %5341
      %5345 = vset.pattern.permute.xlu0 0
      %5346 = vperm.xlu0 %5345, %v5322
      %v5347 = vpop.permute.xlu0 %5346
      %5350 = vset.pattern.permute.xlu0 0
      %5351 = vperm.xlu0 %5350, %v5323
      %v5352 = vpop.permute.xlu0 %5351
      %5355 = vset.pattern.permute.xlu0 0
      %5356 = vperm.xlu0 %5355, %v5324
      %v5357 = vpop.permute.xlu0 %5356
      %5360 = vset.pattern.permute.xlu0 0
      %5361 = vperm.xlu0 %5360, %v5325
      %v5362 = vpop.permute.xlu0 %5361
      %5365 = vset.pattern.permute.xlu0 0
      %5366 = vperm.xlu0 %5365, %v5326
      %v5367 = vpop.permute.xlu0 %5366
      %5370 = vset.pattern.permute.xlu0 0
      %5371 = vperm.xlu0 %5370, %v5327
      %v5372 = vpop.permute.xlu0 %5371
      %5375 = vset.pattern.permute.xlu0 0
      %5376 = vperm.xlu0 %5375, %v5328
      %v5377 = vpop.permute.xlu0 %5376
      %5380 = vset.pattern.permute.xlu0 0
      %5381 = vperm.xlu0 %5380, %v5329
      %v5382 = vpop.permute.xlu0 %5381
      %5385 = vset.pattern.permute.xlu0 0
      %5386 = vperm.xlu0 %5385, %v5330
      %v5387 = vpop.permute.xlu0 %5386
      %5390 = vset.pattern.permute.xlu0 0
      %5391 = vperm.xlu0 %5390, %v5331
      %v5392 = vpop.permute.xlu0 %5391
      %5395 = vset.pattern.permute.xlu0 0
      %5396 = vperm.xlu0 %5395, %v5332
      %v5397 = vpop.permute.xlu0 %5396
      %5400 = vset.pattern.permute.xlu0 0
      %5401 = vperm.xlu0 %5400, %v5333
      %v5402 = vpop.permute.xlu0 %5401
      %v5404 = vmul.f32 %v5306, %v5337
      %v5405 = vmul.f32 %v5307, %v5342
      %v5406 = vmul.f32 %v5308, %v5347
      %v5407 = vmul.f32 %v5309, %v5352
      %v5408 = vmul.f32 %v5310, %v5357
      %v5409 = vmul.f32 %v5311, %v5362
      %v5410 = vmul.f32 %v5312, %v5367
      %v5411 = vmul.f32 %v5313, %v5372
      %v5412 = vmul.f32 %v5314, %v5377
      %v5413 = vmul.f32 %v5315, %v5382
      %v5414 = vmul.f32 %v5316, %v5387
      %v5415 = vmul.f32 %v5317, %v5392
      %v5416 = vmul.f32 %v5318, %v5397
      %v5417 = vmul.f32 %v5319, %v5402
      %v5418 = vpack.c.bf16 %v5404, %v5404
      %v5419 = vpack.c.bf16 %v5405, %v5405
      %v5420 = vpack.c.bf16 %v5406, %v5406
      %v5421 = vpack.c.bf16 %v5407, %v5407
      %v5422 = vpack.c.bf16 %v5408, %v5408
      %v5423 = vpack.c.bf16 %v5409, %v5409
      %v5424 = vpack.c.bf16 %v5410, %v5410
      %v5425 = vpack.c.bf16 %v5411, %v5411
      %v5426 = vpack.c.bf16 %v5412, %v5412
      %v5427 = vpack.c.bf16 %v5413, %v5413
      %v5428 = vpack.c.bf16 %v5414, %v5414
      %v5429 = vpack.c.bf16 %v5415, %v5415
      %v5430 = vpack.c.bf16 %v5416, %v5416
      %v5431 = vpack.c.bf16 %v5417, %v5417
      %5432 = vst.msk [vmem:[#allocation3 + $0x80] sm:$0xf] %vm253, %v5418
      %5433 = vst.msk [vmem:[#allocation3 + $0x84] sm:$0xf] %vm253, %v5419
      %5434 = vst.msk [vmem:[#allocation3 + $0x88] sm:$0xf] %vm253, %v5420
      %5435 = vst.msk [vmem:[#allocation3 + $0x8c] sm:$0xf] %vm253, %v5421
      %5436 = vst.msk [vmem:[#allocation3 + $0x90] sm:$0xf] %vm253, %v5422
      %5437 = vst.msk [vmem:[#allocation3 + $0x94] sm:$0xf] %vm253, %v5423
      %5438 = vst.msk [vmem:[#allocation3 + $0x98] sm:$0xf] %vm253, %v5424
      %5439 = vst.msk [vmem:[#allocation3 + $0x9c] sm:$0xf] %vm253, %v5425
      %5440 = vst.msk [vmem:[#allocation3 + $0xa0] sm:$0xf] %vm253, %v5426
      %5441 = vst.msk [vmem:[#allocation3 + $0xa4] sm:$0xf] %vm253, %v5427
      %5442 = vst.msk [vmem:[#allocation3 + $0xa8] sm:$0xf] %vm253, %v5428
      %5443 = vst.msk [vmem:[#allocation3 + $0xac] sm:$0xf] %vm253, %v5429
      %5444 = vst.msk [vmem:[#allocation3 + $0xb0] sm:$0xf] %vm253, %v5430
      %5445 = vst.msk [vmem:[#allocation3 + $0xb4] sm:$0xf] %vm253, %v5431
      %v5446 = vld [vmem:[#allocation3] sm:$0xf]
      %v5447 = vld [vmem:[#allocation3 + $0x4] sm:$0xf]
      %v5448 = vld [vmem:[#allocation3 + $0x8] sm:$0xf]
      %v5449 = vld [vmem:[#allocation3 + $0xc] sm:$0xf]
      %v5450 = vld [vmem:[#allocation3 + $0x10] sm:$0xf]
      %v5451 = vld [vmem:[#allocation3 + $0x14] sm:$0xf]
      %v5452 = vld [vmem:[#allocation3 + $0x18] sm:$0xf]
      %v5453 = vld [vmem:[#allocation3 + $0x1c] sm:$0xf]
      %v5454 = vld [vmem:[#allocation3 + $0x20] sm:$0xf]
      %v5455 = vld [vmem:[#allocation3 + $0x24] sm:$0xf]
      %v5456 = vld [vmem:[#allocation3 + $0x28] sm:$0xf]
      %v5457 = vld [vmem:[#allocation3 + $0x2c] sm:$0xf]
      %v5458 = vld [vmem:[#allocation3 + $0x30] sm:$0xf]
      %v5459 = vld [vmem:[#allocation3 + $0x34] sm:$0xf]
      %v5460 = vld [vmem:[#allocation3 + $0x38] sm:$0xf]
      %v5461 = vld [vmem:[#allocation3 + $0x3c] sm:$0xf]
      %v5462 = vld [vmem:[#allocation3 + $0x40] sm:$0xf]
      %v5463 = vld [vmem:[#allocation3 + $0x44] sm:$0xf]
      %v5464 = vld [vmem:[#allocation3 + $0x48] sm:$0xf]
      %v5465 = vld [vmem:[#allocation3 + $0x4c] sm:$0xf]
      %v5466 = vld [vmem:[#allocation3 + $0x50] sm:$0xf]
      %v5467 = vld [vmem:[#allocation3 + $0x54] sm:$0xf]
      %v5468 = vld [vmem:[#allocation3 + $0x58] sm:$0xf]
      %v5469 = vld [vmem:[#allocation3 + $0x5c] sm:$0xf]
      %v5470 = vld [vmem:[#allocation3 + $0x60] sm:$0xf]
      %v5471 = vld [vmem:[#allocation3 + $0x64] sm:$0xf]
      %v5472 = vld [vmem:[#allocation3 + $0x68] sm:$0xf]
      %v5473 = vld [vmem:[#allocation3 + $0x6c] sm:$0xf]
      %v5474 = vld [vmem:[#allocation3 + $0x70] sm:$0xf]
      %v5475 = vld [vmem:[#allocation3 + $0x74] sm:$0xf]
      %v5476 = vld [vmem:[#allocation3 + $0x78] sm:$0xf]
      %v5477 = vld [vmem:[#allocation3 + $0x7c] sm:$0xf]
      %v5478 = vld [vmem:[#allocation3 + $0x80] sm:$0xf]
      %v5479 = vld [vmem:[#allocation3 + $0x84] sm:$0xf]
      %v5480 = vld [vmem:[#allocation3 + $0x88] sm:$0xf]
      %v5481 = vld [vmem:[#allocation3 + $0x8c] sm:$0xf]
      %v5482 = vld [vmem:[#allocation3 + $0x90] sm:$0xf]
      %v5483 = vld [vmem:[#allocation3 + $0x94] sm:$0xf]
      %v5484 = vld [vmem:[#allocation3 + $0x98] sm:$0xf]
      %v5485 = vld [vmem:[#allocation3 + $0x9c] sm:$0xf]
      %v5486 = vld [vmem:[#allocation3 + $0xa0] sm:$0xf]
      %v5487 = vld [vmem:[#allocation3 + $0xa4] sm:$0xf]
      %v5488 = vld [vmem:[#allocation3 + $0xa8] sm:$0xf]
      %v5489 = vld [vmem:[#allocation3 + $0xac] sm:$0xf]
      %v5490 = vld [vmem:[#allocation3 + $0xb0] sm:$0xf]
      %v5491 = vld [vmem:[#allocation3 + $0xb4] sm:$0xf]
      %v5492 = vld [vmem:[#allocation3 + $0xb8] sm:$0xf]
      %v5493 = vld [vmem:[#allocation3 + $0xbc] sm:$0xf]
      %v5494 = vld [vmem:[#allocation3 + $0xc0] sm:$0xf]
      %v5495 = vld [vmem:[#allocation3 + $0xc4] sm:$0xf]
      %v5497 = vshrl.u32 %v5446, 16
      %v5499 = vrot.slane %v5497, 4
      %v5500 = vshll.u32 %v5446, 16
      %v5502 = vrot.slane %v5500, 5
      %v5503 = vor.u32 %v5499, %v5502
      %v5504 = vrot.slane %v5503, 4
      %v5506 = vshll.u32 %v5447, 16
      %v5508 = vrot.slane %v5506, 5
      %v5509 = vsel %vm464, %v5504, %v5508
      %v5510 = vshrl.u32 %v5447, 16
      %v5512 = vrot.slane %v5510, 4
      %v5513 = vor.u32 %v5512, %v5508
      %v5514 = vrot.slane %v5513, 4
      %v5516 = vshll.u32 %v5448, 16
      %v5518 = vrot.slane %v5516, 5
      %v5519 = vsel %vm464, %v5514, %v5518
      %v5520 = vshrl.u32 %v5448, 16
      %v5522 = vrot.slane %v5520, 4
      %v5523 = vor.u32 %v5522, %v5518
      %v5524 = vrot.slane %v5523, 4
      %v5526 = vshll.u32 %v5449, 16
      %v5528 = vrot.slane %v5526, 5
      %v5529 = vsel %vm464, %v5524, %v5528
      %v5530 = vshrl.u32 %v5449, 16
      %v5532 = vrot.slane %v5530, 4
      %v5533 = vor.u32 %v5532, %v5528
      %v5534 = vrot.slane %v5533, 4
      %v5536 = vshll.u32 %v5450, 16
      %v5538 = vrot.slane %v5536, 5
      %v5539 = vsel %vm464, %v5534, %v5538
      %v5540 = vshrl.u32 %v5450, 16
      %v5542 = vrot.slane %v5540, 4
      %v5543 = vor.u32 %v5542, %v5538
      %v5544 = vrot.slane %v5543, 4
      %v5546 = vshll.u32 %v5451, 16
      %v5548 = vrot.slane %v5546, 5
      %v5549 = vsel %vm464, %v5544, %v5548
      %v5550 = vshrl.u32 %v5451, 16
      %v5552 = vrot.slane %v5550, 4
      %v5553 = vor.u32 %v5552, %v5548
      %v5554 = vrot.slane %v5553, 4
      %v5556 = vshll.u32 %v5452, 16
      %v5558 = vrot.slane %v5556, 5
      %v5559 = vsel %vm464, %v5554, %v5558
      %v5560 = vshrl.u32 %v5452, 16
      %v5562 = vrot.slane %v5560, 4
      %v5563 = vor.u32 %v5562, %v5558
      %v5564 = vrot.slane %v5563, 4
      %v5566 = vshll.u32 %v5453, 16
      %v5568 = vrot.slane %v5566, 5
      %v5569 = vsel %vm464, %v5564, %v5568
      %v5570 = vshrl.u32 %v5453, 16
      %v5572 = vrot.slane %v5570, 4
      %v5573 = vor.u32 %v5572, %v5568
      %v5574 = vrot.slane %v5573, 4
      %v5576 = vshll.u32 %v5454, 16
      %v5578 = vrot.slane %v5576, 5
      %v5579 = vsel %vm464, %v5574, %v5578
      %v5580 = vshrl.u32 %v5454, 16
      %v5582 = vrot.slane %v5580, 4
      %v5583 = vor.u32 %v5582, %v5578
      %v5584 = vrot.slane %v5583, 4
      %v5586 = vshll.u32 %v5455, 16
      %v5588 = vrot.slane %v5586, 5
      %v5589 = vsel %vm464, %v5584, %v5588
      %v5590 = vshrl.u32 %v5455, 16
      %v5592 = vrot.slane %v5590, 4
      %v5593 = vor.u32 %v5592, %v5588
      %v5594 = vrot.slane %v5593, 4
      %v5596 = vshll.u32 %v5456, 16
      %v5598 = vrot.slane %v5596, 5
      %v5599 = vsel %vm464, %v5594, %v5598
      %v5600 = vshrl.u32 %v5456, 16
      %v5602 = vrot.slane %v5600, 4
      %v5603 = vor.u32 %v5602, %v5598
      %v5604 = vrot.slane %v5603, 4
      %v5606 = vshll.u32 %v5457, 16
      %v5608 = vrot.slane %v5606, 5
      %v5609 = vsel %vm464, %v5604, %v5608
      %v5610 = vshrl.u32 %v5457, 16
      %v5612 = vrot.slane %v5610, 4
      %v5613 = vor.u32 %v5612, %v5608
      %v5614 = vrot.slane %v5613, 4
      %v5616 = vshll.u32 %v5458, 16
      %v5618 = vrot.slane %v5616, 5
      %v5619 = vsel %vm464, %v5614, %v5618
      %v5620 = vshrl.u32 %v5458, 16
      %v5622 = vrot.slane %v5620, 4
      %v5623 = vor.u32 %v5622, %v5618
      %v5624 = vrot.slane %v5623, 4
      %v5626 = vshll.u32 %v5459, 16
      %v5628 = vrot.slane %v5626, 5
      %v5629 = vsel %vm464, %v5624, %v5628
      %v5630 = vshrl.u32 %v5459, 16
      %v5632 = vrot.slane %v5630, 4
      %v5633 = vor.u32 %v5632, %v5628
      %v5634 = vrot.slane %v5633, 4
      %v5636 = vshll.u32 %v5460, 16
      %v5638 = vrot.slane %v5636, 5
      %v5639 = vsel %vm464, %v5634, %v5638
      %v5640 = vshrl.u32 %v5460, 16
      %v5642 = vrot.slane %v5640, 4
      %v5643 = vor.u32 %v5642, %v5638
      %v5644 = vrot.slane %v5643, 4
      %v5646 = vshll.u32 %v5461, 16
      %v5648 = vrot.slane %v5646, 5
      %v5649 = vsel %vm464, %v5644, %v5648
      %v5650 = vshrl.u32 %v5461, 16
      %v5652 = vrot.slane %v5650, 4
      %v5653 = vor.u32 %v5652, %v5648
      %v5654 = vrot.slane %v5653, 4
      %v5656 = vshll.u32 %v5462, 16
      %v5658 = vrot.slane %v5656, 5
      %v5659 = vsel %vm464, %v5654, %v5658
      %v5660 = vshrl.u32 %v5462, 16
      %v5662 = vrot.slane %v5660, 4
      %v5663 = vor.u32 %v5662, %v5658
      %v5664 = vrot.slane %v5663, 4
      %v5666 = vshll.u32 %v5463, 16
      %v5668 = vrot.slane %v5666, 5
      %v5669 = vsel %vm464, %v5664, %v5668
      %v5670 = vshrl.u32 %v5463, 16
      %v5672 = vrot.slane %v5670, 4
      %v5673 = vor.u32 %v5672, %v5668
      %v5674 = vrot.slane %v5673, 4
      %v5676 = vshll.u32 %v5464, 16
      %v5678 = vrot.slane %v5676, 5
      %v5679 = vsel %vm464, %v5674, %v5678
      %v5680 = vshrl.u32 %v5464, 16
      %v5682 = vrot.slane %v5680, 4
      %v5683 = vor.u32 %v5682, %v5678
      %v5684 = vrot.slane %v5683, 4
      %v5686 = vshll.u32 %v5465, 16
      %v5688 = vrot.slane %v5686, 5
      %v5689 = vsel %vm464, %v5684, %v5688
      %v5690 = vshrl.u32 %v5465, 16
      %v5692 = vrot.slane %v5690, 4
      %v5693 = vor.u32 %v5692, %v5688
      %v5694 = vrot.slane %v5693, 4
      %v5696 = vshll.u32 %v5466, 16
      %v5698 = vrot.slane %v5696, 5
      %v5699 = vsel %vm464, %v5694, %v5698
      %v5700 = vshrl.u32 %v5466, 16
      %v5702 = vrot.slane %v5700, 4
      %v5703 = vor.u32 %v5702, %v5698
      %v5704 = vrot.slane %v5703, 4
      %v5706 = vshll.u32 %v5467, 16
      %v5708 = vrot.slane %v5706, 5
      %v5709 = vsel %vm464, %v5704, %v5708
      %v5710 = vshrl.u32 %v5467, 16
      %v5712 = vrot.slane %v5710, 4
      %v5713 = vor.u32 %v5712, %v5708
      %v5714 = vrot.slane %v5713, 4
      %v5716 = vshll.u32 %v5468, 16
      %v5718 = vrot.slane %v5716, 5
      %v5719 = vsel %vm464, %v5714, %v5718
      %v5720 = vshrl.u32 %v5468, 16
      %v5722 = vrot.slane %v5720, 4
      %v5723 = vor.u32 %v5722, %v5718
      %v5724 = vrot.slane %v5723, 4
      %v5726 = vshll.u32 %v5469, 16
      %v5728 = vrot.slane %v5726, 5
      %v5729 = vsel %vm464, %v5724, %v5728
      %v5730 = vshrl.u32 %v5469, 16
      %v5732 = vrot.slane %v5730, 4
      %v5733 = vor.u32 %v5732, %v5728
      %v5734 = vrot.slane %v5733, 4
      %v5736 = vshll.u32 %v5470, 16
      %v5738 = vrot.slane %v5736, 5
      %v5739 = vsel %vm464, %v5734, %v5738
      %v5740 = vshrl.u32 %v5470, 16
      %v5742 = vrot.slane %v5740, 4
      %v5743 = vor.u32 %v5742, %v5738
      %v5744 = vrot.slane %v5743, 4
      %v5746 = vshll.u32 %v5471, 16
      %v5748 = vrot.slane %v5746, 5
      %v5749 = vsel %vm464, %v5744, %v5748
      %v5750 = vshrl.u32 %v5471, 16
      %v5752 = vrot.slane %v5750, 4
      %v5753 = vor.u32 %v5752, %v5748
      %v5754 = vrot.slane %v5753, 4
      %v5756 = vshll.u32 %v5472, 16
      %v5758 = vrot.slane %v5756, 5
      %v5759 = vsel %vm464, %v5754, %v5758
      %v5760 = vshrl.u32 %v5472, 16
      %v5762 = vrot.slane %v5760, 4
      %v5763 = vor.u32 %v5762, %v5758
      %v5764 = vrot.slane %v5763, 4
      %v5766 = vshll.u32 %v5473, 16
      %v5768 = vrot.slane %v5766, 5
      %v5769 = vsel %vm464, %v5764, %v5768
      %v5770 = vshrl.u32 %v5473, 16
      %v5772 = vrot.slane %v5770, 4
      %v5773 = vor.u32 %v5772, %v5768
      %v5774 = vrot.slane %v5773, 4
      %v5776 = vshll.u32 %v5474, 16
      %v5778 = vrot.slane %v5776, 5
      %v5779 = vsel %vm464, %v5774, %v5778
      %v5780 = vshrl.u32 %v5474, 16
      %v5782 = vrot.slane %v5780, 4
      %v5783 = vor.u32 %v5782, %v5778
      %v5784 = vrot.slane %v5783, 4
      %v5786 = vshll.u32 %v5475, 16
      %v5788 = vrot.slane %v5786, 5
      %v5789 = vsel %vm464, %v5784, %v5788
      %v5790 = vshrl.u32 %v5475, 16
      %v5792 = vrot.slane %v5790, 4
      %v5793 = vor.u32 %v5792, %v5788
      %v5794 = vrot.slane %v5793, 4
      %v5796 = vshll.u32 %v5476, 16
      %v5798 = vrot.slane %v5796, 5
      %v5799 = vsel %vm464, %v5794, %v5798
      %v5800 = vshrl.u32 %v5476, 16
      %v5802 = vrot.slane %v5800, 4
      %v5803 = vor.u32 %v5802, %v5798
      %v5804 = vrot.slane %v5803, 4
      %v5806 = vshll.u32 %v5477, 16
      %v5808 = vrot.slane %v5806, 5
      %v5809 = vsel %vm464, %v5804, %v5808
      %v5810 = vshrl.u32 %v5477, 16
      %v5812 = vrot.slane %v5810, 4
      %v5813 = vor.u32 %v5812, %v5808
      %v5814 = vrot.slane %v5813, 4
      %v5816 = vshll.u32 %v5478, 16
      %v5818 = vrot.slane %v5816, 5
      %v5819 = vsel %vm464, %v5814, %v5818
      %v5820 = vshrl.u32 %v5478, 16
      %v5822 = vrot.slane %v5820, 4
      %v5823 = vor.u32 %v5822, %v5818
      %v5824 = vrot.slane %v5823, 4
      %v5826 = vshll.u32 %v5479, 16
      %v5828 = vrot.slane %v5826, 5
      %v5829 = vsel %vm464, %v5824, %v5828
      %v5830 = vshrl.u32 %v5479, 16
      %v5832 = vrot.slane %v5830, 4
      %v5833 = vor.u32 %v5832, %v5828
      %v5834 = vrot.slane %v5833, 4
      %v5836 = vshll.u32 %v5480, 16
      %v5838 = vrot.slane %v5836, 5
      %v5839 = vsel %vm464, %v5834, %v5838
      %v5840 = vshrl.u32 %v5480, 16
      %v5842 = vrot.slane %v5840, 4
      %v5843 = vor.u32 %v5842, %v5838
      %v5844 = vrot.slane %v5843, 4
      %v5846 = vshll.u32 %v5481, 16
      %v5848 = vrot.slane %v5846, 5
      %v5849 = vsel %vm464, %v5844, %v5848
      %v5850 = vshrl.u32 %v5481, 16
      %v5852 = vrot.slane %v5850, 4
      %v5853 = vor.u32 %v5852, %v5848
      %v5854 = vrot.slane %v5853, 4
      %v5856 = vshll.u32 %v5482, 16
      %v5858 = vrot.slane %v5856, 5
      %v5859 = vsel %vm464, %v5854, %v5858
      %v5860 = vshrl.u32 %v5482, 16
      %v5862 = vrot.slane %v5860, 4
      %v5863 = vor.u32 %v5862, %v5858
      %v5864 = vrot.slane %v5863, 4
      %v5866 = vshll.u32 %v5483, 16
      %v5868 = vrot.slane %v5866, 5
      %v5869 = vsel %vm464, %v5864, %v5868
      %v5870 = vshrl.u32 %v5483, 16
      %v5872 = vrot.slane %v5870, 4
      %v5873 = vor.u32 %v5872, %v5868
      %v5874 = vrot.slane %v5873, 4
      %v5876 = vshll.u32 %v5484, 16
      %v5878 = vrot.slane %v5876, 5
      %v5879 = vsel %vm464, %v5874, %v5878
      %v5880 = vshrl.u32 %v5484, 16
      %v5882 = vrot.slane %v5880, 4
      %v5883 = vor.u32 %v5882, %v5878
      %v5884 = vrot.slane %v5883, 4
      %v5886 = vshll.u32 %v5485, 16
      %v5888 = vrot.slane %v5886, 5
      %v5889 = vsel %vm464, %v5884, %v5888
      %v5890 = vshrl.u32 %v5485, 16
      %v5892 = vrot.slane %v5890, 4
      %v5893 = vor.u32 %v5892, %v5888
      %v5894 = vrot.slane %v5893, 4
      %v5896 = vshll.u32 %v5486, 16
      %v5898 = vrot.slane %v5896, 5
      %v5899 = vsel %vm464, %v5894, %v5898
      %v5900 = vshrl.u32 %v5486, 16
      %v5902 = vrot.slane %v5900, 4
      %v5903 = vor.u32 %v5902, %v5898
      %v5904 = vrot.slane %v5903, 4
      %v5906 = vshll.u32 %v5487, 16
      %v5908 = vrot.slane %v5906, 5
      %v5909 = vsel %vm464, %v5904, %v5908
      %v5910 = vshrl.u32 %v5487, 16
      %v5912 = vrot.slane %v5910, 4
      %v5913 = vor.u32 %v5912, %v5908
      %v5914 = vrot.slane %v5913, 4
      %v5916 = vshll.u32 %v5488, 16
      %v5918 = vrot.slane %v5916, 5
      %v5919 = vsel %vm464, %v5914, %v5918
      %v5920 = vshrl.u32 %v5488, 16
      %v5922 = vrot.slane %v5920, 4
      %v5923 = vor.u32 %v5922, %v5918
      %v5924 = vrot.slane %v5923, 4
      %v5926 = vshll.u32 %v5489, 16
      %v5928 = vrot.slane %v5926, 5
      %v5929 = vsel %vm464, %v5924, %v5928
      %v5930 = vshrl.u32 %v5489, 16
      %v5932 = vrot.slane %v5930, 4
      %v5933 = vor.u32 %v5932, %v5928
      %v5934 = vrot.slane %v5933, 4
      %v5936 = vshll.u32 %v5490, 16
      %v5938 = vrot.slane %v5936, 5
      %v5939 = vsel %vm464, %v5934, %v5938
      %v5940 = vshrl.u32 %v5490, 16
      %v5942 = vrot.slane %v5940, 4
      %v5943 = vor.u32 %v5942, %v5938
      %v5944 = vrot.slane %v5943, 4
      %v5946 = vshll.u32 %v5491, 16
      %v5948 = vrot.slane %v5946, 5
      %v5949 = vsel %vm464, %v5944, %v5948
      %v5950 = vshrl.u32 %v5491, 16
      %v5952 = vrot.slane %v5950, 4
      %v5953 = vor.u32 %v5952, %v5948
      %v5954 = vrot.slane %v5953, 4
      %v5956 = vshll.u32 %v5492, 16
      %v5958 = vrot.slane %v5956, 5
      %v5959 = vsel %vm464, %v5954, %v5958
      %v5960 = vshrl.u32 %v5492, 16
      %v5962 = vrot.slane %v5960, 4
      %v5963 = vor.u32 %v5962, %v5958
      %v5964 = vrot.slane %v5963, 4
      %v5966 = vshll.u32 %v5493, 16
      %v5968 = vrot.slane %v5966, 5
      %v5969 = vsel %vm464, %v5964, %v5968
      %v5970 = vshrl.u32 %v5493, 16
      %v5972 = vrot.slane %v5970, 4
      %v5973 = vor.u32 %v5972, %v5968
      %v5974 = vrot.slane %v5973, 4
      %v5976 = vshll.u32 %v5494, 16
      %v5978 = vrot.slane %v5976, 5
      %v5979 = vsel %vm464, %v5974, %v5978
      %v5980 = vshrl.u32 %v5494, 16
      %v5982 = vrot.slane %v5980, 4
      %v5983 = vor.u32 %v5982, %v5978
      %v5984 = vrot.slane %v5983, 4
      %v5986 = vshll.u32 %v5495, 16
      %v5988 = vrot.slane %v5986, 5
      %v5989 = vsel %vm464, %v5984, %v5988
      %v5990 = vshrl.u32 %v5495, 16
      %v5992 = vrot.slane %v5990, 4
      %v5993 = vor.u32 %v5992, %v5988
      %v5994 = vrot.slane %v5993, 4
      %5995 = vrot.lane.b32.xlu0 %v5509, 64
      %v5996 = vpop.permute.xlu0 %5995
      %5997 = vrot.lane.b32.xlu0 %v5519, 64
      %v5998 = vpop.permute.xlu0 %5997
      %5999 = vrot.lane.b32.xlu0 %v5529, 64
      %v6000 = vpop.permute.xlu0 %5999
      %6001 = vrot.lane.b32.xlu0 %v5539, 64
      %v6002 = vpop.permute.xlu0 %6001
      %6003 = vrot.lane.b32.xlu0 %v5549, 64
      %v6004 = vpop.permute.xlu0 %6003
      %6005 = vrot.lane.b32.xlu0 %v5559, 64
      %v6006 = vpop.permute.xlu0 %6005
      %6007 = vrot.lane.b32.xlu0 %v5569, 64
      %v6008 = vpop.permute.xlu0 %6007
      %6009 = vrot.lane.b32.xlu0 %v5579, 64
      %v6010 = vpop.permute.xlu0 %6009
      %6011 = vrot.lane.b32.xlu0 %v5589, 64
      %v6012 = vpop.permute.xlu0 %6011
      %6013 = vrot.lane.b32.xlu0 %v5599, 64
      %v6014 = vpop.permute.xlu0 %6013
      %6015 = vrot.lane.b32.xlu0 %v5609, 64
      %v6016 = vpop.permute.xlu0 %6015
      %6017 = vrot.lane.b32.xlu0 %v5619, 64
      %v6018 = vpop.permute.xlu0 %6017
      %6019 = vrot.lane.b32.xlu0 %v5629, 64
      %v6020 = vpop.permute.xlu0 %6019
      %6021 = vrot.lane.b32.xlu0 %v5639, 64
      %v6022 = vpop.permute.xlu0 %6021
      %6023 = vrot.lane.b32.xlu0 %v5649, 64
      %v6024 = vpop.permute.xlu0 %6023
      %6025 = vrot.lane.b32.xlu0 %v5659, 64
      %v6026 = vpop.permute.xlu0 %6025
      %6027 = vrot.lane.b32.xlu0 %v5669, 64
      %v6028 = vpop.permute.xlu0 %6027
      %6029 = vrot.lane.b32.xlu0 %v5679, 64
      %v6030 = vpop.permute.xlu0 %6029
      %6031 = vrot.lane.b32.xlu0 %v5689, 64
      %v6032 = vpop.permute.xlu0 %6031
      %6033 = vrot.lane.b32.xlu0 %v5699, 64
      %v6034 = vpop.permute.xlu0 %6033
      %6035 = vrot.lane.b32.xlu0 %v5709, 64
      %v6036 = vpop.permute.xlu0 %6035
      %6037 = vrot.lane.b32.xlu0 %v5719, 64
      %v6038 = vpop.permute.xlu0 %6037
      %6039 = vrot.lane.b32.xlu0 %v5729, 64
      %v6040 = vpop.permute.xlu0 %6039
      %6041 = vrot.lane.b32.xlu0 %v5739, 64
      %v6042 = vpop.permute.xlu0 %6041
      %6043 = vrot.lane.b32.xlu0 %v5749, 64
      %v6044 = vpop.permute.xlu0 %6043
      %6045 = vrot.lane.b32.xlu0 %v5759, 64
      %v6046 = vpop.permute.xlu0 %6045
      %6047 = vrot.lane.b32.xlu0 %v5769, 64
      %v6048 = vpop.permute.xlu0 %6047
      %6049 = vrot.lane.b32.xlu0 %v5779, 64
      %v6050 = vpop.permute.xlu0 %6049
      %6051 = vrot.lane.b32.xlu0 %v5789, 64
      %v6052 = vpop.permute.xlu0 %6051
      %6053 = vrot.lane.b32.xlu0 %v5799, 64
      %v6054 = vpop.permute.xlu0 %6053
      %6055 = vrot.lane.b32.xlu0 %v5809, 64
      %v6056 = vpop.permute.xlu0 %6055
      %6057 = vrot.lane.b32.xlu0 %v5819, 64
      %v6058 = vpop.permute.xlu0 %6057
      %6059 = vrot.lane.b32.xlu0 %v5829, 64
      %v6060 = vpop.permute.xlu0 %6059
      %6061 = vrot.lane.b32.xlu0 %v5839, 64
      %v6062 = vpop.permute.xlu0 %6061
      %6063 = vrot.lane.b32.xlu0 %v5849, 64
      %v6064 = vpop.permute.xlu0 %6063
      %6065 = vrot.lane.b32.xlu0 %v5859, 64
      %v6066 = vpop.permute.xlu0 %6065
      %6067 = vrot.lane.b32.xlu0 %v5869, 64
      %v6068 = vpop.permute.xlu0 %6067
      %6069 = vrot.lane.b32.xlu0 %v5879, 64
      %v6070 = vpop.permute.xlu0 %6069
      %6071 = vrot.lane.b32.xlu0 %v5889, 64
      %v6072 = vpop.permute.xlu0 %6071
      %6073 = vrot.lane.b32.xlu0 %v5899, 64
      %v6074 = vpop.permute.xlu0 %6073
      %6075 = vrot.lane.b32.xlu0 %v5909, 64
      %v6076 = vpop.permute.xlu0 %6075
      %6077 = vrot.lane.b32.xlu0 %v5919, 64
      %v6078 = vpop.permute.xlu0 %6077
      %6079 = vrot.lane.b32.xlu0 %v5929, 64
      %v6080 = vpop.permute.xlu0 %6079
      %6081 = vrot.lane.b32.xlu0 %v5939, 64
      %v6082 = vpop.permute.xlu0 %6081
      %6083 = vrot.lane.b32.xlu0 %v5949, 64
      %v6084 = vpop.permute.xlu0 %6083
      %6085 = vrot.lane.b32.xlu0 %v5959, 64
      %v6086 = vpop.permute.xlu0 %6085
      %6087 = vrot.lane.b32.xlu0 %v5969, 64
      %v6088 = vpop.permute.xlu0 %6087
      %6089 = vrot.lane.b32.xlu0 %v5979, 64
      %v6090 = vpop.permute.xlu0 %6089
      %6091 = vrot.lane.b32.xlu0 %v5989, 64
      %v6092 = vpop.permute.xlu0 %6091
      %6093 = vrot.lane.b32.xlu0 %v5994, 64
      %v6094 = vpop.permute.xlu0 %6093
      %6145 = vst.msk [vmem:[#allocation3] sm:$0xf] %vm1114, %v5996
      %6146 = vst.msk [vmem:[#allocation3 + $0x4] sm:$0xf] %vm1114, %v5998
      %6147 = vst.msk [vmem:[#allocation3 + $0x8] sm:$0xf] %vm1114, %v6000
      %6148 = vst.msk [vmem:[#allocation3 + $0xc] sm:$0xf] %vm1114, %v6002
      %6149 = vst.msk [vmem:[#allocation3 + $0x10] sm:$0xf] %vm1114, %v6004
      %6150 = vst.msk [vmem:[#allocation3 + $0x14] sm:$0xf] %vm1114, %v6006
      %6151 = vst.msk [vmem:[#allocation3 + $0x18] sm:$0xf] %vm1114, %v6008
      %6152 = vst.msk [vmem:[#allocation3 + $0x1c] sm:$0xf] %vm1114, %v6010
      %6153 = vst.msk [vmem:[#allocation3 + $0x20] sm:$0xf] %vm1114, %v6012
      %6154 = vst.msk [vmem:[#allocation3 + $0x24] sm:$0xf] %vm1114, %v6014
      %6155 = vst.msk [vmem:[#allocation3 + $0x28] sm:$0xf] %vm1114, %v6016
      %6156 = vst.msk [vmem:[#allocation3 + $0x2c] sm:$0xf] %vm1114, %v6018
      %6157 = vst.msk [vmem:[#allocation3 + $0x30] sm:$0xf] %vm1114, %v6020
      %6158 = vst.msk [vmem:[#allocation3 + $0x34] sm:$0xf] %vm1114, %v6022
      %6159 = vst.msk [vmem:[#allocation3 + $0x38] sm:$0xf] %vm1114, %v6024
      %6160 = vst.msk [vmem:[#allocation3 + $0x3c] sm:$0xf] %vm1114, %v6026
      %6161 = vst.msk [vmem:[#allocation3 + $0x40] sm:$0xf] %vm1114, %v6028
      %6162 = vst.msk [vmem:[#allocation3 + $0x44] sm:$0xf] %vm1114, %v6030
      %6163 = vst.msk [vmem:[#allocation3 + $0x48] sm:$0xf] %vm1114, %v6032
      %6164 = vst.msk [vmem:[#allocation3 + $0x4c] sm:$0xf] %vm1114, %v6034
      %6165 = vst.msk [vmem:[#allocation3 + $0x50] sm:$0xf] %vm1114, %v6036
      %6166 = vst.msk [vmem:[#allocation3 + $0x54] sm:$0xf] %vm1114, %v6038
      %6167 = vst.msk [vmem:[#allocation3 + $0x58] sm:$0xf] %vm1114, %v6040
      %6168 = vst.msk [vmem:[#allocation3 + $0x5c] sm:$0xf] %vm1114, %v6042
      %6169 = vst.msk [vmem:[#allocation3 + $0x60] sm:$0xf] %vm1114, %v6044
      %6170 = vst.msk [vmem:[#allocation3 + $0x64] sm:$0xf] %vm1114, %v6046
      %6171 = vst.msk [vmem:[#allocation3 + $0x68] sm:$0xf] %vm1114, %v6048
      %6172 = vst.msk [vmem:[#allocation3 + $0x6c] sm:$0xf] %vm1114, %v6050
      %6173 = vst.msk [vmem:[#allocation3 + $0x70] sm:$0xf] %vm1114, %v6052
      %6174 = vst.msk [vmem:[#allocation3 + $0x74] sm:$0xf] %vm1114, %v6054
      %6175 = vst.msk [vmem:[#allocation3 + $0x78] sm:$0xf] %vm1114, %v6056
      %6176 = vst.msk [vmem:[#allocation3 + $0x7c] sm:$0xf] %vm1114, %v6058
      %6177 = vst.msk [vmem:[#allocation3 + $0x80] sm:$0xf] %vm1114, %v6060
      %6178 = vst.msk [vmem:[#allocation3 + $0x84] sm:$0xf] %vm1114, %v6062
      %6179 = vst.msk [vmem:[#allocation3 + $0x88] sm:$0xf] %vm1114, %v6064
      %6180 = vst.msk [vmem:[#allocation3 + $0x8c] sm:$0xf] %vm1114, %v6066
      %6181 = vst.msk [vmem:[#allocation3 + $0x90] sm:$0xf] %vm1114, %v6068
      %6182 = vst.msk [vmem:[#allocation3 + $0x94] sm:$0xf] %vm1114, %v6070
      %6183 = vst.msk [vmem:[#allocation3 + $0x98] sm:$0xf] %vm1114, %v6072
      %6184 = vst.msk [vmem:[#allocation3 + $0x9c] sm:$0xf] %vm1114, %v6074
      %6185 = vst.msk [vmem:[#allocation3 + $0xa0] sm:$0xf] %vm1114, %v6076
      %6186 = vst.msk [vmem:[#allocation3 + $0xa4] sm:$0xf] %vm1114, %v6078
      %6187 = vst.msk [vmem:[#allocation3 + $0xa8] sm:$0xf] %vm1114, %v6080
      %6188 = vst.msk [vmem:[#allocation3 + $0xac] sm:$0xf] %vm1114, %v6082
      %6189 = vst.msk [vmem:[#allocation3 + $0xb0] sm:$0xf] %vm1114, %v6084
      %6190 = vst.msk [vmem:[#allocation3 + $0xb4] sm:$0xf] %vm1114, %v6086
      %6191 = vst.msk [vmem:[#allocation3 + $0xb8] sm:$0xf] %vm1114, %v6088
      %6192 = vst.msk [vmem:[#allocation3 + $0xbc] sm:$0xf] %vm1114, %v6090
      %6193 = vst.msk [vmem:[#allocation3 + $0xc0] sm:$0xf] %vm1114, %v6092
      %v6194 = vld [vmem:[#allocation3 + $0xc4] sm:$0xf]
      %v6195 = vsel %vm1165, %v6094, %v6194
      %6196 = vst [vmem:[#allocation3 + $0xc4] sm:$0xf] %v6195
      %v6197 = vld [vmem:[#allocation3 + $0xc4] sm:$0x8]
      %v6198 = vsel %vm1171, 0, %v6197
      %6199 = vst [vmem:[#allocation3 + $0xc4] sm:$0x8] %v6198
      %v6200 = vld [vmem:[%s246 + $0x20] sm:$0xff]
      %v6201 = vld [vmem:[%s246 + $0x28] sm:$0xff]
      %v6202 = vld [vmem:[%s246 + $0x30] sm:$0xff]
      %v6203 = vld [vmem:[%s246 + $0x38] sm:$0xff]
      %v6204 = vld [vmem:[%s246 + $0x40] sm:$0xff]
      %v6205 = vld [vmem:[%s246 + $0x48] sm:$0xff]
      %v6206 = vld [vmem:[%s246 + $0x50] sm:$0xff]
      %v6207 = vld [vmem:[%s246 + $0x58] sm:$0xff]
      %v6208 = vld [vmem:[%s246 + $0x60] sm:$0xff]
      %v6209 = vld [vmem:[%s246 + $0x68] sm:$0xff]
      %v6210 = vld [vmem:[%s246 + $0x70] sm:$0xff]
      %v6211 = vld [vmem:[%s246 + $0x78] sm:$0xff]
      %v6212 = vld [vmem:[%s246 + $0x80] sm:$0xff]
      %v6213 = vld [vmem:[%s246 + $0x88] sm:$0xff]
      %v6214 = vld [vmem:[#allocation3 + $0x4] sm:$0xc]
      %v6215 = vld [vmem:[#allocation3 + $0x8] sm:$0xf]
      %v6216 = vld [vmem:[#allocation3 + $0xc] sm:$0xf]
      %v6217 = vld [vmem:[#allocation3 + $0x10] sm:$0xf]
      %v6218 = vld [vmem:[#allocation3 + $0x14] sm:$0xf]
      %v6219 = vld [vmem:[#allocation3 + $0x18] sm:$0xf]
      %v6220 = vld [vmem:[#allocation3 + $0x1c] sm:$0xf]
      %v6221 = vld [vmem:[#allocation3 + $0x20] sm:$0xf]
      %v6222 = vld [vmem:[#allocation3 + $0x24] sm:$0xf]
      %v6223 = vld [vmem:[#allocation3 + $0x28] sm:$0xf]
      %v6224 = vld [vmem:[#allocation3 + $0x2c] sm:$0xf]
      %v6225 = vld [vmem:[#allocation3 + $0x30] sm:$0xf]
      %v6226 = vld [vmem:[#allocation3 + $0x34] sm:$0xf]
      %v6227 = vld [vmem:[#allocation3 + $0x38] sm:$0xf]
      %v6228 = vld [vmem:[#allocation3 + $0x3c] sm:$0x7]
      %v6229 = vld [vmem:[%s4] sm:$0xf]
      %v6230 = vld [vmem:[%s4 + $0x4] sm:$0xf]
      %v6231 = vld [vmem:[%s4 + $0x8] sm:$0xf]
      %v6232 = vld [vmem:[%s4 + $0xc] sm:$0xf]
      %v6233 = vld [vmem:[%s4 + $0x10] sm:$0xf]
      %v6234 = vld [vmem:[%s4 + $0x14] sm:$0xf]
      %v6235 = vld [vmem:[%s4 + $0x18] sm:$0xf]
      %v6236 = vld [vmem:[%s4 + $0x1c] sm:$0xf]
      %v6237 = vld [vmem:[%s4 + $0x20] sm:$0xf]
      %v6238 = vld [vmem:[%s4 + $0x24] sm:$0xf]
      %v6239 = vld [vmem:[%s4 + $0x28] sm:$0xf]
      %v6240 = vld [vmem:[%s4 + $0x2c] sm:$0xf]
      %v6241 = vld [vmem:[%s4 + $0x30] sm:$0xf]
      %v6242 = vld [vmem:[%s4 + $0x34] sm:$0xf]
      %v6243 = vld [vmem:[%s4 + $0x38] sm:$0xf]
      %v6244 = vld [vmem:[%s4 + $0x3c] sm:$0xf]
      %v6245 = vld [vmem:[#allocation3 + $0x4] sm:$0x8]
      %v6246 = vld [vmem:[#allocation3 + $0x3c] sm:$0xf]
      %v6247 = vld [vmem:[%s4 + $0x40] sm:$0xf]
      %v6248 = vld [vmem:[%s4 + $0x44] sm:$0xf]
      %v6249 = vld [vmem:[%s4 + $0x48] sm:$0xf]
      %v6250 = vld [vmem:[%s4 + $0x4c] sm:$0xf]
      %v6251 = vld [vmem:[%s4 + $0x50] sm:$0xf]
      %v6252 = vld [vmem:[%s4 + $0x54] sm:$0xf]
      %v6253 = vld [vmem:[%s4 + $0x58] sm:$0xf]
      %v6254 = vld [vmem:[%s4 + $0x5c] sm:$0xf]
      %v6270 = vunpack.c.l.b16 %v6245
      %v6271 = vunpack.c.l.b16 %v6215
      %v6272 = vunpack.c.l.b16 %v6216
      %v6273 = vunpack.c.l.b16 %v6217
      %v6274 = vunpack.c.l.b16 %v6218
      %v6275 = vunpack.c.l.b16 %v6219
      %v6276 = vunpack.c.l.b16 %v6220
      %v6277 = vunpack.c.l.b16 %v6221
      %v6278 = vunpack.c.l.b16 %v6222
      %v6279 = vunpack.c.l.b16 %v6223
      %v6280 = vunpack.c.l.b16 %v6224
      %v6281 = vunpack.c.l.b16 %v6225
      %v6282 = vunpack.c.l.b16 %v6226
      %v6283 = vunpack.c.l.b16 %v6227
      %v6284 = vunpack.c.l.b16 %v6246
      %v6285 = vpack.c.b16 %v6271, %v6270
      %v6286 = vpack.c.b16 %v6273, %v6272
      %v6287 = vpack.c.b16 %v6275, %v6274
      %v6288 = vpack.c.b16 %v6277, %v6276
      %v6289 = vpack.c.b16 %v6279, %v6278
      %v6290 = vpack.c.b16 %v6281, %v6280
      %v6291 = vpack.c.b16 %v6283, %v6282
      %v6292 = vpack.c.b16 %v6284, %v6284
      %v6294 = vshrl.u32 %v6285, 16
      %v6296 = vrot.slane %v6294, 3
      %v6297 = vshll.u32 %v6285, 16
      %v6299 = vrot.slane %v6297, 4
      %v6300 = vor.u32 %v6296, %v6299
      %v6302 = vshrl.u32 %v6286, 16
      %v6304 = vrot.slane %v6302, 3
      %v6305 = vshll.u32 %v6286, 16
      %v6307 = vrot.slane %v6305, 4
      %v6308 = vor.u32 %v6304, %v6307
      %v6309 = vsel %vm1254, %v6300, %v6308
      %v6311 = vshrl.u32 %v6287, 16
      %v6313 = vrot.slane %v6311, 3
      %v6314 = vshll.u32 %v6287, 16
      %v6316 = vrot.slane %v6314, 4
      %v6317 = vor.u32 %v6313, %v6316
      %v6318 = vsel %vm1254, %v6308, %v6317
      %v6320 = vshrl.u32 %v6288, 16
      %v6322 = vrot.slane %v6320, 3
      %v6323 = vshll.u32 %v6288, 16
      %v6325 = vrot.slane %v6323, 4
      %v6326 = vor.u32 %v6322, %v6325
      %v6327 = vsel %vm1254, %v6317, %v6326
      %v6329 = vshrl.u32 %v6289, 16
      %v6331 = vrot.slane %v6329, 3
      %v6332 = vshll.u32 %v6289, 16
      %v6334 = vrot.slane %v6332, 4
      %v6335 = vor.u32 %v6331, %v6334
      %v6336 = vsel %vm1254, %v6326, %v6335
      %v6338 = vshrl.u32 %v6290, 16
      %v6340 = vrot.slane %v6338, 3
      %v6341 = vshll.u32 %v6290, 16
      %v6343 = vrot.slane %v6341, 4
      %v6344 = vor.u32 %v6340, %v6343
      %v6345 = vsel %vm1254, %v6335, %v6344
      %v6347 = vshrl.u32 %v6291, 16
      %v6349 = vrot.slane %v6347, 3
      %v6350 = vshll.u32 %v6291, 16
      %v6352 = vrot.slane %v6350, 4
      %v6353 = vor.u32 %v6349, %v6352
      %v6354 = vsel %vm1254, %v6344, %v6353
      %v6356 = vshrl.u32 %v6292, 16
      %v6358 = vrot.slane %v6356, 3
      %v6359 = vshll.u32 %v6292, 16
      %v6361 = vrot.slane %v6359, 4
      %v6362 = vor.u32 %v6358, %v6361
      %v6363 = vsel %vm1254, %v6353, %v6362
      %v6372 = vunpack.c.l.b16 %v6247
      %v6373 = vunpack.c.l.b16 %v6248
      %v6374 = vunpack.c.l.b16 %v6249
      %v6375 = vunpack.c.l.b16 %v6250
      %v6376 = vunpack.c.l.b16 %v6251
      %v6377 = vunpack.c.l.b16 %v6252
      %v6378 = vunpack.c.l.b16 %v6253
      %v6379 = vunpack.c.l.b16 %v6254
      %v6380 = vpack.c.b16 %v6373, %v6372
      %v6381 = vpack.c.b16 %v6375, %v6374
      %v6382 = vpack.c.b16 %v6377, %v6376
      %v6383 = vpack.c.b16 %v6379, %v6378
      %v6389 = vsel %vm1350, %v6309, 0
      %v6392 = vsel %vm1350, %v6318, 0
      %v6395 = vsel %vm1350, %v6327, 0
      %v6398 = vsel %vm1350, %v6336, 0
      %v6401 = vsel %vm1350, %v6345, 0
      %v6404 = vsel %vm1350, %v6354, 0
      %v6407 = vsel %vm1350, %v6363, 0
      %6409 = vmatpush.bf16.msra.mxu0 0
      %6410 = vmatpush.bf16.msra.mxu0 0
      %6411 = vmatpush.bf16.msra.mxu0 0
      %6412 = vmatpush.bf16.msra.mxu0 0
      %6413 = vmatpush.bf16.msra.mxu0 %v6383
      %6414 = vmatpush.bf16.msra.mxu0 %v6382
      %6415 = vmatpush.bf16.msra.mxu0 %v6381
      %6416 = vmatpush.bf16.msra.mxu0 %v6380
      %6417 = vmatmul.bf16.gmra.mxu0 %v6389
      %v6418 = vpop.f32.mrf.mxu0
      %v6419 = vadd.f32 0.0, %v6418
      %v6420 = vpop.f32.mrf.mxu0
      %v6421 = vadd.f32 0.0, %v6420
      %6422 = vmatmul.bf16.gmra.mxu0 %v6392
      %v6423 = vpop.f32.mrf.mxu0
      %v6424 = vadd.f32 0.0, %v6423
      %v6425 = vpop.f32.mrf.mxu0
      %v6426 = vadd.f32 0.0, %v6425
      %6427 = vmatmul.bf16.gmra.mxu0 %v6395
      %v6428 = vpop.f32.mrf.mxu0
      %v6429 = vadd.f32 0.0, %v6428
      %v6430 = vpop.f32.mrf.mxu0
      %v6431 = vadd.f32 0.0, %v6430
      %6432 = vmatmul.bf16.gmra.mxu0 %v6398
      %v6433 = vpop.f32.mrf.mxu0
      %v6434 = vadd.f32 0.0, %v6433
      %v6435 = vpop.f32.mrf.mxu0
      %v6436 = vadd.f32 0.0, %v6435
      %6437 = vmatmul.bf16.gmra.mxu0 %v6401
      %v6438 = vpop.f32.mrf.mxu0
      %v6439 = vadd.f32 0.0, %v6438
      %v6440 = vpop.f32.mrf.mxu0
      %v6441 = vadd.f32 0.0, %v6440
      %6442 = vmatmul.bf16.gmra.mxu0 %v6404
      %v6443 = vpop.f32.mrf.mxu0
      %v6444 = vadd.f32 0.0, %v6443
      %v6445 = vpop.f32.mrf.mxu0
      %v6446 = vadd.f32 0.0, %v6445
      %6447 = vmatmul.bf16.gmra.mxu0 %v6407
      %v6448 = vpop.f32.mrf.mxu0
      %v6449 = vadd.f32 0.0, %v6448
      %v6450 = vpop.f32.mrf.mxu0
      %v6451 = vadd.f32 0.0, %v6450
      %6452 = vdwg.mxu0
      %v6455 = vunpack.c.l.b16 %v6214
      %v6456 = vunpack.c.l.b16 %v6228
      %v6457 = vpack.c.b16 %v6271, %v6455
      %v6458 = vpack.c.b16 %v6456, %v6456
      %v6460 = vshrl.u32 %v6457, 16
      %v6462 = vrot.slane %v6460, 2
      %v6463 = vshll.u32 %v6457, 16
      %v6465 = vrot.slane %v6463, 3
      %v6466 = vor.u32 %v6462, %v6465
      %v6467 = vrot.slane %v6302, 2
      %v6468 = vrot.slane %v6305, 3
      %v6469 = vor.u32 %v6467, %v6468
      %v6470 = vsel %vm1422, %v6466, %v6469
      %v6471 = vrot.slane %v6311, 2
      %v6472 = vrot.slane %v6314, 3
      %v6473 = vor.u32 %v6471, %v6472
      %v6474 = vsel %vm1422, %v6469, %v6473
      %v6475 = vrot.slane %v6320, 2
      %v6476 = vrot.slane %v6323, 3
      %v6477 = vor.u32 %v6475, %v6476
      %v6478 = vsel %vm1422, %v6473, %v6477
      %v6479 = vrot.slane %v6329, 2
      %v6480 = vrot.slane %v6332, 3
      %v6481 = vor.u32 %v6479, %v6480
      %v6482 = vsel %vm1422, %v6477, %v6481
      %v6483 = vrot.slane %v6338, 2
      %v6484 = vrot.slane %v6341, 3
      %v6485 = vor.u32 %v6483, %v6484
      %v6486 = vsel %vm1422, %v6481, %v6485
      %v6487 = vrot.slane %v6347, 2
      %v6488 = vrot.slane %v6350, 3
      %v6489 = vor.u32 %v6487, %v6488
      %v6490 = vsel %vm1422, %v6485, %v6489
      %v6492 = vshrl.u32 %v6458, 16
      %v6494 = vrot.slane %v6492, 2
      %v6495 = vshll.u32 %v6458, 16
      %v6497 = vrot.slane %v6495, 3
      %v6498 = vor.u32 %v6494, %v6497
      %v6499 = vsel %vm1422, %v6489, %v6498
      %v6523 = vunpack.c.l.b16 %v6229
      %v6524 = vunpack.c.l.b16 %v6230
      %v6525 = vunpack.c.l.b16 %v6231
      %v6526 = vunpack.c.l.b16 %v6232
      %v6527 = vunpack.c.l.b16 %v6233
      %v6528 = vunpack.c.l.b16 %v6234
      %v6529 = vunpack.c.l.b16 %v6235
      %v6530 = vunpack.c.l.b16 %v6236
      %v6531 = vunpack.c.l.b16 %v6237
      %v6532 = vunpack.c.l.b16 %v6238
      %v6533 = vunpack.c.l.b16 %v6239
      %v6534 = vunpack.c.l.b16 %v6240
      %v6535 = vunpack.c.l.b16 %v6241
      %v6536 = vunpack.c.l.b16 %v6242
      %v6537 = vunpack.c.l.b16 %v6243
      %v6538 = vunpack.c.l.b16 %v6244
      %v6539 = vpack.c.b16 %v6524, %v6523
      %v6540 = vpack.c.b16 %v6526, %v6525
      %v6541 = vpack.c.b16 %v6528, %v6527
      %v6542 = vpack.c.b16 %v6530, %v6529
      %v6543 = vpack.c.b16 %v6532, %v6531
      %v6544 = vpack.c.b16 %v6534, %v6533
      %v6545 = vpack.c.b16 %v6536, %v6535
      %v6546 = vpack.c.b16 %v6538, %v6537
      %6555 = vmatpush.bf16.msra.mxu0 %v6546
      %6556 = vmatpush.bf16.msra.mxu0 %v6545
      %6557 = vmatpush.bf16.msra.mxu0 %v6544
      %6558 = vmatpush.bf16.msra.mxu0 %v6543
      %6559 = vmatpush.bf16.msra.mxu0 %v6542
      %6560 = vmatpush.bf16.msra.mxu0 %v6541
      %6561 = vmatpush.bf16.msra.mxu0 %v6540
      %6562 = vmatpush.bf16.msra.mxu0 %v6539
      %6563 = vmatmul.bf16.gmra.mxu0 %v6470
      %v6564 = vpop.f32.mrf.mxu0
      %v6565 = vadd.f32 %v6419, %v6564
      %v6566 = vpop.f32.mrf.mxu0
      %v6567 = vadd.f32 %v6421, %v6566
      %6568 = vmatmul.bf16.gmra.mxu0 %v6474
      %v6569 = vpop.f32.mrf.mxu0
      %v6570 = vadd.f32 %v6424, %v6569
      %v6571 = vpop.f32.mrf.mxu0
      %v6572 = vadd.f32 %v6426, %v6571
      %6573 = vmatmul.bf16.gmra.mxu0 %v6478
      %v6574 = vpop.f32.mrf.mxu0
      %v6575 = vadd.f32 %v6429, %v6574
      %v6576 = vpop.f32.mrf.mxu0
      %v6577 = vadd.f32 %v6431, %v6576
      %6578 = vmatmul.bf16.gmra.mxu0 %v6482
      %v6579 = vpop.f32.mrf.mxu0
      %v6580 = vadd.f32 %v6434, %v6579
      %v6581 = vpop.f32.mrf.mxu0
      %v6582 = vadd.f32 %v6436, %v6581
      %6583 = vmatmul.bf16.gmra.mxu0 %v6486
      %v6584 = vpop.f32.mrf.mxu0
      %v6585 = vadd.f32 %v6439, %v6584
      %v6586 = vpop.f32.mrf.mxu0
      %v6587 = vadd.f32 %v6441, %v6586
      %6588 = vmatmul.bf16.gmra.mxu0 %v6490
      %v6589 = vpop.f32.mrf.mxu0
      %v6590 = vadd.f32 %v6444, %v6589
      %v6591 = vpop.f32.mrf.mxu0
      %v6592 = vadd.f32 %v6446, %v6591
      %6593 = vmatmul.bf16.gmra.mxu0 %v6499
      %v6594 = vpop.f32.mrf.mxu0
      %v6595 = vadd.f32 %v6449, %v6594
      %v6596 = vpop.f32.mrf.mxu0
      %v6597 = vadd.f32 %v6451, %v6596
      %6598 = vdwg.mxu0
      %v6599 = vld [vmem:[#allocation3 + $0xc] sm:$0x8]
      %v6600 = vld [vmem:[#allocation3 + $0x10] sm:$0xf]
      %v6601 = vld [vmem:[#allocation3 + $0x14] sm:$0xf]
      %v6602 = vld [vmem:[#allocation3 + $0x18] sm:$0xf]
      %v6603 = vld [vmem:[#allocation3 + $0x1c] sm:$0xf]
      %v6604 = vld [vmem:[#allocation3 + $0x20] sm:$0xf]
      %v6605 = vld [vmem:[#allocation3 + $0x24] sm:$0xf]
      %v6606 = vld [vmem:[#allocation3 + $0x28] sm:$0xf]
      %v6607 = vld [vmem:[#allocation3 + $0x2c] sm:$0xf]
      %v6608 = vld [vmem:[#allocation3 + $0x30] sm:$0xf]
      %v6609 = vld [vmem:[#allocation3 + $0x34] sm:$0xf]
      %v6610 = vld [vmem:[#allocation3 + $0x38] sm:$0xf]
      %v6611 = vld [vmem:[#allocation3 + $0x3c] sm:$0xf]
      %v6612 = vld [vmem:[#allocation3 + $0x40] sm:$0xf]
      %v6613 = vld [vmem:[#allocation3 + $0x44] sm:$0xf]
      %v6614 = vld [vmem:[%s4 + $0x60] sm:$0xf]
      %v6615 = vld [vmem:[%s4 + $0x64] sm:$0xf]
      %v6616 = vld [vmem:[%s4 + $0x68] sm:$0xf]
      %v6617 = vld [vmem:[%s4 + $0x6c] sm:$0xf]
      %v6618 = vld [vmem:[%s4 + $0x70] sm:$0xf]
      %v6619 = vld [vmem:[%s4 + $0x74] sm:$0xf]
      %v6620 = vld [vmem:[%s4 + $0x78] sm:$0xf]
      %v6621 = vld [vmem:[%s4 + $0x7c] sm:$0xf]
      %v6622 = vld [vmem:[%s4 + $0x80] sm:$0xf]
      %v6623 = vld [vmem:[%s4 + $0x84] sm:$0xf]
      %v6624 = vld [vmem:[%s4 + $0x88] sm:$0xf]
      %v6625 = vld [vmem:[%s4 + $0x8c] sm:$0xf]
      %v6626 = vld [vmem:[%s4 + $0x90] sm:$0xf]
      %v6627 = vld [vmem:[%s4 + $0x94] sm:$0xf]
      %v6628 = vld [vmem:[%s4 + $0x98] sm:$0xf]
      %v6629 = vld [vmem:[%s4 + $0x9c] sm:$0xf]
      %v6645 = vunpack.c.l.b16 %v6599
      %v6646 = vunpack.c.l.b16 %v6600
      %v6647 = vunpack.c.l.b16 %v6601
      %v6648 = vunpack.c.l.b16 %v6602
      %v6649 = vunpack.c.l.b16 %v6603
      %v6650 = vunpack.c.l.b16 %v6604
      %v6651 = vunpack.c.l.b16 %v6605
      %v6652 = vunpack.c.l.b16 %v6606
      %v6653 = vunpack.c.l.b16 %v6607
      %v6654 = vunpack.c.l.b16 %v6608
      %v6655 = vunpack.c.l.b16 %v6609
      %v6656 = vunpack.c.l.b16 %v6610
      %v6657 = vunpack.c.l.b16 %v6611
      %v6658 = vunpack.c.l.b16 %v6612
      %v6659 = vunpack.c.l.b16 %v6613
      %v6660 = vpack.c.b16 %v6646, %v6645
      %v6661 = vpack.c.b16 %v6648, %v6647
      %v6662 = vpack.c.b16 %v6650, %v6649
      %v6663 = vpack.c.b16 %v6652, %v6651
      %v6664 = vpack.c.b16 %v6654, %v6653
      %v6665 = vpack.c.b16 %v6656, %v6655
      %v6666 = vpack.c.b16 %v6658, %v6657
      %v6667 = vpack.c.b16 %v6659, %v6659
      %v6669 = vshrl.u32 %v6660, 16
      %v6671 = vrot.slane %v6669, 3
      %v6672 = vshll.u32 %v6660, 16
      %v6674 = vrot.slane %v6672, 4
      %v6675 = vor.u32 %v6671, %v6674
      %v6677 = vshrl.u32 %v6661, 16
      %v6679 = vrot.slane %v6677, 3
      %v6680 = vshll.u32 %v6661, 16
      %v6682 = vrot.slane %v6680, 4
      %v6683 = vor.u32 %v6679, %v6682
      %v6684 = vsel %vm1254, %v6675, %v6683
      %v6686 = vshrl.u32 %v6662, 16
      %v6688 = vrot.slane %v6686, 3
      %v6689 = vshll.u32 %v6662, 16
      %v6691 = vrot.slane %v6689, 4
      %v6692 = vor.u32 %v6688, %v6691
      %v6693 = vsel %vm1254, %v6683, %v6692
      %v6695 = vshrl.u32 %v6663, 16
      %v6697 = vrot.slane %v6695, 3
      %v6698 = vshll.u32 %v6663, 16
      %v6700 = vrot.slane %v6698, 4
      %v6701 = vor.u32 %v6697, %v6700
      %v6702 = vsel %vm1254, %v6692, %v6701
      %v6704 = vshrl.u32 %v6664, 16
      %v6706 = vrot.slane %v6704, 3
      %v6707 = vshll.u32 %v6664, 16
      %v6709 = vrot.slane %v6707, 4
      %v6710 = vor.u32 %v6706, %v6709
      %v6711 = vsel %vm1254, %v6701, %v6710
      %v6713 = vshrl.u32 %v6665, 16
      %v6715 = vrot.slane %v6713, 3
      %v6716 = vshll.u32 %v6665, 16
      %v6718 = vrot.slane %v6716, 4
      %v6719 = vor.u32 %v6715, %v6718
      %v6720 = vsel %vm1254, %v6710, %v6719
      %v6722 = vshrl.u32 %v6666, 16
      %v6724 = vrot.slane %v6722, 3
      %v6725 = vshll.u32 %v6666, 16
      %v6727 = vrot.slane %v6725, 4
      %v6728 = vor.u32 %v6724, %v6727
      %v6729 = vsel %vm1254, %v6719, %v6728
      %v6731 = vshrl.u32 %v6667, 16
      %v6733 = vrot.slane %v6731, 3
      %v6734 = vshll.u32 %v6667, 16
      %v6736 = vrot.slane %v6734, 4
      %v6737 = vor.u32 %v6733, %v6736
      %v6738 = vsel %vm1254, %v6728, %v6737
      %v6762 = vunpack.c.l.b16 %v6614
      %v6763 = vunpack.c.l.b16 %v6615
      %v6764 = vunpack.c.l.b16 %v6616
      %v6765 = vunpack.c.l.b16 %v6617
      %v6766 = vunpack.c.l.b16 %v6618
      %v6767 = vunpack.c.l.b16 %v6619
      %v6768 = vunpack.c.l.b16 %v6620
      %v6769 = vunpack.c.l.b16 %v6621
      %v6770 = vunpack.c.l.b16 %v6622
      %v6771 = vunpack.c.l.b16 %v6623
      %v6772 = vunpack.c.l.b16 %v6624
      %v6773 = vunpack.c.l.b16 %v6625
      %v6774 = vunpack.c.l.b16 %v6626
      %v6775 = vunpack.c.l.b16 %v6627
      %v6776 = vunpack.c.l.b16 %v6628
      %v6777 = vunpack.c.l.b16 %v6629
      %v6778 = vpack.c.b16 %v6763, %v6762
      %v6779 = vpack.c.b16 %v6765, %v6764
      %v6780 = vpack.c.b16 %v6767, %v6766
      %v6781 = vpack.c.b16 %v6769, %v6768
      %v6782 = vpack.c.b16 %v6771, %v6770
      %v6783 = vpack.c.b16 %v6773, %v6772
      %v6784 = vpack.c.b16 %v6775, %v6774
      %v6785 = vpack.c.b16 %v6777, %v6776
      %6794 = vmatpush.bf16.msra.mxu0 %v6785
      %6795 = vmatpush.bf16.msra.mxu0 %v6784
      %6796 = vmatpush.bf16.msra.mxu0 %v6783
      %6797 = vmatpush.bf16.msra.mxu0 %v6782
      %6798 = vmatpush.bf16.msra.mxu0 %v6781
      %6799 = vmatpush.bf16.msra.mxu0 %v6780
      %6800 = vmatpush.bf16.msra.mxu0 %v6779
      %6801 = vmatpush.bf16.msra.mxu0 %v6778
      %6802 = vmatmul.bf16.gmra.mxu0 %v6684
      %v6803 = vpop.f32.mrf.mxu0
      %v6804 = vadd.f32 0.0, %v6803
      %v6805 = vpop.f32.mrf.mxu0
      %v6806 = vadd.f32 0.0, %v6805
      %6807 = vmatmul.bf16.gmra.mxu0 %v6693
      %v6808 = vpop.f32.mrf.mxu0
      %v6809 = vadd.f32 0.0, %v6808
      %v6810 = vpop.f32.mrf.mxu0
      %v6811 = vadd.f32 0.0, %v6810
      %6812 = vmatmul.bf16.gmra.mxu0 %v6702
      %v6813 = vpop.f32.mrf.mxu0
      %v6814 = vadd.f32 0.0, %v6813
      %v6815 = vpop.f32.mrf.mxu0
      %v6816 = vadd.f32 0.0, %v6815
      %6817 = vmatmul.bf16.gmra.mxu0 %v6711
      %v6818 = vpop.f32.mrf.mxu0
      %v6819 = vadd.f32 0.0, %v6818
      %v6820 = vpop.f32.mrf.mxu0
      %v6821 = vadd.f32 0.0, %v6820
      %6822 = vmatmul.bf16.gmra.mxu0 %v6720
      %v6823 = vpop.f32.mrf.mxu0
      %v6824 = vadd.f32 0.0, %v6823
      %v6825 = vpop.f32.mrf.mxu0
      %v6826 = vadd.f32 0.0, %v6825
      %6827 = vmatmul.bf16.gmra.mxu0 %v6729
      %v6828 = vpop.f32.mrf.mxu0
      %v6829 = vadd.f32 0.0, %v6828
      %v6830 = vpop.f32.mrf.mxu0
      %v6831 = vadd.f32 0.0, %v6830
      %6832 = vmatmul.bf16.gmra.mxu0 %v6738
      %v6833 = vpop.f32.mrf.mxu0
      %v6834 = vadd.f32 0.0, %v6833
      %v6835 = vpop.f32.mrf.mxu0
      %v6836 = vadd.f32 0.0, %v6835
      %6837 = vdwg.mxu0
      %v6838 = vadd.f32 %v6565, %v6804
      %v6839 = vadd.f32 %v6567, %v6806
      %v6840 = vadd.f32 %v6570, %v6809
      %v6841 = vadd.f32 %v6572, %v6811
      %v6842 = vadd.f32 %v6575, %v6814
      %v6843 = vadd.f32 %v6577, %v6816
      %v6844 = vadd.f32 %v6580, %v6819
      %v6845 = vadd.f32 %v6582, %v6821
      %v6846 = vadd.f32 %v6585, %v6824
      %v6847 = vadd.f32 %v6587, %v6826
      %v6848 = vadd.f32 %v6590, %v6829
      %v6849 = vadd.f32 %v6592, %v6831
      %v6850 = vadd.f32 %v6595, %v6834
      %v6851 = vadd.f32 %v6597, %v6836
      %v6852 = vld [vmem:[#allocation3 + $0x10] sm:$0xf]
      %v6853 = vld [vmem:[#allocation3 + $0x14] sm:$0xf]
      %v6854 = vld [vmem:[#allocation3 + $0x18] sm:$0xf]
      %v6855 = vld [vmem:[#allocation3 + $0x1c] sm:$0xf]
      %v6856 = vld [vmem:[#allocation3 + $0x20] sm:$0xf]
      %v6857 = vld [vmem:[#allocation3 + $0x24] sm:$0xf]
      %v6858 = vld [vmem:[#allocation3 + $0x28] sm:$0xf]
      %v6859 = vld [vmem:[#allocation3 + $0x2c] sm:$0xf]
      %v6860 = vld [vmem:[#allocation3 + $0x30] sm:$0xf]
      %v6861 = vld [vmem:[#allocation3 + $0x34] sm:$0xf]
      %v6862 = vld [vmem:[#allocation3 + $0x38] sm:$0xf]
      %v6863 = vld [vmem:[#allocation3 + $0x3c] sm:$0xf]
      %v6864 = vld [vmem:[#allocation3 + $0x40] sm:$0xf]
      %v6865 = vld [vmem:[#allocation3 + $0x44] sm:$0xf]
      %v6866 = vld [vmem:[#allocation3 + $0x48] sm:$0x1]
      %v6867 = vld [vmem:[%s4 + $0xa0] sm:$0xf]
      %v6868 = vld [vmem:[%s4 + $0xa4] sm:$0xf]
      %v6869 = vld [vmem:[%s4 + $0xa8] sm:$0xf]
      %v6870 = vld [vmem:[%s4 + $0xac] sm:$0xf]
      %v6871 = vld [vmem:[%s4 + $0xb0] sm:$0xf]
      %v6872 = vld [vmem:[%s4 + $0xb4] sm:$0xf]
      %v6873 = vld [vmem:[%s4 + $0xb8] sm:$0xf]
      %v6874 = vld [vmem:[%s4 + $0xbc] sm:$0xf]
      %v6890 = vunpack.c.l.b16 %v6852
      %v6891 = vunpack.c.l.b16 %v6853
      %v6892 = vunpack.c.l.b16 %v6854
      %v6893 = vunpack.c.l.b16 %v6855
      %v6894 = vunpack.c.l.b16 %v6856
      %v6895 = vunpack.c.l.b16 %v6857
      %v6896 = vunpack.c.l.b16 %v6858
      %v6897 = vunpack.c.l.b16 %v6859
      %v6898 = vunpack.c.l.b16 %v6860
      %v6899 = vunpack.c.l.b16 %v6861
      %v6900 = vunpack.c.l.b16 %v6862
      %v6901 = vunpack.c.l.b16 %v6863
      %v6902 = vunpack.c.l.b16 %v6864
      %v6903 = vunpack.c.l.b16 %v6865
      %v6904 = vunpack.c.l.b16 %v6866
      %v6905 = vpack.c.b16 %v6891, %v6890
      %v6906 = vpack.c.b16 %v6893, %v6892
      %v6907 = vpack.c.b16 %v6895, %v6894
      %v6908 = vpack.c.b16 %v6897, %v6896
      %v6909 = vpack.c.b16 %v6899, %v6898
      %v6910 = vpack.c.b16 %v6901, %v6900
      %v6911 = vpack.c.b16 %v6903, %v6902
      %v6912 = vpack.c.b16 %v6904, %v6904
      %v6914 = vshrl.u32 %v6905, 16
      %v6916 = vshll.u32 %v6905, 16
      %v6918 = vrot.slane %v6916, 1
      %v6919 = vor.u32 %v6914, %v6918
      %v6921 = vshll.u32 %v6906, 16
      %v6923 = vrot.slane %v6921, 1
      %v6924 = vsel %vm1877, %v6919, %v6923
      %v6925 = vshrl.u32 %v6906, 16
      %v6927 = vor.u32 %v6925, %v6923
      %v6929 = vshll.u32 %v6907, 16
      %v6931 = vrot.slane %v6929, 1
      %v6932 = vsel %vm1877, %v6927, %v6931
      %v6933 = vshrl.u32 %v6907, 16
      %v6935 = vor.u32 %v6933, %v6931
      %v6937 = vshll.u32 %v6908, 16
      %v6939 = vrot.slane %v6937, 1
      %v6940 = vsel %vm1877, %v6935, %v6939
      %v6941 = vshrl.u32 %v6908, 16
      %v6943 = vor.u32 %v6941, %v6939
      %v6945 = vshll.u32 %v6909, 16
      %v6947 = vrot.slane %v6945, 1
      %v6948 = vsel %vm1877, %v6943, %v6947
      %v6949 = vshrl.u32 %v6909, 16
      %v6951 = vor.u32 %v6949, %v6947
      %v6953 = vshll.u32 %v6910, 16
      %v6955 = vrot.slane %v6953, 1
      %v6956 = vsel %vm1877, %v6951, %v6955
      %v6957 = vshrl.u32 %v6910, 16
      %v6959 = vor.u32 %v6957, %v6955
      %v6961 = vshll.u32 %v6911, 16
      %v6963 = vrot.slane %v6961, 1
      %v6964 = vsel %vm1877, %v6959, %v6963
      %v6965 = vshrl.u32 %v6911, 16
      %v6967 = vor.u32 %v6965, %v6963
      %v6969 = vshll.u32 %v6912, 16
      %v6971 = vrot.slane %v6969, 1
      %v6972 = vsel %vm1877, %v6967, %v6971
      %v6981 = vunpack.c.l.b16 %v6867
      %v6982 = vunpack.c.l.b16 %v6868
      %v6983 = vunpack.c.l.b16 %v6869
      %v6984 = vunpack.c.l.b16 %v6870
      %v6985 = vunpack.c.l.b16 %v6871
      %v6986 = vunpack.c.l.b16 %v6872
      %v6987 = vunpack.c.l.b16 %v6873
      %v6988 = vunpack.c.l.b16 %v6874
      %v6989 = vpack.c.b16 %v6982, %v6981
      %v6990 = vpack.c.b16 %v6984, %v6983
      %v6991 = vpack.c.b16 %v6986, %v6985
      %v6992 = vpack.c.b16 %v6988, %v6987
      %v6998 = vsel %vm1350, %v6924, 0
      %v7001 = vsel %vm1350, %v6932, 0
      %v7004 = vsel %vm1350, %v6940, 0
      %v7007 = vsel %vm1350, %v6948, 0
      %v7010 = vsel %vm1350, %v6956, 0
      %v7013 = vsel %vm1350, %v6964, 0
      %v7016 = vsel %vm1350, %v6972, 0
      %7018 = vmatpush.bf16.msra.mxu0 0
      %7019 = vmatpush.bf16.msra.mxu0 0
      %7020 = vmatpush.bf16.msra.mxu0 0
      %7021 = vmatpush.bf16.msra.mxu0 0
      %7022 = vmatpush.bf16.msra.mxu0 %v6992
      %7023 = vmatpush.bf16.msra.mxu0 %v6991
      %7024 = vmatpush.bf16.msra.mxu0 %v6990
      %7025 = vmatpush.bf16.msra.mxu0 %v6989
      %7026 = vmatmul.bf16.gmra.mxu0 %v6998
      %v7027 = vpop.f32.mrf.mxu0
      %v7028 = vadd.f32 0.0, %v7027
      %v7029 = vpop.f32.mrf.mxu0
      %v7030 = vadd.f32 0.0, %v7029
      %7031 = vmatmul.bf16.gmra.mxu0 %v7001
      %v7032 = vpop.f32.mrf.mxu0
      %v7033 = vadd.f32 0.0, %v7032
      %v7034 = vpop.f32.mrf.mxu0
      %v7035 = vadd.f32 0.0, %v7034
      %7036 = vmatmul.bf16.gmra.mxu0 %v7004
      %v7037 = vpop.f32.mrf.mxu0
      %v7038 = vadd.f32 0.0, %v7037
      %v7039 = vpop.f32.mrf.mxu0
      %v7040 = vadd.f32 0.0, %v7039
      %7041 = vmatmul.bf16.gmra.mxu0 %v7007
      %v7042 = vpop.f32.mrf.mxu0
      %v7043 = vadd.f32 0.0, %v7042
      %v7044 = vpop.f32.mrf.mxu0
      %v7045 = vadd.f32 0.0, %v7044
      %7046 = vmatmul.bf16.gmra.mxu0 %v7010
      %v7047 = vpop.f32.mrf.mxu0
      %v7048 = vadd.f32 0.0, %v7047
      %v7049 = vpop.f32.mrf.mxu0
      %v7050 = vadd.f32 0.0, %v7049
      %7051 = vmatmul.bf16.gmra.mxu0 %v7013
      %v7052 = vpop.f32.mrf.mxu0
      %v7053 = vadd.f32 0.0, %v7052
      %v7054 = vpop.f32.mrf.mxu0
      %v7055 = vadd.f32 0.0, %v7054
      %7056 = vmatmul.bf16.gmra.mxu0 %v7016
      %v7057 = vpop.f32.mrf.mxu0
      %v7058 = vadd.f32 0.0, %v7057
      %v7059 = vpop.f32.mrf.mxu0
      %v7060 = vadd.f32 0.0, %v7059
      %7061 = vdwg.mxu0
      %v7062 = vadd.f32 %v6838, %v7028
      %v7063 = vadd.f32 %v6839, %v7030
      %v7064 = vadd.f32 %v6840, %v7033
      %v7065 = vadd.f32 %v6841, %v7035
      %v7066 = vadd.f32 %v6842, %v7038
      %v7067 = vadd.f32 %v6843, %v7040
      %v7068 = vadd.f32 %v6844, %v7043
      %v7069 = vadd.f32 %v6845, %v7045
      %v7070 = vadd.f32 %v6846, %v7048
      %v7071 = vadd.f32 %v6847, %v7050
      %v7072 = vadd.f32 %v6848, %v7053
      %v7073 = vadd.f32 %v6849, %v7055
      %v7074 = vadd.f32 %v6850, %v7058
      %v7075 = vadd.f32 %v6851, %v7060
      %v7076 = vld [vmem:[#allocation3 + $0x18] sm:$0xf]
      %v7077 = vld [vmem:[#allocation3 + $0x1c] sm:$0xf]
      %v7078 = vld [vmem:[#allocation3 + $0x20] sm:$0xf]
      %v7079 = vld [vmem:[#allocation3 + $0x24] sm:$0xf]
      %v7080 = vld [vmem:[#allocation3 + $0x28] sm:$0xf]
      %v7081 = vld [vmem:[#allocation3 + $0x2c] sm:$0xf]
      %v7082 = vld [vmem:[#allocation3 + $0x30] sm:$0xf]
      %v7083 = vld [vmem:[#allocation3 + $0x34] sm:$0xf]
      %v7084 = vld [vmem:[#allocation3 + $0x38] sm:$0xf]
      %v7085 = vld [vmem:[#allocation3 + $0x3c] sm:$0xf]
      %v7086 = vld [vmem:[#allocation3 + $0x40] sm:$0xf]
      %v7087 = vld [vmem:[#allocation3 + $0x44] sm:$0xf]
      %v7088 = vld [vmem:[#allocation3 + $0x48] sm:$0xf]
      %v7089 = vld [vmem:[#allocation3 + $0x4c] sm:$0xf]
      %v7090 = vld [vmem:[#allocation3 + $0x50] sm:$0x1]
      %v7091 = vld [vmem:[%s4 + $0xc0] sm:$0xf]
      %v7092 = vld [vmem:[%s4 + $0xc4] sm:$0xf]
      %v7093 = vld [vmem:[%s4 + $0xc8] sm:$0xf]
      %v7094 = vld [vmem:[%s4 + $0xcc] sm:$0xf]
      %v7095 = vld [vmem:[%s4 + $0xd0] sm:$0xf]
      %v7096 = vld [vmem:[%s4 + $0xd4] sm:$0xf]
      %v7097 = vld [vmem:[%s4 + $0xd8] sm:$0xf]
      %v7098 = vld [vmem:[%s4 + $0xdc] sm:$0xf]
      %v7099 = vld [vmem:[%s4 + $0xe0] sm:$0xf]
      %v7100 = vld [vmem:[%s4 + $0xe4] sm:$0xf]
      %v7101 = vld [vmem:[%s4 + $0xe8] sm:$0xf]
      %v7102 = vld [vmem:[%s4 + $0xec] sm:$0xf]
      %v7103 = vld [vmem:[%s4 + $0xf0] sm:$0xf]
      %v7104 = vld [vmem:[%s4 + $0xf4] sm:$0xf]
      %v7105 = vld [vmem:[%s4 + $0xf8] sm:$0xf]
      %v7106 = vld [vmem:[%s4 + $0xfc] sm:$0xf]
      %v7122 = vunpack.c.l.b16 %v7076
      %v7123 = vunpack.c.l.b16 %v7077
      %v7124 = vunpack.c.l.b16 %v7078
      %v7125 = vunpack.c.l.b16 %v7079
      %v7126 = vunpack.c.l.b16 %v7080
      %v7127 = vunpack.c.l.b16 %v7081
      %v7128 = vunpack.c.l.b16 %v7082
      %v7129 = vunpack.c.l.b16 %v7083
      %v7130 = vunpack.c.l.b16 %v7084
      %v7131 = vunpack.c.l.b16 %v7085
      %v7132 = vunpack.c.l.b16 %v7086
      %v7133 = vunpack.c.l.b16 %v7087
      %v7134 = vunpack.c.l.b16 %v7088
      %v7135 = vunpack.c.l.b16 %v7089
      %v7136 = vunpack.c.l.b16 %v7090
      %v7137 = vpack.c.b16 %v7123, %v7122
      %v7138 = vpack.c.b16 %v7125, %v7124
      %v7139 = vpack.c.b16 %v7127, %v7126
      %v7140 = vpack.c.b16 %v7129, %v7128
      %v7141 = vpack.c.b16 %v7131, %v7130
      %v7142 = vpack.c.b16 %v7133, %v7132
      %v7143 = vpack.c.b16 %v7135, %v7134
      %v7144 = vpack.c.b16 %v7136, %v7136
      %v7146 = vshrl.u32 %v7137, 16
      %v7148 = vshll.u32 %v7137, 16
      %v7150 = vrot.slane %v7148, 1
      %v7151 = vor.u32 %v7146, %v7150
      %v7153 = vshll.u32 %v7138, 16
      %v7155 = vrot.slane %v7153, 1
      %v7156 = vsel %vm1877, %v7151, %v7155
      %v7157 = vshrl.u32 %v7138, 16
      %v7159 = vor.u32 %v7157, %v7155
      %v7161 = vshll.u32 %v7139, 16
      %v7163 = vrot.slane %v7161, 1
      %v7164 = vsel %vm1877, %v7159, %v7163
      %v7165 = vshrl.u32 %v7139, 16
      %v7167 = vor.u32 %v7165, %v7163
      %v7169 = vshll.u32 %v7140, 16
      %v7171 = vrot.slane %v7169, 1
      %v7172 = vsel %vm1877, %v7167, %v7171
      %v7173 = vshrl.u32 %v7140, 16
      %v7175 = vor.u32 %v7173, %v7171
      %v7177 = vshll.u32 %v7141, 16
      %v7179 = vrot.slane %v7177, 1
      %v7180 = vsel %vm1877, %v7175, %v7179
      %v7181 = vshrl.u32 %v7141, 16
      %v7183 = vor.u32 %v7181, %v7179
      %v7185 = vshll.u32 %v7142, 16
      %v7187 = vrot.slane %v7185, 1
      %v7188 = vsel %vm1877, %v7183, %v7187
      %v7189 = vshrl.u32 %v7142, 16
      %v7191 = vor.u32 %v7189, %v7187
      %v7193 = vshll.u32 %v7143, 16
      %v7195 = vrot.slane %v7193, 1
      %v7196 = vsel %vm1877, %v7191, %v7195
      %v7197 = vshrl.u32 %v7143, 16
      %v7199 = vor.u32 %v7197, %v7195
      %v7201 = vshll.u32 %v7144, 16
      %v7203 = vrot.slane %v7201, 1
      %v7204 = vsel %vm1877, %v7199, %v7203
      %v7228 = vunpack.c.l.b16 %v7091
      %v7229 = vunpack.c.l.b16 %v7092
      %v7230 = vunpack.c.l.b16 %v7093
      %v7231 = vunpack.c.l.b16 %v7094
      %v7232 = vunpack.c.l.b16 %v7095
      %v7233 = vunpack.c.l.b16 %v7096
      %v7234 = vunpack.c.l.b16 %v7097
      %v7235 = vunpack.c.l.b16 %v7098
      %v7236 = vunpack.c.l.b16 %v7099
      %v7237 = vunpack.c.l.b16 %v7100
      %v7238 = vunpack.c.l.b16 %v7101
      %v7239 = vunpack.c.l.b16 %v7102
      %v7240 = vunpack.c.l.b16 %v7103
      %v7241 = vunpack.c.l.b16 %v7104
      %v7242 = vunpack.c.l.b16 %v7105
      %v7243 = vunpack.c.l.b16 %v7106
      %v7244 = vpack.c.b16 %v7229, %v7228
      %v7245 = vpack.c.b16 %v7231, %v7230
      %v7246 = vpack.c.b16 %v7233, %v7232
      %v7247 = vpack.c.b16 %v7235, %v7234
      %v7248 = vpack.c.b16 %v7237, %v7236
      %v7249 = vpack.c.b16 %v7239, %v7238
      %v7250 = vpack.c.b16 %v7241, %v7240
      %v7251 = vpack.c.b16 %v7243, %v7242
      %7260 = vmatpush.bf16.msra.mxu0 %v7251
      %7261 = vmatpush.bf16.msra.mxu0 %v7250
      %7262 = vmatpush.bf16.msra.mxu0 %v7249
      %7263 = vmatpush.bf16.msra.mxu0 %v7248
      %7264 = vmatpush.bf16.msra.mxu0 %v7247
      %7265 = vmatpush.bf16.msra.mxu0 %v7246
      %7266 = vmatpush.bf16.msra.mxu0 %v7245
      %7267 = vmatpush.bf16.msra.mxu0 %v7244
      %7268 = vmatmul.bf16.gmra.mxu0 %v7156
      %v7269 = vpop.f32.mrf.mxu0
      %v7270 = vadd.f32 0.0, %v7269
      %v7271 = vpop.f32.mrf.mxu0
      %v7272 = vadd.f32 0.0, %v7271
      %7273 = vmatmul.bf16.gmra.mxu0 %v7164
      %v7274 = vpop.f32.mrf.mxu0
      %v7275 = vadd.f32 0.0, %v7274
      %v7276 = vpop.f32.mrf.mxu0
      %v7277 = vadd.f32 0.0, %v7276
      %7278 = vmatmul.bf16.gmra.mxu0 %v7172
      %v7279 = vpop.f32.mrf.mxu0
      %v7280 = vadd.f32 0.0, %v7279
      %v7281 = vpop.f32.mrf.mxu0
      %v7282 = vadd.f32 0.0, %v7281
      %7283 = vmatmul.bf16.gmra.mxu0 %v7180
      %v7284 = vpop.f32.mrf.mxu0
      %v7285 = vadd.f32 0.0, %v7284
      %v7286 = vpop.f32.mrf.mxu0
      %v7287 = vadd.f32 0.0, %v7286
      %7288 = vmatmul.bf16.gmra.mxu0 %v7188
      %v7289 = vpop.f32.mrf.mxu0
      %v7290 = vadd.f32 0.0, %v7289
      %v7291 = vpop.f32.mrf.mxu0
      %v7292 = vadd.f32 0.0, %v7291
      %7293 = vmatmul.bf16.gmra.mxu0 %v7196
      %v7294 = vpop.f32.mrf.mxu0
      %v7295 = vadd.f32 0.0, %v7294
      %v7296 = vpop.f32.mrf.mxu0
      %v7297 = vadd.f32 0.0, %v7296
      %7298 = vmatmul.bf16.gmra.mxu0 %v7204
      %v7299 = vpop.f32.mrf.mxu0
      %v7300 = vadd.f32 0.0, %v7299
      %v7301 = vpop.f32.mrf.mxu0
      %v7302 = vadd.f32 0.0, %v7301
      %7303 = vdwg.mxu0
      %v7304 = vadd.f32 %v7062, %v7270
      %v7305 = vadd.f32 %v7063, %v7272
      %v7306 = vadd.f32 %v7064, %v7275
      %v7307 = vadd.f32 %v7065, %v7277
      %v7308 = vadd.f32 %v7066, %v7280
      %v7309 = vadd.f32 %v7067, %v7282
      %v7310 = vadd.f32 %v7068, %v7285
      %v7311 = vadd.f32 %v7069, %v7287
      %v7312 = vadd.f32 %v7070, %v7290
      %v7313 = vadd.f32 %v7071, %v7292
      %v7314 = vadd.f32 %v7072, %v7295
      %v7315 = vadd.f32 %v7073, %v7297
      %v7316 = vadd.f32 %v7074, %v7300
      %v7317 = vadd.f32 %v7075, %v7302
      %v7318 = vld [vmem:[#allocation3 + $0x18] sm:$0xe]
      %v7319 = vld [vmem:[#allocation3 + $0x50] sm:$0x3]
      %v7320 = vld [vmem:[%s4 + $0x100] sm:$0xf]
      %v7321 = vld [vmem:[%s4 + $0x104] sm:$0xf]
      %v7322 = vld [vmem:[%s4 + $0x108] sm:$0xf]
      %v7323 = vld [vmem:[%s4 + $0x10c] sm:$0xf]
      %v7324 = vld [vmem:[%s4 + $0x110] sm:$0xf]
      %v7325 = vld [vmem:[%s4 + $0x114] sm:$0xf]
      %v7326 = vld [vmem:[%s4 + $0x118] sm:$0xf]
      %v7327 = vld [vmem:[%s4 + $0x11c] sm:$0xf]
      %v7330 = vunpack.c.l.b16 %v7318
      %v7331 = vunpack.c.l.b16 %v7319
      %v7332 = vpack.c.b16 %v7123, %v7330
      %v7333 = vpack.c.b16 %v7331, %v7331
      %v7335 = vshrl.u32 %v7332, 16
      %v7337 = vrot.slane %v7335, 1
      %v7338 = vshll.u32 %v7332, 16
      %v7340 = vrot.slane %v7338, 2
      %v7341 = vor.u32 %v7337, %v7340
      %v7342 = vrot.slane %v7157, 1
      %v7343 = vrot.slane %v7153, 2
      %v7344 = vor.u32 %v7342, %v7343
      %v7345 = vsel %vm2299, %v7341, %v7344
      %v7346 = vrot.slane %v7165, 1
      %v7347 = vrot.slane %v7161, 2
      %v7348 = vor.u32 %v7346, %v7347
      %v7349 = vsel %vm2299, %v7344, %v7348
      %v7350 = vrot.slane %v7173, 1
      %v7351 = vrot.slane %v7169, 2
      %v7352 = vor.u32 %v7350, %v7351
      %v7353 = vsel %vm2299, %v7348, %v7352
      %v7354 = vrot.slane %v7181, 1
      %v7355 = vrot.slane %v7177, 2
      %v7356 = vor.u32 %v7354, %v7355
      %v7357 = vsel %vm2299, %v7352, %v7356
      %v7358 = vrot.slane %v7189, 1
      %v7359 = vrot.slane %v7185, 2
      %v7360 = vor.u32 %v7358, %v7359
      %v7361 = vsel %vm2299, %v7356, %v7360
      %v7362 = vrot.slane %v7197, 1
      %v7363 = vrot.slane %v7193, 2
      %v7364 = vor.u32 %v7362, %v7363
      %v7365 = vsel %vm2299, %v7360, %v7364
      %v7367 = vshrl.u32 %v7333, 16
      %v7369 = vrot.slane %v7367, 1
      %v7370 = vshll.u32 %v7333, 16
      %v7372 = vrot.slane %v7370, 2
      %v7373 = vor.u32 %v7369, %v7372
      %v7374 = vsel %vm2299, %v7364, %v7373
      %v7383 = vunpack.c.l.b16 %v7320
      %v7384 = vunpack.c.l.b16 %v7321
      %v7385 = vunpack.c.l.b16 %v7322
      %v7386 = vunpack.c.l.b16 %v7323
      %v7387 = vunpack.c.l.b16 %v7324
      %v7388 = vunpack.c.l.b16 %v7325
      %v7389 = vunpack.c.l.b16 %v7326
      %v7390 = vunpack.c.l.b16 %v7327
      %v7391 = vpack.c.b16 %v7384, %v7383
      %v7392 = vpack.c.b16 %v7386, %v7385
      %v7393 = vpack.c.b16 %v7388, %v7387
      %v7394 = vpack.c.b16 %v7390, %v7389
      %v7400 = vsel %vm1350, %v7345, 0
      %v7403 = vsel %vm1350, %v7349, 0
      %v7406 = vsel %vm1350, %v7353, 0
      %v7409 = vsel %vm1350, %v7357, 0
      %v7412 = vsel %vm1350, %v7361, 0
      %v7415 = vsel %vm1350, %v7365, 0
      %v7418 = vsel %vm1350, %v7374, 0
      %7420 = vmatpush.bf16.msra.mxu0 0
      %7421 = vmatpush.bf16.msra.mxu0 0
      %7422 = vmatpush.bf16.msra.mxu0 0
      %7423 = vmatpush.bf16.msra.mxu0 0
      %7424 = vmatpush.bf16.msra.mxu0 %v7394
      %7425 = vmatpush.bf16.msra.mxu0 %v7393
      %7426 = vmatpush.bf16.msra.mxu0 %v7392
      %7427 = vmatpush.bf16.msra.mxu0 %v7391
      %7428 = vmatmul.bf16.gmra.mxu0 %v7400
      %v7429 = vpop.f32.mrf.mxu0
      %v7430 = vadd.f32 0.0, %v7429
      %v7431 = vpop.f32.mrf.mxu0
      %v7432 = vadd.f32 0.0, %v7431
      %7433 = vmatmul.bf16.gmra.mxu0 %v7403
      %v7434 = vpop.f32.mrf.mxu0
      %v7435 = vadd.f32 0.0, %v7434
      %v7436 = vpop.f32.mrf.mxu0
      %v7437 = vadd.f32 0.0, %v7436
      %7438 = vmatmul.bf16.gmra.mxu0 %v7406
      %v7439 = vpop.f32.mrf.mxu0
      %v7440 = vadd.f32 0.0, %v7439
      %v7441 = vpop.f32.mrf.mxu0
      %v7442 = vadd.f32 0.0, %v7441
      %7443 = vmatmul.bf16.gmra.mxu0 %v7409
      %v7444 = vpop.f32.mrf.mxu0
      %v7445 = vadd.f32 0.0, %v7444
      %v7446 = vpop.f32.mrf.mxu0
      %v7447 = vadd.f32 0.0, %v7446
      %7448 = vmatmul.bf16.gmra.mxu0 %v7412
      %v7449 = vpop.f32.mrf.mxu0
      %v7450 = vadd.f32 0.0, %v7449
      %v7451 = vpop.f32.mrf.mxu0
      %v7452 = vadd.f32 0.0, %v7451
      %7453 = vmatmul.bf16.gmra.mxu0 %v7415
      %v7454 = vpop.f32.mrf.mxu0
      %v7455 = vadd.f32 0.0, %v7454
      %v7456 = vpop.f32.mrf.mxu0
      %v7457 = vadd.f32 0.0, %v7456
      %7458 = vmatmul.bf16.gmra.mxu0 %v7418
      %v7459 = vpop.f32.mrf.mxu0
      %v7460 = vadd.f32 0.0, %v7459
      %v7461 = vpop.f32.mrf.mxu0
      %v7462 = vadd.f32 0.0, %v7461
      %7463 = vdwg.mxu0
      %v7464 = vadd.f32 %v7304, %v7430
      %v7465 = vadd.f32 %v7305, %v7432
      %v7466 = vadd.f32 %v7306, %v7435
      %v7467 = vadd.f32 %v7307, %v7437
      %v7468 = vadd.f32 %v7308, %v7440
      %v7469 = vadd.f32 %v7309, %v7442
      %v7470 = vadd.f32 %v7310, %v7445
      %v7471 = vadd.f32 %v7311, %v7447
      %v7472 = vadd.f32 %v7312, %v7450
      %v7473 = vadd.f32 %v7313, %v7452
      %v7474 = vadd.f32 %v7314, %v7455
      %v7475 = vadd.f32 %v7315, %v7457
      %v7476 = vadd.f32 %v7316, %v7460
      %v7477 = vadd.f32 %v7317, %v7462
      %v7478 = vld [vmem:[%s5] sm:$0x1]
      %v7480 = vperm.slane %v7478, 0
      %v7482 = vadd.f32 %v7464, %v7480
      %v7483 = vadd.f32 %v7465, %v7480
      %v7484 = vadd.f32 %v7466, %v7480
      %v7485 = vadd.f32 %v7467, %v7480
      %v7486 = vadd.f32 %v7468, %v7480
      %v7487 = vadd.f32 %v7469, %v7480
      %v7488 = vadd.f32 %v7470, %v7480
      %v7489 = vadd.f32 %v7471, %v7480
      %v7490 = vadd.f32 %v7472, %v7480
      %v7491 = vadd.f32 %v7473, %v7480
      %v7492 = vadd.f32 %v7474, %v7480
      %v7493 = vadd.f32 %v7475, %v7480
      %v7494 = vadd.f32 %v7476, %v7480
      %v7495 = vadd.f32 %v7477, %v7480
      %v7496 = vadd.f32 %v7482, %v6200
      %v7497 = vadd.f32 %v7483, %v6201
      %v7498 = vadd.f32 %v7484, %v6202
      %v7499 = vadd.f32 %v7485, %v6203
      %v7500 = vadd.f32 %v7486, %v6204
      %v7501 = vadd.f32 %v7487, %v6205
      %v7502 = vadd.f32 %v7488, %v6206
      %v7503 = vadd.f32 %v7489, %v6207
      %v7504 = vadd.f32 %v7490, %v6208
      %v7505 = vadd.f32 %v7491, %v6209
      %v7506 = vadd.f32 %v7492, %v6210
      %v7507 = vadd.f32 %v7493, %v6211
      %v7508 = vadd.f32 %v7494, %v6212
      %v7509 = vadd.f32 %v7495, %v6213
      %v7510 = vmax.f32 %v7496, 0.0
      %v7511 = vmax.f32 %v7497, 0.0
      %v7512 = vmax.f32 %v7498, 0.0
      %v7513 = vmax.f32 %v7499, 0.0
      %v7514 = vmax.f32 %v7500, 0.0
      %v7515 = vmax.f32 %v7501, 0.0
      %v7516 = vmax.f32 %v7502, 0.0
      %v7517 = vmax.f32 %v7503, 0.0
      %v7518 = vmax.f32 %v7504, 0.0
      %v7519 = vmax.f32 %v7505, 0.0
      %v7520 = vmax.f32 %v7506, 0.0
      %v7521 = vmax.f32 %v7507, 0.0
      %v7522 = vmax.f32 %v7508, 0.0
      %v7523 = vmax.f32 %v7509, 0.0
      %v7524 = vld [vmem:[%s1] sm:$0xff]
      %v7525 = vld [vmem:[%s1 + $0x8] sm:$0xff]
      %v7526 = vld [vmem:[%s1 + $0x10] sm:$0xff]
      %v7527 = vld [vmem:[%s1 + $0x18] sm:$0xff]
      %v7528 = vld [vmem:[%s1 + $0x20] sm:$0xff]
      %v7529 = vld [vmem:[%s1 + $0x28] sm:$0xff]
      %v7530 = vld [vmem:[%s1 + $0x30] sm:$0xff]
      %v7531 = vld [vmem:[%s1 + $0x38] sm:$0xff]
      %v7532 = vld [vmem:[%s1 + $0x40] sm:$0xff]
      %v7533 = vld [vmem:[%s1 + $0x48] sm:$0xff]
      %v7534 = vld [vmem:[%s1 + $0x50] sm:$0xff]
      %v7535 = vld [vmem:[%s1 + $0x58] sm:$0xff]
      %v7536 = vld [vmem:[%s1 + $0x60] sm:$0xff]
      %v7537 = vld [vmem:[%s1 + $0x68] sm:$0xff]
      %7539 = vset.pattern.permute.xlu0 0
      %7540 = vperm.xlu0 %7539, %v7524
      %v7541 = vpop.permute.xlu0 %7540
      %7544 = vset.pattern.permute.xlu0 0
      %7545 = vperm.xlu0 %7544, %v7525
      %v7546 = vpop.permute.xlu0 %7545
      %7549 = vset.pattern.permute.xlu0 0
      %7550 = vperm.xlu0 %7549, %v7526
      %v7551 = vpop.permute.xlu0 %7550
      %7554 = vset.pattern.permute.xlu0 0
      %7555 = vperm.xlu0 %7554, %v7527
      %v7556 = vpop.permute.xlu0 %7555
      %7559 = vset.pattern.permute.xlu0 0
      %7560 = vperm.xlu0 %7559, %v7528
      %v7561 = vpop.permute.xlu0 %7560
      %7564 = vset.pattern.permute.xlu0 0
      %7565 = vperm.xlu0 %7564, %v7529
      %v7566 = vpop.permute.xlu0 %7565
      %7569 = vset.pattern.permute.xlu0 0
      %7570 = vperm.xlu0 %7569, %v7530
      %v7571 = vpop.permute.xlu0 %7570
      %7574 = vset.pattern.permute.xlu0 0
      %7575 = vperm.xlu0 %7574, %v7531
      %v7576 = vpop.permute.xlu0 %7575
      %7579 = vset.pattern.permute.xlu0 0
      %7580 = vperm.xlu0 %7579, %v7532
      %v7581 = vpop.permute.xlu0 %7580
      %7584 = vset.pattern.permute.xlu0 0
      %7585 = vperm.xlu0 %7584, %v7533
      %v7586 = vpop.permute.xlu0 %7585
      %7589 = vset.pattern.permute.xlu0 0
      %7590 = vperm.xlu0 %7589, %v7534
      %v7591 = vpop.permute.xlu0 %7590
      %7594 = vset.pattern.permute.xlu0 0
      %7595 = vperm.xlu0 %7594, %v7535
      %v7596 = vpop.permute.xlu0 %7595
      %7599 = vset.pattern.permute.xlu0 0
      %7600 = vperm.xlu0 %7599, %v7536
      %v7601 = vpop.permute.xlu0 %7600
      %7604 = vset.pattern.permute.xlu0 0
      %7605 = vperm.xlu0 %7604, %v7537
      %v7606 = vpop.permute.xlu0 %7605
      %v7608 = vmul.f32 %v7510, %v7541
      %v7609 = vmul.f32 %v7511, %v7546
      %v7610 = vmul.f32 %v7512, %v7551
      %v7611 = vmul.f32 %v7513, %v7556
      %v7612 = vmul.f32 %v7514, %v7561
      %v7613 = vmul.f32 %v7515, %v7566
      %v7614 = vmul.f32 %v7516, %v7571
      %v7615 = vmul.f32 %v7517, %v7576
      %v7616 = vmul.f32 %v7518, %v7581
      %v7617 = vmul.f32 %v7519, %v7586
      %v7618 = vmul.f32 %v7520, %v7591
      %v7619 = vmul.f32 %v7521, %v7596
      %v7620 = vmul.f32 %v7522, %v7601
      %v7621 = vmul.f32 %v7523, %v7606
      %7622 = vst.msk [vmem:[%s251] sm:$0xff] %vm1350, %v7608
      %7623 = vst.msk [vmem:[%s251 + $0x8] sm:$0xff] %vm1350, %v7609
      %7624 = vst.msk [vmem:[%s251 + $0x10] sm:$0xff] %vm1350, %v7610
      %7625 = vst.msk [vmem:[%s251 + $0x18] sm:$0xff] %vm1350, %v7611
      %7626 = vst.msk [vmem:[%s251 + $0x20] sm:$0xff] %vm1350, %v7612
      %7627 = vst.msk [vmem:[%s251 + $0x28] sm:$0xff] %vm1350, %v7613
      %7628 = vst.msk [vmem:[%s251 + $0x30] sm:$0xff] %vm1350, %v7614
      %7629 = vst.msk [vmem:[%s251 + $0x38] sm:$0xff] %vm1350, %v7615
      %7630 = vst.msk [vmem:[%s251 + $0x40] sm:$0xff] %vm1350, %v7616
      %7631 = vst.msk [vmem:[%s251 + $0x48] sm:$0xff] %vm1350, %v7617
      %7632 = vst.msk [vmem:[%s251 + $0x50] sm:$0xff] %vm1350, %v7618
      %7633 = vst.msk [vmem:[%s251 + $0x58] sm:$0xff] %vm1350, %v7619
      %7634 = vst.msk [vmem:[%s251 + $0x60] sm:$0xff] %vm1350, %v7620
      %7635 = vst.msk [vmem:[%s251 + $0x68] sm:$0xff] %vm1350, %v7621
      %v7636 = vld [vmem:[%s246 + $0x90] sm:$0xff]
      %v7637 = vld [vmem:[%s246 + $0x98] sm:$0xff]
      %v7638 = vld [vmem:[%s246 + $0xa0] sm:$0xff]
      %v7639 = vld [vmem:[%s246 + $0xa8] sm:$0xff]
      %v7640 = vld [vmem:[%s246 + $0xb0] sm:$0xff]
      %v7641 = vld [vmem:[%s246 + $0xb8] sm:$0xff]
      %v7642 = vld [vmem:[%s246 + $0xc0] sm:$0xff]
      %v7643 = vld [vmem:[%s246 + $0xc8] sm:$0xff]
      %v7644 = vld [vmem:[%s246 + $0xd0] sm:$0xff]
      %v7645 = vld [vmem:[%s246 + $0xd8] sm:$0xff]
      %v7646 = vld [vmem:[%s246 + $0xe0] sm:$0xff]
      %v7647 = vld [vmem:[%s246 + $0xe8] sm:$0xff]
      %v7648 = vld [vmem:[%s246 + $0xf0] sm:$0xff]
      %v7649 = vld [vmem:[%s246 + $0xf8] sm:$0xff]
      %v7650 = vld [vmem:[#allocation3 + $0x3c] sm:$0xc]
      %v7651 = vld [vmem:[#allocation3 + $0x40] sm:$0xf]
      %v7652 = vld [vmem:[#allocation3 + $0x44] sm:$0xf]
      %v7653 = vld [vmem:[#allocation3 + $0x48] sm:$0xf]
      %v7654 = vld [vmem:[#allocation3 + $0x4c] sm:$0xf]
      %v7655 = vld [vmem:[#allocation3 + $0x50] sm:$0xf]
      %v7656 = vld [vmem:[#allocation3 + $0x54] sm:$0xf]
      %v7657 = vld [vmem:[#allocation3 + $0x58] sm:$0xf]
      %v7658 = vld [vmem:[#allocation3 + $0x5c] sm:$0xf]
      %v7659 = vld [vmem:[#allocation3 + $0x60] sm:$0xf]
      %v7660 = vld [vmem:[#allocation3 + $0x64] sm:$0xf]
      %v7661 = vld [vmem:[#allocation3 + $0x68] sm:$0xf]
      %v7662 = vld [vmem:[#allocation3 + $0x6c] sm:$0xf]
      %v7663 = vld [vmem:[#allocation3 + $0x70] sm:$0xf]
      %v7664 = vld [vmem:[#allocation3 + $0x74] sm:$0x7]
      %v7665 = vld [vmem:[%s4] sm:$0xf]
      %v7666 = vld [vmem:[%s4 + $0x4] sm:$0xf]
      %v7667 = vld [vmem:[%s4 + $0x8] sm:$0xf]
      %v7668 = vld [vmem:[%s4 + $0xc] sm:$0xf]
      %v7669 = vld [vmem:[%s4 + $0x10] sm:$0xf]
      %v7670 = vld [vmem:[%s4 + $0x14] sm:$0xf]
      %v7671 = vld [vmem:[%s4 + $0x18] sm:$0xf]
      %v7672 = vld [vmem:[%s4 + $0x1c] sm:$0xf]
      %v7673 = vld [vmem:[%s4 + $0x20] sm:$0xf]
      %v7674 = vld [vmem:[%s4 + $0x24] sm:$0xf]
      %v7675 = vld [vmem:[%s4 + $0x28] sm:$0xf]
      %v7676 = vld [vmem:[%s4 + $0x2c] sm:$0xf]
      %v7677 = vld [vmem:[%s4 + $0x30] sm:$0xf]
      %v7678 = vld [vmem:[%s4 + $0x34] sm:$0xf]
      %v7679 = vld [vmem:[%s4 + $0x38] sm:$0xf]
      %v7680 = vld [vmem:[%s4 + $0x3c] sm:$0xf]
      %v7681 = vld [vmem:[#allocation3 + $0x3c] sm:$0x8]
      %v7682 = vld [vmem:[#allocation3 + $0x74] sm:$0xf]
      %v7683 = vld [vmem:[%s4 + $0x40] sm:$0xf]
      %v7684 = vld [vmem:[%s4 + $0x44] sm:$0xf]
      %v7685 = vld [vmem:[%s4 + $0x48] sm:$0xf]
      %v7686 = vld [vmem:[%s4 + $0x4c] sm:$0xf]
      %v7687 = vld [vmem:[%s4 + $0x50] sm:$0xf]
      %v7688 = vld [vmem:[%s4 + $0x54] sm:$0xf]
      %v7689 = vld [vmem:[%s4 + $0x58] sm:$0xf]
      %v7690 = vld [vmem:[%s4 + $0x5c] sm:$0xf]
      %v7706 = vunpack.c.l.b16 %v7681
      %v7707 = vunpack.c.l.b16 %v7651
      %v7708 = vunpack.c.l.b16 %v7652
      %v7709 = vunpack.c.l.b16 %v7653
      %v7710 = vunpack.c.l.b16 %v7654
      %v7711 = vunpack.c.l.b16 %v7655
      %v7712 = vunpack.c.l.b16 %v7656
      %v7713 = vunpack.c.l.b16 %v7657
      %v7714 = vunpack.c.l.b16 %v7658
      %v7715 = vunpack.c.l.b16 %v7659
      %v7716 = vunpack.c.l.b16 %v7660
      %v7717 = vunpack.c.l.b16 %v7661
      %v7718 = vunpack.c.l.b16 %v7662
      %v7719 = vunpack.c.l.b16 %v7663
      %v7720 = vunpack.c.l.b16 %v7682
      %v7721 = vpack.c.b16 %v7707, %v7706
      %v7722 = vpack.c.b16 %v7709, %v7708
      %v7723 = vpack.c.b16 %v7711, %v7710
      %v7724 = vpack.c.b16 %v7713, %v7712
      %v7725 = vpack.c.b16 %v7715, %v7714
      %v7726 = vpack.c.b16 %v7717, %v7716
      %v7727 = vpack.c.b16 %v7719, %v7718
      %v7728 = vpack.c.b16 %v7720, %v7720
      %v7730 = vshrl.u32 %v7721, 16
      %v7732 = vrot.slane %v7730, 3
      %v7733 = vshll.u32 %v7721, 16
      %v7735 = vrot.slane %v7733, 4
      %v7736 = vor.u32 %v7732, %v7735
      %v7738 = vshrl.u32 %v7722, 16
      %v7740 = vrot.slane %v7738, 3
      %v7741 = vshll.u32 %v7722, 16
      %v7743 = vrot.slane %v7741, 4
      %v7744 = vor.u32 %v7740, %v7743
      %v7745 = vsel %vm1254, %v7736, %v7744
      %v7747 = vshrl.u32 %v7723, 16
      %v7749 = vrot.slane %v7747, 3
      %v7750 = vshll.u32 %v7723, 16
      %v7752 = vrot.slane %v7750, 4
      %v7753 = vor.u32 %v7749, %v7752
      %v7754 = vsel %vm1254, %v7744, %v7753
      %v7756 = vshrl.u32 %v7724, 16
      %v7758 = vrot.slane %v7756, 3
      %v7759 = vshll.u32 %v7724, 16
      %v7761 = vrot.slane %v7759, 4
      %v7762 = vor.u32 %v7758, %v7761
      %v7763 = vsel %vm1254, %v7753, %v7762
      %v7765 = vshrl.u32 %v7725, 16
      %v7767 = vrot.slane %v7765, 3
      %v7768 = vshll.u32 %v7725, 16
      %v7770 = vrot.slane %v7768, 4
      %v7771 = vor.u32 %v7767, %v7770
      %v7772 = vsel %vm1254, %v7762, %v7771
      %v7774 = vshrl.u32 %v7726, 16
      %v7776 = vrot.slane %v7774, 3
      %v7777 = vshll.u32 %v7726, 16
      %v7779 = vrot.slane %v7777, 4
      %v7780 = vor.u32 %v7776, %v7779
      %v7781 = vsel %vm1254, %v7771, %v7780
      %v7783 = vshrl.u32 %v7727, 16
      %v7785 = vrot.slane %v7783, 3
      %v7786 = vshll.u32 %v7727, 16
      %v7788 = vrot.slane %v7786, 4
      %v7789 = vor.u32 %v7785, %v7788
      %v7790 = vsel %vm1254, %v7780, %v7789
      %v7792 = vshrl.u32 %v7728, 16
      %v7794 = vrot.slane %v7792, 3
      %v7795 = vshll.u32 %v7728, 16
      %v7797 = vrot.slane %v7795, 4
      %v7798 = vor.u32 %v7794, %v7797
      %v7799 = vsel %vm1254, %v7789, %v7798
      %v7808 = vunpack.c.l.b16 %v7683
      %v7809 = vunpack.c.l.b16 %v7684
      %v7810 = vunpack.c.l.b16 %v7685
      %v7811 = vunpack.c.l.b16 %v7686
      %v7812 = vunpack.c.l.b16 %v7687
      %v7813 = vunpack.c.l.b16 %v7688
      %v7814 = vunpack.c.l.b16 %v7689
      %v7815 = vunpack.c.l.b16 %v7690
      %v7816 = vpack.c.b16 %v7809, %v7808
      %v7817 = vpack.c.b16 %v7811, %v7810
      %v7818 = vpack.c.b16 %v7813, %v7812
      %v7819 = vpack.c.b16 %v7815, %v7814
      %v7825 = vsel %vm1350, %v7745, 0
      %v7828 = vsel %vm1350, %v7754, 0
      %v7831 = vsel %vm1350, %v7763, 0
      %v7834 = vsel %vm1350, %v7772, 0
      %v7837 = vsel %vm1350, %v7781, 0
      %v7840 = vsel %vm1350, %v7790, 0
      %v7843 = vsel %vm1350, %v7799, 0
      %7845 = vmatpush.bf16.msra.mxu0 0
      %7846 = vmatpush.bf16.msra.mxu0 0
      %7847 = vmatpush.bf16.msra.mxu0 0
      %7848 = vmatpush.bf16.msra.mxu0 0
      %7849 = vmatpush.bf16.msra.mxu0 %v7819
      %7850 = vmatpush.bf16.msra.mxu0 %v7818
      %7851 = vmatpush.bf16.msra.mxu0 %v7817
      %7852 = vmatpush.bf16.msra.mxu0 %v7816
      %7853 = vmatmul.bf16.gmra.mxu0 %v7825
      %v7854 = vpop.f32.mrf.mxu0
      %v7855 = vadd.f32 0.0, %v7854
      %v7856 = vpop.f32.mrf.mxu0
      %v7857 = vadd.f32 0.0, %v7856
      %7858 = vmatmul.bf16.gmra.mxu0 %v7828
      %v7859 = vpop.f32.mrf.mxu0
      %v7860 = vadd.f32 0.0, %v7859
      %v7861 = vpop.f32.mrf.mxu0
      %v7862 = vadd.f32 0.0, %v7861
      %7863 = vmatmul.bf16.gmra.mxu0 %v7831
      %v7864 = vpop.f32.mrf.mxu0
      %v7865 = vadd.f32 0.0, %v7864
      %v7866 = vpop.f32.mrf.mxu0
      %v7867 = vadd.f32 0.0, %v7866
      %7868 = vmatmul.bf16.gmra.mxu0 %v7834
      %v7869 = vpop.f32.mrf.mxu0
      %v7870 = vadd.f32 0.0, %v7869
      %v7871 = vpop.f32.mrf.mxu0
      %v7872 = vadd.f32 0.0, %v7871
      %7873 = vmatmul.bf16.gmra.mxu0 %v7837
      %v7874 = vpop.f32.mrf.mxu0
      %v7875 = vadd.f32 0.0, %v7874
      %v7876 = vpop.f32.mrf.mxu0
      %v7877 = vadd.f32 0.0, %v7876
      %7878 = vmatmul.bf16.gmra.mxu0 %v7840
      %v7879 = vpop.f32.mrf.mxu0
      %v7880 = vadd.f32 0.0, %v7879
      %v7881 = vpop.f32.mrf.mxu0
      %v7882 = vadd.f32 0.0, %v7881
      %7883 = vmatmul.bf16.gmra.mxu0 %v7843
      %v7884 = vpop.f32.mrf.mxu0
      %v7885 = vadd.f32 0.0, %v7884
      %v7886 = vpop.f32.mrf.mxu0
      %v7887 = vadd.f32 0.0, %v7886
      %7888 = vdwg.mxu0
      %v7891 = vunpack.c.l.b16 %v7650
      %v7892 = vunpack.c.l.b16 %v7664
      %v7893 = vpack.c.b16 %v7707, %v7891
      %v7894 = vpack.c.b16 %v7892, %v7892
      %v7896 = vshrl.u32 %v7893, 16
      %v7898 = vrot.slane %v7896, 2
      %v7899 = vshll.u32 %v7893, 16
      %v7901 = vrot.slane %v7899, 3
      %v7902 = vor.u32 %v7898, %v7901
      %v7903 = vrot.slane %v7738, 2
      %v7904 = vrot.slane %v7741, 3
      %v7905 = vor.u32 %v7903, %v7904
      %v7906 = vsel %vm1422, %v7902, %v7905
      %v7907 = vrot.slane %v7747, 2
      %v7908 = vrot.slane %v7750, 3
      %v7909 = vor.u32 %v7907, %v7908
      %v7910 = vsel %vm1422, %v7905, %v7909
      %v7911 = vrot.slane %v7756, 2
      %v7912 = vrot.slane %v7759, 3
      %v7913 = vor.u32 %v7911, %v7912
      %v7914 = vsel %vm1422, %v7909, %v7913
      %v7915 = vrot.slane %v7765, 2
      %v7916 = vrot.slane %v7768, 3
      %v7917 = vor.u32 %v7915, %v7916
      %v7918 = vsel %vm1422, %v7913, %v7917
      %v7919 = vrot.slane %v7774, 2
      %v7920 = vrot.slane %v7777, 3
      %v7921 = vor.u32 %v7919, %v7920
      %v7922 = vsel %vm1422, %v7917, %v7921
      %v7923 = vrot.slane %v7783, 2
      %v7924 = vrot.slane %v7786, 3
      %v7925 = vor.u32 %v7923, %v7924
      %v7926 = vsel %vm1422, %v7921, %v7925
      %v7928 = vshrl.u32 %v7894, 16
      %v7930 = vrot.slane %v7928, 2
      %v7931 = vshll.u32 %v7894, 16
      %v7933 = vrot.slane %v7931, 3
      %v7934 = vor.u32 %v7930, %v7933
      %v7935 = vsel %vm1422, %v7925, %v7934
      %v7959 = vunpack.c.l.b16 %v7665
      %v7960 = vunpack.c.l.b16 %v7666
      %v7961 = vunpack.c.l.b16 %v7667
      %v7962 = vunpack.c.l.b16 %v7668
      %v7963 = vunpack.c.l.b16 %v7669
      %v7964 = vunpack.c.l.b16 %v7670
      %v7965 = vunpack.c.l.b16 %v7671
      %v7966 = vunpack.c.l.b16 %v7672
      %v7967 = vunpack.c.l.b16 %v7673
      %v7968 = vunpack.c.l.b16 %v7674
      %v7969 = vunpack.c.l.b16 %v7675
      %v7970 = vunpack.c.l.b16 %v7676
      %v7971 = vunpack.c.l.b16 %v7677
      %v7972 = vunpack.c.l.b16 %v7678
      %v7973 = vunpack.c.l.b16 %v7679
      %v7974 = vunpack.c.l.b16 %v7680
      %v7975 = vpack.c.b16 %v7960, %v7959
      %v7976 = vpack.c.b16 %v7962, %v7961
      %v7977 = vpack.c.b16 %v7964, %v7963
      %v7978 = vpack.c.b16 %v7966, %v7965
      %v7979 = vpack.c.b16 %v7968, %v7967
      %v7980 = vpack.c.b16 %v7970, %v7969
      %v7981 = vpack.c.b16 %v7972, %v7971
      %v7982 = vpack.c.b16 %v7974, %v7973
      %7991 = vmatpush.bf16.msra.mxu0 %v7982
      %7992 = vmatpush.bf16.msra.mxu0 %v7981
      %7993 = vmatpush.bf16.msra.mxu0 %v7980
      %7994 = vmatpush.bf16.msra.mxu0 %v7979
      %7995 = vmatpush.bf16.msra.mxu0 %v7978
      %7996 = vmatpush.bf16.msra.mxu0 %v7977
      %7997 = vmatpush.bf16.msra.mxu0 %v7976
      %7998 = vmatpush.bf16.msra.mxu0 %v7975
      %7999 = vmatmul.bf16.gmra.mxu0 %v7906
      %v8000 = vpop.f32.mrf.mxu0
      %v8001 = vadd.f32 %v7855, %v8000
      %v8002 = vpop.f32.mrf.mxu0
      %v8003 = vadd.f32 %v7857, %v8002
      %8004 = vmatmul.bf16.gmra.mxu0 %v7910
      %v8005 = vpop.f32.mrf.mxu0
      %v8006 = vadd.f32 %v7860, %v8005
      %v8007 = vpop.f32.mrf.mxu0
      %v8008 = vadd.f32 %v7862, %v8007
      %8009 = vmatmul.bf16.gmra.mxu0 %v7914
      %v8010 = vpop.f32.mrf.mxu0
      %v8011 = vadd.f32 %v7865, %v8010
      %v8012 = vpop.f32.mrf.mxu0
      %v8013 = vadd.f32 %v7867, %v8012
      %8014 = vmatmul.bf16.gmra.mxu0 %v7918
      %v8015 = vpop.f32.mrf.mxu0
      %v8016 = vadd.f32 %v7870, %v8015
      %v8017 = vpop.f32.mrf.mxu0
      %v8018 = vadd.f32 %v7872, %v8017
      %8019 = vmatmul.bf16.gmra.mxu0 %v7922
      %v8020 = vpop.f32.mrf.mxu0
      %v8021 = vadd.f32 %v7875, %v8020
      %v8022 = vpop.f32.mrf.mxu0
      %v8023 = vadd.f32 %v7877, %v8022
      %8024 = vmatmul.bf16.gmra.mxu0 %v7926
      %v8025 = vpop.f32.mrf.mxu0
      %v8026 = vadd.f32 %v7880, %v8025
      %v8027 = vpop.f32.mrf.mxu0
      %v8028 = vadd.f32 %v7882, %v8027
      %8029 = vmatmul.bf16.gmra.mxu0 %v7935
      %v8030 = vpop.f32.mrf.mxu0
      %v8031 = vadd.f32 %v7885, %v8030
      %v8032 = vpop.f32.mrf.mxu0
      %v8033 = vadd.f32 %v7887, %v8032
      %8034 = vdwg.mxu0
      %v8035 = vld [vmem:[#allocation3 + $0x44] sm:$0x8]
      %v8036 = vld [vmem:[#allocation3 + $0x48] sm:$0xf]
      %v8037 = vld [vmem:[#allocation3 + $0x4c] sm:$0xf]
      %v8038 = vld [vmem:[#allocation3 + $0x50] sm:$0xf]
      %v8039 = vld [vmem:[#allocation3 + $0x54] sm:$0xf]
      %v8040 = vld [vmem:[#allocation3 + $0x58] sm:$0xf]
      %v8041 = vld [vmem:[#allocation3 + $0x5c] sm:$0xf]
      %v8042 = vld [vmem:[#allocation3 + $0x60] sm:$0xf]
      %v8043 = vld [vmem:[#allocation3 + $0x64] sm:$0xf]
      %v8044 = vld [vmem:[#allocation3 + $0x68] sm:$0xf]
      %v8045 = vld [vmem:[#allocation3 + $0x6c] sm:$0xf]
      %v8046 = vld [vmem:[#allocation3 + $0x70] sm:$0xf]
      %v8047 = vld [vmem:[#allocation3 + $0x74] sm:$0xf]
      %v8048 = vld [vmem:[#allocation3 + $0x78] sm:$0xf]
      %v8049 = vld [vmem:[#allocation3 + $0x7c] sm:$0xf]
      %v8050 = vld [vmem:[%s4 + $0x60] sm:$0xf]
      %v8051 = vld [vmem:[%s4 + $0x64] sm:$0xf]
      %v8052 = vld [vmem:[%s4 + $0x68] sm:$0xf]
      %v8053 = vld [vmem:[%s4 + $0x6c] sm:$0xf]
      %v8054 = vld [vmem:[%s4 + $0x70] sm:$0xf]
      %v8055 = vld [vmem:[%s4 + $0x74] sm:$0xf]
      %v8056 = vld [vmem:[%s4 + $0x78] sm:$0xf]
      %v8057 = vld [vmem:[%s4 + $0x7c] sm:$0xf]
      %v8058 = vld [vmem:[%s4 + $0x80] sm:$0xf]
      %v8059 = vld [vmem:[%s4 + $0x84] sm:$0xf]
      %v8060 = vld [vmem:[%s4 + $0x88] sm:$0xf]
      %v8061 = vld [vmem:[%s4 + $0x8c] sm:$0xf]
      %v8062 = vld [vmem:[%s4 + $0x90] sm:$0xf]
      %v8063 = vld [vmem:[%s4 + $0x94] sm:$0xf]
      %v8064 = vld [vmem:[%s4 + $0x98] sm:$0xf]
      %v8065 = vld [vmem:[%s4 + $0x9c] sm:$0xf]
      %v8081 = vunpack.c.l.b16 %v8035
      %v8082 = vunpack.c.l.b16 %v8036
      %v8083 = vunpack.c.l.b16 %v8037
      %v8084 = vunpack.c.l.b16 %v8038
      %v8085 = vunpack.c.l.b16 %v8039
      %v8086 = vunpack.c.l.b16 %v8040
      %v8087 = vunpack.c.l.b16 %v8041
      %v8088 = vunpack.c.l.b16 %v8042
      %v8089 = vunpack.c.l.b16 %v8043
      %v8090 = vunpack.c.l.b16 %v8044
      %v8091 = vunpack.c.l.b16 %v8045
      %v8092 = vunpack.c.l.b16 %v8046
      %v8093 = vunpack.c.l.b16 %v8047
      %v8094 = vunpack.c.l.b16 %v8048
      %v8095 = vunpack.c.l.b16 %v8049
      %v8096 = vpack.c.b16 %v8082, %v8081
      %v8097 = vpack.c.b16 %v8084, %v8083
      %v8098 = vpack.c.b16 %v8086, %v8085
      %v8099 = vpack.c.b16 %v8088, %v8087
      %v8100 = vpack.c.b16 %v8090, %v8089
      %v8101 = vpack.c.b16 %v8092, %v8091
      %v8102 = vpack.c.b16 %v8094, %v8093
      %v8103 = vpack.c.b16 %v8095, %v8095
      %v8105 = vshrl.u32 %v8096, 16
      %v8107 = vrot.slane %v8105, 3
      %v8108 = vshll.u32 %v8096, 16
      %v8110 = vrot.slane %v8108, 4
      %v8111 = vor.u32 %v8107, %v8110
      %v8113 = vshrl.u32 %v8097, 16
      %v8115 = vrot.slane %v8113, 3
      %v8116 = vshll.u32 %v8097, 16
      %v8118 = vrot.slane %v8116, 4
      %v8119 = vor.u32 %v8115, %v8118
      %v8120 = vsel %vm1254, %v8111, %v8119
      %v8122 = vshrl.u32 %v8098, 16
      %v8124 = vrot.slane %v8122, 3
      %v8125 = vshll.u32 %v8098, 16
      %v8127 = vrot.slane %v8125, 4
      %v8128 = vor.u32 %v8124, %v8127
      %v8129 = vsel %vm1254, %v8119, %v8128
      %v8131 = vshrl.u32 %v8099, 16
      %v8133 = vrot.slane %v8131, 3
      %v8134 = vshll.u32 %v8099, 16
      %v8136 = vrot.slane %v8134, 4
      %v8137 = vor.u32 %v8133, %v8136
      %v8138 = vsel %vm1254, %v8128, %v8137
      %v8140 = vshrl.u32 %v8100, 16
      %v8142 = vrot.slane %v8140, 3
      %v8143 = vshll.u32 %v8100, 16
      %v8145 = vrot.slane %v8143, 4
      %v8146 = vor.u32 %v8142, %v8145
      %v8147 = vsel %vm1254, %v8137, %v8146
      %v8149 = vshrl.u32 %v8101, 16
      %v8151 = vrot.slane %v8149, 3
      %v8152 = vshll.u32 %v8101, 16
      %v8154 = vrot.slane %v8152, 4
      %v8155 = vor.u32 %v8151, %v8154
      %v8156 = vsel %vm1254, %v8146, %v8155
      %v8158 = vshrl.u32 %v8102, 16
      %v8160 = vrot.slane %v8158, 3
      %v8161 = vshll.u32 %v8102, 16
      %v8163 = vrot.slane %v8161, 4
      %v8164 = vor.u32 %v8160, %v8163
      %v8165 = vsel %vm1254, %v8155, %v8164
      %v8167 = vshrl.u32 %v8103, 16
      %v8169 = vrot.slane %v8167, 3
      %v8170 = vshll.u32 %v8103, 16
      %v8172 = vrot.slane %v8170, 4
      %v8173 = vor.u32 %v8169, %v8172
      %v8174 = vsel %vm1254, %v8164, %v8173
      %v8198 = vunpack.c.l.b16 %v8050
      %v8199 = vunpack.c.l.b16 %v8051
      %v8200 = vunpack.c.l.b16 %v8052
      %v8201 = vunpack.c.l.b16 %v8053
      %v8202 = vunpack.c.l.b16 %v8054
      %v8203 = vunpack.c.l.b16 %v8055
      %v8204 = vunpack.c.l.b16 %v8056
      %v8205 = vunpack.c.l.b16 %v8057
      %v8206 = vunpack.c.l.b16 %v8058
      %v8207 = vunpack.c.l.b16 %v8059
      %v8208 = vunpack.c.l.b16 %v8060
      %v8209 = vunpack.c.l.b16 %v8061
      %v8210 = vunpack.c.l.b16 %v8062
      %v8211 = vunpack.c.l.b16 %v8063
      %v8212 = vunpack.c.l.b16 %v8064
      %v8213 = vunpack.c.l.b16 %v8065
      %v8214 = vpack.c.b16 %v8199, %v8198
      %v8215 = vpack.c.b16 %v8201, %v8200
      %v8216 = vpack.c.b16 %v8203, %v8202
      %v8217 = vpack.c.b16 %v8205, %v8204
      %v8218 = vpack.c.b16 %v8207, %v8206
      %v8219 = vpack.c.b16 %v8209, %v8208
      %v8220 = vpack.c.b16 %v8211, %v8210
      %v8221 = vpack.c.b16 %v8213, %v8212
      %8230 = vmatpush.bf16.msra.mxu0 %v8221
      %8231 = vmatpush.bf16.msra.mxu0 %v8220
      %8232 = vmatpush.bf16.msra.mxu0 %v8219
      %8233 = vmatpush.bf16.msra.mxu0 %v8218
      %8234 = vmatpush.bf16.msra.mxu0 %v8217
      %8235 = vmatpush.bf16.msra.mxu0 %v8216
      %8236 = vmatpush.bf16.msra.mxu0 %v8215
      %8237 = vmatpush.bf16.msra.mxu0 %v8214
      %8238 = vmatmul.bf16.gmra.mxu0 %v8120
      %v8239 = vpop.f32.mrf.mxu0
      %v8240 = vadd.f32 0.0, %v8239
      %v8241 = vpop.f32.mrf.mxu0
      %v8242 = vadd.f32 0.0, %v8241
      %8243 = vmatmul.bf16.gmra.mxu0 %v8129
      %v8244 = vpop.f32.mrf.mxu0
      %v8245 = vadd.f32 0.0, %v8244
      %v8246 = vpop.f32.mrf.mxu0
      %v8247 = vadd.f32 0.0, %v8246
      %8248 = vmatmul.bf16.gmra.mxu0 %v8138
      %v8249 = vpop.f32.mrf.mxu0
      %v8250 = vadd.f32 0.0, %v8249
      %v8251 = vpop.f32.mrf.mxu0
      %v8252 = vadd.f32 0.0, %v8251
      %8253 = vmatmul.bf16.gmra.mxu0 %v8147
      %v8254 = vpop.f32.mrf.mxu0
      %v8255 = vadd.f32 0.0, %v8254
      %v8256 = vpop.f32.mrf.mxu0
      %v8257 = vadd.f32 0.0, %v8256
      %8258 = vmatmul.bf16.gmra.mxu0 %v8156
      %v8259 = vpop.f32.mrf.mxu0
      %v8260 = vadd.f32 0.0, %v8259
      %v8261 = vpop.f32.mrf.mxu0
      %v8262 = vadd.f32 0.0, %v8261
      %8263 = vmatmul.bf16.gmra.mxu0 %v8165
      %v8264 = vpop.f32.mrf.mxu0
      %v8265 = vadd.f32 0.0, %v8264
      %v8266 = vpop.f32.mrf.mxu0
      %v8267 = vadd.f32 0.0, %v8266
      %8268 = vmatmul.bf16.gmra.mxu0 %v8174
      %v8269 = vpop.f32.mrf.mxu0
      %v8270 = vadd.f32 0.0, %v8269
      %v8271 = vpop.f32.mrf.mxu0
      %v8272 = vadd.f32 0.0, %v8271
      %8273 = vdwg.mxu0
      %v8274 = vadd.f32 %v8001, %v8240
      %v8275 = vadd.f32 %v8003, %v8242
      %v8276 = vadd.f32 %v8006, %v8245
      %v8277 = vadd.f32 %v8008, %v8247
      %v8278 = vadd.f32 %v8011, %v8250
      %v8279 = vadd.f32 %v8013, %v8252
      %v8280 = vadd.f32 %v8016, %v8255
      %v8281 = vadd.f32 %v8018, %v8257
      %v8282 = vadd.f32 %v8021, %v8260
      %v8283 = vadd.f32 %v8023, %v8262
      %v8284 = vadd.f32 %v8026, %v8265
      %v8285 = vadd.f32 %v8028, %v8267
      %v8286 = vadd.f32 %v8031, %v8270
      %v8287 = vadd.f32 %v8033, %v8272
      %v8288 = vld [vmem:[#allocation3 + $0x48] sm:$0xf]
      %v8289 = vld [vmem:[#allocation3 + $0x4c] sm:$0xf]
      %v8290 = vld [vmem:[#allocation3 + $0x50] sm:$0xf]
      %v8291 = vld [vmem:[#allocation3 + $0x54] sm:$0xf]
      %v8292 = vld [vmem:[#allocation3 + $0x58] sm:$0xf]
      %v8293 = vld [vmem:[#allocation3 + $0x5c] sm:$0xf]
      %v8294 = vld [vmem:[#allocation3 + $0x60] sm:$0xf]
      %v8295 = vld [vmem:[#allocation3 + $0x64] sm:$0xf]
      %v8296 = vld [vmem:[#allocation3 + $0x68] sm:$0xf]
      %v8297 = vld [vmem:[#allocation3 + $0x6c] sm:$0xf]
      %v8298 = vld [vmem:[#allocation3 + $0x70] sm:$0xf]
      %v8299 = vld [vmem:[#allocation3 + $0x74] sm:$0xf]
      %v8300 = vld [vmem:[#allocation3 + $0x78] sm:$0xf]
      %v8301 = vld [vmem:[#allocation3 + $0x7c] sm:$0xf]
      %v8302 = vld [vmem:[#allocation3 + $0x80] sm:$0x1]
      %v8303 = vld [vmem:[%s4 + $0xa0] sm:$0xf]
      %v8304 = vld [vmem:[%s4 + $0xa4] sm:$0xf]
      %v8305 = vld [vmem:[%s4 + $0xa8] sm:$0xf]
      %v8306 = vld [vmem:[%s4 + $0xac] sm:$0xf]
      %v8307 = vld [vmem:[%s4 + $0xb0] sm:$0xf]
      %v8308 = vld [vmem:[%s4 + $0xb4] sm:$0xf]
      %v8309 = vld [vmem:[%s4 + $0xb8] sm:$0xf]
      %v8310 = vld [vmem:[%s4 + $0xbc] sm:$0xf]
      %v8326 = vunpack.c.l.b16 %v8288
      %v8327 = vunpack.c.l.b16 %v8289
      %v8328 = vunpack.c.l.b16 %v8290
      %v8329 = vunpack.c.l.b16 %v8291
      %v8330 = vunpack.c.l.b16 %v8292
      %v8331 = vunpack.c.l.b16 %v8293
      %v8332 = vunpack.c.l.b16 %v8294
      %v8333 = vunpack.c.l.b16 %v8295
      %v8334 = vunpack.c.l.b16 %v8296
      %v8335 = vunpack.c.l.b16 %v8297
      %v8336 = vunpack.c.l.b16 %v8298
      %v8337 = vunpack.c.l.b16 %v8299
      %v8338 = vunpack.c.l.b16 %v8300
      %v8339 = vunpack.c.l.b16 %v8301
      %v8340 = vunpack.c.l.b16 %v8302
      %v8341 = vpack.c.b16 %v8327, %v8326
      %v8342 = vpack.c.b16 %v8329, %v8328
      %v8343 = vpack.c.b16 %v8331, %v8330
      %v8344 = vpack.c.b16 %v8333, %v8332
      %v8345 = vpack.c.b16 %v8335, %v8334
      %v8346 = vpack.c.b16 %v8337, %v8336
      %v8347 = vpack.c.b16 %v8339, %v8338
      %v8348 = vpack.c.b16 %v8340, %v8340
      %v8350 = vshrl.u32 %v8341, 16
      %v8352 = vshll.u32 %v8341, 16
      %v8354 = vrot.slane %v8352, 1
      %v8355 = vor.u32 %v8350, %v8354
      %v8357 = vshll.u32 %v8342, 16
      %v8359 = vrot.slane %v8357, 1
      %v8360 = vsel %vm1877, %v8355, %v8359
      %v8361 = vshrl.u32 %v8342, 16
      %v8363 = vor.u32 %v8361, %v8359
      %v8365 = vshll.u32 %v8343, 16
      %v8367 = vrot.slane %v8365, 1
      %v8368 = vsel %vm1877, %v8363, %v8367
      %v8369 = vshrl.u32 %v8343, 16
      %v8371 = vor.u32 %v8369, %v8367
      %v8373 = vshll.u32 %v8344, 16
      %v8375 = vrot.slane %v8373, 1
      %v8376 = vsel %vm1877, %v8371, %v8375
      %v8377 = vshrl.u32 %v8344, 16
      %v8379 = vor.u32 %v8377, %v8375
      %v8381 = vshll.u32 %v8345, 16
      %v8383 = vrot.slane %v8381, 1
      %v8384 = vsel %vm1877, %v8379, %v8383
      %v8385 = vshrl.u32 %v8345, 16
      %v8387 = vor.u32 %v8385, %v8383
      %v8389 = vshll.u32 %v8346, 16
      %v8391 = vrot.slane %v8389, 1
      %v8392 = vsel %vm1877, %v8387, %v8391
      %v8393 = vshrl.u32 %v8346, 16
      %v8395 = vor.u32 %v8393, %v8391
      %v8397 = vshll.u32 %v8347, 16
      %v8399 = vrot.slane %v8397, 1
      %v8400 = vsel %vm1877, %v8395, %v8399
      %v8401 = vshrl.u32 %v8347, 16
      %v8403 = vor.u32 %v8401, %v8399
      %v8405 = vshll.u32 %v8348, 16
      %v8407 = vrot.slane %v8405, 1
      %v8408 = vsel %vm1877, %v8403, %v8407
      %v8417 = vunpack.c.l.b16 %v8303
      %v8418 = vunpack.c.l.b16 %v8304
      %v8419 = vunpack.c.l.b16 %v8305
      %v8420 = vunpack.c.l.b16 %v8306
      %v8421 = vunpack.c.l.b16 %v8307
      %v8422 = vunpack.c.l.b16 %v8308
      %v8423 = vunpack.c.l.b16 %v8309
      %v8424 = vunpack.c.l.b16 %v8310
      %v8425 = vpack.c.b16 %v8418, %v8417
      %v8426 = vpack.c.b16 %v8420, %v8419
      %v8427 = vpack.c.b16 %v8422, %v8421
      %v8428 = vpack.c.b16 %v8424, %v8423
      %v8434 = vsel %vm1350, %v8360, 0
      %v8437 = vsel %vm1350, %v8368, 0
      %v8440 = vsel %vm1350, %v8376, 0
      %v8443 = vsel %vm1350, %v8384, 0
      %v8446 = vsel %vm1350, %v8392, 0
      %v8449 = vsel %vm1350, %v8400, 0
      %v8452 = vsel %vm1350, %v8408, 0
      %8454 = vmatpush.bf16.msra.mxu0 0
      %8455 = vmatpush.bf16.msra.mxu0 0
      %8456 = vmatpush.bf16.msra.mxu0 0
      %8457 = vmatpush.bf16.msra.mxu0 0
      %8458 = vmatpush.bf16.msra.mxu0 %v8428
      %8459 = vmatpush.bf16.msra.mxu0 %v8427
      %8460 = vmatpush.bf16.msra.mxu0 %v8426
      %8461 = vmatpush.bf16.msra.mxu0 %v8425
      %8462 = vmatmul.bf16.gmra.mxu0 %v8434
      %v8463 = vpop.f32.mrf.mxu0
      %v8464 = vadd.f32 0.0, %v8463
      %v8465 = vpop.f32.mrf.mxu0
      %v8466 = vadd.f32 0.0, %v8465
      %8467 = vmatmul.bf16.gmra.mxu0 %v8437
      %v8468 = vpop.f32.mrf.mxu0
      %v8469 = vadd.f32 0.0, %v8468
      %v8470 = vpop.f32.mrf.mxu0
      %v8471 = vadd.f32 0.0, %v8470
      %8472 = vmatmul.bf16.gmra.mxu0 %v8440
      %v8473 = vpop.f32.mrf.mxu0
      %v8474 = vadd.f32 0.0, %v8473
      %v8475 = vpop.f32.mrf.mxu0
      %v8476 = vadd.f32 0.0, %v8475
      %8477 = vmatmul.bf16.gmra.mxu0 %v8443
      %v8478 = vpop.f32.mrf.mxu0
      %v8479 = vadd.f32 0.0, %v8478
      %v8480 = vpop.f32.mrf.mxu0
      %v8481 = vadd.f32 0.0, %v8480
      %8482 = vmatmul.bf16.gmra.mxu0 %v8446
      %v8483 = vpop.f32.mrf.mxu0
      %v8484 = vadd.f32 0.0, %v8483
      %v8485 = vpop.f32.mrf.mxu0
      %v8486 = vadd.f32 0.0, %v8485
      %8487 = vmatmul.bf16.gmra.mxu0 %v8449
      %v8488 = vpop.f32.mrf.mxu0
      %v8489 = vadd.f32 0.0, %v8488
      %v8490 = vpop.f32.mrf.mxu0
      %v8491 = vadd.f32 0.0, %v8490
      %8492 = vmatmul.bf16.gmra.mxu0 %v8452
      %v8493 = vpop.f32.mrf.mxu0
      %v8494 = vadd.f32 0.0, %v8493
      %v8495 = vpop.f32.mrf.mxu0
      %v8496 = vadd.f32 0.0, %v8495
      %8497 = vdwg.mxu0
      %v8498 = vadd.f32 %v8274, %v8464
      %v8499 = vadd.f32 %v8275, %v8466
      %v8500 = vadd.f32 %v8276, %v8469
      %v8501 = vadd.f32 %v8277, %v8471
      %v8502 = vadd.f32 %v8278, %v8474
      %v8503 = vadd.f32 %v8279, %v8476
      %v8504 = vadd.f32 %v8280, %v8479
      %v8505 = vadd.f32 %v8281, %v8481
      %v8506 = vadd.f32 %v8282, %v8484
      %v8507 = vadd.f32 %v8283, %v8486
      %v8508 = vadd.f32 %v8284, %v8489
      %v8509 = vadd.f32 %v8285, %v8491
      %v8510 = vadd.f32 %v8286, %v8494
      %v8511 = vadd.f32 %v8287, %v8496
      %v8512 = vld [vmem:[#allocation3 + $0x50] sm:$0xf]
      %v8513 = vld [vmem:[#allocation3 + $0x54] sm:$0xf]
      %v8514 = vld [vmem:[#allocation3 + $0x58] sm:$0xf]
      %v8515 = vld [vmem:[#allocation3 + $0x5c] sm:$0xf]
      %v8516 = vld [vmem:[#allocation3 + $0x60] sm:$0xf]
      %v8517 = vld [vmem:[#allocation3 + $0x64] sm:$0xf]
      %v8518 = vld [vmem:[#allocation3 + $0x68] sm:$0xf]
      %v8519 = vld [vmem:[#allocation3 + $0x6c] sm:$0xf]
      %v8520 = vld [vmem:[#allocation3 + $0x70] sm:$0xf]
      %v8521 = vld [vmem:[#allocation3 + $0x74] sm:$0xf]
      %v8522 = vld [vmem:[#allocation3 + $0x78] sm:$0xf]
      %v8523 = vld [vmem:[#allocation3 + $0x7c] sm:$0xf]
      %v8524 = vld [vmem:[#allocation3 + $0x80] sm:$0xf]
      %v8525 = vld [vmem:[#allocation3 + $0x84] sm:$0xf]
      %v8526 = vld [vmem:[#allocation3 + $0x88] sm:$0x1]
      %v8527 = vld [vmem:[%s4 + $0xc0] sm:$0xf]
      %v8528 = vld [vmem:[%s4 + $0xc4] sm:$0xf]
      %v8529 = vld [vmem:[%s4 + $0xc8] sm:$0xf]
      %v8530 = vld [vmem:[%s4 + $0xcc] sm:$0xf]
      %v8531 = vld [vmem:[%s4 + $0xd0] sm:$0xf]
      %v8532 = vld [vmem:[%s4 + $0xd4] sm:$0xf]
      %v8533 = vld [vmem:[%s4 + $0xd8] sm:$0xf]
      %v8534 = vld [vmem:[%s4 + $0xdc] sm:$0xf]
      %v8535 = vld [vmem:[%s4 + $0xe0] sm:$0xf]
      %v8536 = vld [vmem:[%s4 + $0xe4] sm:$0xf]
      %v8537 = vld [vmem:[%s4 + $0xe8] sm:$0xf]
      %v8538 = vld [vmem:[%s4 + $0xec] sm:$0xf]
      %v8539 = vld [vmem:[%s4 + $0xf0] sm:$0xf]
      %v8540 = vld [vmem:[%s4 + $0xf4] sm:$0xf]
      %v8541 = vld [vmem:[%s4 + $0xf8] sm:$0xf]
      %v8542 = vld [vmem:[%s4 + $0xfc] sm:$0xf]
      %v8558 = vunpack.c.l.b16 %v8512
      %v8559 = vunpack.c.l.b16 %v8513
      %v8560 = vunpack.c.l.b16 %v8514
      %v8561 = vunpack.c.l.b16 %v8515
      %v8562 = vunpack.c.l.b16 %v8516
      %v8563 = vunpack.c.l.b16 %v8517
      %v8564 = vunpack.c.l.b16 %v8518
      %v8565 = vunpack.c.l.b16 %v8519
      %v8566 = vunpack.c.l.b16 %v8520
      %v8567 = vunpack.c.l.b16 %v8521
      %v8568 = vunpack.c.l.b16 %v8522
      %v8569 = vunpack.c.l.b16 %v8523
      %v8570 = vunpack.c.l.b16 %v8524
      %v8571 = vunpack.c.l.b16 %v8525
      %v8572 = vunpack.c.l.b16 %v8526
      %v8573 = vpack.c.b16 %v8559, %v8558
      %v8574 = vpack.c.b16 %v8561, %v8560
      %v8575 = vpack.c.b16 %v8563, %v8562
      %v8576 = vpack.c.b16 %v8565, %v8564
      %v8577 = vpack.c.b16 %v8567, %v8566
      %v8578 = vpack.c.b16 %v8569, %v8568
      %v8579 = vpack.c.b16 %v8571, %v8570
      %v8580 = vpack.c.b16 %v8572, %v8572
      %v8582 = vshrl.u32 %v8573, 16
      %v8584 = vshll.u32 %v8573, 16
      %v8586 = vrot.slane %v8584, 1
      %v8587 = vor.u32 %v8582, %v8586
      %v8589 = vshll.u32 %v8574, 16
      %v8591 = vrot.slane %v8589, 1
      %v8592 = vsel %vm1877, %v8587, %v8591
      %v8593 = vshrl.u32 %v8574, 16
      %v8595 = vor.u32 %v8593, %v8591
      %v8597 = vshll.u32 %v8575, 16
      %v8599 = vrot.slane %v8597, 1
      %v8600 = vsel %vm1877, %v8595, %v8599
      %v8601 = vshrl.u32 %v8575, 16
      %v8603 = vor.u32 %v8601, %v8599
      %v8605 = vshll.u32 %v8576, 16
      %v8607 = vrot.slane %v8605, 1
      %v8608 = vsel %vm1877, %v8603, %v8607
      %v8609 = vshrl.u32 %v8576, 16
      %v8611 = vor.u32 %v8609, %v8607
      %v8613 = vshll.u32 %v8577, 16
      %v8615 = vrot.slane %v8613, 1
      %v8616 = vsel %vm1877, %v8611, %v8615
      %v8617 = vshrl.u32 %v8577, 16
      %v8619 = vor.u32 %v8617, %v8615
      %v8621 = vshll.u32 %v8578, 16
      %v8623 = vrot.slane %v8621, 1
      %v8624 = vsel %vm1877, %v8619, %v8623
      %v8625 = vshrl.u32 %v8578, 16
      %v8627 = vor.u32 %v8625, %v8623
      %v8629 = vshll.u32 %v8579, 16
      %v8631 = vrot.slane %v8629, 1
      %v8632 = vsel %vm1877, %v8627, %v8631
      %v8633 = vshrl.u32 %v8579, 16
      %v8635 = vor.u32 %v8633, %v8631
      %v8637 = vshll.u32 %v8580, 16
      %v8639 = vrot.slane %v8637, 1
      %v8640 = vsel %vm1877, %v8635, %v8639
      %v8664 = vunpack.c.l.b16 %v8527
      %v8665 = vunpack.c.l.b16 %v8528
      %v8666 = vunpack.c.l.b16 %v8529
      %v8667 = vunpack.c.l.b16 %v8530
      %v8668 = vunpack.c.l.b16 %v8531
      %v8669 = vunpack.c.l.b16 %v8532
      %v8670 = vunpack.c.l.b16 %v8533
      %v8671 = vunpack.c.l.b16 %v8534
      %v8672 = vunpack.c.l.b16 %v8535
      %v8673 = vunpack.c.l.b16 %v8536
      %v8674 = vunpack.c.l.b16 %v8537
      %v8675 = vunpack.c.l.b16 %v8538
      %v8676 = vunpack.c.l.b16 %v8539
      %v8677 = vunpack.c.l.b16 %v8540
      %v8678 = vunpack.c.l.b16 %v8541
      %v8679 = vunpack.c.l.b16 %v8542
      %v8680 = vpack.c.b16 %v8665, %v8664
      %v8681 = vpack.c.b16 %v8667, %v8666
      %v8682 = vpack.c.b16 %v8669, %v8668
      %v8683 = vpack.c.b16 %v8671, %v8670
      %v8684 = vpack.c.b16 %v8673, %v8672
      %v8685 = vpack.c.b16 %v8675, %v8674
      %v8686 = vpack.c.b16 %v8677, %v8676
      %v8687 = vpack.c.b16 %v8679, %v8678
      %8696 = vmatpush.bf16.msra.mxu0 %v8687
      %8697 = vmatpush.bf16.msra.mxu0 %v8686
      %8698 = vmatpush.bf16.msra.mxu0 %v8685
      %8699 = vmatpush.bf16.msra.mxu0 %v8684
      %8700 = vmatpush.bf16.msra.mxu0 %v8683
      %8701 = vmatpush.bf16.msra.mxu0 %v8682
      %8702 = vmatpush.bf16.msra.mxu0 %v8681
      %8703 = vmatpush.bf16.msra.mxu0 %v8680
      %8704 = vmatmul.bf16.gmra.mxu0 %v8592
      %v8705 = vpop.f32.mrf.mxu0
      %v8706 = vadd.f32 0.0, %v8705
      %v8707 = vpop.f32.mrf.mxu0
      %v8708 = vadd.f32 0.0, %v8707
      %8709 = vmatmul.bf16.gmra.mxu0 %v8600
      %v8710 = vpop.f32.mrf.mxu0
      %v8711 = vadd.f32 0.0, %v8710
      %v8712 = vpop.f32.mrf.mxu0
      %v8713 = vadd.f32 0.0, %v8712
      %8714 = vmatmul.bf16.gmra.mxu0 %v8608
      %v8715 = vpop.f32.mrf.mxu0
      %v8716 = vadd.f32 0.0, %v8715
      %v8717 = vpop.f32.mrf.mxu0
      %v8718 = vadd.f32 0.0, %v8717
      %8719 = vmatmul.bf16.gmra.mxu0 %v8616
      %v8720 = vpop.f32.mrf.mxu0
      %v8721 = vadd.f32 0.0, %v8720
      %v8722 = vpop.f32.mrf.mxu0
      %v8723 = vadd.f32 0.0, %v8722
      %8724 = vmatmul.bf16.gmra.mxu0 %v8624
      %v8725 = vpop.f32.mrf.mxu0
      %v8726 = vadd.f32 0.0, %v8725
      %v8727 = vpop.f32.mrf.mxu0
      %v8728 = vadd.f32 0.0, %v8727
      %8729 = vmatmul.bf16.gmra.mxu0 %v8632
      %v8730 = vpop.f32.mrf.mxu0
      %v8731 = vadd.f32 0.0, %v8730
      %v8732 = vpop.f32.mrf.mxu0
      %v8733 = vadd.f32 0.0, %v8732
      %8734 = vmatmul.bf16.gmra.mxu0 %v8640
      %v8735 = vpop.f32.mrf.mxu0
      %v8736 = vadd.f32 0.0, %v8735
      %v8737 = vpop.f32.mrf.mxu0
      %v8738 = vadd.f32 0.0, %v8737
      %8739 = vdwg.mxu0
      %v8740 = vadd.f32 %v8498, %v8706
      %v8741 = vadd.f32 %v8499, %v8708
      %v8742 = vadd.f32 %v8500, %v8711
      %v8743 = vadd.f32 %v8501, %v8713
      %v8744 = vadd.f32 %v8502, %v8716
      %v8745 = vadd.f32 %v8503, %v8718
      %v8746 = vadd.f32 %v8504, %v8721
      %v8747 = vadd.f32 %v8505, %v8723
      %v8748 = vadd.f32 %v8506, %v8726
      %v8749 = vadd.f32 %v8507, %v8728
      %v8750 = vadd.f32 %v8508, %v8731
      %v8751 = vadd.f32 %v8509, %v8733
      %v8752 = vadd.f32 %v8510, %v8736
      %v8753 = vadd.f32 %v8511, %v8738
      %v8754 = vld [vmem:[#allocation3 + $0x50] sm:$0xe]
      %v8755 = vld [vmem:[#allocation3 + $0x88] sm:$0x3]
      %v8756 = vld [vmem:[%s4 + $0x100] sm:$0xf]
      %v8757 = vld [vmem:[%s4 + $0x104] sm:$0xf]
      %v8758 = vld [vmem:[%s4 + $0x108] sm:$0xf]
      %v8759 = vld [vmem:[%s4 + $0x10c] sm:$0xf]
      %v8760 = vld [vmem:[%s4 + $0x110] sm:$0xf]
      %v8761 = vld [vmem:[%s4 + $0x114] sm:$0xf]
      %v8762 = vld [vmem:[%s4 + $0x118] sm:$0xf]
      %v8763 = vld [vmem:[%s4 + $0x11c] sm:$0xf]
      %v8766 = vunpack.c.l.b16 %v8754
      %v8767 = vunpack.c.l.b16 %v8755
      %v8768 = vpack.c.b16 %v8559, %v8766
      %v8769 = vpack.c.b16 %v8767, %v8767
      %v8771 = vshrl.u32 %v8768, 16
      %v8773 = vrot.slane %v8771, 1
      %v8774 = vshll.u32 %v8768, 16
      %v8776 = vrot.slane %v8774, 2
      %v8777 = vor.u32 %v8773, %v8776
      %v8778 = vrot.slane %v8593, 1
      %v8779 = vrot.slane %v8589, 2
      %v8780 = vor.u32 %v8778, %v8779
      %v8781 = vsel %vm2299, %v8777, %v8780
      %v8782 = vrot.slane %v8601, 1
      %v8783 = vrot.slane %v8597, 2
      %v8784 = vor.u32 %v8782, %v8783
      %v8785 = vsel %vm2299, %v8780, %v8784
      %v8786 = vrot.slane %v8609, 1
      %v8787 = vrot.slane %v8605, 2
      %v8788 = vor.u32 %v8786, %v8787
      %v8789 = vsel %vm2299, %v8784, %v8788
      %v8790 = vrot.slane %v8617, 1
      %v8791 = vrot.slane %v8613, 2
      %v8792 = vor.u32 %v8790, %v8791
      %v8793 = vsel %vm2299, %v8788, %v8792
      %v8794 = vrot.slane %v8625, 1
      %v8795 = vrot.slane %v8621, 2
      %v8796 = vor.u32 %v8794, %v8795
      %v8797 = vsel %vm2299, %v8792, %v8796
      %v8798 = vrot.slane %v8633, 1
      %v8799 = vrot.slane %v8629, 2
      %v8800 = vor.u32 %v8798, %v8799
      %v8801 = vsel %vm2299, %v8796, %v8800
      %v8803 = vshrl.u32 %v8769, 16
      %v8805 = vrot.slane %v8803, 1
      %v8806 = vshll.u32 %v8769, 16
      %v8808 = vrot.slane %v8806, 2
      %v8809 = vor.u32 %v8805, %v8808
      %v8810 = vsel %vm2299, %v8800, %v8809
      %v8819 = vunpack.c.l.b16 %v8756
      %v8820 = vunpack.c.l.b16 %v8757
      %v8821 = vunpack.c.l.b16 %v8758
      %v8822 = vunpack.c.l.b16 %v8759
      %v8823 = vunpack.c.l.b16 %v8760
      %v8824 = vunpack.c.l.b16 %v8761
      %v8825 = vunpack.c.l.b16 %v8762
      %v8826 = vunpack.c.l.b16 %v8763
      %v8827 = vpack.c.b16 %v8820, %v8819
      %v8828 = vpack.c.b16 %v8822, %v8821
      %v8829 = vpack.c.b16 %v8824, %v8823
      %v8830 = vpack.c.b16 %v8826, %v8825
      %v8836 = vsel %vm1350, %v8781, 0
      %v8839 = vsel %vm1350, %v8785, 0
      %v8842 = vsel %vm1350, %v8789, 0
      %v8845 = vsel %vm1350, %v8793, 0
      %v8848 = vsel %vm1350, %v8797, 0
      %v8851 = vsel %vm1350, %v8801, 0
      %v8854 = vsel %vm1350, %v8810, 0
      %8856 = vmatpush.bf16.msra.mxu0 0
      %8857 = vmatpush.bf16.msra.mxu0 0
      %8858 = vmatpush.bf16.msra.mxu0 0
      %8859 = vmatpush.bf16.msra.mxu0 0
      %8860 = vmatpush.bf16.msra.mxu0 %v8830
      %8861 = vmatpush.bf16.msra.mxu0 %v8829
      %8862 = vmatpush.bf16.msra.mxu0 %v8828
      %8863 = vmatpush.bf16.msra.mxu0 %v8827
      %8864 = vmatmul.bf16.gmra.mxu0 %v8836
      %v8865 = vpop.f32.mrf.mxu0
      %v8866 = vadd.f32 0.0, %v8865
      %v8867 = vpop.f32.mrf.mxu0
      %v8868 = vadd.f32 0.0, %v8867
      %8869 = vmatmul.bf16.gmra.mxu0 %v8839
      %v8870 = vpop.f32.mrf.mxu0
      %v8871 = vadd.f32 0.0, %v8870
      %v8872 = vpop.f32.mrf.mxu0
      %v8873 = vadd.f32 0.0, %v8872
      %8874 = vmatmul.bf16.gmra.mxu0 %v8842
      %v8875 = vpop.f32.mrf.mxu0
      %v8876 = vadd.f32 0.0, %v8875
      %v8877 = vpop.f32.mrf.mxu0
      %v8878 = vadd.f32 0.0, %v8877
      %8879 = vmatmul.bf16.gmra.mxu0 %v8845
      %v8880 = vpop.f32.mrf.mxu0
      %v8881 = vadd.f32 0.0, %v8880
      %v8882 = vpop.f32.mrf.mxu0
      %v8883 = vadd.f32 0.0, %v8882
      %8884 = vmatmul.bf16.gmra.mxu0 %v8848
      %v8885 = vpop.f32.mrf.mxu0
      %v8886 = vadd.f32 0.0, %v8885
      %v8887 = vpop.f32.mrf.mxu0
      %v8888 = vadd.f32 0.0, %v8887
      %8889 = vmatmul.bf16.gmra.mxu0 %v8851
      %v8890 = vpop.f32.mrf.mxu0
      %v8891 = vadd.f32 0.0, %v8890
      %v8892 = vpop.f32.mrf.mxu0
      %v8893 = vadd.f32 0.0, %v8892
      %8894 = vmatmul.bf16.gmra.mxu0 %v8854
      %v8895 = vpop.f32.mrf.mxu0
      %v8896 = vadd.f32 0.0, %v8895
      %v8897 = vpop.f32.mrf.mxu0
      %v8898 = vadd.f32 0.0, %v8897
      %8899 = vdwg.mxu0
      %v8900 = vadd.f32 %v8740, %v8866
      %v8901 = vadd.f32 %v8741, %v8868
      %v8902 = vadd.f32 %v8742, %v8871
      %v8903 = vadd.f32 %v8743, %v8873
      %v8904 = vadd.f32 %v8744, %v8876
      %v8905 = vadd.f32 %v8745, %v8878
      %v8906 = vadd.f32 %v8746, %v8881
      %v8907 = vadd.f32 %v8747, %v8883
      %v8908 = vadd.f32 %v8748, %v8886
      %v8909 = vadd.f32 %v8749, %v8888
      %v8910 = vadd.f32 %v8750, %v8891
      %v8911 = vadd.f32 %v8751, %v8893
      %v8912 = vadd.f32 %v8752, %v8896
      %v8913 = vadd.f32 %v8753, %v8898
      %v8914 = vld [vmem:[%s5] sm:$0x1]
      %v8916 = vperm.slane %v8914, 0
      %v8918 = vadd.f32 %v8900, %v8916
      %v8919 = vadd.f32 %v8901, %v8916
      %v8920 = vadd.f32 %v8902, %v8916
      %v8921 = vadd.f32 %v8903, %v8916
      %v8922 = vadd.f32 %v8904, %v8916
      %v8923 = vadd.f32 %v8905, %v8916
      %v8924 = vadd.f32 %v8906, %v8916
      %v8925 = vadd.f32 %v8907, %v8916
      %v8926 = vadd.f32 %v8908, %v8916
      %v8927 = vadd.f32 %v8909, %v8916
      %v8928 = vadd.f32 %v8910, %v8916
      %v8929 = vadd.f32 %v8911, %v8916
      %v8930 = vadd.f32 %v8912, %v8916
      %v8931 = vadd.f32 %v8913, %v8916
      %v8932 = vadd.f32 %v8918, %v7636
      %v8933 = vadd.f32 %v8919, %v7637
      %v8934 = vadd.f32 %v8920, %v7638
      %v8935 = vadd.f32 %v8921, %v7639
      %v8936 = vadd.f32 %v8922, %v7640
      %v8937 = vadd.f32 %v8923, %v7641
      %v8938 = vadd.f32 %v8924, %v7642
      %v8939 = vadd.f32 %v8925, %v7643
      %v8940 = vadd.f32 %v8926, %v7644
      %v8941 = vadd.f32 %v8927, %v7645
      %v8942 = vadd.f32 %v8928, %v7646
      %v8943 = vadd.f32 %v8929, %v7647
      %v8944 = vadd.f32 %v8930, %v7648
      %v8945 = vadd.f32 %v8931, %v7649
      %v8946 = vmax.f32 %v8932, 0.0
      %v8947 = vmax.f32 %v8933, 0.0
      %v8948 = vmax.f32 %v8934, 0.0
      %v8949 = vmax.f32 %v8935, 0.0
      %v8950 = vmax.f32 %v8936, 0.0
      %v8951 = vmax.f32 %v8937, 0.0
      %v8952 = vmax.f32 %v8938, 0.0
      %v8953 = vmax.f32 %v8939, 0.0
      %v8954 = vmax.f32 %v8940, 0.0
      %v8955 = vmax.f32 %v8941, 0.0
      %v8956 = vmax.f32 %v8942, 0.0
      %v8957 = vmax.f32 %v8943, 0.0
      %v8958 = vmax.f32 %v8944, 0.0
      %v8959 = vmax.f32 %v8945, 0.0
      %v8960 = vld [vmem:[%s1 + $0x70] sm:$0xff]
      %v8961 = vld [vmem:[%s1 + $0x78] sm:$0xff]
      %v8962 = vld [vmem:[%s1 + $0x80] sm:$0xff]
      %v8963 = vld [vmem:[%s1 + $0x88] sm:$0xff]
      %v8964 = vld [vmem:[%s1 + $0x90] sm:$0xff]
      %v8965 = vld [vmem:[%s1 + $0x98] sm:$0xff]
      %v8966 = vld [vmem:[%s1 + $0xa0] sm:$0xff]
      %v8967 = vld [vmem:[%s1 + $0xa8] sm:$0xff]
      %v8968 = vld [vmem:[%s1 + $0xb0] sm:$0xff]
      %v8969 = vld [vmem:[%s1 + $0xb8] sm:$0xff]
      %v8970 = vld [vmem:[%s1 + $0xc0] sm:$0xff]
      %v8971 = vld [vmem:[%s1 + $0xc8] sm:$0xff]
      %v8972 = vld [vmem:[%s1 + $0xd0] sm:$0xff]
      %v8973 = vld [vmem:[%s1 + $0xd8] sm:$0xff]
      %8975 = vset.pattern.permute.xlu0 0
      %8976 = vperm.xlu0 %8975, %v8960
      %v8977 = vpop.permute.xlu0 %8976
      %8980 = vset.pattern.permute.xlu0 0
      %8981 = vperm.xlu0 %8980, %v8961
      %v8982 = vpop.permute.xlu0 %8981
      %8985 = vset.pattern.permute.xlu0 0
      %8986 = vperm.xlu0 %8985, %v8962
      %v8987 = vpop.permute.xlu0 %8986
      %8990 = vset.pattern.permute.xlu0 0
      %8991 = vperm.xlu0 %8990, %v8963
      %v8992 = vpop.permute.xlu0 %8991
      %8995 = vset.pattern.permute.xlu0 0
      %8996 = vperm.xlu0 %8995, %v8964
      %v8997 = vpop.permute.xlu0 %8996
      %9000 = vset.pattern.permute.xlu0 0
      %9001 = vperm.xlu0 %9000, %v8965
      %v9002 = vpop.permute.xlu0 %9001
      %9005 = vset.pattern.permute.xlu0 0
      %9006 = vperm.xlu0 %9005, %v8966
      %v9007 = vpop.permute.xlu0 %9006
      %9010 = vset.pattern.permute.xlu0 0
      %9011 = vperm.xlu0 %9010, %v8967
      %v9012 = vpop.permute.xlu0 %9011
      %9015 = vset.pattern.permute.xlu0 0
      %9016 = vperm.xlu0 %9015, %v8968
      %v9017 = vpop.permute.xlu0 %9016
      %9020 = vset.pattern.permute.xlu0 0
      %9021 = vperm.xlu0 %9020, %v8969
      %v9022 = vpop.permute.xlu0 %9021
      %9025 = vset.pattern.permute.xlu0 0
      %9026 = vperm.xlu0 %9025, %v8970
      %v9027 = vpop.permute.xlu0 %9026
      %9030 = vset.pattern.permute.xlu0 0
      %9031 = vperm.xlu0 %9030, %v8971
      %v9032 = vpop.permute.xlu0 %9031
      %9035 = vset.pattern.permute.xlu0 0
      %9036 = vperm.xlu0 %9035, %v8972
      %v9037 = vpop.permute.xlu0 %9036
      %9040 = vset.pattern.permute.xlu0 0
      %9041 = vperm.xlu0 %9040, %v8973
      %v9042 = vpop.permute.xlu0 %9041
      %v9044 = vmul.f32 %v8946, %v8977
      %v9045 = vmul.f32 %v8947, %v8982
      %v9046 = vmul.f32 %v8948, %v8987
      %v9047 = vmul.f32 %v8949, %v8992
      %v9048 = vmul.f32 %v8950, %v8997
      %v9049 = vmul.f32 %v8951, %v9002
      %v9050 = vmul.f32 %v8952, %v9007
      %v9051 = vmul.f32 %v8953, %v9012
      %v9052 = vmul.f32 %v8954, %v9017
      %v9053 = vmul.f32 %v8955, %v9022
      %v9054 = vmul.f32 %v8956, %v9027
      %v9055 = vmul.f32 %v8957, %v9032
      %v9056 = vmul.f32 %v8958, %v9037
      %v9057 = vmul.f32 %v8959, %v9042
      %9058 = vst.msk [vmem:[%s251 + $0x70] sm:$0xff] %vm1350, %v9044
      %9059 = vst.msk [vmem:[%s251 + $0x78] sm:$0xff] %vm1350, %v9045
      %9060 = vst.msk [vmem:[%s251 + $0x80] sm:$0xff] %vm1350, %v9046
      %9061 = vst.msk [vmem:[%s251 + $0x88] sm:$0xff] %vm1350, %v9047
      %9062 = vst.msk [vmem:[%s251 + $0x90] sm:$0xff] %vm1350, %v9048
      %9063 = vst.msk [vmem:[%s251 + $0x98] sm:$0xff] %vm1350, %v9049
      %9064 = vst.msk [vmem:[%s251 + $0xa0] sm:$0xff] %vm1350, %v9050
      %9065 = vst.msk [vmem:[%s251 + $0xa8] sm:$0xff] %vm1350, %v9051
      %9066 = vst.msk [vmem:[%s251 + $0xb0] sm:$0xff] %vm1350, %v9052
      %9067 = vst.msk [vmem:[%s251 + $0xb8] sm:$0xff] %vm1350, %v9053
      %9068 = vst.msk [vmem:[%s251 + $0xc0] sm:$0xff] %vm1350, %v9054
      %9069 = vst.msk [vmem:[%s251 + $0xc8] sm:$0xff] %vm1350, %v9055
      %9070 = vst.msk [vmem:[%s251 + $0xd0] sm:$0xff] %vm1350, %v9056
      %9071 = vst.msk [vmem:[%s251 + $0xd8] sm:$0xff] %vm1350, %v9057
      %v9072 = vld [vmem:[%s246 + $0x100] sm:$0xff]
      %v9073 = vld [vmem:[%s246 + $0x108] sm:$0xff]
      %v9074 = vld [vmem:[%s246 + $0x110] sm:$0xff]
      %v9075 = vld [vmem:[%s246 + $0x118] sm:$0xff]
      %v9076 = vld [vmem:[%s246 + $0x120] sm:$0xff]
      %v9077 = vld [vmem:[%s246 + $0x128] sm:$0xff]
      %v9078 = vld [vmem:[%s246 + $0x130] sm:$0xff]
      %v9079 = vld [vmem:[%s246 + $0x138] sm:$0xff]
      %v9080 = vld [vmem:[%s246 + $0x140] sm:$0xff]
      %v9081 = vld [vmem:[%s246 + $0x148] sm:$0xff]
      %v9082 = vld [vmem:[%s246 + $0x150] sm:$0xff]
      %v9083 = vld [vmem:[%s246 + $0x158] sm:$0xff]
      %v9084 = vld [vmem:[%s246 + $0x160] sm:$0xff]
      %v9085 = vld [vmem:[%s246 + $0x168] sm:$0xff]
      %v9086 = vld [vmem:[#allocation3 + $0x74] sm:$0xc]
      %v9087 = vld [vmem:[#allocation3 + $0x78] sm:$0xf]
      %v9088 = vld [vmem:[#allocation3 + $0x7c] sm:$0xf]
      %v9089 = vld [vmem:[#allocation3 + $0x80] sm:$0xf]
      %v9090 = vld [vmem:[#allocation3 + $0x84] sm:$0xf]
      %v9091 = vld [vmem:[#allocation3 + $0x88] sm:$0xf]
      %v9092 = vld [vmem:[#allocation3 + $0x8c] sm:$0xf]
      %v9093 = vld [vmem:[#allocation3 + $0x90] sm:$0xf]
      %v9094 = vld [vmem:[#allocation3 + $0x94] sm:$0xf]
      %v9095 = vld [vmem:[#allocation3 + $0x98] sm:$0xf]
      %v9096 = vld [vmem:[#allocation3 + $0x9c] sm:$0xf]
      %v9097 = vld [vmem:[#allocation3 + $0xa0] sm:$0xf]
      %v9098 = vld [vmem:[#allocation3 + $0xa4] sm:$0xf]
      %v9099 = vld [vmem:[#allocation3 + $0xa8] sm:$0xf]
      %v9100 = vld [vmem:[#allocation3 + $0xac] sm:$0x7]
      %v9101 = vld [vmem:[%s4] sm:$0xf]
      %v9102 = vld [vmem:[%s4 + $0x4] sm:$0xf]
      %v9103 = vld [vmem:[%s4 + $0x8] sm:$0xf]
      %v9104 = vld [vmem:[%s4 + $0xc] sm:$0xf]
      %v9105 = vld [vmem:[%s4 + $0x10] sm:$0xf]
      %v9106 = vld [vmem:[%s4 + $0x14] sm:$0xf]
      %v9107 = vld [vmem:[%s4 + $0x18] sm:$0xf]
      %v9108 = vld [vmem:[%s4 + $0x1c] sm:$0xf]
      %v9109 = vld [vmem:[%s4 + $0x20] sm:$0xf]
      %v9110 = vld [vmem:[%s4 + $0x24] sm:$0xf]
      %v9111 = vld [vmem:[%s4 + $0x28] sm:$0xf]
      %v9112 = vld [vmem:[%s4 + $0x2c] sm:$0xf]
      %v9113 = vld [vmem:[%s4 + $0x30] sm:$0xf]
      %v9114 = vld [vmem:[%s4 + $0x34] sm:$0xf]
      %v9115 = vld [vmem:[%s4 + $0x38] sm:$0xf]
      %v9116 = vld [vmem:[%s4 + $0x3c] sm:$0xf]
      %v9117 = vld [vmem:[#allocation3 + $0x74] sm:$0x8]
      %v9118 = vld [vmem:[#allocation3 + $0xac] sm:$0xf]
      %v9119 = vld [vmem:[%s4 + $0x40] sm:$0xf]
      %v9120 = vld [vmem:[%s4 + $0x44] sm:$0xf]
      %v9121 = vld [vmem:[%s4 + $0x48] sm:$0xf]
      %v9122 = vld [vmem:[%s4 + $0x4c] sm:$0xf]
      %v9123 = vld [vmem:[%s4 + $0x50] sm:$0xf]
      %v9124 = vld [vmem:[%s4 + $0x54] sm:$0xf]
      %v9125 = vld [vmem:[%s4 + $0x58] sm:$0xf]
      %v9126 = vld [vmem:[%s4 + $0x5c] sm:$0xf]
      %v9142 = vunpack.c.l.b16 %v9117
      %v9143 = vunpack.c.l.b16 %v9087
      %v9144 = vunpack.c.l.b16 %v9088
      %v9145 = vunpack.c.l.b16 %v9089
      %v9146 = vunpack.c.l.b16 %v9090
      %v9147 = vunpack.c.l.b16 %v9091
      %v9148 = vunpack.c.l.b16 %v9092
      %v9149 = vunpack.c.l.b16 %v9093
      %v9150 = vunpack.c.l.b16 %v9094
      %v9151 = vunpack.c.l.b16 %v9095
      %v9152 = vunpack.c.l.b16 %v9096
      %v9153 = vunpack.c.l.b16 %v9097
      %v9154 = vunpack.c.l.b16 %v9098
      %v9155 = vunpack.c.l.b16 %v9099
      %v9156 = vunpack.c.l.b16 %v9118
      %v9157 = vpack.c.b16 %v9143, %v9142
      %v9158 = vpack.c.b16 %v9145, %v9144
      %v9159 = vpack.c.b16 %v9147, %v9146
      %v9160 = vpack.c.b16 %v9149, %v9148
      %v9161 = vpack.c.b16 %v9151, %v9150
      %v9162 = vpack.c.b16 %v9153, %v9152
      %v9163 = vpack.c.b16 %v9155, %v9154
      %v9164 = vpack.c.b16 %v9156, %v9156
      %v9166 = vshrl.u32 %v9157, 16
      %v9168 = vrot.slane %v9166, 3
      %v9169 = vshll.u32 %v9157, 16
      %v9171 = vrot.slane %v9169, 4
      %v9172 = vor.u32 %v9168, %v9171
      %v9174 = vshrl.u32 %v9158, 16
      %v9176 = vrot.slane %v9174, 3
      %v9177 = vshll.u32 %v9158, 16
      %v9179 = vrot.slane %v9177, 4
      %v9180 = vor.u32 %v9176, %v9179
      %v9181 = vsel %vm1254, %v9172, %v9180
      %v9183 = vshrl.u32 %v9159, 16
      %v9185 = vrot.slane %v9183, 3
      %v9186 = vshll.u32 %v9159, 16
      %v9188 = vrot.slane %v9186, 4
      %v9189 = vor.u32 %v9185, %v9188
      %v9190 = vsel %vm1254, %v9180, %v9189
      %v9192 = vshrl.u32 %v9160, 16
      %v9194 = vrot.slane %v9192, 3
      %v9195 = vshll.u32 %v9160, 16
      %v9197 = vrot.slane %v9195, 4
      %v9198 = vor.u32 %v9194, %v9197
      %v9199 = vsel %vm1254, %v9189, %v9198
      %v9201 = vshrl.u32 %v9161, 16
      %v9203 = vrot.slane %v9201, 3
      %v9204 = vshll.u32 %v9161, 16
      %v9206 = vrot.slane %v9204, 4
      %v9207 = vor.u32 %v9203, %v9206
      %v9208 = vsel %vm1254, %v9198, %v9207
      %v9210 = vshrl.u32 %v9162, 16
      %v9212 = vrot.slane %v9210, 3
      %v9213 = vshll.u32 %v9162, 16
      %v9215 = vrot.slane %v9213, 4
      %v9216 = vor.u32 %v9212, %v9215
      %v9217 = vsel %vm1254, %v9207, %v9216
      %v9219 = vshrl.u32 %v9163, 16
      %v9221 = vrot.slane %v9219, 3
      %v9222 = vshll.u32 %v9163, 16
      %v9224 = vrot.slane %v9222, 4
      %v9225 = vor.u32 %v9221, %v9224
      %v9226 = vsel %vm1254, %v9216, %v9225
      %v9228 = vshrl.u32 %v9164, 16
      %v9230 = vrot.slane %v9228, 3
      %v9231 = vshll.u32 %v9164, 16
      %v9233 = vrot.slane %v9231, 4
      %v9234 = vor.u32 %v9230, %v9233
      %v9235 = vsel %vm1254, %v9225, %v9234
      %v9244 = vunpack.c.l.b16 %v9119
      %v9245 = vunpack.c.l.b16 %v9120
      %v9246 = vunpack.c.l.b16 %v9121
      %v9247 = vunpack.c.l.b16 %v9122
      %v9248 = vunpack.c.l.b16 %v9123
      %v9249 = vunpack.c.l.b16 %v9124
      %v9250 = vunpack.c.l.b16 %v9125
      %v9251 = vunpack.c.l.b16 %v9126
      %v9252 = vpack.c.b16 %v9245, %v9244
      %v9253 = vpack.c.b16 %v9247, %v9246
      %v9254 = vpack.c.b16 %v9249, %v9248
      %v9255 = vpack.c.b16 %v9251, %v9250
      %v9261 = vsel %vm1350, %v9181, 0
      %v9264 = vsel %vm1350, %v9190, 0
      %v9267 = vsel %vm1350, %v9199, 0
      %v9270 = vsel %vm1350, %v9208, 0
      %v9273 = vsel %vm1350, %v9217, 0
      %v9276 = vsel %vm1350, %v9226, 0
      %v9279 = vsel %vm1350, %v9235, 0
      %9281 = vmatpush.bf16.msra.mxu0 0
      %9282 = vmatpush.bf16.msra.mxu0 0
      %9283 = vmatpush.bf16.msra.mxu0 0
      %9284 = vmatpush.bf16.msra.mxu0 0
      %9285 = vmatpush.bf16.msra.mxu0 %v9255
      %9286 = vmatpush.bf16.msra.mxu0 %v9254
      %9287 = vmatpush.bf16.msra.mxu0 %v9253
      %9288 = vmatpush.bf16.msra.mxu0 %v9252
      %9289 = vmatmul.bf16.gmra.mxu0 %v9261
      %v9290 = vpop.f32.mrf.mxu0
      %v9291 = vadd.f32 0.0, %v9290
      %v9292 = vpop.f32.mrf.mxu0
      %v9293 = vadd.f32 0.0, %v9292
      %9294 = vmatmul.bf16.gmra.mxu0 %v9264
      %v9295 = vpop.f32.mrf.mxu0
      %v9296 = vadd.f32 0.0, %v9295
      %v9297 = vpop.f32.mrf.mxu0
      %v9298 = vadd.f32 0.0, %v9297
      %9299 = vmatmul.bf16.gmra.mxu0 %v9267
      %v9300 = vpop.f32.mrf.mxu0
      %v9301 = vadd.f32 0.0, %v9300
      %v9302 = vpop.f32.mrf.mxu0
      %v9303 = vadd.f32 0.0, %v9302
      %9304 = vmatmul.bf16.gmra.mxu0 %v9270
      %v9305 = vpop.f32.mrf.mxu0
      %v9306 = vadd.f32 0.0, %v9305
      %v9307 = vpop.f32.mrf.mxu0
      %v9308 = vadd.f32 0.0, %v9307
      %9309 = vmatmul.bf16.gmra.mxu0 %v9273
      %v9310 = vpop.f32.mrf.mxu0
      %v9311 = vadd.f32 0.0, %v9310
      %v9312 = vpop.f32.mrf.mxu0
      %v9313 = vadd.f32 0.0, %v9312
      %9314 = vmatmul.bf16.gmra.mxu0 %v9276
      %v9315 = vpop.f32.mrf.mxu0
      %v9316 = vadd.f32 0.0, %v9315
      %v9317 = vpop.f32.mrf.mxu0
      %v9318 = vadd.f32 0.0, %v9317
      %9319 = vmatmul.bf16.gmra.mxu0 %v9279
      %v9320 = vpop.f32.mrf.mxu0
      %v9321 = vadd.f32 0.0, %v9320
      %v9322 = vpop.f32.mrf.mxu0
      %v9323 = vadd.f32 0.0, %v9322
      %9324 = vdwg.mxu0
      %v9327 = vunpack.c.l.b16 %v9086
      %v9328 = vunpack.c.l.b16 %v9100
      %v9329 = vpack.c.b16 %v9143, %v9327
      %v9330 = vpack.c.b16 %v9328, %v9328
      %v9332 = vshrl.u32 %v9329, 16
      %v9334 = vrot.slane %v9332, 2
      %v9335 = vshll.u32 %v9329, 16
      %v9337 = vrot.slane %v9335, 3
      %v9338 = vor.u32 %v9334, %v9337
      %v9339 = vrot.slane %v9174, 2
      %v9340 = vrot.slane %v9177, 3
      %v9341 = vor.u32 %v9339, %v9340
      %v9342 = vsel %vm1422, %v9338, %v9341
      %v9343 = vrot.slane %v9183, 2
      %v9344 = vrot.slane %v9186, 3
      %v9345 = vor.u32 %v9343, %v9344
      %v9346 = vsel %vm1422, %v9341, %v9345
      %v9347 = vrot.slane %v9192, 2
      %v9348 = vrot.slane %v9195, 3
      %v9349 = vor.u32 %v9347, %v9348
      %v9350 = vsel %vm1422, %v9345, %v9349
      %v9351 = vrot.slane %v9201, 2
      %v9352 = vrot.slane %v9204, 3
      %v9353 = vor.u32 %v9351, %v9352
      %v9354 = vsel %vm1422, %v9349, %v9353
      %v9355 = vrot.slane %v9210, 2
      %v9356 = vrot.slane %v9213, 3
      %v9357 = vor.u32 %v9355, %v9356
      %v9358 = vsel %vm1422, %v9353, %v9357
      %v9359 = vrot.slane %v9219, 2
      %v9360 = vrot.slane %v9222, 3
      %v9361 = vor.u32 %v9359, %v9360
      %v9362 = vsel %vm1422, %v9357, %v9361
      %v9364 = vshrl.u32 %v9330, 16
      %v9366 = vrot.slane %v9364, 2
      %v9367 = vshll.u32 %v9330, 16
      %v9369 = vrot.slane %v9367, 3
      %v9370 = vor.u32 %v9366, %v9369
      %v9371 = vsel %vm1422, %v9361, %v9370
      %v9395 = vunpack.c.l.b16 %v9101
      %v9396 = vunpack.c.l.b16 %v9102
      %v9397 = vunpack.c.l.b16 %v9103
      %v9398 = vunpack.c.l.b16 %v9104
      %v9399 = vunpack.c.l.b16 %v9105
      %v9400 = vunpack.c.l.b16 %v9106
      %v9401 = vunpack.c.l.b16 %v9107
      %v9402 = vunpack.c.l.b16 %v9108
      %v9403 = vunpack.c.l.b16 %v9109
      %v9404 = vunpack.c.l.b16 %v9110
      %v9405 = vunpack.c.l.b16 %v9111
      %v9406 = vunpack.c.l.b16 %v9112
      %v9407 = vunpack.c.l.b16 %v9113
      %v9408 = vunpack.c.l.b16 %v9114
      %v9409 = vunpack.c.l.b16 %v9115
      %v9410 = vunpack.c.l.b16 %v9116
      %v9411 = vpack.c.b16 %v9396, %v9395
      %v9412 = vpack.c.b16 %v9398, %v9397
      %v9413 = vpack.c.b16 %v9400, %v9399
      %v9414 = vpack.c.b16 %v9402, %v9401
      %v9415 = vpack.c.b16 %v9404, %v9403
      %v9416 = vpack.c.b16 %v9406, %v9405
      %v9417 = vpack.c.b16 %v9408, %v9407
      %v9418 = vpack.c.b16 %v9410, %v9409
      %9427 = vmatpush.bf16.msra.mxu0 %v9418
      %9428 = vmatpush.bf16.msra.mxu0 %v9417
      %9429 = vmatpush.bf16.msra.mxu0 %v9416
      %9430 = vmatpush.bf16.msra.mxu0 %v9415
      %9431 = vmatpush.bf16.msra.mxu0 %v9414
      %9432 = vmatpush.bf16.msra.mxu0 %v9413
      %9433 = vmatpush.bf16.msra.mxu0 %v9412
      %9434 = vmatpush.bf16.msra.mxu0 %v9411
      %9435 = vmatmul.bf16.gmra.mxu0 %v9342
      %v9436 = vpop.f32.mrf.mxu0
      %v9437 = vadd.f32 %v9291, %v9436
      %v9438 = vpop.f32.mrf.mxu0
      %v9439 = vadd.f32 %v9293, %v9438
      %9440 = vmatmul.bf16.gmra.mxu0 %v9346
      %v9441 = vpop.f32.mrf.mxu0
      %v9442 = vadd.f32 %v9296, %v9441
      %v9443 = vpop.f32.mrf.mxu0
      %v9444 = vadd.f32 %v9298, %v9443
      %9445 = vmatmul.bf16.gmra.mxu0 %v9350
      %v9446 = vpop.f32.mrf.mxu0
      %v9447 = vadd.f32 %v9301, %v9446
      %v9448 = vpop.f32.mrf.mxu0
      %v9449 = vadd.f32 %v9303, %v9448
      %9450 = vmatmul.bf16.gmra.mxu0 %v9354
      %v9451 = vpop.f32.mrf.mxu0
      %v9452 = vadd.f32 %v9306, %v9451
      %v9453 = vpop.f32.mrf.mxu0
      %v9454 = vadd.f32 %v9308, %v9453
      %9455 = vmatmul.bf16.gmra.mxu0 %v9358
      %v9456 = vpop.f32.mrf.mxu0
      %v9457 = vadd.f32 %v9311, %v9456
      %v9458 = vpop.f32.mrf.mxu0
      %v9459 = vadd.f32 %v9313, %v9458
      %9460 = vmatmul.bf16.gmra.mxu0 %v9362
      %v9461 = vpop.f32.mrf.mxu0
      %v9462 = vadd.f32 %v9316, %v9461
      %v9463 = vpop.f32.mrf.mxu0
      %v9464 = vadd.f32 %v9318, %v9463
      %9465 = vmatmul.bf16.gmra.mxu0 %v9371
      %v9466 = vpop.f32.mrf.mxu0
      %v9467 = vadd.f32 %v9321, %v9466
      %v9468 = vpop.f32.mrf.mxu0
      %v9469 = vadd.f32 %v9323, %v9468
      %9470 = vdwg.mxu0
      %v9471 = vld [vmem:[#allocation3 + $0x7c] sm:$0x8]
      %v9472 = vld [vmem:[#allocation3 + $0x80] sm:$0xf]
      %v9473 = vld [vmem:[#allocation3 + $0x84] sm:$0xf]
      %v9474 = vld [vmem:[#allocation3 + $0x88] sm:$0xf]
      %v9475 = vld [vmem:[#allocation3 + $0x8c] sm:$0xf]
      %v9476 = vld [vmem:[#allocation3 + $0x90] sm:$0xf]
      %v9477 = vld [vmem:[#allocation3 + $0x94] sm:$0xf]
      %v9478 = vld [vmem:[#allocation3 + $0x98] sm:$0xf]
      %v9479 = vld [vmem:[#allocation3 + $0x9c] sm:$0xf]
      %v9480 = vld [vmem:[#allocation3 + $0xa0] sm:$0xf]
      %v9481 = vld [vmem:[#allocation3 + $0xa4] sm:$0xf]
      %v9482 = vld [vmem:[#allocation3 + $0xa8] sm:$0xf]
      %v9483 = vld [vmem:[#allocation3 + $0xac] sm:$0xf]
      %v9484 = vld [vmem:[#allocation3 + $0xb0] sm:$0xf]
      %v9485 = vld [vmem:[#allocation3 + $0xb4] sm:$0xf]
      %v9486 = vld [vmem:[%s4 + $0x60] sm:$0xf]
      %v9487 = vld [vmem:[%s4 + $0x64] sm:$0xf]
      %v9488 = vld [vmem:[%s4 + $0x68] sm:$0xf]
      %v9489 = vld [vmem:[%s4 + $0x6c] sm:$0xf]
      %v9490 = vld [vmem:[%s4 + $0x70] sm:$0xf]
      %v9491 = vld [vmem:[%s4 + $0x74] sm:$0xf]
      %v9492 = vld [vmem:[%s4 + $0x78] sm:$0xf]
      %v9493 = vld [vmem:[%s4 + $0x7c] sm:$0xf]
      %v9494 = vld [vmem:[%s4 + $0x80] sm:$0xf]
      %v9495 = vld [vmem:[%s4 + $0x84] sm:$0xf]
      %v9496 = vld [vmem:[%s4 + $0x88] sm:$0xf]
      %v9497 = vld [vmem:[%s4 + $0x8c] sm:$0xf]
      %v9498 = vld [vmem:[%s4 + $0x90] sm:$0xf]
      %v9499 = vld [vmem:[%s4 + $0x94] sm:$0xf]
      %v9500 = vld [vmem:[%s4 + $0x98] sm:$0xf]
      %v9501 = vld [vmem:[%s4 + $0x9c] sm:$0xf]
      %v9517 = vunpack.c.l.b16 %v9471
      %v9518 = vunpack.c.l.b16 %v9472
      %v9519 = vunpack.c.l.b16 %v9473
      %v9520 = vunpack.c.l.b16 %v9474
      %v9521 = vunpack.c.l.b16 %v9475
      %v9522 = vunpack.c.l.b16 %v9476
      %v9523 = vunpack.c.l.b16 %v9477
      %v9524 = vunpack.c.l.b16 %v9478
      %v9525 = vunpack.c.l.b16 %v9479
      %v9526 = vunpack.c.l.b16 %v9480
      %v9527 = vunpack.c.l.b16 %v9481
      %v9528 = vunpack.c.l.b16 %v9482
      %v9529 = vunpack.c.l.b16 %v9483
      %v9530 = vunpack.c.l.b16 %v9484
      %v9531 = vunpack.c.l.b16 %v9485
      %v9532 = vpack.c.b16 %v9518, %v9517
      %v9533 = vpack.c.b16 %v9520, %v9519
      %v9534 = vpack.c.b16 %v9522, %v9521
      %v9535 = vpack.c.b16 %v9524, %v9523
      %v9536 = vpack.c.b16 %v9526, %v9525
      %v9537 = vpack.c.b16 %v9528, %v9527
      %v9538 = vpack.c.b16 %v9530, %v9529
      %v9539 = vpack.c.b16 %v9531, %v9531
      %v9541 = vshrl.u32 %v9532, 16
      %v9543 = vrot.slane %v9541, 3
      %v9544 = vshll.u32 %v9532, 16
      %v9546 = vrot.slane %v9544, 4
      %v9547 = vor.u32 %v9543, %v9546
      %v9549 = vshrl.u32 %v9533, 16
      %v9551 = vrot.slane %v9549, 3
      %v9552 = vshll.u32 %v9533, 16
      %v9554 = vrot.slane %v9552, 4
      %v9555 = vor.u32 %v9551, %v9554
      %v9556 = vsel %vm1254, %v9547, %v9555
      %v9558 = vshrl.u32 %v9534, 16
      %v9560 = vrot.slane %v9558, 3
      %v9561 = vshll.u32 %v9534, 16
      %v9563 = vrot.slane %v9561, 4
      %v9564 = vor.u32 %v9560, %v9563
      %v9565 = vsel %vm1254, %v9555, %v9564
      %v9567 = vshrl.u32 %v9535, 16
      %v9569 = vrot.slane %v9567, 3
      %v9570 = vshll.u32 %v9535, 16
      %v9572 = vrot.slane %v9570, 4
      %v9573 = vor.u32 %v9569, %v9572
      %v9574 = vsel %vm1254, %v9564, %v9573
      %v9576 = vshrl.u32 %v9536, 16
      %v9578 = vrot.slane %v9576, 3
      %v9579 = vshll.u32 %v9536, 16
      %v9581 = vrot.slane %v9579, 4
      %v9582 = vor.u32 %v9578, %v9581
      %v9583 = vsel %vm1254, %v9573, %v9582
      %v9585 = vshrl.u32 %v9537, 16
      %v9587 = vrot.slane %v9585, 3
      %v9588 = vshll.u32 %v9537, 16
      %v9590 = vrot.slane %v9588, 4
      %v9591 = vor.u32 %v9587, %v9590
      %v9592 = vsel %vm1254, %v9582, %v9591
      %v9594 = vshrl.u32 %v9538, 16
      %v9596 = vrot.slane %v9594, 3
      %v9597 = vshll.u32 %v9538, 16
      %v9599 = vrot.slane %v9597, 4
      %v9600 = vor.u32 %v9596, %v9599
      %v9601 = vsel %vm1254, %v9591, %v9600
      %v9603 = vshrl.u32 %v9539, 16
      %v9605 = vrot.slane %v9603, 3
      %v9606 = vshll.u32 %v9539, 16
      %v9608 = vrot.slane %v9606, 4
      %v9609 = vor.u32 %v9605, %v9608
      %v9610 = vsel %vm1254, %v9600, %v9609
      %v9634 = vunpack.c.l.b16 %v9486
      %v9635 = vunpack.c.l.b16 %v9487
      %v9636 = vunpack.c.l.b16 %v9488
      %v9637 = vunpack.c.l.b16 %v9489
      %v9638 = vunpack.c.l.b16 %v9490
      %v9639 = vunpack.c.l.b16 %v9491
      %v9640 = vunpack.c.l.b16 %v9492
      %v9641 = vunpack.c.l.b16 %v9493
      %v9642 = vunpack.c.l.b16 %v9494
      %v9643 = vunpack.c.l.b16 %v9495
      %v9644 = vunpack.c.l.b16 %v9496
      %v9645 = vunpack.c.l.b16 %v9497
      %v9646 = vunpack.c.l.b16 %v9498
      %v9647 = vunpack.c.l.b16 %v9499
      %v9648 = vunpack.c.l.b16 %v9500
      %v9649 = vunpack.c.l.b16 %v9501
      %v9650 = vpack.c.b16 %v9635, %v9634
      %v9651 = vpack.c.b16 %v9637, %v9636
      %v9652 = vpack.c.b16 %v9639, %v9638
      %v9653 = vpack.c.b16 %v9641, %v9640
      %v9654 = vpack.c.b16 %v9643, %v9642
      %v9655 = vpack.c.b16 %v9645, %v9644
      %v9656 = vpack.c.b16 %v9647, %v9646
      %v9657 = vpack.c.b16 %v9649, %v9648
      %9666 = vmatpush.bf16.msra.mxu0 %v9657
      %9667 = vmatpush.bf16.msra.mxu0 %v9656
      %9668 = vmatpush.bf16.msra.mxu0 %v9655
      %9669 = vmatpush.bf16.msra.mxu0 %v9654
      %9670 = vmatpush.bf16.msra.mxu0 %v9653
      %9671 = vmatpush.bf16.msra.mxu0 %v9652
      %9672 = vmatpush.bf16.msra.mxu0 %v9651
      %9673 = vmatpush.bf16.msra.mxu0 %v9650
      %9674 = vmatmul.bf16.gmra.mxu0 %v9556
      %v9675 = vpop.f32.mrf.mxu0
      %v9676 = vadd.f32 0.0, %v9675
      %v9677 = vpop.f32.mrf.mxu0
      %v9678 = vadd.f32 0.0, %v9677
      %9679 = vmatmul.bf16.gmra.mxu0 %v9565
      %v9680 = vpop.f32.mrf.mxu0
      %v9681 = vadd.f32 0.0, %v9680
      %v9682 = vpop.f32.mrf.mxu0
      %v9683 = vadd.f32 0.0, %v9682
      %9684 = vmatmul.bf16.gmra.mxu0 %v9574
      %v9685 = vpop.f32.mrf.mxu0
      %v9686 = vadd.f32 0.0, %v9685
      %v9687 = vpop.f32.mrf.mxu0
      %v9688 = vadd.f32 0.0, %v9687
      %9689 = vmatmul.bf16.gmra.mxu0 %v9583
      %v9690 = vpop.f32.mrf.mxu0
      %v9691 = vadd.f32 0.0, %v9690
      %v9692 = vpop.f32.mrf.mxu0
      %v9693 = vadd.f32 0.0, %v9692
      %9694 = vmatmul.bf16.gmra.mxu0 %v9592
      %v9695 = vpop.f32.mrf.mxu0
      %v9696 = vadd.f32 0.0, %v9695
      %v9697 = vpop.f32.mrf.mxu0
      %v9698 = vadd.f32 0.0, %v9697
      %9699 = vmatmul.bf16.gmra.mxu0 %v9601
      %v9700 = vpop.f32.mrf.mxu0
      %v9701 = vadd.f32 0.0, %v9700
      %v9702 = vpop.f32.mrf.mxu0
      %v9703 = vadd.f32 0.0, %v9702
      %9704 = vmatmul.bf16.gmra.mxu0 %v9610
      %v9705 = vpop.f32.mrf.mxu0
      %v9706 = vadd.f32 0.0, %v9705
      %v9707 = vpop.f32.mrf.mxu0
      %v9708 = vadd.f32 0.0, %v9707
      %9709 = vdwg.mxu0
      %v9710 = vadd.f32 %v9437, %v9676
      %v9711 = vadd.f32 %v9439, %v9678
      %v9712 = vadd.f32 %v9442, %v9681
      %v9713 = vadd.f32 %v9444, %v9683
      %v9714 = vadd.f32 %v9447, %v9686
      %v9715 = vadd.f32 %v9449, %v9688
      %v9716 = vadd.f32 %v9452, %v9691
      %v9717 = vadd.f32 %v9454, %v9693
      %v9718 = vadd.f32 %v9457, %v9696
      %v9719 = vadd.f32 %v9459, %v9698
      %v9720 = vadd.f32 %v9462, %v9701
      %v9721 = vadd.f32 %v9464, %v9703
      %v9722 = vadd.f32 %v9467, %v9706
      %v9723 = vadd.f32 %v9469, %v9708
      %v9724 = vld [vmem:[#allocation3 + $0x80] sm:$0xf]
      %v9725 = vld [vmem:[#allocation3 + $0x84] sm:$0xf]
      %v9726 = vld [vmem:[#allocation3 + $0x88] sm:$0xf]
      %v9727 = vld [vmem:[#allocation3 + $0x8c] sm:$0xf]
      %v9728 = vld [vmem:[#allocation3 + $0x90] sm:$0xf]
      %v9729 = vld [vmem:[#allocation3 + $0x94] sm:$0xf]
      %v9730 = vld [vmem:[#allocation3 + $0x98] sm:$0xf]
      %v9731 = vld [vmem:[#allocation3 + $0x9c] sm:$0xf]
      %v9732 = vld [vmem:[#allocation3 + $0xa0] sm:$0xf]
      %v9733 = vld [vmem:[#allocation3 + $0xa4] sm:$0xf]
      %v9734 = vld [vmem:[#allocation3 + $0xa8] sm:$0xf]
      %v9735 = vld [vmem:[#allocation3 + $0xac] sm:$0xf]
      %v9736 = vld [vmem:[#allocation3 + $0xb0] sm:$0xf]
      %v9737 = vld [vmem:[#allocation3 + $0xb4] sm:$0xf]
      %v9738 = vld [vmem:[#allocation3 + $0xb8] sm:$0x1]
      %v9739 = vld [vmem:[%s4 + $0xa0] sm:$0xf]
      %v9740 = vld [vmem:[%s4 + $0xa4] sm:$0xf]
      %v9741 = vld [vmem:[%s4 + $0xa8] sm:$0xf]
      %v9742 = vld [vmem:[%s4 + $0xac] sm:$0xf]
      %v9743 = vld [vmem:[%s4 + $0xb0] sm:$0xf]
      %v9744 = vld [vmem:[%s4 + $0xb4] sm:$0xf]
      %v9745 = vld [vmem:[%s4 + $0xb8] sm:$0xf]
      %v9746 = vld [vmem:[%s4 + $0xbc] sm:$0xf]
      %v9762 = vunpack.c.l.b16 %v9724
      %v9763 = vunpack.c.l.b16 %v9725
      %v9764 = vunpack.c.l.b16 %v9726
      %v9765 = vunpack.c.l.b16 %v9727
      %v9766 = vunpack.c.l.b16 %v9728
      %v9767 = vunpack.c.l.b16 %v9729
      %v9768 = vunpack.c.l.b16 %v9730
      %v9769 = vunpack.c.l.b16 %v9731
      %v9770 = vunpack.c.l.b16 %v9732
      %v9771 = vunpack.c.l.b16 %v9733
      %v9772 = vunpack.c.l.b16 %v9734
      %v9773 = vunpack.c.l.b16 %v9735
      %v9774 = vunpack.c.l.b16 %v9736
      %v9775 = vunpack.c.l.b16 %v9737
      %v9776 = vunpack.c.l.b16 %v9738
      %v9777 = vpack.c.b16 %v9763, %v9762
      %v9778 = vpack.c.b16 %v9765, %v9764
      %v9779 = vpack.c.b16 %v9767, %v9766
      %v9780 = vpack.c.b16 %v9769, %v9768
      %v9781 = vpack.c.b16 %v9771, %v9770
      %v9782 = vpack.c.b16 %v9773, %v9772
      %v9783 = vpack.c.b16 %v9775, %v9774
      %v9784 = vpack.c.b16 %v9776, %v9776
      %v9786 = vshrl.u32 %v9777, 16
      %v9788 = vshll.u32 %v9777, 16
      %v9790 = vrot.slane %v9788, 1
      %v9791 = vor.u32 %v9786, %v9790
      %v9793 = vshll.u32 %v9778, 16
      %v9795 = vrot.slane %v9793, 1
      %v9796 = vsel %vm1877, %v9791, %v9795
      %v9797 = vshrl.u32 %v9778, 16
      %v9799 = vor.u32 %v9797, %v9795
      %v9801 = vshll.u32 %v9779, 16
      %v9803 = vrot.slane %v9801, 1
      %v9804 = vsel %vm1877, %v9799, %v9803
      %v9805 = vshrl.u32 %v9779, 16
      %v9807 = vor.u32 %v9805, %v9803
      %v9809 = vshll.u32 %v9780, 16
      %v9811 = vrot.slane %v9809, 1
      %v9812 = vsel %vm1877, %v9807, %v9811
      %v9813 = vshrl.u32 %v9780, 16
      %v9815 = vor.u32 %v9813, %v9811
      %v9817 = vshll.u32 %v9781, 16
      %v9819 = vrot.slane %v9817, 1
      %v9820 = vsel %vm1877, %v9815, %v9819
      %v9821 = vshrl.u32 %v9781, 16
      %v9823 = vor.u32 %v9821, %v9819
      %v9825 = vshll.u32 %v9782, 16
      %v9827 = vrot.slane %v9825, 1
      %v9828 = vsel %vm1877, %v9823, %v9827
      %v9829 = vshrl.u32 %v9782, 16
      %v9831 = vor.u32 %v9829, %v9827
      %v9833 = vshll.u32 %v9783, 16
      %v9835 = vrot.slane %v9833, 1
      %v9836 = vsel %vm1877, %v9831, %v9835
      %v9837 = vshrl.u32 %v9783, 16
      %v9839 = vor.u32 %v9837, %v9835
      %v9841 = vshll.u32 %v9784, 16
      %v9843 = vrot.slane %v9841, 1
      %v9844 = vsel %vm1877, %v9839, %v9843
      %v9853 = vunpack.c.l.b16 %v9739
      %v9854 = vunpack.c.l.b16 %v9740
      %v9855 = vunpack.c.l.b16 %v9741
      %v9856 = vunpack.c.l.b16 %v9742
      %v9857 = vunpack.c.l.b16 %v9743
      %v9858 = vunpack.c.l.b16 %v9744
      %v9859 = vunpack.c.l.b16 %v9745
      %v9860 = vunpack.c.l.b16 %v9746
      %v9861 = vpack.c.b16 %v9854, %v9853
      %v9862 = vpack.c.b16 %v9856, %v9855
      %v9863 = vpack.c.b16 %v9858, %v9857
      %v9864 = vpack.c.b16 %v9860, %v9859
      %v9870 = vsel %vm1350, %v9796, 0
      %v9873 = vsel %vm1350, %v9804, 0
      %v9876 = vsel %vm1350, %v9812, 0
      %v9879 = vsel %vm1350, %v9820, 0
      %v9882 = vsel %vm1350, %v9828, 0
      %v9885 = vsel %vm1350, %v9836, 0
      %v9888 = vsel %vm1350, %v9844, 0
      %9890 = vmatpush.bf16.msra.mxu0 0
      %9891 = vmatpush.bf16.msra.mxu0 0
      %9892 = vmatpush.bf16.msra.mxu0 0
      %9893 = vmatpush.bf16.msra.mxu0 0
      %9894 = vmatpush.bf16.msra.mxu0 %v9864
      %9895 = vmatpush.bf16.msra.mxu0 %v9863
      %9896 = vmatpush.bf16.msra.mxu0 %v9862
      %9897 = vmatpush.bf16.msra.mxu0 %v9861
      %9898 = vmatmul.bf16.gmra.mxu0 %v9870
      %v9899 = vpop.f32.mrf.mxu0
      %v9900 = vadd.f32 0.0, %v9899
      %v9901 = vpop.f32.mrf.mxu0
      %v9902 = vadd.f32 0.0, %v9901
      %9903 = vmatmul.bf16.gmra.mxu0 %v9873
      %v9904 = vpop.f32.mrf.mxu0
      %v9905 = vadd.f32 0.0, %v9904
      %v9906 = vpop.f32.mrf.mxu0
      %v9907 = vadd.f32 0.0, %v9906
      %9908 = vmatmul.bf16.gmra.mxu0 %v9876
      %v9909 = vpop.f32.mrf.mxu0
      %v9910 = vadd.f32 0.0, %v9909
      %v9911 = vpop.f32.mrf.mxu0
      %v9912 = vadd.f32 0.0, %v9911
      %9913 = vmatmul.bf16.gmra.mxu0 %v9879
      %v9914 = vpop.f32.mrf.mxu0
      %v9915 = vadd.f32 0.0, %v9914
      %v9916 = vpop.f32.mrf.mxu0
      %v9917 = vadd.f32 0.0, %v9916
      %9918 = vmatmul.bf16.gmra.mxu0 %v9882
      %v9919 = vpop.f32.mrf.mxu0
      %v9920 = vadd.f32 0.0, %v9919
      %v9921 = vpop.f32.mrf.mxu0
      %v9922 = vadd.f32 0.0, %v9921
      %9923 = vmatmul.bf16.gmra.mxu0 %v9885
      %v9924 = vpop.f32.mrf.mxu0
      %v9925 = vadd.f32 0.0, %v9924
      %v9926 = vpop.f32.mrf.mxu0
      %v9927 = vadd.f32 0.0, %v9926
      %9928 = vmatmul.bf16.gmra.mxu0 %v9888
      %v9929 = vpop.f32.mrf.mxu0
      %v9930 = vadd.f32 0.0, %v9929
      %v9931 = vpop.f32.mrf.mxu0
      %v9932 = vadd.f32 0.0, %v9931
      %9933 = vdwg.mxu0
      %v9934 = vadd.f32 %v9710, %v9900
      %v9935 = vadd.f32 %v9711, %v9902
      %v9936 = vadd.f32 %v9712, %v9905
      %v9937 = vadd.f32 %v9713, %v9907
      %v9938 = vadd.f32 %v9714, %v9910
      %v9939 = vadd.f32 %v9715, %v9912
      %v9940 = vadd.f32 %v9716, %v9915
      %v9941 = vadd.f32 %v9717, %v9917
      %v9942 = vadd.f32 %v9718, %v9920
      %v9943 = vadd.f32 %v9719, %v9922
      %v9944 = vadd.f32 %v9720, %v9925
      %v9945 = vadd.f32 %v9721, %v9927
      %v9946 = vadd.f32 %v9722, %v9930
      %v9947 = vadd.f32 %v9723, %v9932
      %v9948 = vld [vmem:[#allocation3 + $0x88] sm:$0xf]
      %v9949 = vld [vmem:[#allocation3 + $0x8c] sm:$0xf]
      %v9950 = vld [vmem:[#allocation3 + $0x90] sm:$0xf]
      %v9951 = vld [vmem:[#allocation3 + $0x94] sm:$0xf]
      %v9952 = vld [vmem:[#allocation3 + $0x98] sm:$0xf]
      %v9953 = vld [vmem:[#allocation3 + $0x9c] sm:$0xf]
      %v9954 = vld [vmem:[#allocation3 + $0xa0] sm:$0xf]
      %v9955 = vld [vmem:[#allocation3 + $0xa4] sm:$0xf]
      %v9956 = vld [vmem:[#allocation3 + $0xa8] sm:$0xf]
      %v9957 = vld [vmem:[#allocation3 + $0xac] sm:$0xf]
      %v9958 = vld [vmem:[#allocation3 + $0xb0] sm:$0xf]
      %v9959 = vld [vmem:[#allocation3 + $0xb4] sm:$0xf]
      %v9960 = vld [vmem:[#allocation3 + $0xb8] sm:$0xf]
      %v9961 = vld [vmem:[#allocation3 + $0xbc] sm:$0xf]
      %v9962 = vld [vmem:[#allocation3 + $0xc0] sm:$0x1]
      %v9963 = vld [vmem:[%s4 + $0xc0] sm:$0xf]
      %v9964 = vld [vmem:[%s4 + $0xc4] sm:$0xf]
      %v9965 = vld [vmem:[%s4 + $0xc8] sm:$0xf]
      %v9966 = vld [vmem:[%s4 + $0xcc] sm:$0xf]
      %v9967 = vld [vmem:[%s4 + $0xd0] sm:$0xf]
      %v9968 = vld [vmem:[%s4 + $0xd4] sm:$0xf]
      %v9969 = vld [vmem:[%s4 + $0xd8] sm:$0xf]
      %v9970 = vld [vmem:[%s4 + $0xdc] sm:$0xf]
      %v9971 = vld [vmem:[%s4 + $0xe0] sm:$0xf]
      %v9972 = vld [vmem:[%s4 + $0xe4] sm:$0xf]
      %v9973 = vld [vmem:[%s4 + $0xe8] sm:$0xf]
      %v9974 = vld [vmem:[%s4 + $0xec] sm:$0xf]
      %v9975 = vld [vmem:[%s4 + $0xf0] sm:$0xf]
      %v9976 = vld [vmem:[%s4 + $0xf4] sm:$0xf]
      %v9977 = vld [vmem:[%s4 + $0xf8] sm:$0xf]
      %v9978 = vld [vmem:[%s4 + $0xfc] sm:$0xf]
      %v9994 = vunpack.c.l.b16 %v9948
      %v9995 = vunpack.c.l.b16 %v9949
      %v9996 = vunpack.c.l.b16 %v9950
      %v9997 = vunpack.c.l.b16 %v9951
      %v9998 = vunpack.c.l.b16 %v9952
      %v9999 = vunpack.c.l.b16 %v9953
      %v10000 = vunpack.c.l.b16 %v9954
      %v10001 = vunpack.c.l.b16 %v9955
      %v10002 = vunpack.c.l.b16 %v9956
      %v10003 = vunpack.c.l.b16 %v9957
      %v10004 = vunpack.c.l.b16 %v9958
      %v10005 = vunpack.c.l.b16 %v9959
      %v10006 = vunpack.c.l.b16 %v9960
      %v10007 = vunpack.c.l.b16 %v9961
      %v10008 = vunpack.c.l.b16 %v9962
      %v10009 = vpack.c.b16 %v9995, %v9994
      %v10010 = vpack.c.b16 %v9997, %v9996
      %v10011 = vpack.c.b16 %v9999, %v9998
      %v10012 = vpack.c.b16 %v10001, %v10000
      %v10013 = vpack.c.b16 %v10003, %v10002
      %v10014 = vpack.c.b16 %v10005, %v10004
      %v10015 = vpack.c.b16 %v10007, %v10006
      %v10016 = vpack.c.b16 %v10008, %v10008
      %v10018 = vshrl.u32 %v10009, 16
      %v10020 = vshll.u32 %v10009, 16
      %v10022 = vrot.slane %v10020, 1
      %v10023 = vor.u32 %v10018, %v10022
      %v10025 = vshll.u32 %v10010, 16
      %v10027 = vrot.slane %v10025, 1
      %v10028 = vsel %vm1877, %v10023, %v10027
      %v10029 = vshrl.u32 %v10010, 16
      %v10031 = vor.u32 %v10029, %v10027
      %v10033 = vshll.u32 %v10011, 16
      %v10035 = vrot.slane %v10033, 1
      %v10036 = vsel %vm1877, %v10031, %v10035
      %v10037 = vshrl.u32 %v10011, 16
      %v10039 = vor.u32 %v10037, %v10035
      %v10041 = vshll.u32 %v10012, 16
      %v10043 = vrot.slane %v10041, 1
      %v10044 = vsel %vm1877, %v10039, %v10043
      %v10045 = vshrl.u32 %v10012, 16
      %v10047 = vor.u32 %v10045, %v10043
      %v10049 = vshll.u32 %v10013, 16
      %v10051 = vrot.slane %v10049, 1
      %v10052 = vsel %vm1877, %v10047, %v10051
      %v10053 = vshrl.u32 %v10013, 16
      %v10055 = vor.u32 %v10053, %v10051
      %v10057 = vshll.u32 %v10014, 16
      %v10059 = vrot.slane %v10057, 1
      %v10060 = vsel %vm1877, %v10055, %v10059
      %v10061 = vshrl.u32 %v10014, 16
      %v10063 = vor.u32 %v10061, %v10059
      %v10065 = vshll.u32 %v10015, 16
      %v10067 = vrot.slane %v10065, 1
      %v10068 = vsel %vm1877, %v10063, %v10067
      %v10069 = vshrl.u32 %v10015, 16
      %v10071 = vor.u32 %v10069, %v10067
      %v10073 = vshll.u32 %v10016, 16
      %v10075 = vrot.slane %v10073, 1
      %v10076 = vsel %vm1877, %v10071, %v10075
      %v10100 = vunpack.c.l.b16 %v9963
      %v10101 = vunpack.c.l.b16 %v9964
      %v10102 = vunpack.c.l.b16 %v9965
      %v10103 = vunpack.c.l.b16 %v9966
      %v10104 = vunpack.c.l.b16 %v9967
      %v10105 = vunpack.c.l.b16 %v9968
      %v10106 = vunpack.c.l.b16 %v9969
      %v10107 = vunpack.c.l.b16 %v9970
      %v10108 = vunpack.c.l.b16 %v9971
      %v10109 = vunpack.c.l.b16 %v9972
      %v10110 = vunpack.c.l.b16 %v9973
      %v10111 = vunpack.c.l.b16 %v9974
      %v10112 = vunpack.c.l.b16 %v9975
      %v10113 = vunpack.c.l.b16 %v9976
      %v10114 = vunpack.c.l.b16 %v9977
      %v10115 = vunpack.c.l.b16 %v9978
      %v10116 = vpack.c.b16 %v10101, %v10100
      %v10117 = vpack.c.b16 %v10103, %v10102
      %v10118 = vpack.c.b16 %v10105, %v10104
      %v10119 = vpack.c.b16 %v10107, %v10106
      %v10120 = vpack.c.b16 %v10109, %v10108
      %v10121 = vpack.c.b16 %v10111, %v10110
      %v10122 = vpack.c.b16 %v10113, %v10112
      %v10123 = vpack.c.b16 %v10115, %v10114
      %10132 = vmatpush.bf16.msra.mxu0 %v10123
      %10133 = vmatpush.bf16.msra.mxu0 %v10122
      %10134 = vmatpush.bf16.msra.mxu0 %v10121
      %10135 = vmatpush.bf16.msra.mxu0 %v10120
      %10136 = vmatpush.bf16.msra.mxu0 %v10119
      %10137 = vmatpush.bf16.msra.mxu0 %v10118
      %10138 = vmatpush.bf16.msra.mxu0 %v10117
      %10139 = vmatpush.bf16.msra.mxu0 %v10116
      %10140 = vmatmul.bf16.gmra.mxu0 %v10028
      %v10141 = vpop.f32.mrf.mxu0
      %v10142 = vadd.f32 0.0, %v10141
      %v10143 = vpop.f32.mrf.mxu0
      %v10144 = vadd.f32 0.0, %v10143
      %10145 = vmatmul.bf16.gmra.mxu0 %v10036
      %v10146 = vpop.f32.mrf.mxu0
      %v10147 = vadd.f32 0.0, %v10146
      %v10148 = vpop.f32.mrf.mxu0
      %v10149 = vadd.f32 0.0, %v10148
      %10150 = vmatmul.bf16.gmra.mxu0 %v10044
      %v10151 = vpop.f32.mrf.mxu0
      %v10152 = vadd.f32 0.0, %v10151
      %v10153 = vpop.f32.mrf.mxu0
      %v10154 = vadd.f32 0.0, %v10153
      %10155 = vmatmul.bf16.gmra.mxu0 %v10052
      %v10156 = vpop.f32.mrf.mxu0
      %v10157 = vadd.f32 0.0, %v10156
      %v10158 = vpop.f32.mrf.mxu0
      %v10159 = vadd.f32 0.0, %v10158
      %10160 = vmatmul.bf16.gmra.mxu0 %v10060
      %v10161 = vpop.f32.mrf.mxu0
      %v10162 = vadd.f32 0.0, %v10161
      %v10163 = vpop.f32.mrf.mxu0
      %v10164 = vadd.f32 0.0, %v10163
      %10165 = vmatmul.bf16.gmra.mxu0 %v10068
      %v10166 = vpop.f32.mrf.mxu0
      %v10167 = vadd.f32 0.0, %v10166
      %v10168 = vpop.f32.mrf.mxu0
      %v10169 = vadd.f32 0.0, %v10168
      %10170 = vmatmul.bf16.gmra.mxu0 %v10076
      %v10171 = vpop.f32.mrf.mxu0
      %v10172 = vadd.f32 0.0, %v10171
      %v10173 = vpop.f32.mrf.mxu0
      %v10174 = vadd.f32 0.0, %v10173
      %10175 = vdwg.mxu0
      %v10176 = vadd.f32 %v9934, %v10142
      %v10177 = vadd.f32 %v9935, %v10144
      %v10178 = vadd.f32 %v9936, %v10147
      %v10179 = vadd.f32 %v9937, %v10149
      %v10180 = vadd.f32 %v9938, %v10152
      %v10181 = vadd.f32 %v9939, %v10154
      %v10182 = vadd.f32 %v9940, %v10157
      %v10183 = vadd.f32 %v9941, %v10159
      %v10184 = vadd.f32 %v9942, %v10162
      %v10185 = vadd.f32 %v9943, %v10164
      %v10186 = vadd.f32 %v9944, %v10167
      %v10187 = vadd.f32 %v9945, %v10169
      %v10188 = vadd.f32 %v9946, %v10172
      %v10189 = vadd.f32 %v9947, %v10174
      %v10190 = vld [vmem:[#allocation3 + $0x88] sm:$0xe]
      %v10191 = vld [vmem:[#allocation3 + $0xc0] sm:$0x3]
      %v10192 = vld [vmem:[%s4 + $0x100] sm:$0xf]
      %v10193 = vld [vmem:[%s4 + $0x104] sm:$0xf]
      %v10194 = vld [vmem:[%s4 + $0x108] sm:$0xf]
      %v10195 = vld [vmem:[%s4 + $0x10c] sm:$0xf]
      %v10196 = vld [vmem:[%s4 + $0x110] sm:$0xf]
      %v10197 = vld [vmem:[%s4 + $0x114] sm:$0xf]
      %v10198 = vld [vmem:[%s4 + $0x118] sm:$0xf]
      %v10199 = vld [vmem:[%s4 + $0x11c] sm:$0xf]
      %v10202 = vunpack.c.l.b16 %v10190
      %v10203 = vunpack.c.l.b16 %v10191
      %v10204 = vpack.c.b16 %v9995, %v10202
      %v10205 = vpack.c.b16 %v10203, %v10203
      %v10207 = vshrl.u32 %v10204, 16
      %v10209 = vrot.slane %v10207, 1
      %v10210 = vshll.u32 %v10204, 16
      %v10212 = vrot.slane %v10210, 2
      %v10213 = vor.u32 %v10209, %v10212
      %v10214 = vrot.slane %v10029, 1
      %v10215 = vrot.slane %v10025, 2
      %v10216 = vor.u32 %v10214, %v10215
      %v10217 = vsel %vm2299, %v10213, %v10216
      %v10218 = vrot.slane %v10037, 1
      %v10219 = vrot.slane %v10033, 2
      %v10220 = vor.u32 %v10218, %v10219
      %v10221 = vsel %vm2299, %v10216, %v10220
      %v10222 = vrot.slane %v10045, 1
      %v10223 = vrot.slane %v10041, 2
      %v10224 = vor.u32 %v10222, %v10223
      %v10225 = vsel %vm2299, %v10220, %v10224
      %v10226 = vrot.slane %v10053, 1
      %v10227 = vrot.slane %v10049, 2
      %v10228 = vor.u32 %v10226, %v10227
      %v10229 = vsel %vm2299, %v10224, %v10228
      %v10230 = vrot.slane %v10061, 1
      %v10231 = vrot.slane %v10057, 2
      %v10232 = vor.u32 %v10230, %v10231
      %v10233 = vsel %vm2299, %v10228, %v10232
      %v10234 = vrot.slane %v10069, 1
      %v10235 = vrot.slane %v10065, 2
      %v10236 = vor.u32 %v10234, %v10235
      %v10237 = vsel %vm2299, %v10232, %v10236
      %v10239 = vshrl.u32 %v10205, 16
      %v10241 = vrot.slane %v10239, 1
      %v10242 = vshll.u32 %v10205, 16
      %v10244 = vrot.slane %v10242, 2
      %v10245 = vor.u32 %v10241, %v10244
      %v10246 = vsel %vm2299, %v10236, %v10245
      %v10255 = vunpack.c.l.b16 %v10192
      %v10256 = vunpack.c.l.b16 %v10193
      %v10257 = vunpack.c.l.b16 %v10194
      %v10258 = vunpack.c.l.b16 %v10195
      %v10259 = vunpack.c.l.b16 %v10196
      %v10260 = vunpack.c.l.b16 %v10197
      %v10261 = vunpack.c.l.b16 %v10198
      %v10262 = vunpack.c.l.b16 %v10199
      %v10263 = vpack.c.b16 %v10256, %v10255
      %v10264 = vpack.c.b16 %v10258, %v10257
      %v10265 = vpack.c.b16 %v10260, %v10259
      %v10266 = vpack.c.b16 %v10262, %v10261
      %v10272 = vsel %vm1350, %v10217, 0
      %v10275 = vsel %vm1350, %v10221, 0
      %v10278 = vsel %vm1350, %v10225, 0
      %v10281 = vsel %vm1350, %v10229, 0
      %v10284 = vsel %vm1350, %v10233, 0
      %v10287 = vsel %vm1350, %v10237, 0
      %v10290 = vsel %vm1350, %v10246, 0
      %10292 = vmatpush.bf16.msra.mxu0 0
      %10293 = vmatpush.bf16.msra.mxu0 0
      %10294 = vmatpush.bf16.msra.mxu0 0
      %10295 = vmatpush.bf16.msra.mxu0 0
      %10296 = vmatpush.bf16.msra.mxu0 %v10266
      %10297 = vmatpush.bf16.msra.mxu0 %v10265
      %10298 = vmatpush.bf16.msra.mxu0 %v10264
      %10299 = vmatpush.bf16.msra.mxu0 %v10263
      %10300 = vmatmul.bf16.gmra.mxu0 %v10272
      %v10301 = vpop.f32.mrf.mxu0
      %v10302 = vadd.f32 0.0, %v10301
      %v10303 = vpop.f32.mrf.mxu0
      %v10304 = vadd.f32 0.0, %v10303
      %10305 = vmatmul.bf16.gmra.mxu0 %v10275
      %v10306 = vpop.f32.mrf.mxu0
      %v10307 = vadd.f32 0.0, %v10306
      %v10308 = vpop.f32.mrf.mxu0
      %v10309 = vadd.f32 0.0, %v10308
      %10310 = vmatmul.bf16.gmra.mxu0 %v10278
      %v10311 = vpop.f32.mrf.mxu0
      %v10312 = vadd.f32 0.0, %v10311
      %v10313 = vpop.f32.mrf.mxu0
      %v10314 = vadd.f32 0.0, %v10313
      %10315 = vmatmul.bf16.gmra.mxu0 %v10281
      %v10316 = vpop.f32.mrf.mxu0
      %v10317 = vadd.f32 0.0, %v10316
      %v10318 = vpop.f32.mrf.mxu0
      %v10319 = vadd.f32 0.0, %v10318
      %10320 = vmatmul.bf16.gmra.mxu0 %v10284
      %v10321 = vpop.f32.mrf.mxu0
      %v10322 = vadd.f32 0.0, %v10321
      %v10323 = vpop.f32.mrf.mxu0
      %v10324 = vadd.f32 0.0, %v10323
      %10325 = vmatmul.bf16.gmra.mxu0 %v10287
      %v10326 = vpop.f32.mrf.mxu0
      %v10327 = vadd.f32 0.0, %v10326
      %v10328 = vpop.f32.mrf.mxu0
      %v10329 = vadd.f32 0.0, %v10328
      %10330 = vmatmul.bf16.gmra.mxu0 %v10290
      %v10331 = vpop.f32.mrf.mxu0
      %v10332 = vadd.f32 0.0, %v10331
      %v10333 = vpop.f32.mrf.mxu0
      %v10334 = vadd.f32 0.0, %v10333
      %10335 = vdwg.mxu0
      %v10336 = vadd.f32 %v10176, %v10302
      %v10337 = vadd.f32 %v10177, %v10304
      %v10338 = vadd.f32 %v10178, %v10307
      %v10339 = vadd.f32 %v10179, %v10309
      %v10340 = vadd.f32 %v10180, %v10312
      %v10341 = vadd.f32 %v10181, %v10314
      %v10342 = vadd.f32 %v10182, %v10317
      %v10343 = vadd.f32 %v10183, %v10319
      %v10344 = vadd.f32 %v10184, %v10322
      %v10345 = vadd.f32 %v10185, %v10324
      %v10346 = vadd.f32 %v10186, %v10327
      %v10347 = vadd.f32 %v10187, %v10329
      %v10348 = vadd.f32 %v10188, %v10332
      %v10349 = vadd.f32 %v10189, %v10334
      %v10350 = vld [vmem:[%s5] sm:$0x1]
      %v10352 = vperm.slane %v10350, 0
      %v10354 = vadd.f32 %v10336, %v10352
      %v10355 = vadd.f32 %v10337, %v10352
      %v10356 = vadd.f32 %v10338, %v10352
      %v10357 = vadd.f32 %v10339, %v10352
      %v10358 = vadd.f32 %v10340, %v10352
      %v10359 = vadd.f32 %v10341, %v10352
      %v10360 = vadd.f32 %v10342, %v10352
      %v10361 = vadd.f32 %v10343, %v10352
      %v10362 = vadd.f32 %v10344, %v10352
      %v10363 = vadd.f32 %v10345, %v10352
      %v10364 = vadd.f32 %v10346, %v10352
      %v10365 = vadd.f32 %v10347, %v10352
      %v10366 = vadd.f32 %v10348, %v10352
      %v10367 = vadd.f32 %v10349, %v10352
      %v10368 = vadd.f32 %v10354, %v9072
      %v10369 = vadd.f32 %v10355, %v9073
      %v10370 = vadd.f32 %v10356, %v9074
      %v10371 = vadd.f32 %v10357, %v9075
      %v10372 = vadd.f32 %v10358, %v9076
      %v10373 = vadd.f32 %v10359, %v9077
      %v10374 = vadd.f32 %v10360, %v9078
      %v10375 = vadd.f32 %v10361, %v9079
      %v10376 = vadd.f32 %v10362, %v9080
      %v10377 = vadd.f32 %v10363, %v9081
      %v10378 = vadd.f32 %v10364, %v9082
      %v10379 = vadd.f32 %v10365, %v9083
      %v10380 = vadd.f32 %v10366, %v9084
      %v10381 = vadd.f32 %v10367, %v9085
      %v10382 = vmax.f32 %v10368, 0.0
      %v10383 = vmax.f32 %v10369, 0.0
      %v10384 = vmax.f32 %v10370, 0.0
      %v10385 = vmax.f32 %v10371, 0.0
      %v10386 = vmax.f32 %v10372, 0.0
      %v10387 = vmax.f32 %v10373, 0.0
      %v10388 = vmax.f32 %v10374, 0.0
      %v10389 = vmax.f32 %v10375, 0.0
      %v10390 = vmax.f32 %v10376, 0.0
      %v10391 = vmax.f32 %v10377, 0.0
      %v10392 = vmax.f32 %v10378, 0.0
      %v10393 = vmax.f32 %v10379, 0.0
      %v10394 = vmax.f32 %v10380, 0.0
      %v10395 = vmax.f32 %v10381, 0.0
      %v10396 = vld [vmem:[%s1 + $0xe0] sm:$0xff]
      %v10397 = vld [vmem:[%s1 + $0xe8] sm:$0xff]
      %v10398 = vld [vmem:[%s1 + $0xf0] sm:$0xff]
      %v10399 = vld [vmem:[%s1 + $0xf8] sm:$0xff]
      %v10400 = vld [vmem:[%s1 + $0x100] sm:$0xff]
      %v10401 = vld [vmem:[%s1 + $0x108] sm:$0xff]
      %v10402 = vld [vmem:[%s1 + $0x110] sm:$0xff]
      %v10403 = vld [vmem:[%s1 + $0x118] sm:$0xff]
      %v10404 = vld [vmem:[%s1 + $0x120] sm:$0xff]
      %v10405 = vld [vmem:[%s1 + $0x128] sm:$0xff]
      %v10406 = vld [vmem:[%s1 + $0x130] sm:$0xff]
      %v10407 = vld [vmem:[%s1 + $0x138] sm:$0xff]
      %v10408 = vld [vmem:[%s1 + $0x140] sm:$0xff]
      %v10409 = vld [vmem:[%s1 + $0x148] sm:$0xff]
      %10411 = vset.pattern.permute.xlu0 0
      %10412 = vperm.xlu0 %10411, %v10396
      %v10413 = vpop.permute.xlu0 %10412
      %10416 = vset.pattern.permute.xlu0 0
      %10417 = vperm.xlu0 %10416, %v10397
      %v10418 = vpop.permute.xlu0 %10417
      %10421 = vset.pattern.permute.xlu0 0
      %10422 = vperm.xlu0 %10421, %v10398
      %v10423 = vpop.permute.xlu0 %10422
      %10426 = vset.pattern.permute.xlu0 0
      %10427 = vperm.xlu0 %10426, %v10399
      %v10428 = vpop.permute.xlu0 %10427
      %10431 = vset.pattern.permute.xlu0 0
      %10432 = vperm.xlu0 %10431, %v10400
      %v10433 = vpop.permute.xlu0 %10432
      %10436 = vset.pattern.permute.xlu0 0
      %10437 = vperm.xlu0 %10436, %v10401
      %v10438 = vpop.permute.xlu0 %10437
      %10441 = vset.pattern.permute.xlu0 0
      %10442 = vperm.xlu0 %10441, %v10402
      %v10443 = vpop.permute.xlu0 %10442
      %10446 = vset.pattern.permute.xlu0 0
      %10447 = vperm.xlu0 %10446, %v10403
      %v10448 = vpop.permute.xlu0 %10447
      %10451 = vset.pattern.permute.xlu0 0
      %10452 = vperm.xlu0 %10451, %v10404
      %v10453 = vpop.permute.xlu0 %10452
      %10456 = vset.pattern.permute.xlu0 0
      %10457 = vperm.xlu0 %10456, %v10405
      %v10458 = vpop.permute.xlu0 %10457
      %10461 = vset.pattern.permute.xlu0 0
      %10462 = vperm.xlu0 %10461, %v10406
      %v10463 = vpop.permute.xlu0 %10462
      %10466 = vset.pattern.permute.xlu0 0
      %10467 = vperm.xlu0 %10466, %v10407
      %v10468 = vpop.permute.xlu0 %10467
      %10471 = vset.pattern.permute.xlu0 0
      %10472 = vperm.xlu0 %10471, %v10408
      %v10473 = vpop.permute.xlu0 %10472
      %10476 = vset.pattern.permute.xlu0 0
      %10477 = vperm.xlu0 %10476, %v10409
      %v10478 = vpop.permute.xlu0 %10477
      %v10480 = vmul.f32 %v10382, %v10413
      %v10481 = vmul.f32 %v10383, %v10418
      %v10482 = vmul.f32 %v10384, %v10423
      %v10483 = vmul.f32 %v10385, %v10428
      %v10484 = vmul.f32 %v10386, %v10433
      %v10485 = vmul.f32 %v10387, %v10438
      %v10486 = vmul.f32 %v10388, %v10443
      %v10487 = vmul.f32 %v10389, %v10448
      %v10488 = vmul.f32 %v10390, %v10453
      %v10489 = vmul.f32 %v10391, %v10458
      %v10490 = vmul.f32 %v10392, %v10463
      %v10491 = vmul.f32 %v10393, %v10468
      %v10492 = vmul.f32 %v10394, %v10473
      %v10493 = vmul.f32 %v10395, %v10478
      %10494 = vst.msk [vmem:[%s251 + $0xe0] sm:$0xff] %vm1350, %v10480
      %10495 = vst.msk [vmem:[%s251 + $0xe8] sm:$0xff] %vm1350, %v10481
      %10496 = vst.msk [vmem:[%s251 + $0xf0] sm:$0xff] %vm1350, %v10482
      %10497 = vst.msk [vmem:[%s251 + $0xf8] sm:$0xff] %vm1350, %v10483
      %10498 = vst.msk [vmem:[%s251 + $0x100] sm:$0xff] %vm1350, %v10484
      %10499 = vst.msk [vmem:[%s251 + $0x108] sm:$0xff] %vm1350, %v10485
      %10500 = vst.msk [vmem:[%s251 + $0x110] sm:$0xff] %vm1350, %v10486
      %10501 = vst.msk [vmem:[%s251 + $0x118] sm:$0xff] %vm1350, %v10487
      %10502 = vst.msk [vmem:[%s251 + $0x120] sm:$0xff] %vm1350, %v10488
      %10503 = vst.msk [vmem:[%s251 + $0x128] sm:$0xff] %vm1350, %v10489
      %10504 = vst.msk [vmem:[%s251 + $0x130] sm:$0xff] %vm1350, %v10490
      %10505 = vst.msk [vmem:[%s251 + $0x138] sm:$0xff] %vm1350, %v10491
      %10506 = vst.msk [vmem:[%s251 + $0x140] sm:$0xff] %vm1350, %v10492
      %10507 = vst.msk [vmem:[%s251 + $0x148] sm:$0xff] %vm1350, %v10493
      %p10508 = scmp.lt.s32.totalorder %s17, 1
      %s10509 = scalar_select %p10508, %s17, 1
      %s10510 = smul.addr %s10509, 42
      %s10511 = smul.addr %s10510, 8
      %s10512 = scalar_lea.vmem %s6, %s10511
      // Predicated region
      $region45: #{resnet_block1_forward.1} parent=43 // pred_check
        %p10513 = pneg %p166
      $region46: #{resnet_block1_forward.1} parent=43 // pred_check_branch
        %10515 = sbr.rel (%p10513) target = $region48
      $region47: #{resnet_block1_forward.1} parent=43 // pred_region
        _
      $region48: #{resnet_block1_forward.1} parent=43 // pred_fallthru
        _
    $region44: #{resnet_block1_forward.1} parent=5 // pred_fallthru
      _
    %p10516 = scmp.le.s32.totalorder 2, %s12
    // Predicated region
    $region49: #{resnet_block1_forward.1} parent=5 // pred_check
      %p10517 = pneg %p10516
    $region50: #{resnet_block1_forward.1} parent=5 // pred_check_branch
      %10519 = sbr.rel (%p10517) target = $region52
    $region51: #{resnet_block1_forward.1} parent=5 // pred_region
      %s10520 = ssub.s32 %s12, 2
      // Predicated region
      $region53: #{resnet_block1_forward.1} parent=51 // pred_check
        %p10521 = pneg %p172
      $region54: #{resnet_block1_forward.1} parent=51 // pred_check_branch
        %10523 = sbr.rel (%p10521) target = $region56
      $region55: #{resnet_block1_forward.1} parent=51 // pred_region
        %p10524 = scmp.lt.s32.totalorder %s18, 1
        %s10525 = scalar_select %p10524, %s18, 1
        %s10526 = smul.addr %s10525, 42
        %s10527 = smul.addr %s10526, 8
        %s10528 = scalar_lea.vmem %s6, %s10527
      $region56: #{resnet_block1_forward.1} parent=51 // pred_fallthru
        _
    $region52: #{resnet_block1_forward.1} parent=5 // pred_fallthru
      _
  $region6: #{resnet_block1_forward.1} parent=0 // loop_footer
    %s16 = sadd.s32 1, %s12
  $region7: #{resnet_block1_forward.1} parent=0 // loop_footer_branch
    %11 = sbr.rel target = $region3
  $region8: #{resnet_block1_forward.1} parent=0 // loop_exit
    _

</llo_original>
